<compile_context>
chip_gen: v5e
topology: v5e:2x2
jax: 0.10.0
libtpu: 0.0.40
codegen_flags: <defaults>
</compile_context>

<pallas_src>
import functools
import math

import jax
import jax.numpy as jnp
from jax import lax
from jax.experimental import pallas as pl
from jax.experimental.pallas import tpu as pltpu

J = 3      # number of filter taps
J_H = 5    # harmonic filter depth -> P^(2**(J_H-1))


def _mm(a, b):
    return jnp.dot(a, b, preferred_element_type=jnp.float32)


def gsan_kernel(x_ref, wcat_ref, wattn_ref, arows_ref,
                gdu_ref, gb1_ref, gb2_ref, p_ref,
                code_d_ref, code_u_ref, out_ref, *, p0, p1, tm):
    i = pl.program_id(0)
    c_out = out_ref.shape[1]
    n_all = x_ref.shape[0]

    # ---- shared projections: x @ [W_d_sum | W_u_sum | W_b1_sum | W_b2_sum | W_h] -------------
    x = x_ref[...]                                  # (n_all, c_in), resident
    xw = _mm(x, wcat_ref[...])                      # (n_all, 5*c_out)
    xwd = xw[:, 0 * c_out:1 * c_out]
    xwu = xw[:, 1 * c_out:2 * c_out]
    xwb1 = xw[:, 2 * c_out:3 * c_out]
    xwb2 = xw[:, 3 * c_out:4 * c_out]
    xwh = xw[:, 4 * c_out:5 * c_out]

    # merged (L0 (+) 0 (+) L2) operator: node rows consume the W_d projection, triangle rows the
    # W_u projection (edge rows/cols of the merged operator are identically zero).
    row = lax.broadcasted_iota(jnp.int32, (n_all, 1), 0)
    ydu = jnp.where(row < (p0 + p1), xwd, xwu)

    out_ref[...] = (_mm(gdu_ref[...].astype(jnp.float32), ydu)
                    + _mm(gb1_ref[...].astype(jnp.float32), xwb1)
                    + _mm(gb2_ref[...].astype(jnp.float32), xwb2)
                    + _mm(p_ref[...], xwh))

    # ---- data-dependent attention: only for output tiles inside the edge (z1) block ----------
    p0_blk = p0 // tm
    p1_blk = p1 // tm
    is_edge = jnp.logical_and(i >= p0_blk, i < p0_blk + p1_blk)

    @pl.when(is_edge)
    def _():
        start = pl.multiple_of(i * tm, tm)
        x_tile = x_ref[pl.ds(start, tm), :]                 # (tm, c_in): this tile's z1 rows
        a_cols = _mm(x_tile, wattn_ref[...])                # (tm, 4): [src_d, dst_d, src_u, dst_u]
        a_rows = arows_ref[...]                             # (4, p1): same projections over all
                                                            #          edges, biases folded in

        def attn(code, src_c, dst_c, src_r, dst_r):
            # torch scatters [src,dst] then [dst,src]; the (dst,src) write wins on overlap:
            #   attn[a,b] = sigm(w_src.x[b]+w_dst.x[a]+bias) if L[b,a]!=0
            #             else sigm(w_src.x[a]+w_dst.x[b]+bias) if L[a,b]!=0 else 0
            # Select the pre-activation with the code first -> a single sigmoid (EUP).
            pre = jnp.where(code >= 1.5, dst_c + src_r, src_c + dst_r)
            return jnp.where(code >= 0.5, jax.nn.sigmoid(pre), 0.0)

        attn_d = attn(code_d_ref[...], a_cols[:, 0:1], a_cols[:, 1:2],
                      a_rows[0:1, :], a_rows[1:2, :])
        attn_u = attn(code_u_ref[...], a_cols[:, 2:3], a_cols[:, 3:4],
                      a_rows[2:3, :], a_rows[3:4, :])

        xwd_e = xwd[p0:p0 + p1, :]                          # z1 @ W_d_sum
        xwu_e = xwu[p0:p0 + p1, :]                          # z1 @ W_u_sum
        out_ref[...] = out_ref[...] + _mm(attn_d, xwd_e) + _mm(attn_u, xwu_e)

    # TODO(synk): F.dropout(p=0.5, training=True) is stochastic; implemented here as eval-mode
    # identity (dropout skipped).  ReLU kept in-kernel.
    out_ref[...] = jnp.maximum(out_ref[...], 0.0)


def _epsilon(L):
    # TODO(synk): torch.linalg.eigvalsh has no Pallas equivalent; spectral radius is computed
    # with jnp.linalg in the wrapper and kept as a DEVICE scalar (no host sync).
    lam_max = jnp.linalg.eigvalsh(L)[-1]
    safe = jnp.where(lam_max > 0, lam_max, 1.0)
    return jnp.where(lam_max > 0, 1.0 / safe, 0.1).astype(jnp.float32)   # 0.5 * (2 / lam_max)


def gsan_forward(params, z0, z1, z2, L0, L1_d, L1_u, L2, B1, B2, tm=128):
    f32 = jnp.float32
    bf16 = jnp.bfloat16
    n0, c_in = z0.shape
    n1 = z1.shape[0]
    n2 = z2.shape[0]
    c_out = params["W_h"].shape[1]

    rup = lambda n: ((n + tm - 1) // tm) * tm
    p0, p1, p2 = rup(n0), rup(n1), rup(n2)         # each block padded to a tile multiple
    n_all = p0 + p1 + p2

    hp = lax.Precision.HIGHEST

    def propagator(L):
        # per-block harmonic propagator, squared wrapper-side in f32 / HIGHEST precision
        P = jnp.eye(L.shape[0], dtype=f32) - _epsilon(L) * L
        for _ in range(J_H - 1):
            P = jnp.dot(P, P, precision=hp)
        return P

    def embed(M, r, c, dtype):
        z = jnp.zeros((n_all, n_all), dtype)
        return z.at[r:r + M.shape[0], c:c + M.shape[1]].set(M.astype(dtype))

    # block-diagonal P^(2**(J_H-1))  (f32, precision-critical)
    Pfull = (embed(propagator(L0), 0, 0, f32)
             + embed(propagator(L1_d + L1_u), p0, p0, f32)
             + embed(propagator(L2), p0 + p1, p0 + p1, f32))

    # fixed integer-valued block operators: exact in bf16 -> half the dominant N^2 traffic
    Gdu = embed(L0, 0, 0, bf16) + embed(L2, p0 + p1, p0 + p1, bf16)       # acts on [W_d | W_u]
    Gb1 = embed(B1, 0, p0, bf16) + embed(B1.T, p0, 0, bf16)               # acts on W_b1
    Gb2 = embed(B2, p0, p0 + p1, bf16) + embed(B2.T, p0 + p1, p0, bf16)   # acts on W_b2

    # attention mask codes, edge block only: code = 1*(L[i,j]!=0) + 2*(L[j,i]!=0)
    def mask_code(L):
        Lp = jnp.zeros((p1, p1), f32).at[:n1, :n1].set(L)
        return (Lp != 0).astype(f32) + 2.0 * (Lp.T != 0).astype(f32)

    code_d = mask_code(L1_d)
    code_u = mask_code(L1_u)

    # tap-summed, output-axis-concatenated weights: (c_in, 5*c_out)
    Wcat = jnp.concatenate(
        [params["W_d"].sum(0), params["W_u"].sum(0),
         params["W_b1"].sum(0), params["W_b2"].sum(0), params["W_h"]], axis=1)

    wad = params["attn_d_w"][0]
    wau = params["attn_u_w"][0]
    Wattn = jnp.stack([wad[:c_in], wad[c_in:], wau[:c_in], wau[c_in:]], axis=1)   # (c_in, 4)

    # padded stacked features [z0; z1; z2]
    x_all = (jnp.zeros((n_all, c_in), f32)
             .at[:n0].set(z0)
             .at[p0:p0 + n1].set(z1)
             .at[p0 + p1:p0 + p1 + n2].set(z2))

    # row-form attention projections over all edges (layout plumbing), biases folded in
    bias_vec = jnp.stack([params["attn_d_b"], params["attn_d_b"],
                          params["attn_u_b"], params["attn_u_b"]]).astype(f32)
    a_rows = (x_all[p0:p0 + p1] @ Wattn).T + bias_vec[:, None]                    # (4, p1)

    p0_blk, p1_blk = p0 // tm, p1 // tm

    def full_spec(shape):
        return pl.BlockSpec(shape, lambda i: (0,) * len(shape))

    def row_spec():
        return pl.BlockSpec((tm, n_all), lambda i: (i, 0))

    def code_spec():
        # non-edge tiles get a clamped (harmless, unused) block; edge tiles get their own rows
        return pl.BlockSpec(
            (tm, p1),
            lambda i: (jnp.maximum(jnp.minimum(i - p0_blk, p1_blk - 1), 0), 0))

    kernel = functools.partial(gsan_kernel, p0=p0, p1=p1, tm=tm)

    out = pl.pallas_call(
        kernel,
        out_shape=jax.ShapeDtypeStruct((n_all, c_out), f32),
        grid=(n_all // tm,),
        in_specs=[
            full_spec((n_all, c_in)),        # x_all   (resident)
            full_spec((c_in, 5 * c_out)),    # Wcat    (resident)
            full_spec((c_in, 4)),            # Wattn   (resident)
            full_spec((4, p1)),              # a_rows  (resident)
            row_spec(),                      # Gdu  bf16, (tm, n_all) row tiles
            row_spec(),                      # Gb1  bf16
            row_spec(),                      # Gb2  bf16
            row_spec(),                      # P    f32
            code_spec(),                     # code_d (edge-block row tile)
            code_spec(),                     # code_u
        ],
        out_specs=pl.BlockSpec((tm, c_out), lambda i: (i, 0)),
        compiler_params=pltpu.CompilerParams(
            dimension_semantics=("parallel",),
            vmem_limit_bytes=48 * 1024 * 1024),
    )(x_all, Wcat, Wattn, a_rows, Gdu, Gb1, Gb2, Pfull, code_d, code_u)

    return out[:n0], out[p0:p0 + n1], out[p0 + p1:p0 + p1 + n2]


def gsan_reference(params, z0, z1, z2, L0, L1_d, L1_u, L2, B1, B2):
    hp = lax.Precision.HIGHEST
    mm = lambda a, b: jnp.dot(a, b, precision=hp)
    c_in = z1.shape[1]

    def attn(L, w, b):
        wsrc = w[0, :c_in]; wdst = w[0, c_in:]
        a = z1 @ wsrc; d = z1 @ wdst
        S = jax.nn.sigmoid(a[:, None] + d[None, :] + b)
        mask = L != 0
        return jnp.where(mask.T, S.T, jnp.where(mask, S, 0.0))

    def harmonic(L, x):
        eps = _epsilon(L)
        P = jnp.eye(L.shape[0], dtype=jnp.float32) - eps * L
        for _ in range(J_H - 1):
            P = mm(P, P)
        return mm(mm(P, x), params["W_h"])

    L1d_a = attn(L1_d, params["attn_d_w"], params["attn_d_b"])
    L1u_a = attn(L1_u, params["attn_u_w"], params["attn_u_b"])

    c_out = params["W_h"].shape[1]
    z0_out = jnp.zeros((z0.shape[0], c_out), jnp.float32)
    for j in range(J):
        z0_out += mm(mm(L0, z0), params["W_d"][j])
        z0_out += mm(mm(B1, z1), params["W_b1"][j])
    z0_out = jax.nn.relu(z0_out + harmonic(L0, z0))

    z1_out = jnp.zeros((z1.shape[0], c_out), jnp.float32)
    for j in range(J):
        z1_out += mm(mm(L1d_a, z1), params["W_d"][j])
        z1_out += mm(mm(L1u_a, z1), params["W_u"][j])
        z1_out += mm(mm(B1.T, z0), params["W_b1"][j])
        z1_out += mm(mm(B2, z2), params["W_b2"][j])
    z1_out = jax.nn.relu(z1_out + harmonic(L1_d + L1_u, z1))

    z2_out = jnp.zeros((z2.shape[0], c_out), jnp.float32)
    for j in range(J):
        z2_out += mm(mm(L2, z2), params["W_u"][j])
        z2_out += mm(mm(B2.T, z1), params["W_b2"][j])
    z2_out = jax.nn.relu(z2_out + harmonic(L2, z2))
    return z0_out, z1_out, z2_out


def init_params(key, c_in, c_out):
    ks = jax.random.split(key, 9)
    lim = 1.0 / math.sqrt(2 * c_in)
    return {
        "W_d":  jax.random.normal(ks[0], (J, c_in, c_out), jnp.float32),
        "W_u":  jax.random.normal(ks[1], (J, c_in, c_out), jnp.float32),
        "W_h":  jax.random.normal(ks[2], (c_in, c_out), jnp.float32),
        "W_b1": jax.random.normal(ks[3], (J, c_in, c_out), jnp.float32),
        "W_b2": jax.random.normal(ks[4], (J, c_in, c_out), jnp.float32),
        "attn_d_w": jax.random.uniform(ks[5], (1, 2 * c_in), jnp.float32, -lim, lim),
        "attn_u_w": jax.random.uniform(ks[6], (1, 2 * c_in), jnp.float32, -lim, lim),
        "attn_d_b": jax.random.uniform(ks[7], (), jnp.float32, -lim, lim),
        "attn_u_b": jax.random.uniform(ks[8], (), jnp.float32, -lim, lim),
    }


if __name__ == "__main__":
    key = jax.random.PRNGKey(0)
    kB1, kB2, kz0, kz1, kz2, kp = jax.random.split(key, 6)

    n0, n1, n2 = 12, 20, 8       # nodes / edges / triangles
    c_in, c_out = 8, 16

    # incidence-like matrices with entries in {-1, 0, 1}
    B1 = jax.random.randint(kB1, (n0, n1), -1, 2).astype(jnp.float32)
    B2 = jax.random.randint(kB2, (n1, n2), -1, 2).astype(jnp.float32)
    L0 = B1 @ B1.T
    L1_d = B1.T @ B1
    L1_u = B2 @ B2.T
    L2 = B2.T @ B2

    z0 = jax.random.normal(kz0, (n0, c_in), jnp.float32)
    z1 = jax.random.normal(kz1, (n1, c_in), jnp.float32)
    z2 = jax.random.normal(kz2, (n2, c_in), jnp.float32)

    params = init_params(kp, c_in, c_out)

    outs = jax.jit(gsan_forward)(params, z0, z1, z2, L0, L1_d, L1_u, L2, B1, B2)
    outs = jax.block_until_ready(outs)

    refs = gsan_reference(params, z0, z1, z2, L0, L1_d, L1_u, L2, B1, B2)
    for o, r in zip(outs, refs):
        assert o.shape == r.shape and o.dtype == jnp.float32
        scale = float(jnp.max(jnp.abs(r))) + 1e-6
        rel = float(jnp.max(jnp.abs(o - r))) / scale
        assert rel < 1e-2, f"kernel/reference mismatch: rel={rel}"

    print("KERNEL_OK")
</pallas_src>

<mosaic_0001>
module attributes {stable_mosaic.version = 11 : i64} {
  func.func @gsan_kernel(%arg0: i32, %arg1: memref<384x8xf32, #tpu.memory_space<vmem>>, %arg2: memref<8x80xf32, #tpu.memory_space<vmem>>, %arg3: memref<8x4xf32, #tpu.memory_space<vmem>>, %arg4: memref<4x128xf32, #tpu.memory_space<vmem>>, %arg5: memref<128x384xbf16, #tpu.memory_space<vmem>>, %arg6: memref<128x384xbf16, #tpu.memory_space<vmem>>, %arg7: memref<128x384xbf16, #tpu.memory_space<vmem>>, %arg8: memref<128x384xf32, #tpu.memory_space<vmem>>, %arg9: memref<128x128xf32, #tpu.memory_space<vmem>>, %arg10: memref<128x128xf32, #tpu.memory_space<vmem>>, %arg11: memref<128x16xf32, #tpu.memory_space<vmem>>) attributes {dimension_semantics = [#tpu.dimension_semantics<parallel>], iteration_bounds = array<i64: 3>, scalar_prefetch = 0 : i64, scratch_operands = 0 : i64, tpu.core_type = #tpu.core_type<tc>, window_params = [{pipeline_mode = #tpu.pipeline_mode<synchronous>, transform_indices = @transform_0, window_bounds = array<i64: 384, 8>}, {pipeline_mode = #tpu.pipeline_mode<synchronous>, transform_indices = @transform_1, window_bounds = array<i64: 8, 80>}, {pipeline_mode = #tpu.pipeline_mode<synchronous>, transform_indices = @transform_2, window_bounds = array<i64: 8, 4>}, {pipeline_mode = #tpu.pipeline_mode<synchronous>, transform_indices = @transform_3, window_bounds = array<i64: 4, 128>}, {transform_indices = @transform_4, window_bounds = array<i64: 128, 384>}, {transform_indices = @transform_5, window_bounds = array<i64: 128, 384>}, {transform_indices = @transform_6, window_bounds = array<i64: 128, 384>}, {transform_indices = @transform_7, window_bounds = array<i64: 128, 384>}, {transform_indices = @transform_8, window_bounds = array<i64: 128, 128>}, {transform_indices = @transform_9, window_bounds = array<i64: 128, 128>}, {transform_indices = @transform_10, window_bounds = array<i64: 128, 16>}]} {
    %c0 = arith.constant 0 : index
    %c0_0 = arith.constant 0 : index
    %0 = vector.load %arg1[%c0, %c0_0] : memref<384x8xf32, #tpu.memory_space<vmem>>, vector<384x8xf32>
    %c0_1 = arith.constant 0 : index
    %c0_2 = arith.constant 0 : index
    %1 = vector.load %arg2[%c0_1, %c0_2] : memref<8x80xf32, #tpu.memory_space<vmem>>, vector<8x80xf32>
    %cst = arith.constant dense<0.000000e+00> : vector<384x80xf32>
    %2 = tpu.matmul %0, %1, %cst {dimension_numbers = #tpu.dot_dimension_numbers<[1], [0], [0], [1], [0, 0, 1, 1], [], []>} : vector<384x8xf32>, vector<8x80xf32>, vector<384x80xf32> -> vector<384x80xf32>
    %3 = vector.extract_strided_slice %2 {offsets = [0, 0], sizes = [384, 16], strides = [1, 1]} : vector<384x80xf32> to vector<384x16xf32>
    %4 = vector.extract_strided_slice %2 {offsets = [0, 16], sizes = [384, 16], strides = [1, 1]} : vector<384x80xf32> to vector<384x16xf32>
    %5 = vector.extract_strided_slice %2 {offsets = [0, 32], sizes = [384, 16], strides = [1, 1]} : vector<384x80xf32> to vector<384x16xf32>
    %6 = vector.extract_strided_slice %2 {offsets = [0, 48], sizes = [384, 16], strides = [1, 1]} : vector<384x80xf32> to vector<384x16xf32>
    %7 = vector.extract_strided_slice %2 {offsets = [0, 64], sizes = [384, 16], strides = [1, 1]} : vector<384x80xf32> to vector<384x16xf32>
    %8 = tpu.iota {dimensions = array<i32: 0>} : vector<384x1xi32>
    %c256_i32 = arith.constant 256 : i32
    %9 = vector.broadcast %c256_i32 : i32 to vector<384x1xi32>
    %10 = arith.cmpi slt, %8, %9 : vector<384x1xi32>
    %11 = vector.shape_cast %10 : vector<384x1xi1> to vector<384x1xi1>
    %12 = vector.broadcast %11 : vector<384x1xi1> to vector<384x16xi1>
    %13 = arith.select %12, %3, %4 : vector<384x16xi1>, vector<384x16xf32>
    %c0_3 = arith.constant 0 : index
    %c0_4 = arith.constant 0 : index
    %14 = vector.load %arg5[%c0_3, %c0_4] : memref<128x384xbf16, #tpu.memory_space<vmem>>, vector<128x384xbf16>
    %15 = arith.extf %14 : vector<128x384xbf16> to vector<128x384xf32>
    %cst_5 = arith.constant dense<0.000000e+00> : vector<128x16xf32>
    %16 = tpu.matmul %15, %13, %cst_5 {dimension_numbers = #tpu.dot_dimension_numbers<[1], [0], [0], [1], [0, 0, 1, 1], [], []>} : vector<128x384xf32>, vector<384x16xf32>, vector<128x16xf32> -> vector<128x16xf32>
    %c0_6 = arith.constant 0 : index
    %c0_7 = arith.constant 0 : index
    %17 = vector.load %arg6[%c0_6, %c0_7] : memref<128x384xbf16, #tpu.memory_space<vmem>>, vector<128x384xbf16>
    %18 = arith.extf %17 : vector<128x384xbf16> to vector<128x384xf32>
    %cst_8 = arith.constant dense<0.000000e+00> : vector<128x16xf32>
    %19 = tpu.matmul %18, %5, %cst_8 {dimension_numbers = #tpu.dot_dimension_numbers<[1], [0], [0], [1], [0, 0, 1, 1], [], []>} : vector<128x384xf32>, vector<384x16xf32>, vector<128x16xf32> -> vector<128x16xf32>
    %20 = arith.addf %16, %19 : vector<128x16xf32>
    %c0_9 = arith.constant 0 : index
    %c0_10 = arith.constant 0 : index
    %21 = vector.load %arg7[%c0_9, %c0_10] : memref<128x384xbf16, #tpu.memory_space<vmem>>, vector<128x384xbf16>
    %22 = arith.extf %21 : vector<128x384xbf16> to vector<128x384xf32>
    %cst_11 = arith.constant dense<0.000000e+00> : vector<128x16xf32>
    %23 = tpu.matmul %22, %6, %cst_11 {dimension_numbers = #tpu.dot_dimension_numbers<[1], [0], [0], [1], [0, 0, 1, 1], [], []>} : vector<128x384xf32>, vector<384x16xf32>, vector<128x16xf32> -> vector<128x16xf32>
    %24 = arith.addf %20, %23 : vector<128x16xf32>
    %c0_12 = arith.constant 0 : index
    %c0_13 = arith.constant 0 : index
    %25 = vector.load %arg8[%c0_12, %c0_13] : memref<128x384xf32, #tpu.memory_space<vmem>>, vector<128x384xf32>
    %cst_14 = arith.constant dense<0.000000e+00> : vector<128x16xf32>
    %26 = tpu.matmul %25, %7, %cst_14 {dimension_numbers = #tpu.dot_dimension_numbers<[1], [0], [0], [1], [0, 0, 1, 1], [], []>} : vector<128x384xf32>, vector<384x16xf32>, vector<128x16xf32> -> vector<128x16xf32>
    %27 = arith.addf %24, %26 : vector<128x16xf32>
    %c0_15 = arith.constant 0 : index
    %c0_16 = arith.constant 0 : index
    %28 = vector.load %arg11[%c0_15, %c0_16] : memref<128x16xf32, #tpu.memory_space<vmem>>, vector<128x16xf32>
    tpu.vector_store %arg11[%c0_15, %c0_16], %27 {strides = array<i32>} : memref<128x16xf32, #tpu.memory_space<vmem>>, vector<128x16xf32>,
    %c1_i32 = arith.constant 1 : i32
    %29 = arith.cmpi sge, %arg0, %c1_i32 : i32
    %c2_i32 = arith.constant 2 : i32
    %30 = arith.cmpi slt, %arg0, %c2_i32 : i32
    %31 = arith.andi %29, %30 : i1
    %32 = arith.extui %31 : i1 to i32
    %c0_i32 = arith.constant 0 : i32
    %33 = arith.cmpi ne, %32, %c0_i32 : i32
    scf.if %33 {
      %c128_i32 = arith.constant 128 : i32
      %38 = arith.muli %arg0, %c128_i32 : i32
      %39 = tpu.assume_multiple %38, 128 : i32
      %40 = arith.index_cast %39 : i32 to index
      %c0_22 = arith.constant 0 : index
      %41 = vector.load %arg1[%40, %c0_22] : memref<384x8xf32, #tpu.memory_space<vmem>>, vector<128x8xf32>
      %c0_23 = arith.constant 0 : index
      %c0_24 = arith.constant 0 : index
      %42 = vector.load %arg3[%c0_23, %c0_24] : memref<8x4xf32, #tpu.memory_space<vmem>>, vector<8x4xf32>
      %cst_25 = arith.constant dense<0.000000e+00> : vector<128x4xf32>
      %43 = tpu.matmul %41, %42, %cst_25 {dimension_numbers = #tpu.dot_dimension_numbers<[1], [0], [0], [1], [0, 0, 1, 1], [], []>} : vector<128x8xf32>, vector<8x4xf32>, vector<128x4xf32> -> vector<128x4xf32>
      %c0_26 = arith.constant 0 : index
      %c0_27 = arith.constant 0 : index
      %44 = vector.load %arg4[%c0_26, %c0_27] : memref<4x128xf32, #tpu.memory_space<vmem>>, vector<4x128xf32>
      %c0_28 = arith.constant 0 : index
      %c0_29 = arith.constant 0 : index
      %45 = vector.load %arg9[%c0_28, %c0_29] : memref<128x128xf32, #tpu.memory_space<vmem>>, vector<128x128xf32>
      %46 = vector.extract_strided_slice %43 {offsets = [0, 0], sizes = [128, 1], strides = [1, 1]} : vector<128x4xf32> to vector<128x1xf32>
      %47 = vector.extract_strided_slice %43 {offsets = [0, 1], sizes = [128, 1], strides = [1, 1]} : vector<128x4xf32> to vector<128x1xf32>
      %48 = vector.extract_strided_slice %44 {offsets = [0, 0], sizes = [1, 128], strides = [1, 1]} : vector<4x128xf32> to vector<1x128xf32>
      %49 = vector.extract_strided_slice %44 {offsets = [1, 0], sizes = [1, 128], strides = [1, 1]} : vector<4x128xf32> to vector<1x128xf32>
      %cst_30 = arith.constant 1.500000e+00 : f32
      %50 = vector.broadcast %cst_30 : f32 to vector<128x128xf32>
      %51 = arith.cmpf oge, %45, %50 : vector<128x128xf32>
      %52 = vector.broadcast %47 : vector<128x1xf32> to vector<128x128xf32>
      %53 = vector.broadcast %48 : vector<1x128xf32> to vector<128x128xf32>
      %54 = arith.addf %52, %53 : vector<128x128xf32>
      %55 = vector.broadcast %46 : vector<128x1xf32> to vector<128x128xf32>
      %56 = vector.broadcast %49 : vector<1x128xf32> to vector<128x128xf32>
      %57 = arith.addf %55, %56 : vector<128x128xf32>
      %58 = arith.select %51, %54, %57 : vector<128x128xi1>, vector<128x128xf32>
      %cst_31 = arith.constant 5.000000e-01 : f32
      %59 = vector.broadcast %cst_31 : f32 to vector<128x128xf32>
      %60 = arith.cmpf oge, %45, %59 : vector<128x128xf32>
      %61 = arith.negf %58 : vector<128x128xf32>
      %62 = math.exp %61 : vector<128x128xf32>
      %cst_32 = arith.constant 1.000000e+00 : f32
      %63 = vector.broadcast %cst_32 : f32 to vector<128x128xf32>
      %64 = arith.addf %63, %62 : vector<128x128xf32>
      %65 = arith.divf %63, %64 : vector<128x128xf32>
      %cst_33 = arith.constant 0.000000e+00 : f32
      %66 = vector.broadcast %cst_33 : f32 to vector<128x128xf32>
      %67 = arith.select %60, %65, %66 : vector<128x128xi1>, vector<128x128xf32>
      %c0_34 = arith.constant 0 : index
      %c0_35 = arith.constant 0 : index
      %68 = vector.load %arg10[%c0_34, %c0_35] : memref<128x128xf32, #tpu.memory_space<vmem>>, vector<128x128xf32>
      %69 = vector.extract_strided_slice %43 {offsets = [0, 2], sizes = [128, 1], strides = [1, 1]} : vector<128x4xf32> to vector<128x1xf32>
      %70 = vector.extract_strided_slice %43 {offsets = [0, 3], sizes = [128, 1], strides = [1, 1]} : vector<128x4xf32> to vector<128x1xf32>
      %71 = vector.extract_strided_slice %44 {offsets = [2, 0], sizes = [1, 128], strides = [1, 1]} : vector<4x128xf32> to vector<1x128xf32>
      %72 = vector.extract_strided_slice %44 {offsets = [3, 0], sizes = [1, 128], strides = [1, 1]} : vector<4x128xf32> to vector<1x128xf32>
      %cst_36 = arith.constant 1.500000e+00 : f32
      %73 = vector.broadcast %cst_36 : f32 to vector<128x128xf32>
      %74 = arith.cmpf oge, %68, %73 : vector<128x128xf32>
      %75 = vector.broadcast %70 : vector<128x1xf32> to vector<128x128xf32>
      %76 = vector.broadcast %71 : vector<1x128xf32> to vector<128x128xf32>
      %77 = arith.addf %75, %76 : vector<128x128xf32>
      %78 = vector.broadcast %69 : vector<128x1xf32> to vector<128x128xf32>
      %79 = vector.broadcast %72 : vector<1x128xf32> to vector<128x128xf32>
      %80 = arith.addf %78, %79 : vector<128x128xf32>
      %81 = arith.select %74, %77, %80 : vector<128x128xi1>, vector<128x128xf32>
      %cst_37 = arith.constant 5.000000e-01 : f32
      %82 = vector.broadcast %cst_37 : f32 to vector<128x128xf32>
      %83 = arith.cmpf oge, %68, %82 : vector<128x128xf32>
      %84 = arith.negf %81 : vector<128x128xf32>
      %85 = math.exp %84 : vector<128x128xf32>
      %cst_38 = arith.constant 1.000000e+00 : f32
      %86 = vector.broadcast %cst_38 : f32 to vector<128x128xf32>
      %87 = arith.addf %86, %85 : vector<128x128xf32>
      %88 = arith.divf %86, %87 : vector<128x128xf32>
      %cst_39 = arith.constant 0.000000e+00 : f32
      %89 = vector.broadcast %cst_39 : f32 to vector<128x128xf32>
      %90 = arith.select %83, %88, %89 : vector<128x128xi1>, vector<128x128xf32>
      %91 = vector.extract_strided_slice %3 {offsets = [128, 0], sizes = [128, 16], strides = [1, 1]} : vector<384x16xf32> to vector<128x16xf32>
      %92 = vector.extract_strided_slice %4 {offsets = [128, 0], sizes = [128, 16], strides = [1, 1]} : vector<384x16xf32> to vector<128x16xf32>
      %c0_40 = arith.constant 0 : index
      %c0_41 = arith.constant 0 : index
      %93 = vector.load %arg11[%c0_40, %c0_41] : memref<128x16xf32, #tpu.memory_space<vmem>>, vector<128x16xf32>
      %cst_42 = arith.constant dense<0.000000e+00> : vector<128x16xf32>
      %94 = tpu.matmul %67, %91, %cst_42 {dimension_numbers = #tpu.dot_dimension_numbers<[1], [0], [0], [1], [0, 0, 1, 1], [], []>} : vector<128x128xf32>, vector<128x16xf32>, vector<128x16xf32> -> vector<128x16xf32>
      %95 = arith.addf %93, %94 : vector<128x16xf32>
      %cst_43 = arith.constant dense<0.000000e+00> : vector<128x16xf32>
      %96 = tpu.matmul %90, %92, %cst_43 {dimension_numbers = #tpu.dot_dimension_numbers<[1], [0], [0], [1], [0, 0, 1, 1], [], []>} : vector<128x128xf32>, vector<128x16xf32>, vector<128x16xf32> -> vector<128x16xf32>
      %97 = arith.addf %95, %96 : vector<128x16xf32>
      %c0_44 = arith.constant 0 : index
      %c0_45 = arith.constant 0 : index
      %98 = vector.load %arg11[%c0_44, %c0_45] : memref<128x16xf32, #tpu.memory_space<vmem>>, vector<128x16xf32>
      tpu.vector_store %arg11[%c0_44, %c0_45], %97 {strides = array<i32>} : memref<128x16xf32, #tpu.memory_space<vmem>>, vector<128x16xf32>,
    } else {
    }
    %c0_17 = arith.constant 0 : index
    %c0_18 = arith.constant 0 : index
    %34 = vector.load %arg11[%c0_17, %c0_18] : memref<128x16xf32, #tpu.memory_space<vmem>>, vector<128x16xf32>
    %cst_19 = arith.constant 0.000000e+00 : f32
    %35 = vector.broadcast %cst_19 : f32 to vector<128x16xf32>
    %36 = arith.maximumf %34, %35 : vector<128x16xf32>
    %c0_20 = arith.constant 0 : index
    %c0_21 = arith.constant 0 : index
    %37 = vector.load %arg11[%c0_20, %c0_21] : memref<128x16xf32, #tpu.memory_space<vmem>>, vector<128x16xf32>
    tpu.vector_store %arg11[%c0_20, %c0_21], %36 {strides = array<i32>} : memref<128x16xf32, #tpu.memory_space<vmem>>, vector<128x16xf32>,
    return
  }
  func.func @transform_0(%arg0: i32) -> (i32, i32) {
    %c0_i32 = arith.constant 0 : i32
    %c0_i32_0 = arith.constant 0 : i32
    %c0_i32_1 = arith.constant 0 : i32
    return %c0_i32, %c0_i32_0 : i32, i32
  }
  func.func @transform_1(%arg0: i32) -> (i32, i32) {
    %c0_i32 = arith.constant 0 : i32
    %c0_i32_0 = arith.constant 0 : i32
    %c0_i32_1 = arith.constant 0 : i32
    return %c0_i32, %c0_i32_0 : i32, i32
  }
  func.func @transform_2(%arg0: i32) -> (i32, i32) {
    %c0_i32 = arith.constant 0 : i32
    %c0_i32_0 = arith.constant 0 : i32
    %c0_i32_1 = arith.constant 0 : i32
    return %c0_i32, %c0_i32_0 : i32, i32
  }
  func.func @transform_3(%arg0: i32) -> (i32, i32) {
    %c0_i32 = arith.constant 0 : i32
    %c0_i32_0 = arith.constant 0 : i32
    %c0_i32_1 = arith.constant 0 : i32
    return %c0_i32, %c0_i32_0 : i32, i32
  }
  func.func @transform_4(%arg0: i32) -> (i32, i32) {
    %c0_i32 = arith.constant 0 : i32
    %c0_i32_0 = arith.constant 0 : i32
    return %arg0, %c0_i32 : i32, i32
  }
  func.func @transform_5(%arg0: i32) -> (i32, i32) {
    %c0_i32 = arith.constant 0 : i32
    %c0_i32_0 = arith.constant 0 : i32
    return %arg0, %c0_i32 : i32, i32
  }
  func.func @transform_6(%arg0: i32) -> (i32, i32) {
    %c0_i32 = arith.constant 0 : i32
    %c0_i32_0 = arith.constant 0 : i32
    return %arg0, %c0_i32 : i32, i32
  }
  func.func @transform_7(%arg0: i32) -> (i32, i32) {
    %c0_i32 = arith.constant 0 : i32
    %c0_i32_0 = arith.constant 0 : i32
    return %arg0, %c0_i32 : i32, i32
  }
  func.func @transform_8(%arg0: i32) -> (i32, i32) {
    %c1_i32 = arith.constant 1 : i32
    %0 = arith.subi %arg0, %c1_i32 : i32
    %c0_i32 = arith.constant 0 : i32
    %1 = arith.minsi %0, %c0_i32 : i32
    %c0_i32_0 = arith.constant 0 : i32
    %2 = arith.maxsi %1, %c0_i32_0 : i32
    %c0_i32_1 = arith.constant 0 : i32
    %c0_i32_2 = arith.constant 0 : i32
    return %2, %c0_i32_1 : i32, i32
  }
  func.func @transform_9(%arg0: i32) -> (i32, i32) {
    %c1_i32 = arith.constant 1 : i32
    %0 = arith.subi %arg0, %c1_i32 : i32
    %c0_i32 = arith.constant 0 : i32
    %1 = arith.minsi %0, %c0_i32 : i32
    %c0_i32_0 = arith.constant 0 : i32
    %2 = arith.maxsi %1, %c0_i32_0 : i32
    %c0_i32_1 = arith.constant 0 : i32
    %c0_i32_2 = arith.constant 0 : i32
    return %2, %c0_i32_1 : i32, i32
  }
  func.func @transform_10(%arg0: i32) -> (i32, i32) {
    %c0_i32 = arith.constant 0 : i32
    %c0_i32_0 = arith.constant 0 : i32
    return %arg0, %c0_i32 : i32, i32
  }
}

</mosaic_0001>

<llo_original>
// kernel: custom-call.10
$region0: #{custom-call.10}
  %s0 = inlined_call_operand.vmem [shape: f32[10,10], index: 0, kind: input, shape index: {}]
  %s1 = inlined_call_operand.vmem [shape: f32[10,10], index: 1, kind: input, shape index: {}]
  %s2 = inlined_call_operand.vmem [shape: f32[10,10], index: 2, kind: input, shape index: {}]
  %s3 = inlined_call_operand.vmem [shape: f32[10,10], index: 3, kind: input, shape index: {}]
  %s4 = inlined_call_operand.vmem [shape: f32[10], index: 4, kind: output, shape index: {0}]
  %s5 = inlined_call_operand.vmem [shape: f32[10], index: 5, kind: output, shape index: {1}]
  %s6 = inlined_call_operand.hbm [shape: f32[10,10], index: 6, kind: output, shape index: {2}]
  %s7 = inlined_call_operand.hbm [shape: f32[10,10], index: 7, kind: output, shape index: {3}]
  %s8 = inlined_call_operand.hbm [shape: f32[10,10], index: 8, kind: output, shape index: {4}]
  %s9 = inlined_call_operand.hbm [shape: f32[10,10], index: 9, kind: output, shape index: {5}]
  %10 = xla_tuple %s4, %s5, %s6, %s7, %s8, %s9
  $region1: #{custom-call.10} parent=0
    #allocation0 [shape = 'u8[8192]{0}', space=vmem, size = 0x2000, scoped, tag = 'operand span for operand 0']
    #allocation1 [shape = 'u8[8192]{0}', space=vmem, size = 0x2000, scoped, tag = 'operand span for operand 1']
    #allocation2 [shape = 'u8[8192]{0}', space=vmem, size = 0x2000, scoped, tag = 'operand span for operand 2']
    #allocation3 [shape = 'u8[8192]{0}', space=vmem, size = 0x2000, scoped, tag = 'operand span for operand 3']
    #allocation4 [shape = 'u8[4096]{0}', space=vmem, size = 0x1000, scoped, tag = 'operand span for operand 4']
    #allocation5 [shape = 'u8[512]{0}', space=vmem, size = 0x400, scoped, tag = 'packed  for operand 4']
    #allocation6 [shape = 'u8[4096]{0}', space=vmem, size = 0x1000, scoped, tag = 'operand span for operand 5']
    #allocation7 [shape = 'u8[512]{0}', space=vmem, size = 0x400, scoped, tag = 'packed  for operand 5']
    #allocation8 [shape = 'u8[8192]{0}', space=vmem, size = 0x2000, scoped, tag = 'operand span for operand 6']
    #allocation9 [shape = 's32[1]{0}', space=sflag, size = 0x4, scoped, tag = 'scoped memory for custom-call.10']
    #allocation10 [shape = 'u8[8192]{0}', space=vmem, size = 0x2000, scoped, tag = 'operand span for operand 7']
    #allocation11 [shape = 's32[1]{0}', space=sflag, size = 0x4, scoped, tag = 'scoped memory for custom-call.10']
    #allocation12 [shape = 'u8[8192]{0}', space=vmem, size = 0x2000, scoped, tag = 'operand span for operand 8']
    #allocation13 [shape = 'u8[8192]{0}', space=vmem, size = 0x2000, scoped, tag = 'operand span for operand 9']
    #allocation14 [shape = 's32[1]{0}', space=sflag, size = 0x4, scoped, tag = 'scoped memory for custom-call.10']
    #allocation15 [shape = 'f32[10,10]{1,0}', space=vmem, size = 0x2000, scoped, tag = 'a top-left matrix']
    #allocation16 [shape = 'f32[10,10]{1,0}', space=vmem, size = 0x2000, scoped, tag = 'a top-right matrix']
    #allocation17 [shape = 'f32[10,10]{1,0}', space=vmem, size = 0x2000, scoped, tag = 'a bottom-left matrix']
    #allocation18 [shape = 'f32[10,10]{1,0}', space=vmem, size = 0x2000, scoped, tag = 'a bottom-right matrix']
    %11 = vsyncpa [#allocation9], 0
    %12 = vsyncpa [#allocation11], 0
    %13 = vsyncpa [#allocation14], 0
    // Predicated region
    $region2: #{custom-call.10} parent=1 // pred_check
      _
    $region3: #{custom-call.10} parent=1 // pred_check_branch
      %15 = sbr.rel (0) target = $region5
    $region4: #{custom-call.10} parent=1 // pred_region
      %p17 = scmp.gt.s32.totalorder 2, 0
      // Predicated region
      $region6: #{custom-call.10} parent=4 // pred_check
        %p18 = pneg %p17
      $region7: #{custom-call.10} parent=4 // pred_check_branch
        %20 = sbr.rel (%p18) target = $region9
      $region8: #{custom-call.10} parent=4 // pred_region
        %s21 = ssub.s32 2, 1
        %s22 = smul.u32 %s21, 8
        %s23 = scalar_lea.vmem %s0, %s22
        %v24 = vld [vmem:[%s0] sm:$0xff]
        // While loop
        $region10: #{custom-call.10} parent=8 // loop_pre_header
          _
        $region11: #{custom-call.10} parent=8 // loop_header
          %s25 = sphi %s0, %s47
          %s26 = sphi [#allocation0], %s48
          %v27 = vphi %v24, %v49
          %s28 = ssub.s32 %s23, 64
          %p29 = scmp.gt.s32.totalorder %s25, %s28
        $region12: #{custom-call.10} parent=8 // loop_header_branch
          %31 = sbr.rel (%p29) target = $region16
        $region13: #{custom-call.10} parent=8 // loop_body
          %32 = vst [vmem:[%s26] sm:$0xff] %v27
          %v33 = vld [vmem:[%s25 + $0x8] sm:$0xff]
          %34 = vst [vmem:[%s26 + $0x8] sm:$0xff] %v33
          %v35 = vld [vmem:[%s25 + $0x10] sm:$0xff]
          %36 = vst [vmem:[%s26 + $0x10] sm:$0xff] %v35
          %v37 = vld [vmem:[%s25 + $0x18] sm:$0xff]
          %38 = vst [vmem:[%s26 + $0x18] sm:$0xff] %v37
          %v39 = vld [vmem:[%s25 + $0x20] sm:$0xff]
          %40 = vst [vmem:[%s26 + $0x20] sm:$0xff] %v39
          %v41 = vld [vmem:[%s25 + $0x28] sm:$0xff]
          %42 = vst [vmem:[%s26 + $0x28] sm:$0xff] %v41
          %v43 = vld [vmem:[%s25 + $0x30] sm:$0xff]
          %44 = vst [vmem:[%s26 + $0x30] sm:$0xff] %v43
          %v45 = vld [vmem:[%s25 + $0x38] sm:$0xff]
          %46 = vst [vmem:[%s26 + $0x38] sm:$0xff] %v45
        $region14: #{custom-call.10} parent=8 // loop_footer
          %s47 = scalar_lea.vmem %s25, 64
          %s48 = scalar_lea.vmem %s26, 64
          %v49 = vld [vmem:[%s25 + $0x40] sm:$0xff]
        $region15: #{custom-call.10} parent=8 // loop_footer_branch
          %50 = sbr.rel target = $region11
        $region16: #{custom-call.10} parent=8 // loop_exit
          _
        // While loop
        $region17: #{custom-call.10} parent=8 // loop_pre_header
          _
        $region18: #{custom-call.10} parent=8 // loop_header
          %s51 = sphi %s25, %s59
          %s52 = sphi %s26, %s60
          %v53 = vphi %v27, %v53
          %p54 = scmp.gt.s32.totalorder %s51, %s23
        $region19: #{custom-call.10} parent=8 // loop_header_branch
          %56 = sbr.rel (%p54) target = $region23
        $region20: #{custom-call.10} parent=8 // loop_body
          %v57 = vld [vmem:[%s51] sm:$0xff]
          %58 = vst [vmem:[%s52] sm:$0xff] %v57
        $region21: #{custom-call.10} parent=8 // loop_footer
          %s59 = scalar_lea.vmem %s51, 8
          %s60 = scalar_lea.vmem %s52, 8
        $region22: #{custom-call.10} parent=8 // loop_footer_branch
          %61 = sbr.rel target = $region18
        $region23: #{custom-call.10} parent=8 // loop_exit
          _
      $region9: #{custom-call.10} parent=4 // pred_fallthru
        _
      %s63 = ssub.s32 1, 1
      %s64 = smul.u32 2, 8
      %s65 = scalar_lea.vmem [#allocation0], %s64
      %s66 = smul.u32 2, 8
      %s67 = scalar_lea.vmem %s0, %s66
      %v68 = vld [vmem:[%s67] sm:%s63]
      %69 = vst [vmem:[%s65] sm:%s63] %v68
    $region5: #{custom-call.10} parent=1 // pred_fallthru
      _
    // Predicated region
    $region24: #{custom-call.10} parent=1 // pred_check
      _
    $region25: #{custom-call.10} parent=1 // pred_check_branch
      %71 = sbr.rel (0) target = $region27
    $region26: #{custom-call.10} parent=1 // pred_region
      %p73 = scmp.gt.s32.totalorder 2, 0
      // Predicated region
      $region28: #{custom-call.10} parent=26 // pred_check
        %p74 = pneg %p73
      $region29: #{custom-call.10} parent=26 // pred_check_branch
        %76 = sbr.rel (%p74) target = $region31
      $region30: #{custom-call.10} parent=26 // pred_region
        %s77 = ssub.s32 2, 1
        %s78 = smul.u32 %s77, 8
        %s79 = scalar_lea.vmem %s1, %s78
        %v80 = vld [vmem:[%s1] sm:$0xff]
        // While loop
        $region32: #{custom-call.10} parent=30 // loop_pre_header
          _
        $region33: #{custom-call.10} parent=30 // loop_header
          %s81 = sphi %s1, %s103
          %s82 = sphi [#allocation1], %s104
          %v83 = vphi %v80, %v105
          %s84 = ssub.s32 %s79, 64
          %p85 = scmp.gt.s32.totalorder %s81, %s84
        $region34: #{custom-call.10} parent=30 // loop_header_branch
          %87 = sbr.rel (%p85) target = $region38
        $region35: #{custom-call.10} parent=30 // loop_body
          %88 = vst [vmem:[%s82] sm:$0xff] %v83
          %v89 = vld [vmem:[%s81 + $0x8] sm:$0xff]
          %90 = vst [vmem:[%s82 + $0x8] sm:$0xff] %v89
          %v91 = vld [vmem:[%s81 + $0x10] sm:$0xff]
          %92 = vst [vmem:[%s82 + $0x10] sm:$0xff] %v91
          %v93 = vld [vmem:[%s81 + $0x18] sm:$0xff]
          %94 = vst [vmem:[%s82 + $0x18] sm:$0xff] %v93
          %v95 = vld [vmem:[%s81 + $0x20] sm:$0xff]
          %96 = vst [vmem:[%s82 + $0x20] sm:$0xff] %v95
          %v97 = vld [vmem:[%s81 + $0x28] sm:$0xff]
          %98 = vst [vmem:[%s82 + $0x28] sm:$0xff] %v97
          %v99 = vld [vmem:[%s81 + $0x30] sm:$0xff]
          %100 = vst [vmem:[%s82 + $0x30] sm:$0xff] %v99
          %v101 = vld [vmem:[%s81 + $0x38] sm:$0xff]
          %102 = vst [vmem:[%s82 + $0x38] sm:$0xff] %v101
        $region36: #{custom-call.10} parent=30 // loop_footer
          %s103 = scalar_lea.vmem %s81, 64
          %s104 = scalar_lea.vmem %s82, 64
          %v105 = vld [vmem:[%s81 + $0x40] sm:$0xff]
        $region37: #{custom-call.10} parent=30 // loop_footer_branch
          %106 = sbr.rel target = $region33
        $region38: #{custom-call.10} parent=30 // loop_exit
          _
        // While loop
        $region39: #{custom-call.10} parent=30 // loop_pre_header
          _
        $region40: #{custom-call.10} parent=30 // loop_header
          %s107 = sphi %s81, %s115
          %s108 = sphi %s82, %s116
          %v109 = vphi %v83, %v109
          %p110 = scmp.gt.s32.totalorder %s107, %s79
        $region41: #{custom-call.10} parent=30 // loop_header_branch
          %112 = sbr.rel (%p110) target = $region45
        $region42: #{custom-call.10} parent=30 // loop_body
          %v113 = vld [vmem:[%s107] sm:$0xff]
          %114 = vst [vmem:[%s108] sm:$0xff] %v113
        $region43: #{custom-call.10} parent=30 // loop_footer
          %s115 = scalar_lea.vmem %s107, 8
          %s116 = scalar_lea.vmem %s108, 8
        $region44: #{custom-call.10} parent=30 // loop_footer_branch
          %117 = sbr.rel target = $region40
        $region45: #{custom-call.10} parent=30 // loop_exit
          _
      $region31: #{custom-call.10} parent=26 // pred_fallthru
        _
      %s119 = ssub.s32 1, 1
      %s120 = smul.u32 2, 8
      %s121 = scalar_lea.vmem [#allocation1], %s120
      %s122 = smul.u32 2, 8
      %s123 = scalar_lea.vmem %s1, %s122
      %v124 = vld [vmem:[%s123] sm:%s119]
      %125 = vst [vmem:[%s121] sm:%s119] %v124
    $region27: #{custom-call.10} parent=1 // pred_fallthru
      _
    // Predicated region
    $region46: #{custom-call.10} parent=1 // pred_check
      _
    $region47: #{custom-call.10} parent=1 // pred_check_branch
      %127 = sbr.rel (0) target = $region49
    $region48: #{custom-call.10} parent=1 // pred_region
      %p129 = scmp.gt.s32.totalorder 2, 0
      // Predicated region
      $region50: #{custom-call.10} parent=48 // pred_check
        %p130 = pneg %p129
      $region51: #{custom-call.10} parent=48 // pred_check_branch
        %132 = sbr.rel (%p130) target = $region53
      $region52: #{custom-call.10} parent=48 // pred_region
        %s133 = ssub.s32 2, 1
        %s134 = smul.u32 %s133, 8
        %s135 = scalar_lea.vmem %s2, %s134
        %v136 = vld [vmem:[%s2] sm:$0xff]
        // While loop
        $region54: #{custom-call.10} parent=52 // loop_pre_header
          _
        $region55: #{custom-call.10} parent=52 // loop_header
          %s137 = sphi %s2, %s159
          %s138 = sphi [#allocation2], %s160
          %v139 = vphi %v136, %v161
          %s140 = ssub.s32 %s135, 64
          %p141 = scmp.gt.s32.totalorder %s137, %s140
        $region56: #{custom-call.10} parent=52 // loop_header_branch
          %143 = sbr.rel (%p141) target = $region60
        $region57: #{custom-call.10} parent=52 // loop_body
          %144 = vst [vmem:[%s138] sm:$0xff] %v139
          %v145 = vld [vmem:[%s137 + $0x8] sm:$0xff]
          %146 = vst [vmem:[%s138 + $0x8] sm:$0xff] %v145
          %v147 = vld [vmem:[%s137 + $0x10] sm:$0xff]
          %148 = vst [vmem:[%s138 + $0x10] sm:$0xff] %v147
          %v149 = vld [vmem:[%s137 + $0x18] sm:$0xff]
          %150 = vst [vmem:[%s138 + $0x18] sm:$0xff] %v149
          %v151 = vld [vmem:[%s137 + $0x20] sm:$0xff]
          %152 = vst [vmem:[%s138 + $0x20] sm:$0xff] %v151
          %v153 = vld [vmem:[%s137 + $0x28] sm:$0xff]
          %154 = vst [vmem:[%s138 + $0x28] sm:$0xff] %v153
          %v155 = vld [vmem:[%s137 + $0x30] sm:$0xff]
          %156 = vst [vmem:[%s138 + $0x30] sm:$0xff] %v155
          %v157 = vld [vmem:[%s137 + $0x38] sm:$0xff]
          %158 = vst [vmem:[%s138 + $0x38] sm:$0xff] %v157
        $region58: #{custom-call.10} parent=52 // loop_footer
          %s159 = scalar_lea.vmem %s137, 64
          %s160 = scalar_lea.vmem %s138, 64
          %v161 = vld [vmem:[%s137 + $0x40] sm:$0xff]
        $region59: #{custom-call.10} parent=52 // loop_footer_branch
          %162 = sbr.rel target = $region55
        $region60: #{custom-call.10} parent=52 // loop_exit
          _
        // While loop
        $region61: #{custom-call.10} parent=52 // loop_pre_header
          _
        $region62: #{custom-call.10} parent=52 // loop_header
          %s163 = sphi %s137, %s171
          %s164 = sphi %s138, %s172
          %v165 = vphi %v139, %v165
          %p166 = scmp.gt.s32.totalorder %s163, %s135
        $region63: #{custom-call.10} parent=52 // loop_header_branch
          %168 = sbr.rel (%p166) target = $region67
        $region64: #{custom-call.10} parent=52 // loop_body
          %v169 = vld [vmem:[%s163] sm:$0xff]
          %170 = vst [vmem:[%s164] sm:$0xff] %v169
        $region65: #{custom-call.10} parent=52 // loop_footer
          %s171 = scalar_lea.vmem %s163, 8
          %s172 = scalar_lea.vmem %s164, 8
        $region66: #{custom-call.10} parent=52 // loop_footer_branch
          %173 = sbr.rel target = $region62
        $region67: #{custom-call.10} parent=52 // loop_exit
          _
      $region53: #{custom-call.10} parent=48 // pred_fallthru
        _
      %s175 = ssub.s32 1, 1
      %s176 = smul.u32 2, 8
      %s177 = scalar_lea.vmem [#allocation2], %s176
      %s178 = smul.u32 2, 8
      %s179 = scalar_lea.vmem %s2, %s178
      %v180 = vld [vmem:[%s179] sm:%s175]
      %181 = vst [vmem:[%s177] sm:%s175] %v180
    $region49: #{custom-call.10} parent=1 // pred_fallthru
      _
    // Predicated region
    $region68: #{custom-call.10} parent=1 // pred_check
      _
    $region69: #{custom-call.10} parent=1 // pred_check_branch
      %183 = sbr.rel (0) target = $region71
    $region70: #{custom-call.10} parent=1 // pred_region
      %p185 = scmp.gt.s32.totalorder 2, 0
      // Predicated region
      $region72: #{custom-call.10} parent=70 // pred_check
        %p186 = pneg %p185
      $region73: #{custom-call.10} parent=70 // pred_check_branch
        %188 = sbr.rel (%p186) target = $region75
      $region74: #{custom-call.10} parent=70 // pred_region
        %s189 = ssub.s32 2, 1
        %s190 = smul.u32 %s189, 8
        %s191 = scalar_lea.vmem %s3, %s190
        %v192 = vld [vmem:[%s3] sm:$0xff]
        // While loop
        $region76: #{custom-call.10} parent=74 // loop_pre_header
          _
        $region77: #{custom-call.10} parent=74 // loop_header
          %s193 = sphi %s3, %s215
          %s194 = sphi [#allocation3], %s216
          %v195 = vphi %v192, %v217
          %s196 = ssub.s32 %s191, 64
          %p197 = scmp.gt.s32.totalorder %s193, %s196
        $region78: #{custom-call.10} parent=74 // loop_header_branch
          %199 = sbr.rel (%p197) target = $region82
        $region79: #{custom-call.10} parent=74 // loop_body
          %200 = vst [vmem:[%s194] sm:$0xff] %v195
          %v201 = vld [vmem:[%s193 + $0x8] sm:$0xff]
          %202 = vst [vmem:[%s194 + $0x8] sm:$0xff] %v201
          %v203 = vld [vmem:[%s193 + $0x10] sm:$0xff]
          %204 = vst [vmem:[%s194 + $0x10] sm:$0xff] %v203
          %v205 = vld [vmem:[%s193 + $0x18] sm:$0xff]
          %206 = vst [vmem:[%s194 + $0x18] sm:$0xff] %v205
          %v207 = vld [vmem:[%s193 + $0x20] sm:$0xff]
          %208 = vst [vmem:[%s194 + $0x20] sm:$0xff] %v207
          %v209 = vld [vmem:[%s193 + $0x28] sm:$0xff]
          %210 = vst [vmem:[%s194 + $0x28] sm:$0xff] %v209
          %v211 = vld [vmem:[%s193 + $0x30] sm:$0xff]
          %212 = vst [vmem:[%s194 + $0x30] sm:$0xff] %v211
          %v213 = vld [vmem:[%s193 + $0x38] sm:$0xff]
          %214 = vst [vmem:[%s194 + $0x38] sm:$0xff] %v213
        $region80: #{custom-call.10} parent=74 // loop_footer
          %s215 = scalar_lea.vmem %s193, 64
          %s216 = scalar_lea.vmem %s194, 64
          %v217 = vld [vmem:[%s193 + $0x40] sm:$0xff]
        $region81: #{custom-call.10} parent=74 // loop_footer_branch
          %218 = sbr.rel target = $region77
        $region82: #{custom-call.10} parent=74 // loop_exit
          _
        // While loop
        $region83: #{custom-call.10} parent=74 // loop_pre_header
          _
        $region84: #{custom-call.10} parent=74 // loop_header
          %s219 = sphi %s193, %s227
          %s220 = sphi %s194, %s228
          %v221 = vphi %v195, %v221
          %p222 = scmp.gt.s32.totalorder %s219, %s191
        $region85: #{custom-call.10} parent=74 // loop_header_branch
          %224 = sbr.rel (%p222) target = $region89
        $region86: #{custom-call.10} parent=74 // loop_body
          %v225 = vld [vmem:[%s219] sm:$0xff]
          %226 = vst [vmem:[%s220] sm:$0xff] %v225
        $region87: #{custom-call.10} parent=74 // loop_footer
          %s227 = scalar_lea.vmem %s219, 8
          %s228 = scalar_lea.vmem %s220, 8
        $region88: #{custom-call.10} parent=74 // loop_footer_branch
          %229 = sbr.rel target = $region84
        $region89: #{custom-call.10} parent=74 // loop_exit
          _
      $region75: #{custom-call.10} parent=70 // pred_fallthru
        _
      %s231 = ssub.s32 1, 1
      %s232 = smul.u32 2, 8
      %s233 = scalar_lea.vmem [#allocation3], %s232
      %s234 = smul.u32 2, 8
      %s235 = scalar_lea.vmem %s3, %s234
      %v236 = vld [vmem:[%s235] sm:%s231]
      %237 = vst [vmem:[%s233] sm:%s231] %v236
    $region71: #{custom-call.10} parent=1 // pred_fallthru
      _
    %s238 = smov [#allocation15]
    %v239 = vld [vmem:[#allocation0] sm:$0xff]
    %240 = vst [vmem:[%s238] sm:$0xff] %v239
    %s241 = scalar_lea.vmem %s238, 8
    %s242 = scalar_lea.vmem [#allocation0], 8
    %v243 = vld [vmem:[%s242] sm:$0xff]
    %244 = vst [vmem:[%s241] sm:$0xff] %v243
    %s245 = smov [#allocation16]
    %v246 = vld [vmem:[#allocation1] sm:$0xff]
    %247 = vst [vmem:[%s245] sm:$0xff] %v246
    %s248 = scalar_lea.vmem %s245, 8
    %s249 = scalar_lea.vmem [#allocation1], 8
    %v250 = vld [vmem:[%s249] sm:$0xff]
    %251 = vst [vmem:[%s248] sm:$0xff] %v250
    %s252 = smov [#allocation17]
    %v253 = vld [vmem:[#allocation2] sm:$0xff]
    %254 = vst [vmem:[%s252] sm:$0xff] %v253
    %s255 = scalar_lea.vmem %s252, 8
    %s256 = scalar_lea.vmem [#allocation2], 8
    %v257 = vld [vmem:[%s256] sm:$0xff]
    %258 = vst [vmem:[%s255] sm:$0xff] %v257
    %s259 = smov [#allocation18]
    %v260 = vld [vmem:[#allocation3] sm:$0xff]
    %261 = vst [vmem:[%s259] sm:$0xff] %v260
    %s262 = scalar_lea.vmem %s259, 8
    %s263 = scalar_lea.vmem [#allocation3], 8
    %v264 = vld [vmem:[%s263] sm:$0xff]
    %265 = vst [vmem:[%s262] sm:$0xff] %v264
    %266 = vst [vmem:[#allocation8] sm:$0xff] 0.0
    %s267 = scalar_lea.vmem [#allocation8], 8
    %268 = vst [vmem:[%s267] sm:$0xff] 0.0
    %269 = vst [vmem:[#allocation10] sm:$0xff] 0.0
    %s270 = scalar_lea.vmem [#allocation10], 8
    %271 = vst [vmem:[%s270] sm:$0xff] 0.0
    %272 = vst [vmem:[#allocation12] sm:$0xff] 0.0
    %s273 = scalar_lea.vmem [#allocation12], 8
    %274 = vst [vmem:[%s273] sm:$0xff] 0.0
    %275 = vst [vmem:[#allocation13] sm:$0xff] 0.0
    %s276 = scalar_lea.vmem [#allocation13], 8
    %277 = vst [vmem:[%s276] sm:$0xff] 0.0
    %s278 = smov [#allocation8]
    %v279 = vlaneseq
    %v280 = vand.u32 %v279, 127
    %v281 = vmov %v280
    %v282 = vlaneseq
    %v283 = vshrl.u32 %v282, 7
    %v284 = vmov %v283
    %v285 = vld [vmem:[%s278] sm:$0xff]
    %vm288 = vcmp.eq.s32.totalorder %v284, %v281
    %v289 = vsel %vm288, 1.0, %v285
    %290 = vst [vmem:[%s278] sm:$0xff] %v289
    %s291 = scalar_lea.vmem %s278, 8
    %v292 = vld [vmem:[%s291] sm:$0x3]
    %v294 = vadd.s32 %v284, 8
    %vm295 = vcmp.eq.s32.totalorder %v294, %v281
    %v296 = vsel %vm295, 1.0, %v292
    %297 = vst [vmem:[%s291] sm:$0x3] %v296
    %s298 = smov [#allocation13]
    %v299 = vlaneseq
    %v300 = vand.u32 %v299, 127
    %v301 = vmov %v300
    %v302 = vlaneseq
    %v303 = vshrl.u32 %v302, 7
    %v304 = vmov %v303
    %v305 = vld [vmem:[%s298] sm:$0xff]
    %vm308 = vcmp.eq.s32.totalorder %v304, %v301
    %v309 = vsel %vm308, 1.0, %v305
    %310 = vst [vmem:[%s298] sm:$0xff] %v309
    %s311 = scalar_lea.vmem %s298, 8
    %v312 = vld [vmem:[%s311] sm:$0x3]
    %v314 = vadd.s32 %v304, 8
    %vm315 = vcmp.eq.s32.totalorder %v314, %v301
    %v316 = vsel %vm315, 1.0, %v312
    %317 = vst [vmem:[%s311] sm:$0x3] %v316
    // While loop
    $region90: #{custom-call.10} parent=1 // loop_pre_header
      _
    $region91: #{custom-call.10} parent=1 // loop_header
      %s319 = sphi 0, %s1257
      %v320 = vlaneseq
      %v321 = vand.u32 %v320, 127
      %v322 = vmov %v321
      %v323 = vlaneseq
      %v324 = vshrl.u32 %v323, 7
      %v325 = vmov %v324
      %s326 = smov [#allocation15]
      %v327 = vlaneseq
      %v328 = vand.u32 %v327, 127
      %vm329 = vcmp.ge.s32.totalorder %v328, 0
      %vm330 = vcmp.lt.s32.totalorder %v328, 10
      %vm331 = vmand %vm329, %vm330
      %v332 = vld [vmem:[%s326] sm:$0xff]
      %v333 = vsel %vm331, %v332, 0.0
      %v334 = vmul.f32 %v333, %v333
      %vm337 = vcmp.eq.s32.totalorder %v325, %v322
      %v338 = vsel %vm337, 0.0, %v334
      %s339 = scalar_lea.vmem %s326, 8
      %v340 = vld [vmem:[%s339] sm:$0x3]
      %v341 = vsel %vm331, %v340, 0.0
      %v342 = vmul.f32 %v341, %v341
      %v344 = vadd.s32 %v325, 8
      %vm345 = vcmp.eq.s32.totalorder %v344, %v322
      %v346 = vsel %vm345, 0.0, %v342
      %v347 = vadd.f32 %v338, %v346
      %v348 = vadd.f32 %v334, %v342
      %v349 = vlaneseq
      %v350 = vand.u32 %v349, 127
      %v351 = vmov %v350
      %v352 = vlaneseq
      %v353 = vshrl.u32 %v352, 7
      %v354 = vmov %v353
      %s355 = smov [#allocation16]
      %v356 = vlaneseq
      %v357 = vand.u32 %v356, 127
      %vm358 = vcmp.ge.s32.totalorder %v357, 0
      %vm359 = vcmp.lt.s32.totalorder %v357, 10
      %vm360 = vmand %vm358, %vm359
      %v361 = vld [vmem:[%s355] sm:$0xff]
      %v362 = vsel %vm360, %v361, 0.0
      %v363 = vmul.f32 %v362, %v362
      %v364 = vadd.f32 %v347, %v363
      %v365 = vadd.f32 %v348, %v363
      %s366 = scalar_lea.vmem %s355, 8
      %v367 = vld [vmem:[%s366] sm:$0x3]
      %v368 = vsel %vm360, %v367, 0.0
      %v369 = vmul.f32 %v368, %v368
      %v370 = vadd.f32 %v364, %v369
      %v371 = vadd.f32 %v365, %v369
      %v372 = vlaneseq
      %v373 = vand.u32 %v372, 127
      %v374 = vmov %v373
      %v375 = vlaneseq
      %v376 = vshrl.u32 %v375, 7
      %v377 = vmov %v376
      %s378 = smov [#allocation17]
      %v379 = vlaneseq
      %v380 = vand.u32 %v379, 127
      %vm381 = vcmp.ge.s32.totalorder %v380, 0
      %vm382 = vcmp.lt.s32.totalorder %v380, 10
      %vm383 = vmand %vm381, %vm382
      %v384 = vld [vmem:[%s378] sm:$0xff]
      %v385 = vsel %vm383, %v384, 0.0
      %v386 = vmul.f32 %v385, %v385
      %v387 = vadd.f32 %v370, %v386
      %v388 = vadd.f32 %v371, %v386
      %s389 = scalar_lea.vmem %s378, 8
      %v390 = vld [vmem:[%s389] sm:$0x3]
      %v391 = vsel %vm383, %v390, 0.0
      %v392 = vmul.f32 %v391, %v391
      %v393 = vadd.f32 %v387, %v392
      %v394 = vadd.f32 %v388, %v392
      %v395 = vlaneseq
      %v396 = vand.u32 %v395, 127
      %v397 = vmov %v396
      %v398 = vlaneseq
      %v399 = vshrl.u32 %v398, 7
      %v400 = vmov %v399
      %s401 = smov [#allocation18]
      %v402 = vlaneseq
      %v403 = vand.u32 %v402, 127
      %vm404 = vcmp.ge.s32.totalorder %v403, 0
      %vm405 = vcmp.lt.s32.totalorder %v403, 10
      %vm406 = vmand %vm404, %vm405
      %v407 = vld [vmem:[%s401] sm:$0xff]
      %v408 = vsel %vm406, %v407, 0.0
      %v409 = vmul.f32 %v408, %v408
      %vm412 = vcmp.eq.s32.totalorder %v400, %v397
      %v413 = vsel %vm412, 0.0, %v409
      %v414 = vadd.f32 %v393, %v413
      %v415 = vadd.f32 %v394, %v409
      %s416 = scalar_lea.vmem %s401, 8
      %v417 = vld [vmem:[%s416] sm:$0x3]
      %v418 = vsel %vm406, %v417, 0.0
      %v419 = vmul.f32 %v418, %v418
      %v421 = vadd.s32 %v400, 8
      %vm422 = vcmp.eq.s32.totalorder %v421, %v397
      %v423 = vsel %vm422, 0.0, %v419
      %v424 = vadd.f32 %v414, %v423
      %v425 = vadd.f32 %v415, %v419
      %426 = vadd.xlane.f32.xlu0 %v425
      %v427 = vpop.xlane.xlu0 %426
      %v428 = vrot.slane %v427, 4
      %v429 = vadd.f32 %v427, %v428
      %v430 = vrot.slane %v429, 2
      %v431 = vadd.f32 %v429, %v430
      %v432 = vrot.slane %v431, 1
      %v433 = vadd.f32 %v431, %v432
      %434 = vadd.xlane.f32.xlu0 %v424
      %v435 = vpop.xlane.xlu0 %434
      %v436 = vrot.slane %v435, 4
      %v437 = vadd.f32 %v435, %v436
      %v438 = vrot.slane %v437, 2
      %v439 = vadd.f32 %v437, %v438
      %v440 = vrot.slane %v439, 1
      %v441 = vadd.f32 %v439, %v440
      %s442 = vtos %v441
      %s443 = vtos %v433
      %s444 = smul.f32 1e-10, %s443
      %p445 = scmp.le.f32.partialorder %s442, %s444
      %p446 = scmp.ge.s32.totalorder %s319, 15
      %p447 = por %p445, %p446
    $region92: #{custom-call.10} parent=1 // loop_header_branch
      %1259 = sbr.rel (%p447) target = $region96
    $region93: #{custom-call.10} parent=1 // loop_body
      loop: start=0, step=1, limit=19
      $region97: #{custom-call.10} parent=93 // loop_pre_header
        _
      $region98: #{custom-call.10} parent=93 // loop_header
        %s449 = sphi 0, %s453
        %p450 = scmp.ge.s32.totalorder %s449, 19
      $region99: #{custom-call.10} parent=93 // loop_header_branch
        %452 = sbr.rel (%p450) target = $region103
      $region100: #{custom-call.10} parent=93 // loop_body
        #allocation19 [shape = 'f32[1024]{0}', space=vmem, size = 0x1000, scoped, tag = 'a_tl_diag vmem']
        #allocation20 [shape = 'f32[1024]{0}', space=vmem, size = 0x1000, scoped, tag = 'a_tr_diag vmem']
        #allocation21 [shape = 'f32[1024]{0}', space=vmem, size = 0x1000, scoped, tag = 'a_br_diag vmem']
        #allocation22 [shape = 'f32[1024]{0}', space=vmem, size = 0x1000, scoped, tag = 'rt1 vmem']
        #allocation23 [shape = 'f32[1024]{0}', space=vmem, size = 0x1000, scoped, tag = 'rt2 vmem']
        #allocation24 [shape = 'f32[1024]{0}', space=vmem, size = 0x1000, scoped, tag = 'c vmem']
        #allocation25 [shape = 'f32[1024]{0}', space=vmem, size = 0x1000, scoped, tag = 's vmem']
        #allocation26 [shape = 'f32[8192]{0}', space=vmem, size = 0x8000, scoped, tag = 'c broadcast']
        #allocation27 [shape = 'f32[8192]{0}', space=vmem, size = 0x8000, scoped, tag = 's broadcast']
        %s454 = smov [#allocation15]
        %s455 = smov [#allocation19]
        %v456 = vlaneseq
        %v457 = vand.u32 %v456, 127
        %v458 = vmov %v457
        %v459 = vlaneseq
        %v460 = vshrl.u32 %v459, 7
        %v461 = vmov %v460
        %v462 = vld [vmem:[%s454] sm:$0xff]
        %vm465 = vcmp.eq.s32.totalorder %v461, %v458
        %v466 = vsel %vm465, %v462, 0.0
        %s467 = scalar_lea.vmem %s454, 8
        %v468 = vld [vmem:[%s467] sm:$0x3]
        %v470 = vadd.s32 %v461, 8
        %vm471 = vcmp.eq.s32.totalorder %v470, %v458
        %v472 = vsel %vm471, %v468, %v466
        %v473 = vrot.slane %v472, 4
        %v474 = vadd.f32 %v472, %v473
        %v475 = vrot.slane %v474, 2
        %v476 = vadd.f32 %v474, %v475
        %v477 = vrot.slane %v476, 1
        %v478 = vadd.f32 %v476, %v477
        %479 = vst [vmem:[%s455] sm:$0x1] %v478
        %s480 = smov [#allocation16]
        %s481 = smov [#allocation20]
        %v482 = vlaneseq
        %v483 = vand.u32 %v482, 127
        %v484 = vmov %v483
        %v485 = vlaneseq
        %v486 = vshrl.u32 %v485, 7
        %v487 = vmov %v486
        %v488 = vld [vmem:[%s480] sm:$0xff]
        %vm491 = vcmp.eq.s32.totalorder %v487, %v484
        %v492 = vsel %vm491, %v488, 0.0
        %s493 = scalar_lea.vmem %s480, 8
        %v494 = vld [vmem:[%s493] sm:$0x3]
        %v496 = vadd.s32 %v487, 8
        %vm497 = vcmp.eq.s32.totalorder %v496, %v484
        %v498 = vsel %vm497, %v494, %v492
        %v499 = vrot.slane %v498, 4
        %v500 = vadd.f32 %v498, %v499
        %v501 = vrot.slane %v500, 2
        %v502 = vadd.f32 %v500, %v501
        %v503 = vrot.slane %v502, 1
        %v504 = vadd.f32 %v502, %v503
        %505 = vst [vmem:[%s481] sm:$0x1] %v504
        %s506 = smov [#allocation18]
        %s507 = smov [#allocation21]
        %v508 = vlaneseq
        %v509 = vand.u32 %v508, 127
        %v510 = vmov %v509
        %v511 = vlaneseq
        %v512 = vshrl.u32 %v511, 7
        %v513 = vmov %v512
        %v514 = vld [vmem:[%s506] sm:$0xff]
        %vm517 = vcmp.eq.s32.totalorder %v513, %v510
        %v518 = vsel %vm517, %v514, 0.0
        %s519 = scalar_lea.vmem %s506, 8
        %v520 = vld [vmem:[%s519] sm:$0x3]
        %v522 = vadd.s32 %v513, 8
        %vm523 = vcmp.eq.s32.totalorder %v522, %v510
        %v524 = vsel %vm523, %v520, %v518
        %v525 = vrot.slane %v524, 4
        %v526 = vadd.f32 %v524, %v525
        %v527 = vrot.slane %v526, 2
        %v528 = vadd.f32 %v526, %v527
        %v529 = vrot.slane %v528, 1
        %v530 = vadd.f32 %v528, %v529
        %531 = vst [vmem:[%s507] sm:$0x1] %v530
        %s532 = smov [#allocation24]
        %s533 = smov [#allocation25]
        %s534 = smov [#allocation19]
        %v535 = vld [vmem:[%s534] sm:$0xff]
        %s536 = smov [#allocation20]
        %v537 = vld [vmem:[%s536] sm:$0xff]
        %s538 = smov [#allocation21]
        %v539 = vld [vmem:[%s538] sm:$0xff]
        %v540 = vsub.f32 %v539, %v535
        %v541 = vmul.f32 2.0, %v537
        %v542 = vrcp.pop %v541
        %v543 = vmul.f32 %v541, %v542
        %v544 = vsub.f32 1.0, %v543
        %v545 = vmul.f32 %v542, %v544
        %v546 = vadd.f32 %v542, %v545
        %vm547 = vweird.f32 %v541
        %vm548 = vweird.f32 %v542
        %vm549 = vmor %vm547, %vm548
        %v550 = vsel %vm549, %v542, %v546
        %v551 = vand.u32 2147483647, %v541
        %vm552 = vcmp.eq.f32.partialorder %v551, 8.507059e+37
        %v553 = vand.u32 %v541, 2147483648
        %v554 = vor.u32 1.1754944e-38, %v553
        %v555 = vsel %vm552, %v554, %v550
        %v556 = vmul.f32 %v540, %v555
        %vm557 = vcmp.ge.f32.partialorder %v556, 0.0
        %v558 = vmul.f32 %v556, %v556
        %v559 = vadd.f32 1.0, %v558
        %v560 = vrsqrt.pop %v559
        %v561 = vmul.f32 %v560, %v559
        %v562 = vmul.f32 %v561, %v560
        %v563 = vmul.f32 0.5, %v562
        %v564 = vsub.f32 1.5, %v563
        %v565 = vmul.f32 %v560, %v564
        %v566 = vmul.f32 %v559, %v565
        %vm567 = vcmp.eq.f32.partialorder %v559, inf
        %v568 = vsel %vm567, %v559, %v566
        %vm569 = vcmp.eq.f32.partialorder %v559, 0.0
        %v570 = vand.u32 %v559, 2147483648
        %v571 = vsel %vm569, %v570, %v568
        %v572 = vxor.u32 %v571, 2147483648
        %v573 = vsel %vm557, %v571, %v572
        %v574 = vadd.f32 %v556, %v573
        %v575 = vrcp.pop %v574
        %v576 = vmul.f32 %v574, %v575
        %v577 = vsub.f32 1.0, %v576
        %v578 = vmul.f32 %v575, %v577
        %v579 = vadd.f32 %v575, %v578
        %vm580 = vweird.f32 %v574
        %vm581 = vweird.f32 %v575
        %vm582 = vmor %vm580, %vm581
        %v583 = vsel %vm582, %v575, %v579
        %v584 = vand.u32 2147483647, %v574
        %vm585 = vcmp.eq.f32.partialorder %v584, 8.507059e+37
        %v586 = vand.u32 %v574, 2147483648
        %v587 = vor.u32 1.1754944e-38, %v586
        %v588 = vsel %vm585, %v587, %v583
        %v589 = vand.u32 2147483647, %v535
        %v590 = vand.u32 2147483647, %v537
        %v591 = vand.u32 2147483647, %v539
        %v592 = vmin.f32 %v589, %v591
        %v593 = vmul.f32 1.1920929e-08, %v592
        %vm594 = vcmp.le.f32.partialorder %v590, %v593
        %v595 = vsel %vm594, 0.0, %v588
        %v596 = vmul.f32 %v595, %v595
        %v597 = vadd.f32 1.0, %v596
        %v598 = vrsqrt.pop %v597
        %v599 = vmul.f32 %v598, %v597
        %v600 = vmul.f32 %v599, %v598
        %v601 = vmul.f32 0.5, %v600
        %v602 = vsub.f32 1.5, %v601
        %v603 = vmul.f32 %v598, %v602
        %vm604 = vweird.f32 %v597
        %vm605 = vweird.f32 %v598
        %vm606 = vmor %vm604, %vm605
        %v607 = vsel %vm606, %v598, %v603
        %v608 = vmul.f32 %v595, %v607
        %v609 = vmul.f32 %v595, %v537
        %v610 = vsub.f32 %v535, %v609
        %v611 = vmul.f32 %v595, %v537
        %v612 = vadd.f32 %v539, %v611
        %s613 = smov [#allocation22]
        %614 = vst [vmem:[%s613] sm:$0xff] %v610
        %s615 = smov [#allocation23]
        %616 = vst [vmem:[%s615] sm:$0xff] %v612
        %s617 = smov %s532
        %618 = vst [vmem:[%s617] sm:$0xff] %v607
        %s619 = smov %s533
        %620 = vst [vmem:[%s619] sm:$0xff] %v608
        %s621 = smov [#allocation24]
        %v622 = vld [vmem:[%s621] ss:$0 sm:$0xff]
        %v623 = vlaneseq
        %v624 = vand.u32 %v623, 127
        %v625 = vmov %v624
        %v626 = vlaneseq
        %v627 = vshrl.u32 %v626, 7
        %v628 = vmov %v627
        %vm630 = vcmp.eq.s32.totalorder %v628, %v625
        %v631 = vsel %vm630, %v622, 0.0
        %632 = vadd.xlane.f32.xlu0 %v631
        %v633 = vpop.xlane.xlu0 %632
        %s634 = smov [#allocation26]
        %635 = vst [vmem:[%s634] sm:$0xff] %v633
        %s636 = smov [#allocation24]
        %v637 = vld [vmem:[%s636] ss:$0 sm:$0xff]
        %v638 = vlaneseq
        %v639 = vand.u32 %v638, 127
        %v640 = vmov %v639
        %v641 = vlaneseq
        %v642 = vshrl.u32 %v641, 7
        %v643 = vmov %v642
        %v644 = vadd.s32 %v643, 8
        %vm645 = vcmp.eq.s32.totalorder %v644, %v640
        %v646 = vsel %vm645, %v637, 0.0
        %647 = vadd.xlane.f32.xlu0 %v646
        %v648 = vpop.xlane.xlu0 %647
        %s649 = smov [#allocation26]
        %s650 = scalar_lea.vmem %s649, 8
        %651 = vst [vmem:[%s650] sm:$0xff] %v648
        %s652 = smov [#allocation25]
        %v653 = vld [vmem:[%s652] ss:$0 sm:$0xff]
        %v654 = vlaneseq
        %v655 = vand.u32 %v654, 127
        %v656 = vmov %v655
        %v657 = vlaneseq
        %v658 = vshrl.u32 %v657, 7
        %v659 = vmov %v658
        %vm661 = vcmp.eq.s32.totalorder %v659, %v656
        %v662 = vsel %vm661, %v653, 0.0
        %663 = vadd.xlane.f32.xlu0 %v662
        %v664 = vpop.xlane.xlu0 %663
        %s665 = smov [#allocation27]
        %666 = vst [vmem:[%s665] sm:$0xff] %v664
        %s667 = smov [#allocation25]
        %v668 = vld [vmem:[%s667] ss:$0 sm:$0xff]
        %v669 = vlaneseq
        %v670 = vand.u32 %v669, 127
        %v671 = vmov %v670
        %v672 = vlaneseq
        %v673 = vshrl.u32 %v672, 7
        %v674 = vmov %v673
        %v675 = vadd.s32 %v674, 8
        %vm676 = vcmp.eq.s32.totalorder %v675, %v671
        %v677 = vsel %vm676, %v668, 0.0
        %678 = vadd.xlane.f32.xlu0 %v677
        %v679 = vpop.xlane.xlu0 %678
        %s680 = smov [#allocation27]
        %s681 = scalar_lea.vmem %s680, 8
        %682 = vst [vmem:[%s681] sm:$0xff] %v679
        %s683 = smov [#allocation26]
        %v684 = vld [vmem:[%s683] sm:$0xff]
        %s685 = smov [#allocation27]
        %v686 = vld [vmem:[%s685] sm:$0xff]
        %s687 = smov [#allocation15]
        %s688 = smov [#allocation16]
        %s689 = smov [#allocation17]
        %s690 = smov [#allocation18]
        %v691 = vld [vmem:[%s687] sm:$0xff]
        %v692 = vld [vmem:[%s688] sm:$0xff]
        %v693 = vld [vmem:[%s689] sm:$0xff]
        %v694 = vld [vmem:[%s690] sm:$0xff]
        %v695 = vmul.f32 %v684, %v691
        %v696 = vmul.f32 %v686, %v693
        %v697 = vsub.f32 %v695, %v696
        %v698 = vmul.f32 %v684, %v692
        %v699 = vmul.f32 %v686, %v694
        %v700 = vsub.f32 %v698, %v699
        %v701 = vmul.f32 %v686, %v691
        %v702 = vmul.f32 %v684, %v693
        %v703 = vadd.f32 %v701, %v702
        %v704 = vmul.f32 %v686, %v692
        %v705 = vmul.f32 %v684, %v694
        %v706 = vadd.f32 %v704, %v705
        %707 = vst [vmem:[%s687] sm:$0xff] %v697
        %708 = vst [vmem:[%s688] sm:$0xff] %v700
        %709 = vst [vmem:[%s689] sm:$0xff] %v703
        %710 = vst [vmem:[%s690] sm:$0xff] %v706
        %s711 = smov [#allocation26]
        %s712 = scalar_lea.vmem %s711, 8
        %v713 = vld [vmem:[%s712] sm:$0xff]
        %s714 = smov [#allocation27]
        %s715 = scalar_lea.vmem %s714, 8
        %v716 = vld [vmem:[%s715] sm:$0xff]
        %s717 = smov [#allocation15]
        %s718 = scalar_lea.vmem %s717, 8
        %s719 = smov [#allocation16]
        %s720 = scalar_lea.vmem %s719, 8
        %s721 = smov [#allocation17]
        %s722 = scalar_lea.vmem %s721, 8
        %s723 = smov [#allocation18]
        %s724 = scalar_lea.vmem %s723, 8
        %v725 = vld [vmem:[%s718] sm:$0x3]
        %v726 = vld [vmem:[%s720] sm:$0x3]
        %v727 = vld [vmem:[%s722] sm:$0x3]
        %v728 = vld [vmem:[%s724] sm:$0x3]
        %v729 = vmul.f32 %v713, %v725
        %v730 = vmul.f32 %v716, %v727
        %v731 = vsub.f32 %v729, %v730
        %v732 = vmul.f32 %v713, %v726
        %v733 = vmul.f32 %v716, %v728
        %v734 = vsub.f32 %v732, %v733
        %v735 = vmul.f32 %v716, %v725
        %v736 = vmul.f32 %v713, %v727
        %v737 = vadd.f32 %v735, %v736
        %v738 = vmul.f32 %v716, %v726
        %v739 = vmul.f32 %v713, %v728
        %v740 = vadd.f32 %v738, %v739
        %741 = vst [vmem:[%s718] sm:$0x3] %v731
        %742 = vst [vmem:[%s720] sm:$0x3] %v734
        %743 = vst [vmem:[%s722] sm:$0x3] %v737
        %744 = vst [vmem:[%s724] sm:$0x3] %v740
        %s745 = smov [#allocation24]
        %v746 = vld [vmem:[%s745] ss:$0 sm:$0xff]
        %s747 = smov [#allocation25]
        %v748 = vld [vmem:[%s747] ss:$0 sm:$0xff]
        %s749 = smov [#allocation15]
        %s750 = smov [#allocation16]
        %s751 = smov [#allocation17]
        %s752 = smov [#allocation18]
        %v753 = vld [vmem:[%s749] sm:$0xff]
        %v754 = vld [vmem:[%s750] sm:$0xff]
        %v755 = vld [vmem:[%s751] sm:$0xff]
        %v756 = vld [vmem:[%s752] sm:$0xff]
        %v757 = vmul.f32 %v746, %v753
        %v758 = vmul.f32 %v748, %v754
        %v759 = vsub.f32 %v757, %v758
        %v760 = vmul.f32 %v748, %v753
        %v761 = vmul.f32 %v746, %v754
        %v762 = vadd.f32 %v760, %v761
        %v763 = vmul.f32 %v746, %v755
        %v764 = vmul.f32 %v748, %v756
        %v765 = vsub.f32 %v763, %v764
        %v766 = vmul.f32 %v748, %v755
        %v767 = vmul.f32 %v746, %v756
        %v768 = vadd.f32 %v766, %v767
        %769 = vst [vmem:[%s749] sm:$0xff] %v759
        %770 = vst [vmem:[%s750] sm:$0xff] %v762
        %771 = vst [vmem:[%s751] sm:$0xff] %v765
        %772 = vst [vmem:[%s752] sm:$0xff] %v768
        %s773 = smov [#allocation15]
        %s774 = scalar_lea.vmem %s773, 8
        %s775 = smov [#allocation16]
        %s776 = scalar_lea.vmem %s775, 8
        %s777 = smov [#allocation17]
        %s778 = scalar_lea.vmem %s777, 8
        %s779 = smov [#allocation18]
        %s780 = scalar_lea.vmem %s779, 8
        %v781 = vld [vmem:[%s774] sm:$0x3]
        %v782 = vld [vmem:[%s776] sm:$0x3]
        %v783 = vld [vmem:[%s778] sm:$0x3]
        %v784 = vld [vmem:[%s780] sm:$0x3]
        %v785 = vmul.f32 %v746, %v781
        %v786 = vmul.f32 %v748, %v782
        %v787 = vsub.f32 %v785, %v786
        %v788 = vmul.f32 %v748, %v781
        %v789 = vmul.f32 %v746, %v782
        %v790 = vadd.f32 %v788, %v789
        %v791 = vmul.f32 %v746, %v783
        %v792 = vmul.f32 %v748, %v784
        %v793 = vsub.f32 %v791, %v792
        %v794 = vmul.f32 %v748, %v783
        %v795 = vmul.f32 %v746, %v784
        %v796 = vadd.f32 %v794, %v795
        %797 = vst [vmem:[%s774] sm:$0x3] %v787
        %798 = vst [vmem:[%s776] sm:$0x3] %v790
        %799 = vst [vmem:[%s778] sm:$0x3] %v793
        %800 = vst [vmem:[%s780] sm:$0x3] %v796
        %s801 = smov [#allocation15]
        %s802 = smov [#allocation22]
        %v803 = vlaneseq
        %v804 = vand.u32 %v803, 127
        %v805 = vmov %v804
        %v806 = vlaneseq
        %v807 = vshrl.u32 %v806, 7
        %v808 = vmov %v807
        %v809 = vld [vmem:[%s802] ss:$0 sm:$0xff]
        %v810 = vld [vmem:[%s801] sm:$0xff]
        %vm813 = vcmp.eq.s32.totalorder %v808, %v805
        %v814 = vsel %vm813, %v809, %v810
        %815 = vst [vmem:[%s801] sm:$0xff] %v814
        %v816 = vld [vmem:[%s802] ss:$0 sm:$0xff]
        %s817 = scalar_lea.vmem %s801, 8
        %v818 = vld [vmem:[%s817] sm:$0x3]
        %v820 = vadd.s32 %v808, 8
        %vm821 = vcmp.eq.s32.totalorder %v820, %v805
        %v822 = vsel %vm821, %v816, %v818
        %823 = vst [vmem:[%s817] sm:$0x3] %v822
        %s824 = smov [#allocation16]
        %v825 = vlaneseq
        %v826 = vand.u32 %v825, 127
        %v827 = vmov %v826
        %v828 = vlaneseq
        %v829 = vshrl.u32 %v828, 7
        %v830 = vmov %v829
        %v831 = vld [vmem:[%s824] sm:$0xff]
        %vm834 = vcmp.eq.s32.totalorder %v830, %v827
        %v835 = vsel %vm834, 0.0, %v831
        %836 = vst [vmem:[%s824] sm:$0xff] %v835
        %s837 = scalar_lea.vmem %s824, 8
        %v838 = vld [vmem:[%s837] sm:$0x3]
        %v840 = vadd.s32 %v830, 8
        %vm841 = vcmp.eq.s32.totalorder %v840, %v827
        %v842 = vsel %vm841, 0.0, %v838
        %843 = vst [vmem:[%s837] sm:$0x3] %v842
        %s844 = smov [#allocation17]
        %v845 = vlaneseq
        %v846 = vand.u32 %v845, 127
        %v847 = vmov %v846
        %v848 = vlaneseq
        %v849 = vshrl.u32 %v848, 7
        %v850 = vmov %v849
        %v851 = vld [vmem:[%s844] sm:$0xff]
        %vm854 = vcmp.eq.s32.totalorder %v850, %v847
        %v855 = vsel %vm854, 0.0, %v851
        %856 = vst [vmem:[%s844] sm:$0xff] %v855
        %s857 = scalar_lea.vmem %s844, 8
        %v858 = vld [vmem:[%s857] sm:$0x3]
        %v860 = vadd.s32 %v850, 8
        %vm861 = vcmp.eq.s32.totalorder %v860, %v847
        %v862 = vsel %vm861, 0.0, %v858
        %863 = vst [vmem:[%s857] sm:$0x3] %v862
        %s864 = smov [#allocation18]
        %s865 = smov [#allocation23]
        %v866 = vlaneseq
        %v867 = vand.u32 %v866, 127
        %v868 = vmov %v867
        %v869 = vlaneseq
        %v870 = vshrl.u32 %v869, 7
        %v871 = vmov %v870
        %v872 = vld [vmem:[%s865] ss:$0 sm:$0xff]
        %v873 = vld [vmem:[%s864] sm:$0xff]
        %vm876 = vcmp.eq.s32.totalorder %v871, %v868
        %v877 = vsel %vm876, %v872, %v873
        %878 = vst [vmem:[%s864] sm:$0xff] %v877
        %v879 = vld [vmem:[%s865] ss:$0 sm:$0xff]
        %s880 = scalar_lea.vmem %s864, 8
        %v881 = vld [vmem:[%s880] sm:$0x3]
        %v883 = vadd.s32 %v871, 8
        %vm884 = vcmp.eq.s32.totalorder %v883, %v868
        %v885 = vsel %vm884, %v879, %v881
        %886 = vst [vmem:[%s880] sm:$0x3] %v885
        %s887 = smov [#allocation15]
        %s888 = smov [#allocation16]
        %v889 = vld [vmem:[%s888] sm:$0xff]
        %890 = vrot.lane.b32.xlu0 %v889, 1
        %v891 = vpop.permute.xlu0 %890
        %v892 = vld [vmem:[%s887] sm:$0xff]
        %v893 = vld [vmem:[%s887] sm:$0xff]
        %894 = vrot.lane.b32.xlu0 %v893, 1
        %v895 = vpop.permute.xlu0 %894
        %v896 = vlaneseq
        %v897 = vand.u32 %v896, 127
        %vm898 = vcmp.eq.s32.totalorder %v897, 0
        %v899 = vsel %vm898, %v893, %v895
        %v900 = vlaneseq
        %v901 = vand.u32 %v900, 127
        %vm902 = vcmp.eq.s32.totalorder %v901, 1
        %v903 = vsel %vm902, %v891, %v899
        %v904 = vlaneseq
        %v905 = vand.u32 %v904, 127
        %vm906 = vcmp.ge.s32.totalorder %v905, 0
        %vm907 = vcmp.lt.s32.totalorder %v905, 10
        %vm908 = vmand %vm906, %vm907
        %v909 = vsel %vm908, %v903, 0.0
        %v910 = vld [vmem:[%s888] sm:$0xff]
        %911 = vrot.lane.b32.xlu0 %v910, 127
        %v912 = vpop.permute.xlu0 %911
        %v913 = vlaneseq
        %v914 = vand.u32 %v913, 127
        %vm915 = vcmp.eq.s32.totalorder %v914, 9
        %v916 = vsel %vm915, %v892, %v912
        %s917 = smov [#allocation15]
        %s918 = scalar_lea.vmem %s917, 8
        %s919 = smov [#allocation16]
        %s920 = scalar_lea.vmem %s919, 8
        %v921 = vld [vmem:[%s920] sm:$0x3]
        %922 = vrot.lane.b32.xlu0 %v921, 1
        %v923 = vpop.permute.xlu0 %922
        %v924 = vld [vmem:[%s918] sm:$0x3]
        %v925 = vld [vmem:[%s918] sm:$0x3]
        %926 = vrot.lane.b32.xlu0 %v925, 1
        %v927 = vpop.permute.xlu0 %926
        %v928 = vlaneseq
        %v929 = vand.u32 %v928, 127
        %vm930 = vcmp.eq.s32.totalorder %v929, 0
        %v931 = vsel %vm930, %v925, %v927
        %v932 = vlaneseq
        %v933 = vand.u32 %v932, 127
        %vm934 = vcmp.eq.s32.totalorder %v933, 1
        %v935 = vsel %vm934, %v923, %v931
        %v936 = vlaneseq
        %v937 = vand.u32 %v936, 127
        %vm938 = vcmp.ge.s32.totalorder %v937, 0
        %vm939 = vcmp.lt.s32.totalorder %v937, 10
        %vm940 = vmand %vm938, %vm939
        %v941 = vsel %vm940, %v935, 0.0
        %v942 = vld [vmem:[%s920] sm:$0x3]
        %943 = vrot.lane.b32.xlu0 %v942, 127
        %v944 = vpop.permute.xlu0 %943
        %v945 = vlaneseq
        %v946 = vand.u32 %v945, 127
        %vm947 = vcmp.eq.s32.totalorder %v946, 9
        %v948 = vsel %vm947, %v924, %v944
        %949 = vst [vmem:[%s887] sm:$0xff] %v909
        %950 = vst [vmem:[%s888] sm:$0xff] %v916
        %951 = vst [vmem:[%s918] sm:$0x3] %v941
        %952 = vst [vmem:[%s920] sm:$0x3] %v948
        %s953 = smov [#allocation17]
        %s954 = smov [#allocation18]
        %v955 = vld [vmem:[%s954] sm:$0xff]
        %956 = vrot.lane.b32.xlu0 %v955, 1
        %v957 = vpop.permute.xlu0 %956
        %v958 = vld [vmem:[%s953] sm:$0xff]
        %v959 = vld [vmem:[%s953] sm:$0xff]
        %960 = vrot.lane.b32.xlu0 %v959, 1
        %v961 = vpop.permute.xlu0 %960
        %v962 = vlaneseq
        %v963 = vand.u32 %v962, 127
        %vm964 = vcmp.eq.s32.totalorder %v963, 0
        %v965 = vsel %vm964, %v959, %v961
        %v966 = vlaneseq
        %v967 = vand.u32 %v966, 127
        %vm968 = vcmp.eq.s32.totalorder %v967, 1
        %v969 = vsel %vm968, %v957, %v965
        %v970 = vlaneseq
        %v971 = vand.u32 %v970, 127
        %vm972 = vcmp.ge.s32.totalorder %v971, 0
        %vm973 = vcmp.lt.s32.totalorder %v971, 10
        %vm974 = vmand %vm972, %vm973
        %v975 = vsel %vm974, %v969, 0.0
        %v976 = vld [vmem:[%s954] sm:$0xff]
        %977 = vrot.lane.b32.xlu0 %v976, 127
        %v978 = vpop.permute.xlu0 %977
        %v979 = vlaneseq
        %v980 = vand.u32 %v979, 127
        %vm981 = vcmp.eq.s32.totalorder %v980, 9
        %v982 = vsel %vm981, %v958, %v978
        %s983 = smov [#allocation17]
        %s984 = scalar_lea.vmem %s983, 8
        %s985 = smov [#allocation18]
        %s986 = scalar_lea.vmem %s985, 8
        %v987 = vld [vmem:[%s986] sm:$0x3]
        %988 = vrot.lane.b32.xlu0 %v987, 1
        %v989 = vpop.permute.xlu0 %988
        %v990 = vld [vmem:[%s984] sm:$0x3]
        %v991 = vld [vmem:[%s984] sm:$0x3]
        %992 = vrot.lane.b32.xlu0 %v991, 1
        %v993 = vpop.permute.xlu0 %992
        %v994 = vlaneseq
        %v995 = vand.u32 %v994, 127
        %vm996 = vcmp.eq.s32.totalorder %v995, 0
        %v997 = vsel %vm996, %v991, %v993
        %v998 = vlaneseq
        %v999 = vand.u32 %v998, 127
        %vm1000 = vcmp.eq.s32.totalorder %v999, 1
        %v1001 = vsel %vm1000, %v989, %v997
        %v1002 = vlaneseq
        %v1003 = vand.u32 %v1002, 127
        %vm1004 = vcmp.ge.s32.totalorder %v1003, 0
        %vm1005 = vcmp.lt.s32.totalorder %v1003, 10
        %vm1006 = vmand %vm1004, %vm1005
        %v1007 = vsel %vm1006, %v1001, 0.0
        %v1008 = vld [vmem:[%s986] sm:$0x3]
        %1009 = vrot.lane.b32.xlu0 %v1008, 127
        %v1010 = vpop.permute.xlu0 %1009
        %v1011 = vlaneseq
        %v1012 = vand.u32 %v1011, 127
        %vm1013 = vcmp.eq.s32.totalorder %v1012, 9
        %v1014 = vsel %vm1013, %v990, %v1010
        %1015 = vst [vmem:[%s953] sm:$0xff] %v975
        %1016 = vst [vmem:[%s954] sm:$0xff] %v982
        %1017 = vst [vmem:[%s984] sm:$0x3] %v1007
        %1018 = vst [vmem:[%s986] sm:$0x3] %v1014
        %s1019 = smov [#allocation15]
        %s1020 = smov [#allocation17]
        %v1021 = vld [vmem:[%s1019] ss:$0 sm:$0xff]
        %s1023 = scalar_lea.vmem %s1019, 4294967295
        %v1024 = vld [vmem:[%s1023] sm:$0xfe]
        %v1025 = vlaneseq
        %v1026 = vshrl.u32 %v1025, 7
        %vm1027 = vcmp.eq.s32.totalorder %v1026, 0
        %v1028 = vsel %vm1027, %v1021, %v1024
        %s1029 = scalar_lea.vmem %s1019, 7
        %v1030 = vld [vmem:[%s1029] ss:$0 sm:$0xff]
        %1031 = vst [vmem:[%s1019] sm:$0xff] %v1028
        %s1032 = scalar_lea.vmem %s1019, 8
        %s1034 = scalar_lea.vmem %s1032, 4294967295
        %v1035 = vld [vmem:[%s1034] sm:$0x2]
        %v1036 = vlaneseq
        %v1037 = vshrl.u32 %v1036, 7
        %vm1038 = vcmp.eq.s32.totalorder %v1037, 0
        %v1039 = vsel %vm1038, %v1030, %v1035
        %s1040 = scalar_lea.vmem %s1032, 1
        %v1041 = vld [vmem:[%s1040] ss:$0 sm:$0xff]
        %1042 = vst [vmem:[%s1032] sm:$0x3] %v1039
        %v1043 = vld [vmem:[%s1020] ss:$0 sm:$0xff]
        %s1044 = scalar_lea.vmem %s1019, 1
        %1045 = vst [vmem:[%s1044] sm:$0x1] %v1043
        %s1046 = scalar_lea.vmem %s1020, 8
        %s1047 = scalar_lea.vmem %s1046, 1
        %v1048 = vld [vmem:[%s1047] sm:$0x1]
        %v1049 = vlaneseq
        %v1050 = vshrl.u32 %v1049, 7
        %vm1051 = vcmp.eq.s32.totalorder %v1050, 1
        %v1052 = vsel %vm1051, %v1041, %v1048
        %v1053 = vld [vmem:[%s1046] ss:$0 sm:$0xff]
        %1054 = vst [vmem:[%s1046] sm:$0x3] %v1052
        %s1055 = scalar_lea.vmem %s1020, 1
        %v1056 = vld [vmem:[%s1055] sm:$0x7f]
        %v1057 = vlaneseq
        %v1058 = vshrl.u32 %v1057, 7
        %vm1059 = vcmp.eq.s32.totalorder %v1058, 7
        %v1060 = vsel %vm1059, %v1053, %v1056
        %v1061 = vld [vmem:[%s1020] ss:$0 sm:$0xff]
        %1062 = vst [vmem:[%s1020] sm:$0xff] %v1060
        %s1063 = smov [#allocation16]
        %s1064 = smov [#allocation18]
        %v1065 = vld [vmem:[%s1063] ss:$0 sm:$0xff]
        %s1067 = scalar_lea.vmem %s1063, 4294967295
        %v1068 = vld [vmem:[%s1067] sm:$0xfe]
        %v1069 = vlaneseq
        %v1070 = vshrl.u32 %v1069, 7
        %vm1071 = vcmp.eq.s32.totalorder %v1070, 0
        %v1072 = vsel %vm1071, %v1065, %v1068
        %s1073 = scalar_lea.vmem %s1063, 7
        %v1074 = vld [vmem:[%s1073] ss:$0 sm:$0xff]
        %1075 = vst [vmem:[%s1063] sm:$0xff] %v1072
        %s1076 = scalar_lea.vmem %s1063, 8
        %s1078 = scalar_lea.vmem %s1076, 4294967295
        %v1079 = vld [vmem:[%s1078] sm:$0x2]
        %v1080 = vlaneseq
        %v1081 = vshrl.u32 %v1080, 7
        %vm1082 = vcmp.eq.s32.totalorder %v1081, 0
        %v1083 = vsel %vm1082, %v1074, %v1079
        %s1084 = scalar_lea.vmem %s1076, 1
        %v1085 = vld [vmem:[%s1084] ss:$0 sm:$0xff]
        %1086 = vst [vmem:[%s1076] sm:$0x3] %v1083
        %v1087 = vld [vmem:[%s1064] ss:$0 sm:$0xff]
        %s1088 = scalar_lea.vmem %s1063, 1
        %1089 = vst [vmem:[%s1088] sm:$0x1] %v1087
        %s1090 = scalar_lea.vmem %s1064, 8
        %s1091 = scalar_lea.vmem %s1090, 1
        %v1092 = vld [vmem:[%s1091] sm:$0x1]
        %v1093 = vlaneseq
        %v1094 = vshrl.u32 %v1093, 7
        %vm1095 = vcmp.eq.s32.totalorder %v1094, 1
        %v1096 = vsel %vm1095, %v1085, %v1092
        %v1097 = vld [vmem:[%s1090] ss:$0 sm:$0xff]
        %1098 = vst [vmem:[%s1090] sm:$0x3] %v1096
        %s1099 = scalar_lea.vmem %s1064, 1
        %v1100 = vld [vmem:[%s1099] sm:$0x7f]
        %v1101 = vlaneseq
        %v1102 = vshrl.u32 %v1101, 7
        %vm1103 = vcmp.eq.s32.totalorder %v1102, 7
        %v1104 = vsel %vm1103, %v1097, %v1100
        %v1105 = vld [vmem:[%s1064] ss:$0 sm:$0xff]
        %1106 = vst [vmem:[%s1064] sm:$0xff] %v1104
        %s1107 = smov [#allocation26]
        %v1108 = vld [vmem:[%s1107] sm:$0xff]
        %s1109 = smov [#allocation27]
        %v1110 = vld [vmem:[%s1109] sm:$0xff]
        %s1111 = smov [#allocation8]
        %s1112 = smov [#allocation10]
        %s1113 = smov [#allocation12]
        %s1114 = smov [#allocation13]
        %v1115 = vld [vmem:[%s1111] sm:$0xff]
        %v1116 = vld [vmem:[%s1112] sm:$0xff]
        %v1117 = vld [vmem:[%s1113] sm:$0xff]
        %v1118 = vld [vmem:[%s1114] sm:$0xff]
        %v1119 = vmul.f32 %v1108, %v1115
        %v1120 = vmul.f32 %v1110, %v1117
        %v1121 = vsub.f32 %v1119, %v1120
        %v1122 = vmul.f32 %v1108, %v1116
        %v1123 = vmul.f32 %v1110, %v1118
        %v1124 = vsub.f32 %v1122, %v1123
        %v1125 = vmul.f32 %v1110, %v1115
        %v1126 = vmul.f32 %v1108, %v1117
        %v1127 = vadd.f32 %v1125, %v1126
        %v1128 = vmul.f32 %v1110, %v1116
        %v1129 = vmul.f32 %v1108, %v1118
        %v1130 = vadd.f32 %v1128, %v1129
        %1131 = vst [vmem:[%s1111] sm:$0xff] %v1121
        %1132 = vst [vmem:[%s1112] sm:$0xff] %v1124
        %1133 = vst [vmem:[%s1113] sm:$0xff] %v1127
        %1134 = vst [vmem:[%s1114] sm:$0xff] %v1130
        %s1135 = smov [#allocation26]
        %s1136 = scalar_lea.vmem %s1135, 8
        %v1137 = vld [vmem:[%s1136] sm:$0xff]
        %s1138 = smov [#allocation27]
        %s1139 = scalar_lea.vmem %s1138, 8
        %v1140 = vld [vmem:[%s1139] sm:$0xff]
        %s1141 = smov [#allocation8]
        %s1142 = scalar_lea.vmem %s1141, 8
        %s1143 = smov [#allocation10]
        %s1144 = scalar_lea.vmem %s1143, 8
        %s1145 = smov [#allocation12]
        %s1146 = scalar_lea.vmem %s1145, 8
        %s1147 = smov [#allocation13]
        %s1148 = scalar_lea.vmem %s1147, 8
        %v1149 = vld [vmem:[%s1142] sm:$0x3]
        %v1150 = vld [vmem:[%s1144] sm:$0x3]
        %v1151 = vld [vmem:[%s1146] sm:$0x3]
        %v1152 = vld [vmem:[%s1148] sm:$0x3]
        %v1153 = vmul.f32 %v1137, %v1149
        %v1154 = vmul.f32 %v1140, %v1151
        %v1155 = vsub.f32 %v1153, %v1154
        %v1156 = vmul.f32 %v1137, %v1150
        %v1157 = vmul.f32 %v1140, %v1152
        %v1158 = vsub.f32 %v1156, %v1157
        %v1159 = vmul.f32 %v1140, %v1149
        %v1160 = vmul.f32 %v1137, %v1151
        %v1161 = vadd.f32 %v1159, %v1160
        %v1162 = vmul.f32 %v1140, %v1150
        %v1163 = vmul.f32 %v1137, %v1152
        %v1164 = vadd.f32 %v1162, %v1163
        %1165 = vst [vmem:[%s1142] sm:$0x3] %v1155
        %1166 = vst [vmem:[%s1144] sm:$0x3] %v1158
        %1167 = vst [vmem:[%s1146] sm:$0x3] %v1161
        %1168 = vst [vmem:[%s1148] sm:$0x3] %v1164
        %s1169 = smov [#allocation8]
        %s1170 = smov [#allocation12]
        %v1171 = vld [vmem:[%s1169] ss:$0 sm:$0xff]
        %s1173 = scalar_lea.vmem %s1169, 4294967295
        %v1174 = vld [vmem:[%s1173] sm:$0xfe]
        %v1175 = vlaneseq
        %v1176 = vshrl.u32 %v1175, 7
        %vm1177 = vcmp.eq.s32.totalorder %v1176, 0
        %v1178 = vsel %vm1177, %v1171, %v1174
        %s1179 = scalar_lea.vmem %s1169, 7
        %v1180 = vld [vmem:[%s1179] ss:$0 sm:$0xff]
        %1181 = vst [vmem:[%s1169] sm:$0xff] %v1178
        %s1182 = scalar_lea.vmem %s1169, 8
        %s1184 = scalar_lea.vmem %s1182, 4294967295
        %v1185 = vld [vmem:[%s1184] sm:$0x2]
        %v1186 = vlaneseq
        %v1187 = vshrl.u32 %v1186, 7
        %vm1188 = vcmp.eq.s32.totalorder %v1187, 0
        %v1189 = vsel %vm1188, %v1180, %v1185
        %s1190 = scalar_lea.vmem %s1182, 1
        %v1191 = vld [vmem:[%s1190] ss:$0 sm:$0xff]
        %1192 = vst [vmem:[%s1182] sm:$0x3] %v1189
        %v1193 = vld [vmem:[%s1170] ss:$0 sm:$0xff]
        %s1194 = scalar_lea.vmem %s1169, 1
        %1195 = vst [vmem:[%s1194] sm:$0x1] %v1193
        %s1196 = scalar_lea.vmem %s1170, 8
        %s1197 = scalar_lea.vmem %s1196, 1
        %v1198 = vld [vmem:[%s1197] sm:$0x1]
        %v1199 = vlaneseq
        %v1200 = vshrl.u32 %v1199, 7
        %vm1201 = vcmp.eq.s32.totalorder %v1200, 1
        %v1202 = vsel %vm1201, %v1191, %v1198
        %v1203 = vld [vmem:[%s1196] ss:$0 sm:$0xff]
        %1204 = vst [vmem:[%s1196] sm:$0x3] %v1202
        %s1205 = scalar_lea.vmem %s1170, 1
        %v1206 = vld [vmem:[%s1205] sm:$0x7f]
        %v1207 = vlaneseq
        %v1208 = vshrl.u32 %v1207, 7
        %vm1209 = vcmp.eq.s32.totalorder %v1208, 7
        %v1210 = vsel %vm1209, %v1203, %v1206
        %v1211 = vld [vmem:[%s1170] ss:$0 sm:$0xff]
        %1212 = vst [vmem:[%s1170] sm:$0xff] %v1210
        %s1213 = smov [#allocation10]
        %s1214 = smov [#allocation13]
        %v1215 = vld [vmem:[%s1213] ss:$0 sm:$0xff]
        %s1217 = scalar_lea.vmem %s1213, 4294967295
        %v1218 = vld [vmem:[%s1217] sm:$0xfe]
        %v1219 = vlaneseq
        %v1220 = vshrl.u32 %v1219, 7
        %vm1221 = vcmp.eq.s32.totalorder %v1220, 0
        %v1222 = vsel %vm1221, %v1215, %v1218
        %s1223 = scalar_lea.vmem %s1213, 7
        %v1224 = vld [vmem:[%s1223] ss:$0 sm:$0xff]
        %1225 = vst [vmem:[%s1213] sm:$0xff] %v1222
        %s1226 = scalar_lea.vmem %s1213, 8
        %s1228 = scalar_lea.vmem %s1226, 4294967295
        %v1229 = vld [vmem:[%s1228] sm:$0x2]
        %v1230 = vlaneseq
        %v1231 = vshrl.u32 %v1230, 7
        %vm1232 = vcmp.eq.s32.totalorder %v1231, 0
        %v1233 = vsel %vm1232, %v1224, %v1229
        %s1234 = scalar_lea.vmem %s1226, 1
        %v1235 = vld [vmem:[%s1234] ss:$0 sm:$0xff]
        %1236 = vst [vmem:[%s1226] sm:$0x3] %v1233
        %v1237 = vld [vmem:[%s1214] ss:$0 sm:$0xff]
        %s1238 = scalar_lea.vmem %s1213, 1
        %1239 = vst [vmem:[%s1238] sm:$0x1] %v1237
        %s1240 = scalar_lea.vmem %s1214, 8
        %s1241 = scalar_lea.vmem %s1240, 1
        %v1242 = vld [vmem:[%s1241] sm:$0x1]
        %v1243 = vlaneseq
        %v1244 = vshrl.u32 %v1243, 7
        %vm1245 = vcmp.eq.s32.totalorder %v1244, 1
        %v1246 = vsel %vm1245, %v1235, %v1242
        %v1247 = vld [vmem:[%s1240] ss:$0 sm:$0xff]
        %1248 = vst [vmem:[%s1240] sm:$0x3] %v1246
        %s1249 = scalar_lea.vmem %s1214, 1
        %v1250 = vld [vmem:[%s1249] sm:$0x7f]
        %v1251 = vlaneseq
        %v1252 = vshrl.u32 %v1251, 7
        %vm1253 = vcmp.eq.s32.totalorder %v1252, 7
        %v1254 = vsel %vm1253, %v1247, %v1250
        %v1255 = vld [vmem:[%s1214] ss:$0 sm:$0xff]
        %1256 = vst [vmem:[%s1214] sm:$0xff] %v1254
      $region101: #{custom-call.10} parent=93 // loop_footer
        %s453 = sadd.s32 1, %s449
      $region102: #{custom-call.10} parent=93 // loop_footer_branch
        %448 = sbr.rel target = $region98
      $region103: #{custom-call.10} parent=93 // loop_exit
        _
      %s1257 = sadd.s32 %s319, 1
    $region94: #{custom-call.10} parent=1 // loop_footer
      _
    $region95: #{custom-call.10} parent=1 // loop_footer_branch
      %318 = sbr.rel target = $region91
    $region96: #{custom-call.10} parent=1 // loop_exit
      _
    %s1260 = smov [#allocation15]
    %s1261 = smov [#allocation4]
    %v1262 = vlaneseq
    %v1263 = vand.u32 %v1262, 127
    %v1264 = vmov %v1263
    %v1265 = vlaneseq
    %v1266 = vshrl.u32 %v1265, 7
    %v1267 = vmov %v1266
    %v1268 = vld [vmem:[%s1260] sm:$0xff]
    %vm1271 = vcmp.eq.s32.totalorder %v1267, %v1264
    %v1272 = vsel %vm1271, %v1268, 0.0
    %s1273 = scalar_lea.vmem %s1260, 8
    %v1274 = vld [vmem:[%s1273] sm:$0x3]
    %v1276 = vadd.s32 %v1267, 8
    %vm1277 = vcmp.eq.s32.totalorder %v1276, %v1264
    %v1278 = vsel %vm1277, %v1274, %v1272
    %v1279 = vrot.slane %v1278, 4
    %v1280 = vadd.f32 %v1278, %v1279
    %v1281 = vrot.slane %v1280, 2
    %v1282 = vadd.f32 %v1280, %v1281
    %v1283 = vrot.slane %v1282, 1
    %v1284 = vadd.f32 %v1282, %v1283
    %1285 = vst [vmem:[%s1261] sm:$0x1] %v1284
    %s1286 = smov [#allocation18]
    %s1287 = smov [#allocation6]
    %v1288 = vlaneseq
    %v1289 = vand.u32 %v1288, 127
    %v1290 = vmov %v1289
    %v1291 = vlaneseq
    %v1292 = vshrl.u32 %v1291, 7
    %v1293 = vmov %v1292
    %v1294 = vld [vmem:[%s1286] sm:$0xff]
    %vm1297 = vcmp.eq.s32.totalorder %v1293, %v1290
    %v1298 = vsel %vm1297, %v1294, 0.0
    %s1299 = scalar_lea.vmem %s1286, 8
    %v1300 = vld [vmem:[%s1299] sm:$0x3]
    %v1302 = vadd.s32 %v1293, 8
    %vm1303 = vcmp.eq.s32.totalorder %v1302, %v1290
    %v1304 = vsel %vm1303, %v1300, %v1298
    %v1305 = vrot.slane %v1304, 4
    %v1306 = vadd.f32 %v1304, %v1305
    %v1307 = vrot.slane %v1306, 2
    %v1308 = vadd.f32 %v1306, %v1307
    %v1309 = vrot.slane %v1308, 1
    %v1310 = vadd.f32 %v1308, %v1309
    %1311 = vst [vmem:[%s1287] sm:$0x1] %v1310
    %s1313 = ssub.s32 2, 1
    %v1314 = vld [vmem:[#allocation4] sm:%s1313]
    %s1316 = ssub.s32 2, 1
    %1317 = vst [vmem:[#allocation5] sm:%s1316] %v1314
    %s1319 = ssub.s32 2, 1
    %v1320 = vld [vmem:[#allocation6] sm:%s1319]
    %s1322 = ssub.s32 2, 1
    %1323 = vst [vmem:[#allocation7] sm:%s1322] %v1320
    // Predicated region
    $region104: #{custom-call.10} parent=1 // pred_check
      _
    $region105: #{custom-call.10} parent=1 // pred_check_branch
      %1325 = sbr.rel (0) target = $region107
    $region106: #{custom-call.10} parent=1 // pred_region
      // Predicated region
      $region108: #{custom-call.10} parent=106 // pred_check
        _
      $region109: #{custom-call.10} parent=106 // pred_check_branch
        %1327 = sbr.rel (0) target = $region111
      $region110: #{custom-call.10} parent=106 // pred_region
        %p1329 = scmp.gt.s32.totalorder 0, 0
        // Predicated region
        $region112: #{custom-call.10} parent=110 // pred_check
          %p1330 = pneg %p1329
        $region113: #{custom-call.10} parent=110 // pred_check_branch
          %1332 = sbr.rel (%p1330) target = $region115
        $region114: #{custom-call.10} parent=110 // pred_region
          %s1333 = ssub.s32 0, 1
          %s1334 = smul.u32 %s1333, 8
          %s1335 = scalar_lea.vmem [#allocation5], %s1334
          %v1336 = vld [vmem:[#allocation5] sm:$0xff]
          // While loop
          $region116: #{custom-call.10} parent=114 // loop_pre_header
            _
          $region117: #{custom-call.10} parent=114 // loop_header
            %s1337 = sphi [#allocation5], %s1359
            %s1338 = sphi %s4, %s1360
            %v1339 = vphi %v1336, %v1361
            %s1340 = ssub.s32 %s1335, 64
            %p1341 = scmp.gt.s32.totalorder %s1337, %s1340
          $region118: #{custom-call.10} parent=114 // loop_header_branch
            %1343 = sbr.rel (%p1341) target = $region122
          $region119: #{custom-call.10} parent=114 // loop_body
            %1344 = vst [vmem:[%s1338] sm:$0xff] %v1339
            %v1345 = vld [vmem:[%s1337 + $0x8] sm:$0xff]
            %1346 = vst [vmem:[%s1338 + $0x8] sm:$0xff] %v1345
            %v1347 = vld [vmem:[%s1337 + $0x10] sm:$0xff]
            %1348 = vst [vmem:[%s1338 + $0x10] sm:$0xff] %v1347
            %v1349 = vld [vmem:[%s1337 + $0x18] sm:$0xff]
            %1350 = vst [vmem:[%s1338 + $0x18] sm:$0xff] %v1349
            %v1351 = vld [vmem:[%s1337 + $0x20] sm:$0xff]
            %1352 = vst [vmem:[%s1338 + $0x20] sm:$0xff] %v1351
            %v1353 = vld [vmem:[%s1337 + $0x28] sm:$0xff]
            %1354 = vst [vmem:[%s1338 + $0x28] sm:$0xff] %v1353
            %v1355 = vld [vmem:[%s1337 + $0x30] sm:$0xff]
            %1356 = vst [vmem:[%s1338 + $0x30] sm:$0xff] %v1355
            %v1357 = vld [vmem:[%s1337 + $0x38] sm:$0xff]
            %1358 = vst [vmem:[%s1338 + $0x38] sm:$0xff] %v1357
          $region120: #{custom-call.10} parent=114 // loop_footer
            %s1359 = scalar_lea.vmem %s1337, 64
            %s1360 = scalar_lea.vmem %s1338, 64
            %v1361 = vld [vmem:[%s1337 + $0x40] sm:$0xff]
          $region121: #{custom-call.10} parent=114 // loop_footer_branch
            %1362 = sbr.rel target = $region117
          $region122: #{custom-call.10} parent=114 // loop_exit
            _
          // While loop
          $region123: #{custom-call.10} parent=114 // loop_pre_header
            _
          $region124: #{custom-call.10} parent=114 // loop_header
            %s1363 = sphi %s1337, %s1371
            %s1364 = sphi %s1338, %s1372
            %v1365 = vphi %v1339, %v1365
            %p1366 = scmp.gt.s32.totalorder %s1363, %s1335
          $region125: #{custom-call.10} parent=114 // loop_header_branch
            %1368 = sbr.rel (%p1366) target = $region129
          $region126: #{custom-call.10} parent=114 // loop_body
            %v1369 = vld [vmem:[%s1363] sm:$0xff]
            %1370 = vst [vmem:[%s1364] sm:$0xff] %v1369
          $region127: #{custom-call.10} parent=114 // loop_footer
            %s1371 = scalar_lea.vmem %s1363, 8
            %s1372 = scalar_lea.vmem %s1364, 8
          $region128: #{custom-call.10} parent=114 // loop_footer_branch
            %1373 = sbr.rel target = $region124
          $region129: #{custom-call.10} parent=114 // loop_exit
            _
        $region115: #{custom-call.10} parent=110 // pred_fallthru
          _
        %s1375 = ssub.s32 2, 1
        %s1376 = smul.u32 0, 8
        %s1377 = scalar_lea.vmem %s4, %s1376
        %s1378 = smul.u32 0, 8
        %s1379 = scalar_lea.vmem [#allocation5], %s1378
        %v1380 = vld [vmem:[%s1379] sm:%s1375]
        %1381 = vst [vmem:[%s1377] sm:%s1375] %v1380
      $region111: #{custom-call.10} parent=106 // pred_fallthru
        _
    $region107: #{custom-call.10} parent=1 // pred_fallthru
      _
    // Predicated region
    $region130: #{custom-call.10} parent=1 // pred_check
      _
    $region131: #{custom-call.10} parent=1 // pred_check_branch
      %1383 = sbr.rel (0) target = $region133
    $region132: #{custom-call.10} parent=1 // pred_region
      // Predicated region
      $region134: #{custom-call.10} parent=132 // pred_check
        _
      $region135: #{custom-call.10} parent=132 // pred_check_branch
        %1385 = sbr.rel (0) target = $region137
      $region136: #{custom-call.10} parent=132 // pred_region
        %p1387 = scmp.gt.s32.totalorder 0, 0
        // Predicated region
        $region138: #{custom-call.10} parent=136 // pred_check
          %p1388 = pneg %p1387
        $region139: #{custom-call.10} parent=136 // pred_check_branch
          %1390 = sbr.rel (%p1388) target = $region141
        $region140: #{custom-call.10} parent=136 // pred_region
          %s1391 = ssub.s32 0, 1
          %s1392 = smul.u32 %s1391, 8
          %s1393 = scalar_lea.vmem [#allocation7], %s1392
          %v1394 = vld [vmem:[#allocation7] sm:$0xff]
          // While loop
          $region142: #{custom-call.10} parent=140 // loop_pre_header
            _
          $region143: #{custom-call.10} parent=140 // loop_header
            %s1395 = sphi [#allocation7], %s1417
            %s1396 = sphi %s5, %s1418
            %v1397 = vphi %v1394, %v1419
            %s1398 = ssub.s32 %s1393, 64
            %p1399 = scmp.gt.s32.totalorder %s1395, %s1398
          $region144: #{custom-call.10} parent=140 // loop_header_branch
            %1401 = sbr.rel (%p1399) target = $region148
          $region145: #{custom-call.10} parent=140 // loop_body
            %1402 = vst [vmem:[%s1396] sm:$0xff] %v1397
            %v1403 = vld [vmem:[%s1395 + $0x8] sm:$0xff]
            %1404 = vst [vmem:[%s1396 + $0x8] sm:$0xff] %v1403
            %v1405 = vld [vmem:[%s1395 + $0x10] sm:$0xff]
            %1406 = vst [vmem:[%s1396 + $0x10] sm:$0xff] %v1405
            %v1407 = vld [vmem:[%s1395 + $0x18] sm:$0xff]
            %1408 = vst [vmem:[%s1396 + $0x18] sm:$0xff] %v1407
            %v1409 = vld [vmem:[%s1395 + $0x20] sm:$0xff]
            %1410 = vst [vmem:[%s1396 + $0x20] sm:$0xff] %v1409
            %v1411 = vld [vmem:[%s1395 + $0x28] sm:$0xff]
            %1412 = vst [vmem:[%s1396 + $0x28] sm:$0xff] %v1411
            %v1413 = vld [vmem:[%s1395 + $0x30] sm:$0xff]
            %1414 = vst [vmem:[%s1396 + $0x30] sm:$0xff] %v1413
            %v1415 = vld [vmem:[%s1395 + $0x38] sm:$0xff]
            %1416 = vst [vmem:[%s1396 + $0x38] sm:$0xff] %v1415
          $region146: #{custom-call.10} parent=140 // loop_footer
            %s1417 = scalar_lea.vmem %s1395, 64
            %s1418 = scalar_lea.vmem %s1396, 64
            %v1419 = vld [vmem:[%s1395 + $0x40] sm:$0xff]
          $region147: #{custom-call.10} parent=140 // loop_footer_branch
            %1420 = sbr.rel target = $region143
          $region148: #{custom-call.10} parent=140 // loop_exit
            _
          // While loop
          $region149: #{custom-call.10} parent=140 // loop_pre_header
            _
          $region150: #{custom-call.10} parent=140 // loop_header
            %s1421 = sphi %s1395, %s1429
            %s1422 = sphi %s1396, %s1430
            %v1423 = vphi %v1397, %v1423
            %p1424 = scmp.gt.s32.totalorder %s1421, %s1393
          $region151: #{custom-call.10} parent=140 // loop_header_branch
            %1426 = sbr.rel (%p1424) target = $region155
          $region152: #{custom-call.10} parent=140 // loop_body
            %v1427 = vld [vmem:[%s1421] sm:$0xff]
            %1428 = vst [vmem:[%s1422] sm:$0xff] %v1427
          $region153: #{custom-call.10} parent=140 // loop_footer
            %s1429 = scalar_lea.vmem %s1421, 8
            %s1430 = scalar_lea.vmem %s1422, 8
          $region154: #{custom-call.10} parent=140 // loop_footer_branch
            %1431 = sbr.rel target = $region150
          $region155: #{custom-call.10} parent=140 // loop_exit
            _
        $region141: #{custom-call.10} parent=136 // pred_fallthru
          _
        %s1433 = ssub.s32 2, 1
        %s1434 = smul.u32 0, 8
        %s1435 = scalar_lea.vmem %s5, %s1434
        %s1436 = smul.u32 0, 8
        %s1437 = scalar_lea.vmem [#allocation7], %s1436
        %v1438 = vld [vmem:[%s1437] sm:%s1433]
        %1439 = vst [vmem:[%s1435] sm:%s1433] %v1438
      $region137: #{custom-call.10} parent=132 // pred_fallthru
        _
    $region133: #{custom-call.10} parent=1 // pred_fallthru
      _
    %1441 = vsyncadd [#allocation9], 0
    %s1443 = sshll.u32 [#allocation8], 4
    %s1444 = int_to_ptr.vmem [resolvable:$true] %s1443
    %s1445 = sshll.u32 %s6, 4
    %s1446 = int_to_ptr.hbm [resolvable:$true] %s1445
    %1448 = dma.vmem_to_hbm [thread:$0]  %s1444, 256, %s1446, [#allocation9]
    %1450 = vsyncadd [#allocation11], 0
    %s1452 = sshll.u32 [#allocation10], 4
    %s1453 = int_to_ptr.vmem [resolvable:$true] %s1452
    %s1454 = sshll.u32 %s7, 4
    %s1455 = int_to_ptr.hbm [resolvable:$true] %s1454
    %1457 = dma.vmem_to_hbm [thread:$0]  %s1453, 256, %s1455, [#allocation11]
    %1459 = vsyncadd [#allocation11], 0
    %s1461 = sshll.u32 [#allocation12], 4
    %s1462 = int_to_ptr.vmem [resolvable:$true] %s1461
    %s1463 = sshll.u32 %s8, 4
    %s1464 = int_to_ptr.hbm [resolvable:$true] %s1463
    %1466 = dma.vmem_to_hbm [thread:$0]  %s1462, 256, %s1464, [#allocation11]
    %1468 = vsyncadd [#allocation14], 0
    %s1470 = sshll.u32 [#allocation13], 4
    %s1471 = int_to_ptr.vmem [resolvable:$true] %s1470
    %s1472 = sshll.u32 %s9, 4
    %s1473 = int_to_ptr.hbm [resolvable:$true] %s1472
    %1475 = dma.vmem_to_hbm [thread:$0]  %s1471, 256, %s1473, [#allocation14]
    // Predicated region
    $region156: #{custom-call.10} parent=1 // pred_check
      _
    $region157: #{custom-call.10} parent=1 // pred_check_branch
      %1477 = sbr.rel (0) target = $region159
    $region158: #{custom-call.10} parent=1 // pred_region
      _
    $region159: #{custom-call.10} parent=1 // pred_fallthru
      _
    // Predicated region
    $region160: #{custom-call.10} parent=1 // pred_check
      _
    $region161: #{custom-call.10} parent=1 // pred_check_branch
      %1479 = sbr.rel (0) target = $region163
    $region162: #{custom-call.10} parent=1 // pred_region
      _
    $region163: #{custom-call.10} parent=1 // pred_fallthru
      _
    %1481 = dma.done [#allocation9], 256
    %1483 = dma.done [#allocation11], 256
    %1485 = dma.done [#allocation11], 256
    %1487 = dma.done [#allocation14], 256
    %1488 = vsyncpa [#allocation9], 1
    %1489 = vsyncpa [#allocation11], 1
    %1490 = vsyncpa [#allocation14], 1

// kernel: custom-call.9
$region0: #{custom-call.9}
  %s0 = inlined_call_operand.vmem [shape: f32[6,6], index: 0, kind: input, shape index: {}]
  %s1 = inlined_call_operand.vmem [shape: f32[6,6], index: 1, kind: input, shape index: {}]
  %s2 = inlined_call_operand.vmem [shape: f32[6,6], index: 2, kind: input, shape index: {}]
  %s3 = inlined_call_operand.vmem [shape: f32[6,6], index: 3, kind: input, shape index: {}]
  %s4 = inlined_call_operand.vmem [shape: f32[6], index: 4, kind: output, shape index: {0}]
  %s5 = inlined_call_operand.vmem [shape: f32[6], index: 5, kind: output, shape index: {1}]
  %s6 = inlined_call_operand.hbm [shape: f32[6,6], index: 6, kind: output, shape index: {2}]
  %s7 = inlined_call_operand.hbm [shape: f32[6,6], index: 7, kind: output, shape index: {3}]
  %s8 = inlined_call_operand.hbm [shape: f32[6,6], index: 8, kind: output, shape index: {4}]
  %s9 = inlined_call_operand.hbm [shape: f32[6,6], index: 9, kind: output, shape index: {5}]
  %10 = xla_tuple %s4, %s5, %s6, %s7, %s8, %s9
  $region1: #{custom-call.9} parent=0
    #allocation0 [shape = 'u8[4096]{0}', space=vmem, size = 0x1000, scoped, tag = 'operand span for operand 0']
    #allocation1 [shape = 'u8[4096]{0}', space=vmem, size = 0x1000, scoped, tag = 'operand span for operand 1']
    #allocation2 [shape = 'u8[4096]{0}', space=vmem, size = 0x1000, scoped, tag = 'operand span for operand 2']
    #allocation3 [shape = 'u8[4096]{0}', space=vmem, size = 0x1000, scoped, tag = 'operand span for operand 3']
    #allocation4 [shape = 'u8[4096]{0}', space=vmem, size = 0x1000, scoped, tag = 'operand span for operand 4']
    #allocation5 [shape = 'u8[512]{0}', space=vmem, size = 0x400, scoped, tag = 'packed  for operand 4']
    #allocation6 [shape = 'u8[4096]{0}', space=vmem, size = 0x1000, scoped, tag = 'operand span for operand 5']
    #allocation7 [shape = 'u8[512]{0}', space=vmem, size = 0x400, scoped, tag = 'packed  for operand 5']
    #allocation8 [shape = 'u8[4096]{0}', space=vmem, size = 0x1000, scoped, tag = 'operand span for operand 6']
    #allocation9 [shape = 's32[1]{0}', space=sflag, size = 0x4, scoped, tag = 'scoped memory for custom-call.9']
    #allocation10 [shape = 'u8[4096]{0}', space=vmem, size = 0x1000, scoped, tag = 'operand span for operand 7']
    #allocation11 [shape = 's32[1]{0}', space=sflag, size = 0x4, scoped, tag = 'scoped memory for custom-call.9']
    #allocation12 [shape = 'u8[4096]{0}', space=vmem, size = 0x1000, scoped, tag = 'operand span for operand 8']
    #allocation13 [shape = 'u8[4096]{0}', space=vmem, size = 0x1000, scoped, tag = 'operand span for operand 9']
    #allocation14 [shape = 's32[1]{0}', space=sflag, size = 0x4, scoped, tag = 'scoped memory for custom-call.9']
    #allocation15 [shape = 'f32[6,6]{1,0}', space=vmem, size = 0x1000, scoped, tag = 'a top-left matrix']
    #allocation16 [shape = 'f32[6,6]{1,0}', space=vmem, size = 0x1000, scoped, tag = 'a top-right matrix']
    #allocation17 [shape = 'f32[6,6]{1,0}', space=vmem, size = 0x1000, scoped, tag = 'a bottom-left matrix']
    #allocation18 [shape = 'f32[6,6]{1,0}', space=vmem, size = 0x1000, scoped, tag = 'a bottom-right matrix']
    %11 = vsyncpa [#allocation9], 0
    %12 = vsyncpa [#allocation11], 0
    %13 = vsyncpa [#allocation14], 0
    // Predicated region
    $region2: #{custom-call.9} parent=1 // pred_check
      _
    $region3: #{custom-call.9} parent=1 // pred_check_branch
      %15 = sbr.rel (0) target = $region5
    $region4: #{custom-call.9} parent=1 // pred_region
      %p17 = scmp.gt.s32.totalorder 1, 0
      // Predicated region
      $region6: #{custom-call.9} parent=4 // pred_check
        %p18 = pneg %p17
      $region7: #{custom-call.9} parent=4 // pred_check_branch
        %20 = sbr.rel (%p18) target = $region9
      $region8: #{custom-call.9} parent=4 // pred_region
        %s21 = ssub.s32 1, 1
        %s22 = smul.u32 %s21, 8
        %s23 = scalar_lea.vmem %s0, %s22
        %v24 = vld [vmem:[%s0] sm:$0xff]
        // While loop
        $region10: #{custom-call.9} parent=8 // loop_pre_header
          _
        $region11: #{custom-call.9} parent=8 // loop_header
          %s25 = sphi %s0, %s47
          %s26 = sphi [#allocation0], %s48
          %v27 = vphi %v24, %v49
          %s28 = ssub.s32 %s23, 64
          %p29 = scmp.gt.s32.totalorder %s25, %s28
        $region12: #{custom-call.9} parent=8 // loop_header_branch
          %31 = sbr.rel (%p29) target = $region16
        $region13: #{custom-call.9} parent=8 // loop_body
          %32 = vst [vmem:[%s26] sm:$0xff] %v27
          %v33 = vld [vmem:[%s25 + $0x8] sm:$0xff]
          %34 = vst [vmem:[%s26 + $0x8] sm:$0xff] %v33
          %v35 = vld [vmem:[%s25 + $0x10] sm:$0xff]
          %36 = vst [vmem:[%s26 + $0x10] sm:$0xff] %v35
          %v37 = vld [vmem:[%s25 + $0x18] sm:$0xff]
          %38 = vst [vmem:[%s26 + $0x18] sm:$0xff] %v37
          %v39 = vld [vmem:[%s25 + $0x20] sm:$0xff]
          %40 = vst [vmem:[%s26 + $0x20] sm:$0xff] %v39
          %v41 = vld [vmem:[%s25 + $0x28] sm:$0xff]
          %42 = vst [vmem:[%s26 + $0x28] sm:$0xff] %v41
          %v43 = vld [vmem:[%s25 + $0x30] sm:$0xff]
          %44 = vst [vmem:[%s26 + $0x30] sm:$0xff] %v43
          %v45 = vld [vmem:[%s25 + $0x38] sm:$0xff]
          %46 = vst [vmem:[%s26 + $0x38] sm:$0xff] %v45
        $region14: #{custom-call.9} parent=8 // loop_footer
          %s47 = scalar_lea.vmem %s25, 64
          %s48 = scalar_lea.vmem %s26, 64
          %v49 = vld [vmem:[%s25 + $0x40] sm:$0xff]
        $region15: #{custom-call.9} parent=8 // loop_footer_branch
          %50 = sbr.rel target = $region11
        $region16: #{custom-call.9} parent=8 // loop_exit
          _
        // While loop
        $region17: #{custom-call.9} parent=8 // loop_pre_header
          _
        $region18: #{custom-call.9} parent=8 // loop_header
          %s51 = sphi %s25, %s59
          %s52 = sphi %s26, %s60
          %v53 = vphi %v27, %v53
          %p54 = scmp.gt.s32.totalorder %s51, %s23
        $region19: #{custom-call.9} parent=8 // loop_header_branch
          %56 = sbr.rel (%p54) target = $region23
        $region20: #{custom-call.9} parent=8 // loop_body
          %v57 = vld [vmem:[%s51] sm:$0xff]
          %58 = vst [vmem:[%s52] sm:$0xff] %v57
        $region21: #{custom-call.9} parent=8 // loop_footer
          %s59 = scalar_lea.vmem %s51, 8
          %s60 = scalar_lea.vmem %s52, 8
        $region22: #{custom-call.9} parent=8 // loop_footer_branch
          %61 = sbr.rel target = $region18
        $region23: #{custom-call.9} parent=8 // loop_exit
          _
      $region9: #{custom-call.9} parent=4 // pred_fallthru
        _
      %s63 = ssub.s32 1, 1
      %s64 = smul.u32 1, 8
      %s65 = scalar_lea.vmem [#allocation0], %s64
      %s66 = smul.u32 1, 8
      %s67 = scalar_lea.vmem %s0, %s66
      %v68 = vld [vmem:[%s67] sm:%s63]
      %69 = vst [vmem:[%s65] sm:%s63] %v68
    $region5: #{custom-call.9} parent=1 // pred_fallthru
      _
    // Predicated region
    $region24: #{custom-call.9} parent=1 // pred_check
      _
    $region25: #{custom-call.9} parent=1 // pred_check_branch
      %71 = sbr.rel (0) target = $region27
    $region26: #{custom-call.9} parent=1 // pred_region
      %p73 = scmp.gt.s32.totalorder 1, 0
      // Predicated region
      $region28: #{custom-call.9} parent=26 // pred_check
        %p74 = pneg %p73
      $region29: #{custom-call.9} parent=26 // pred_check_branch
        %76 = sbr.rel (%p74) target = $region31
      $region30: #{custom-call.9} parent=26 // pred_region
        %s77 = ssub.s32 1, 1
        %s78 = smul.u32 %s77, 8
        %s79 = scalar_lea.vmem %s1, %s78
        %v80 = vld [vmem:[%s1] sm:$0xff]
        // While loop
        $region32: #{custom-call.9} parent=30 // loop_pre_header
          _
        $region33: #{custom-call.9} parent=30 // loop_header
          %s81 = sphi %s1, %s103
          %s82 = sphi [#allocation1], %s104
          %v83 = vphi %v80, %v105
          %s84 = ssub.s32 %s79, 64
          %p85 = scmp.gt.s32.totalorder %s81, %s84
        $region34: #{custom-call.9} parent=30 // loop_header_branch
          %87 = sbr.rel (%p85) target = $region38
        $region35: #{custom-call.9} parent=30 // loop_body
          %88 = vst [vmem:[%s82] sm:$0xff] %v83
          %v89 = vld [vmem:[%s81 + $0x8] sm:$0xff]
          %90 = vst [vmem:[%s82 + $0x8] sm:$0xff] %v89
          %v91 = vld [vmem:[%s81 + $0x10] sm:$0xff]
          %92 = vst [vmem:[%s82 + $0x10] sm:$0xff] %v91
          %v93 = vld [vmem:[%s81 + $0x18] sm:$0xff]
          %94 = vst [vmem:[%s82 + $0x18] sm:$0xff] %v93
          %v95 = vld [vmem:[%s81 + $0x20] sm:$0xff]
          %96 = vst [vmem:[%s82 + $0x20] sm:$0xff] %v95
          %v97 = vld [vmem:[%s81 + $0x28] sm:$0xff]
          %98 = vst [vmem:[%s82 + $0x28] sm:$0xff] %v97
          %v99 = vld [vmem:[%s81 + $0x30] sm:$0xff]
          %100 = vst [vmem:[%s82 + $0x30] sm:$0xff] %v99
          %v101 = vld [vmem:[%s81 + $0x38] sm:$0xff]
          %102 = vst [vmem:[%s82 + $0x38] sm:$0xff] %v101
        $region36: #{custom-call.9} parent=30 // loop_footer
          %s103 = scalar_lea.vmem %s81, 64
          %s104 = scalar_lea.vmem %s82, 64
          %v105 = vld [vmem:[%s81 + $0x40] sm:$0xff]
        $region37: #{custom-call.9} parent=30 // loop_footer_branch
          %106 = sbr.rel target = $region33
        $region38: #{custom-call.9} parent=30 // loop_exit
          _
        // While loop
        $region39: #{custom-call.9} parent=30 // loop_pre_header
          _
        $region40: #{custom-call.9} parent=30 // loop_header
          %s107 = sphi %s81, %s115
          %s108 = sphi %s82, %s116
          %v109 = vphi %v83, %v109
          %p110 = scmp.gt.s32.totalorder %s107, %s79
        $region41: #{custom-call.9} parent=30 // loop_header_branch
          %112 = sbr.rel (%p110) target = $region45
        $region42: #{custom-call.9} parent=30 // loop_body
          %v113 = vld [vmem:[%s107] sm:$0xff]
          %114 = vst [vmem:[%s108] sm:$0xff] %v113
        $region43: #{custom-call.9} parent=30 // loop_footer
          %s115 = scalar_lea.vmem %s107, 8
          %s116 = scalar_lea.vmem %s108, 8
        $region44: #{custom-call.9} parent=30 // loop_footer_branch
          %117 = sbr.rel target = $region40
        $region45: #{custom-call.9} parent=30 // loop_exit
          _
      $region31: #{custom-call.9} parent=26 // pred_fallthru
        _
      %s119 = ssub.s32 1, 1
      %s120 = smul.u32 1, 8
      %s121 = scalar_lea.vmem [#allocation1], %s120
      %s122 = smul.u32 1, 8
      %s123 = scalar_lea.vmem %s1, %s122
      %v124 = vld [vmem:[%s123] sm:%s119]
      %125 = vst [vmem:[%s121] sm:%s119] %v124
    $region27: #{custom-call.9} parent=1 // pred_fallthru
      _
    // Predicated region
    $region46: #{custom-call.9} parent=1 // pred_check
      _
    $region47: #{custom-call.9} parent=1 // pred_check_branch
      %127 = sbr.rel (0) target = $region49
    $region48: #{custom-call.9} parent=1 // pred_region
      %p129 = scmp.gt.s32.totalorder 1, 0
      // Predicated region
      $region50: #{custom-call.9} parent=48 // pred_check
        %p130 = pneg %p129
      $region51: #{custom-call.9} parent=48 // pred_check_branch
        %132 = sbr.rel (%p130) target = $region53
      $region52: #{custom-call.9} parent=48 // pred_region
        %s133 = ssub.s32 1, 1
        %s134 = smul.u32 %s133, 8
        %s135 = scalar_lea.vmem %s2, %s134
        %v136 = vld [vmem:[%s2] sm:$0xff]
        // While loop
        $region54: #{custom-call.9} parent=52 // loop_pre_header
          _
        $region55: #{custom-call.9} parent=52 // loop_header
          %s137 = sphi %s2, %s159
          %s138 = sphi [#allocation2], %s160
          %v139 = vphi %v136, %v161
          %s140 = ssub.s32 %s135, 64
          %p141 = scmp.gt.s32.totalorder %s137, %s140
        $region56: #{custom-call.9} parent=52 // loop_header_branch
          %143 = sbr.rel (%p141) target = $region60
        $region57: #{custom-call.9} parent=52 // loop_body
          %144 = vst [vmem:[%s138] sm:$0xff] %v139
          %v145 = vld [vmem:[%s137 + $0x8] sm:$0xff]
          %146 = vst [vmem:[%s138 + $0x8] sm:$0xff] %v145
          %v147 = vld [vmem:[%s137 + $0x10] sm:$0xff]
          %148 = vst [vmem:[%s138 + $0x10] sm:$0xff] %v147
          %v149 = vld [vmem:[%s137 + $0x18] sm:$0xff]
          %150 = vst [vmem:[%s138 + $0x18] sm:$0xff] %v149
          %v151 = vld [vmem:[%s137 + $0x20] sm:$0xff]
          %152 = vst [vmem:[%s138 + $0x20] sm:$0xff] %v151
          %v153 = vld [vmem:[%s137 + $0x28] sm:$0xff]
          %154 = vst [vmem:[%s138 + $0x28] sm:$0xff] %v153
          %v155 = vld [vmem:[%s137 + $0x30] sm:$0xff]
          %156 = vst [vmem:[%s138 + $0x30] sm:$0xff] %v155
          %v157 = vld [vmem:[%s137 + $0x38] sm:$0xff]
          %158 = vst [vmem:[%s138 + $0x38] sm:$0xff] %v157
        $region58: #{custom-call.9} parent=52 // loop_footer
          %s159 = scalar_lea.vmem %s137, 64
          %s160 = scalar_lea.vmem %s138, 64
          %v161 = vld [vmem:[%s137 + $0x40] sm:$0xff]
        $region59: #{custom-call.9} parent=52 // loop_footer_branch
          %162 = sbr.rel target = $region55
        $region60: #{custom-call.9} parent=52 // loop_exit
          _
        // While loop
        $region61: #{custom-call.9} parent=52 // loop_pre_header
          _
        $region62: #{custom-call.9} parent=52 // loop_header
          %s163 = sphi %s137, %s171
          %s164 = sphi %s138, %s172
          %v165 = vphi %v139, %v165
          %p166 = scmp.gt.s32.totalorder %s163, %s135
        $region63: #{custom-call.9} parent=52 // loop_header_branch
          %168 = sbr.rel (%p166) target = $region67
        $region64: #{custom-call.9} parent=52 // loop_body
          %v169 = vld [vmem:[%s163] sm:$0xff]
          %170 = vst [vmem:[%s164] sm:$0xff] %v169
        $region65: #{custom-call.9} parent=52 // loop_footer
          %s171 = scalar_lea.vmem %s163, 8
          %s172 = scalar_lea.vmem %s164, 8
        $region66: #{custom-call.9} parent=52 // loop_footer_branch
          %173 = sbr.rel target = $region62
        $region67: #{custom-call.9} parent=52 // loop_exit
          _
      $region53: #{custom-call.9} parent=48 // pred_fallthru
        _
      %s175 = ssub.s32 1, 1
      %s176 = smul.u32 1, 8
      %s177 = scalar_lea.vmem [#allocation2], %s176
      %s178 = smul.u32 1, 8
      %s179 = scalar_lea.vmem %s2, %s178
      %v180 = vld [vmem:[%s179] sm:%s175]
      %181 = vst [vmem:[%s177] sm:%s175] %v180
    $region49: #{custom-call.9} parent=1 // pred_fallthru
      _
    // Predicated region
    $region68: #{custom-call.9} parent=1 // pred_check
      _
    $region69: #{custom-call.9} parent=1 // pred_check_branch
      %183 = sbr.rel (0) target = $region71
    $region70: #{custom-call.9} parent=1 // pred_region
      %p185 = scmp.gt.s32.totalorder 1, 0
      // Predicated region
      $region72: #{custom-call.9} parent=70 // pred_check
        %p186 = pneg %p185
      $region73: #{custom-call.9} parent=70 // pred_check_branch
        %188 = sbr.rel (%p186) target = $region75
      $region74: #{custom-call.9} parent=70 // pred_region
        %s189 = ssub.s32 1, 1
        %s190 = smul.u32 %s189, 8
        %s191 = scalar_lea.vmem %s3, %s190
        %v192 = vld [vmem:[%s3] sm:$0xff]
        // While loop
        $region76: #{custom-call.9} parent=74 // loop_pre_header
          _
        $region77: #{custom-call.9} parent=74 // loop_header
          %s193 = sphi %s3, %s215
          %s194 = sphi [#allocation3], %s216
          %v195 = vphi %v192, %v217
          %s196 = ssub.s32 %s191, 64
          %p197 = scmp.gt.s32.totalorder %s193, %s196
        $region78: #{custom-call.9} parent=74 // loop_header_branch
          %199 = sbr.rel (%p197) target = $region82
        $region79: #{custom-call.9} parent=74 // loop_body
          %200 = vst [vmem:[%s194] sm:$0xff] %v195
          %v201 = vld [vmem:[%s193 + $0x8] sm:$0xff]
          %202 = vst [vmem:[%s194 + $0x8] sm:$0xff] %v201
          %v203 = vld [vmem:[%s193 + $0x10] sm:$0xff]
          %204 = vst [vmem:[%s194 + $0x10] sm:$0xff] %v203
          %v205 = vld [vmem:[%s193 + $0x18] sm:$0xff]
          %206 = vst [vmem:[%s194 + $0x18] sm:$0xff] %v205
          %v207 = vld [vmem:[%s193 + $0x20] sm:$0xff]
          %208 = vst [vmem:[%s194 + $0x20] sm:$0xff] %v207
          %v209 = vld [vmem:[%s193 + $0x28] sm:$0xff]
          %210 = vst [vmem:[%s194 + $0x28] sm:$0xff] %v209
          %v211 = vld [vmem:[%s193 + $0x30] sm:$0xff]
          %212 = vst [vmem:[%s194 + $0x30] sm:$0xff] %v211
          %v213 = vld [vmem:[%s193 + $0x38] sm:$0xff]
          %214 = vst [vmem:[%s194 + $0x38] sm:$0xff] %v213
        $region80: #{custom-call.9} parent=74 // loop_footer
          %s215 = scalar_lea.vmem %s193, 64
          %s216 = scalar_lea.vmem %s194, 64
          %v217 = vld [vmem:[%s193 + $0x40] sm:$0xff]
        $region81: #{custom-call.9} parent=74 // loop_footer_branch
          %218 = sbr.rel target = $region77
        $region82: #{custom-call.9} parent=74 // loop_exit
          _
        // While loop
        $region83: #{custom-call.9} parent=74 // loop_pre_header
          _
        $region84: #{custom-call.9} parent=74 // loop_header
          %s219 = sphi %s193, %s227
          %s220 = sphi %s194, %s228
          %v221 = vphi %v195, %v221
          %p222 = scmp.gt.s32.totalorder %s219, %s191
        $region85: #{custom-call.9} parent=74 // loop_header_branch
          %224 = sbr.rel (%p222) target = $region89
        $region86: #{custom-call.9} parent=74 // loop_body
          %v225 = vld [vmem:[%s219] sm:$0xff]
          %226 = vst [vmem:[%s220] sm:$0xff] %v225
        $region87: #{custom-call.9} parent=74 // loop_footer
          %s227 = scalar_lea.vmem %s219, 8
          %s228 = scalar_lea.vmem %s220, 8
        $region88: #{custom-call.9} parent=74 // loop_footer_branch
          %229 = sbr.rel target = $region84
        $region89: #{custom-call.9} parent=74 // loop_exit
          _
      $region75: #{custom-call.9} parent=70 // pred_fallthru
        _
      %s231 = ssub.s32 1, 1
      %s232 = smul.u32 1, 8
      %s233 = scalar_lea.vmem [#allocation3], %s232
      %s234 = smul.u32 1, 8
      %s235 = scalar_lea.vmem %s3, %s234
      %v236 = vld [vmem:[%s235] sm:%s231]
      %237 = vst [vmem:[%s233] sm:%s231] %v236
    $region71: #{custom-call.9} parent=1 // pred_fallthru
      _
    %s238 = smov [#allocation15]
    %v239 = vld [vmem:[#allocation0] sm:$0xff]
    %240 = vst [vmem:[%s238] sm:$0xff] %v239
    %s241 = smov [#allocation16]
    %v242 = vld [vmem:[#allocation1] sm:$0xff]
    %243 = vst [vmem:[%s241] sm:$0xff] %v242
    %s244 = smov [#allocation17]
    %v245 = vld [vmem:[#allocation2] sm:$0xff]
    %246 = vst [vmem:[%s244] sm:$0xff] %v245
    %s247 = smov [#allocation18]
    %v248 = vld [vmem:[#allocation3] sm:$0xff]
    %249 = vst [vmem:[%s247] sm:$0xff] %v248
    %250 = vst [vmem:[#allocation8] sm:$0xff] 0.0
    %251 = vst [vmem:[#allocation10] sm:$0xff] 0.0
    %252 = vst [vmem:[#allocation12] sm:$0xff] 0.0
    %253 = vst [vmem:[#allocation13] sm:$0xff] 0.0
    %s254 = smov [#allocation8]
    %v255 = vlaneseq
    %v256 = vand.u32 %v255, 127
    %v257 = vmov %v256
    %v258 = vlaneseq
    %v259 = vshrl.u32 %v258, 7
    %v260 = vmov %v259
    %v261 = vld [vmem:[%s254] sm:$0x3f]
    %vm264 = vcmp.eq.s32.totalorder %v260, %v257
    %v265 = vsel %vm264, 1.0, %v261
    %266 = vst [vmem:[%s254] sm:$0x3f] %v265
    %s267 = smov [#allocation13]
    %v268 = vlaneseq
    %v269 = vand.u32 %v268, 127
    %v270 = vmov %v269
    %v271 = vlaneseq
    %v272 = vshrl.u32 %v271, 7
    %v273 = vmov %v272
    %v274 = vld [vmem:[%s267] sm:$0x3f]
    %vm277 = vcmp.eq.s32.totalorder %v273, %v270
    %v278 = vsel %vm277, 1.0, %v274
    %279 = vst [vmem:[%s267] sm:$0x3f] %v278
    // While loop
    $region90: #{custom-call.9} parent=1 // loop_pre_header
      _
    $region91: #{custom-call.9} parent=1 // loop_header
      %s281 = sphi 0, %s863
      %v282 = vlaneseq
      %v283 = vand.u32 %v282, 127
      %v284 = vmov %v283
      %v285 = vlaneseq
      %v286 = vshrl.u32 %v285, 7
      %v287 = vmov %v286
      %s288 = smov [#allocation15]
      %v289 = vlaneseq
      %v290 = vand.u32 %v289, 127
      %vm291 = vcmp.ge.s32.totalorder %v290, 0
      %vm292 = vcmp.lt.s32.totalorder %v290, 6
      %vm293 = vmand %vm291, %vm292
      %v294 = vld [vmem:[%s288] sm:$0x3f]
      %v295 = vsel %vm293, %v294, 0.0
      %v296 = vmul.f32 %v295, %v295
      %vm299 = vcmp.eq.s32.totalorder %v287, %v284
      %v300 = vsel %vm299, 0.0, %v296
      %v301 = vlaneseq
      %v302 = vand.u32 %v301, 127
      %v303 = vmov %v302
      %v304 = vlaneseq
      %v305 = vshrl.u32 %v304, 7
      %v306 = vmov %v305
      %s307 = smov [#allocation16]
      %v308 = vlaneseq
      %v309 = vand.u32 %v308, 127
      %vm310 = vcmp.ge.s32.totalorder %v309, 0
      %vm311 = vcmp.lt.s32.totalorder %v309, 6
      %vm312 = vmand %vm310, %vm311
      %v313 = vld [vmem:[%s307] sm:$0x3f]
      %v314 = vsel %vm312, %v313, 0.0
      %v315 = vmul.f32 %v314, %v314
      %v316 = vadd.f32 %v300, %v315
      %v317 = vadd.f32 %v296, %v315
      %v318 = vlaneseq
      %v319 = vand.u32 %v318, 127
      %v320 = vmov %v319
      %v321 = vlaneseq
      %v322 = vshrl.u32 %v321, 7
      %v323 = vmov %v322
      %s324 = smov [#allocation17]
      %v325 = vlaneseq
      %v326 = vand.u32 %v325, 127
      %vm327 = vcmp.ge.s32.totalorder %v326, 0
      %vm328 = vcmp.lt.s32.totalorder %v326, 6
      %vm329 = vmand %vm327, %vm328
      %v330 = vld [vmem:[%s324] sm:$0x3f]
      %v331 = vsel %vm329, %v330, 0.0
      %v332 = vmul.f32 %v331, %v331
      %v333 = vadd.f32 %v316, %v332
      %v334 = vadd.f32 %v317, %v332
      %v335 = vlaneseq
      %v336 = vand.u32 %v335, 127
      %v337 = vmov %v336
      %v338 = vlaneseq
      %v339 = vshrl.u32 %v338, 7
      %v340 = vmov %v339
      %s341 = smov [#allocation18]
      %v342 = vlaneseq
      %v343 = vand.u32 %v342, 127
      %vm344 = vcmp.ge.s32.totalorder %v343, 0
      %vm345 = vcmp.lt.s32.totalorder %v343, 6
      %vm346 = vmand %vm344, %vm345
      %v347 = vld [vmem:[%s341] sm:$0x3f]
      %v348 = vsel %vm346, %v347, 0.0
      %v349 = vmul.f32 %v348, %v348
      %vm352 = vcmp.eq.s32.totalorder %v340, %v337
      %v353 = vsel %vm352, 0.0, %v349
      %v354 = vadd.f32 %v333, %v353
      %v355 = vadd.f32 %v334, %v349
      %356 = vadd.xlane.f32.xlu0 %v355
      %v357 = vpop.xlane.xlu0 %356
      %v358 = vrot.slane %v357, 4
      %v359 = vadd.f32 %v357, %v358
      %v360 = vrot.slane %v359, 2
      %v361 = vadd.f32 %v359, %v360
      %v362 = vrot.slane %v361, 1
      %v363 = vadd.f32 %v361, %v362
      %364 = vadd.xlane.f32.xlu0 %v354
      %v365 = vpop.xlane.xlu0 %364
      %v366 = vrot.slane %v365, 4
      %v367 = vadd.f32 %v365, %v366
      %v368 = vrot.slane %v367, 2
      %v369 = vadd.f32 %v367, %v368
      %v370 = vrot.slane %v369, 1
      %v371 = vadd.f32 %v369, %v370
      %s372 = vtos %v371
      %s373 = vtos %v363
      %s374 = smul.f32 1e-10, %s373
      %p375 = scmp.le.f32.partialorder %s372, %s374
      %p376 = scmp.ge.s32.totalorder %s281, 15
      %p377 = por %p375, %p376
    $region92: #{custom-call.9} parent=1 // loop_header_branch
      %865 = sbr.rel (%p377) target = $region96
    $region93: #{custom-call.9} parent=1 // loop_body
      loop: start=0, step=1, limit=11
      $region97: #{custom-call.9} parent=93 // loop_pre_header
        _
      $region98: #{custom-call.9} parent=93 // loop_header
        %s379 = sphi 0, %s383
        %p380 = scmp.ge.s32.totalorder %s379, 11
      $region99: #{custom-call.9} parent=93 // loop_header_branch
        %382 = sbr.rel (%p380) target = $region103
      $region100: #{custom-call.9} parent=93 // loop_body
        #allocation19 [shape = 'f32[1024]{0}', space=vmem, size = 0x1000, scoped, tag = 'a_tl_diag vmem']
        #allocation20 [shape = 'f32[1024]{0}', space=vmem, size = 0x1000, scoped, tag = 'a_tr_diag vmem']
        #allocation21 [shape = 'f32[1024]{0}', space=vmem, size = 0x1000, scoped, tag = 'a_br_diag vmem']
        #allocation22 [shape = 'f32[1024]{0}', space=vmem, size = 0x1000, scoped, tag = 'rt1 vmem']
        #allocation23 [shape = 'f32[1024]{0}', space=vmem, size = 0x1000, scoped, tag = 'rt2 vmem']
        #allocation24 [shape = 'f32[1024]{0}', space=vmem, size = 0x1000, scoped, tag = 'c vmem']
        #allocation25 [shape = 'f32[1024]{0}', space=vmem, size = 0x1000, scoped, tag = 's vmem']
        #allocation26 [shape = 'f32[4096]{0}', space=vmem, size = 0x4000, scoped, tag = 'c broadcast']
        #allocation27 [shape = 'f32[4096]{0}', space=vmem, size = 0x4000, scoped, tag = 's broadcast']
        %s384 = smov [#allocation15]
        %s385 = smov [#allocation19]
        %v386 = vlaneseq
        %v387 = vand.u32 %v386, 127
        %v388 = vmov %v387
        %v389 = vlaneseq
        %v390 = vshrl.u32 %v389, 7
        %v391 = vmov %v390
        %v392 = vld [vmem:[%s384] sm:$0x3f]
        %vm395 = vcmp.eq.s32.totalorder %v391, %v388
        %v396 = vsel %vm395, %v392, 0.0
        %v397 = vrot.slane %v396, 4
        %v398 = vadd.f32 %v396, %v397
        %v399 = vrot.slane %v398, 2
        %v400 = vadd.f32 %v398, %v399
        %v401 = vrot.slane %v400, 1
        %v402 = vadd.f32 %v400, %v401
        %403 = vst [vmem:[%s385] sm:$0x1] %v402
        %s404 = smov [#allocation16]
        %s405 = smov [#allocation20]
        %v406 = vlaneseq
        %v407 = vand.u32 %v406, 127
        %v408 = vmov %v407
        %v409 = vlaneseq
        %v410 = vshrl.u32 %v409, 7
        %v411 = vmov %v410
        %v412 = vld [vmem:[%s404] sm:$0x3f]
        %vm415 = vcmp.eq.s32.totalorder %v411, %v408
        %v416 = vsel %vm415, %v412, 0.0
        %v417 = vrot.slane %v416, 4
        %v418 = vadd.f32 %v416, %v417
        %v419 = vrot.slane %v418, 2
        %v420 = vadd.f32 %v418, %v419
        %v421 = vrot.slane %v420, 1
        %v422 = vadd.f32 %v420, %v421
        %423 = vst [vmem:[%s405] sm:$0x1] %v422
        %s424 = smov [#allocation18]
        %s425 = smov [#allocation21]
        %v426 = vlaneseq
        %v427 = vand.u32 %v426, 127
        %v428 = vmov %v427
        %v429 = vlaneseq
        %v430 = vshrl.u32 %v429, 7
        %v431 = vmov %v430
        %v432 = vld [vmem:[%s424] sm:$0x3f]
        %vm435 = vcmp.eq.s32.totalorder %v431, %v428
        %v436 = vsel %vm435, %v432, 0.0
        %v437 = vrot.slane %v436, 4
        %v438 = vadd.f32 %v436, %v437
        %v439 = vrot.slane %v438, 2
        %v440 = vadd.f32 %v438, %v439
        %v441 = vrot.slane %v440, 1
        %v442 = vadd.f32 %v440, %v441
        %443 = vst [vmem:[%s425] sm:$0x1] %v442
        %s444 = smov [#allocation24]
        %s445 = smov [#allocation25]
        %s446 = smov [#allocation19]
        %v447 = vld [vmem:[%s446] sm:$0xff]
        %s448 = smov [#allocation20]
        %v449 = vld [vmem:[%s448] sm:$0xff]
        %s450 = smov [#allocation21]
        %v451 = vld [vmem:[%s450] sm:$0xff]
        %v452 = vsub.f32 %v451, %v447
        %v453 = vmul.f32 2.0, %v449
        %v454 = vrcp.pop %v453
        %v455 = vmul.f32 %v453, %v454
        %v456 = vsub.f32 1.0, %v455
        %v457 = vmul.f32 %v454, %v456
        %v458 = vadd.f32 %v454, %v457
        %vm459 = vweird.f32 %v453
        %vm460 = vweird.f32 %v454
        %vm461 = vmor %vm459, %vm460
        %v462 = vsel %vm461, %v454, %v458
        %v463 = vand.u32 2147483647, %v453
        %vm464 = vcmp.eq.f32.partialorder %v463, 8.507059e+37
        %v465 = vand.u32 %v453, 2147483648
        %v466 = vor.u32 1.1754944e-38, %v465
        %v467 = vsel %vm464, %v466, %v462
        %v468 = vmul.f32 %v452, %v467
        %vm469 = vcmp.ge.f32.partialorder %v468, 0.0
        %v470 = vmul.f32 %v468, %v468
        %v471 = vadd.f32 1.0, %v470
        %v472 = vrsqrt.pop %v471
        %v473 = vmul.f32 %v472, %v471
        %v474 = vmul.f32 %v473, %v472
        %v475 = vmul.f32 0.5, %v474
        %v476 = vsub.f32 1.5, %v475
        %v477 = vmul.f32 %v472, %v476
        %v478 = vmul.f32 %v471, %v477
        %vm479 = vcmp.eq.f32.partialorder %v471, inf
        %v480 = vsel %vm479, %v471, %v478
        %vm481 = vcmp.eq.f32.partialorder %v471, 0.0
        %v482 = vand.u32 %v471, 2147483648
        %v483 = vsel %vm481, %v482, %v480
        %v484 = vxor.u32 %v483, 2147483648
        %v485 = vsel %vm469, %v483, %v484
        %v486 = vadd.f32 %v468, %v485
        %v487 = vrcp.pop %v486
        %v488 = vmul.f32 %v486, %v487
        %v489 = vsub.f32 1.0, %v488
        %v490 = vmul.f32 %v487, %v489
        %v491 = vadd.f32 %v487, %v490
        %vm492 = vweird.f32 %v486
        %vm493 = vweird.f32 %v487
        %vm494 = vmor %vm492, %vm493
        %v495 = vsel %vm494, %v487, %v491
        %v496 = vand.u32 2147483647, %v486
        %vm497 = vcmp.eq.f32.partialorder %v496, 8.507059e+37
        %v498 = vand.u32 %v486, 2147483648
        %v499 = vor.u32 1.1754944e-38, %v498
        %v500 = vsel %vm497, %v499, %v495
        %v501 = vand.u32 2147483647, %v447
        %v502 = vand.u32 2147483647, %v449
        %v503 = vand.u32 2147483647, %v451
        %v504 = vmin.f32 %v501, %v503
        %v505 = vmul.f32 1.1920929e-08, %v504
        %vm506 = vcmp.le.f32.partialorder %v502, %v505
        %v507 = vsel %vm506, 0.0, %v500
        %v508 = vmul.f32 %v507, %v507
        %v509 = vadd.f32 1.0, %v508
        %v510 = vrsqrt.pop %v509
        %v511 = vmul.f32 %v510, %v509
        %v512 = vmul.f32 %v511, %v510
        %v513 = vmul.f32 0.5, %v512
        %v514 = vsub.f32 1.5, %v513
        %v515 = vmul.f32 %v510, %v514
        %vm516 = vweird.f32 %v509
        %vm517 = vweird.f32 %v510
        %vm518 = vmor %vm516, %vm517
        %v519 = vsel %vm518, %v510, %v515
        %v520 = vmul.f32 %v507, %v519
        %v521 = vmul.f32 %v507, %v449
        %v522 = vsub.f32 %v447, %v521
        %v523 = vmul.f32 %v507, %v449
        %v524 = vadd.f32 %v451, %v523
        %s525 = smov [#allocation22]
        %526 = vst [vmem:[%s525] sm:$0xff] %v522
        %s527 = smov [#allocation23]
        %528 = vst [vmem:[%s527] sm:$0xff] %v524
        %s529 = smov %s444
        %530 = vst [vmem:[%s529] sm:$0xff] %v519
        %s531 = smov %s445
        %532 = vst [vmem:[%s531] sm:$0xff] %v520
        %s533 = smov [#allocation24]
        %v534 = vld [vmem:[%s533] ss:$0 sm:$0xff]
        %v535 = vlaneseq
        %v536 = vand.u32 %v535, 127
        %v537 = vmov %v536
        %v538 = vlaneseq
        %v539 = vshrl.u32 %v538, 7
        %v540 = vmov %v539
        %vm542 = vcmp.eq.s32.totalorder %v540, %v537
        %v543 = vsel %vm542, %v534, 0.0
        %544 = vadd.xlane.f32.xlu0 %v543
        %v545 = vpop.xlane.xlu0 %544
        %s546 = smov [#allocation26]
        %547 = vst [vmem:[%s546] sm:$0xff] %v545
        %s548 = smov [#allocation25]
        %v549 = vld [vmem:[%s548] ss:$0 sm:$0xff]
        %v550 = vlaneseq
        %v551 = vand.u32 %v550, 127
        %v552 = vmov %v551
        %v553 = vlaneseq
        %v554 = vshrl.u32 %v553, 7
        %v555 = vmov %v554
        %vm557 = vcmp.eq.s32.totalorder %v555, %v552
        %v558 = vsel %vm557, %v549, 0.0
        %559 = vadd.xlane.f32.xlu0 %v558
        %v560 = vpop.xlane.xlu0 %559
        %s561 = smov [#allocation27]
        %562 = vst [vmem:[%s561] sm:$0xff] %v560
        %s563 = smov [#allocation26]
        %v564 = vld [vmem:[%s563] sm:$0xff]
        %s565 = smov [#allocation27]
        %v566 = vld [vmem:[%s565] sm:$0xff]
        %s567 = smov [#allocation15]
        %s568 = smov [#allocation16]
        %s569 = smov [#allocation17]
        %s570 = smov [#allocation18]
        %v571 = vld [vmem:[%s567] sm:$0x3f]
        %v572 = vld [vmem:[%s568] sm:$0x3f]
        %v573 = vld [vmem:[%s569] sm:$0x3f]
        %v574 = vld [vmem:[%s570] sm:$0x3f]
        %v575 = vmul.f32 %v564, %v571
        %v576 = vmul.f32 %v566, %v573
        %v577 = vsub.f32 %v575, %v576
        %v578 = vmul.f32 %v564, %v572
        %v579 = vmul.f32 %v566, %v574
        %v580 = vsub.f32 %v578, %v579
        %v581 = vmul.f32 %v566, %v571
        %v582 = vmul.f32 %v564, %v573
        %v583 = vadd.f32 %v581, %v582
        %v584 = vmul.f32 %v566, %v572
        %v585 = vmul.f32 %v564, %v574
        %v586 = vadd.f32 %v584, %v585
        %587 = vst [vmem:[%s567] sm:$0x3f] %v577
        %588 = vst [vmem:[%s568] sm:$0x3f] %v580
        %589 = vst [vmem:[%s569] sm:$0x3f] %v583
        %590 = vst [vmem:[%s570] sm:$0x3f] %v586
        %s591 = smov [#allocation24]
        %v592 = vld [vmem:[%s591] ss:$0 sm:$0xff]
        %s593 = smov [#allocation25]
        %v594 = vld [vmem:[%s593] ss:$0 sm:$0xff]
        %s595 = smov [#allocation15]
        %s596 = smov [#allocation16]
        %s597 = smov [#allocation17]
        %s598 = smov [#allocation18]
        %v599 = vld [vmem:[%s595] sm:$0x3f]
        %v600 = vld [vmem:[%s596] sm:$0x3f]
        %v601 = vld [vmem:[%s597] sm:$0x3f]
        %v602 = vld [vmem:[%s598] sm:$0x3f]
        %v603 = vmul.f32 %v592, %v599
        %v604 = vmul.f32 %v594, %v600
        %v605 = vsub.f32 %v603, %v604
        %v606 = vmul.f32 %v594, %v599
        %v607 = vmul.f32 %v592, %v600
        %v608 = vadd.f32 %v606, %v607
        %v609 = vmul.f32 %v592, %v601
        %v610 = vmul.f32 %v594, %v602
        %v611 = vsub.f32 %v609, %v610
        %v612 = vmul.f32 %v594, %v601
        %v613 = vmul.f32 %v592, %v602
        %v614 = vadd.f32 %v612, %v613
        %615 = vst [vmem:[%s595] sm:$0x3f] %v605
        %616 = vst [vmem:[%s596] sm:$0x3f] %v608
        %617 = vst [vmem:[%s597] sm:$0x3f] %v611
        %618 = vst [vmem:[%s598] sm:$0x3f] %v614
        %s619 = smov [#allocation15]
        %s620 = smov [#allocation22]
        %v621 = vlaneseq
        %v622 = vand.u32 %v621, 127
        %v623 = vmov %v622
        %v624 = vlaneseq
        %v625 = vshrl.u32 %v624, 7
        %v626 = vmov %v625
        %v627 = vld [vmem:[%s620] ss:$0 sm:$0xff]
        %v628 = vld [vmem:[%s619] sm:$0x3f]
        %vm631 = vcmp.eq.s32.totalorder %v626, %v623
        %v632 = vsel %vm631, %v627, %v628
        %633 = vst [vmem:[%s619] sm:$0x3f] %v632
        %s634 = smov [#allocation16]
        %v635 = vlaneseq
        %v636 = vand.u32 %v635, 127
        %v637 = vmov %v636
        %v638 = vlaneseq
        %v639 = vshrl.u32 %v638, 7
        %v640 = vmov %v639
        %v641 = vld [vmem:[%s634] sm:$0x3f]
        %vm644 = vcmp.eq.s32.totalorder %v640, %v637
        %v645 = vsel %vm644, 0.0, %v641
        %646 = vst [vmem:[%s634] sm:$0x3f] %v645
        %s647 = smov [#allocation17]
        %v648 = vlaneseq
        %v649 = vand.u32 %v648, 127
        %v650 = vmov %v649
        %v651 = vlaneseq
        %v652 = vshrl.u32 %v651, 7
        %v653 = vmov %v652
        %v654 = vld [vmem:[%s647] sm:$0x3f]
        %vm657 = vcmp.eq.s32.totalorder %v653, %v650
        %v658 = vsel %vm657, 0.0, %v654
        %659 = vst [vmem:[%s647] sm:$0x3f] %v658
        %s660 = smov [#allocation18]
        %s661 = smov [#allocation23]
        %v662 = vlaneseq
        %v663 = vand.u32 %v662, 127
        %v664 = vmov %v663
        %v665 = vlaneseq
        %v666 = vshrl.u32 %v665, 7
        %v667 = vmov %v666
        %v668 = vld [vmem:[%s661] ss:$0 sm:$0xff]
        %v669 = vld [vmem:[%s660] sm:$0x3f]
        %vm672 = vcmp.eq.s32.totalorder %v667, %v664
        %v673 = vsel %vm672, %v668, %v669
        %674 = vst [vmem:[%s660] sm:$0x3f] %v673
        %s675 = smov [#allocation15]
        %s676 = smov [#allocation16]
        %v677 = vld [vmem:[%s676] sm:$0x3f]
        %678 = vrot.lane.b32.xlu0 %v677, 1
        %v679 = vpop.permute.xlu0 %678
        %v680 = vld [vmem:[%s675] sm:$0x3f]
        %v681 = vld [vmem:[%s675] sm:$0x3f]
        %682 = vrot.lane.b32.xlu0 %v681, 1
        %v683 = vpop.permute.xlu0 %682
        %v684 = vlaneseq
        %v685 = vand.u32 %v684, 127
        %vm686 = vcmp.eq.s32.totalorder %v685, 0
        %v687 = vsel %vm686, %v681, %v683
        %v688 = vlaneseq
        %v689 = vand.u32 %v688, 127
        %vm690 = vcmp.eq.s32.totalorder %v689, 1
        %v691 = vsel %vm690, %v679, %v687
        %v692 = vlaneseq
        %v693 = vand.u32 %v692, 127
        %vm694 = vcmp.ge.s32.totalorder %v693, 0
        %vm695 = vcmp.lt.s32.totalorder %v693, 6
        %vm696 = vmand %vm694, %vm695
        %v697 = vsel %vm696, %v691, 0.0
        %v698 = vld [vmem:[%s676] sm:$0x3f]
        %699 = vrot.lane.b32.xlu0 %v698, 127
        %v700 = vpop.permute.xlu0 %699
        %v701 = vlaneseq
        %v702 = vand.u32 %v701, 127
        %vm703 = vcmp.eq.s32.totalorder %v702, 5
        %v704 = vsel %vm703, %v680, %v700
        %705 = vst [vmem:[%s675] sm:$0x3f] %v697
        %706 = vst [vmem:[%s676] sm:$0x3f] %v704
        %s707 = smov [#allocation17]
        %s708 = smov [#allocation18]
        %v709 = vld [vmem:[%s708] sm:$0x3f]
        %710 = vrot.lane.b32.xlu0 %v709, 1
        %v711 = vpop.permute.xlu0 %710
        %v712 = vld [vmem:[%s707] sm:$0x3f]
        %v713 = vld [vmem:[%s707] sm:$0x3f]
        %714 = vrot.lane.b32.xlu0 %v713, 1
        %v715 = vpop.permute.xlu0 %714
        %v716 = vlaneseq
        %v717 = vand.u32 %v716, 127
        %vm718 = vcmp.eq.s32.totalorder %v717, 0
        %v719 = vsel %vm718, %v713, %v715
        %v720 = vlaneseq
        %v721 = vand.u32 %v720, 127
        %vm722 = vcmp.eq.s32.totalorder %v721, 1
        %v723 = vsel %vm722, %v711, %v719
        %v724 = vlaneseq
        %v725 = vand.u32 %v724, 127
        %vm726 = vcmp.ge.s32.totalorder %v725, 0
        %vm727 = vcmp.lt.s32.totalorder %v725, 6
        %vm728 = vmand %vm726, %vm727
        %v729 = vsel %vm728, %v723, 0.0
        %v730 = vld [vmem:[%s708] sm:$0x3f]
        %731 = vrot.lane.b32.xlu0 %v730, 127
        %v732 = vpop.permute.xlu0 %731
        %v733 = vlaneseq
        %v734 = vand.u32 %v733, 127
        %vm735 = vcmp.eq.s32.totalorder %v734, 5
        %v736 = vsel %vm735, %v712, %v732
        %737 = vst [vmem:[%s707] sm:$0x3f] %v729
        %738 = vst [vmem:[%s708] sm:$0x3f] %v736
        %s739 = smov [#allocation15]
        %s740 = smov [#allocation17]
        %v741 = vld [vmem:[%s739] ss:$0 sm:$0xff]
        %s743 = scalar_lea.vmem %s739, 4294967295
        %v744 = vld [vmem:[%s743] sm:$0x3e]
        %v745 = vlaneseq
        %v746 = vshrl.u32 %v745, 7
        %vm747 = vcmp.eq.s32.totalorder %v746, 0
        %v748 = vsel %vm747, %v741, %v744
        %s749 = scalar_lea.vmem %s739, 5
        %v750 = vld [vmem:[%s749] ss:$0 sm:$0xff]
        %751 = vst [vmem:[%s739] sm:$0x3f] %v748
        %v752 = vld [vmem:[%s740] ss:$0 sm:$0xff]
        %s753 = scalar_lea.vmem %s739, 1
        %754 = vst [vmem:[%s753] sm:$0x1] %v752
        %s755 = scalar_lea.vmem %s740, 1
        %v756 = vld [vmem:[%s755] sm:$0x1f]
        %v757 = vlaneseq
        %v758 = vshrl.u32 %v757, 7
        %vm759 = vcmp.eq.s32.totalorder %v758, 5
        %v760 = vsel %vm759, %v750, %v756
        %v761 = vld [vmem:[%s740] ss:$0 sm:$0xff]
        %762 = vst [vmem:[%s740] sm:$0x3f] %v760
        %s763 = smov [#allocation16]
        %s764 = smov [#allocation18]
        %v765 = vld [vmem:[%s763] ss:$0 sm:$0xff]
        %s767 = scalar_lea.vmem %s763, 4294967295
        %v768 = vld [vmem:[%s767] sm:$0x3e]
        %v769 = vlaneseq
        %v770 = vshrl.u32 %v769, 7
        %vm771 = vcmp.eq.s32.totalorder %v770, 0
        %v772 = vsel %vm771, %v765, %v768
        %s773 = scalar_lea.vmem %s763, 5
        %v774 = vld [vmem:[%s773] ss:$0 sm:$0xff]
        %775 = vst [vmem:[%s763] sm:$0x3f] %v772
        %v776 = vld [vmem:[%s764] ss:$0 sm:$0xff]
        %s777 = scalar_lea.vmem %s763, 1
        %778 = vst [vmem:[%s777] sm:$0x1] %v776
        %s779 = scalar_lea.vmem %s764, 1
        %v780 = vld [vmem:[%s779] sm:$0x1f]
        %v781 = vlaneseq
        %v782 = vshrl.u32 %v781, 7
        %vm783 = vcmp.eq.s32.totalorder %v782, 5
        %v784 = vsel %vm783, %v774, %v780
        %v785 = vld [vmem:[%s764] ss:$0 sm:$0xff]
        %786 = vst [vmem:[%s764] sm:$0x3f] %v784
        %s787 = smov [#allocation26]
        %v788 = vld [vmem:[%s787] sm:$0xff]
        %s789 = smov [#allocation27]
        %v790 = vld [vmem:[%s789] sm:$0xff]
        %s791 = smov [#allocation8]
        %s792 = smov [#allocation10]
        %s793 = smov [#allocation12]
        %s794 = smov [#allocation13]
        %v795 = vld [vmem:[%s791] sm:$0x3f]
        %v796 = vld [vmem:[%s792] sm:$0x3f]
        %v797 = vld [vmem:[%s793] sm:$0x3f]
        %v798 = vld [vmem:[%s794] sm:$0x3f]
        %v799 = vmul.f32 %v788, %v795
        %v800 = vmul.f32 %v790, %v797
        %v801 = vsub.f32 %v799, %v800
        %v802 = vmul.f32 %v788, %v796
        %v803 = vmul.f32 %v790, %v798
        %v804 = vsub.f32 %v802, %v803
        %v805 = vmul.f32 %v790, %v795
        %v806 = vmul.f32 %v788, %v797
        %v807 = vadd.f32 %v805, %v806
        %v808 = vmul.f32 %v790, %v796
        %v809 = vmul.f32 %v788, %v798
        %v810 = vadd.f32 %v808, %v809
        %811 = vst [vmem:[%s791] sm:$0x3f] %v801
        %812 = vst [vmem:[%s792] sm:$0x3f] %v804
        %813 = vst [vmem:[%s793] sm:$0x3f] %v807
        %814 = vst [vmem:[%s794] sm:$0x3f] %v810
        %s815 = smov [#allocation8]
        %s816 = smov [#allocation12]
        %v817 = vld [vmem:[%s815] ss:$0 sm:$0xff]
        %s819 = scalar_lea.vmem %s815, 4294967295
        %v820 = vld [vmem:[%s819] sm:$0x3e]
        %v821 = vlaneseq
        %v822 = vshrl.u32 %v821, 7
        %vm823 = vcmp.eq.s32.totalorder %v822, 0
        %v824 = vsel %vm823, %v817, %v820
        %s825 = scalar_lea.vmem %s815, 5
        %v826 = vld [vmem:[%s825] ss:$0 sm:$0xff]
        %827 = vst [vmem:[%s815] sm:$0x3f] %v824
        %v828 = vld [vmem:[%s816] ss:$0 sm:$0xff]
        %s829 = scalar_lea.vmem %s815, 1
        %830 = vst [vmem:[%s829] sm:$0x1] %v828
        %s831 = scalar_lea.vmem %s816, 1
        %v832 = vld [vmem:[%s831] sm:$0x1f]
        %v833 = vlaneseq
        %v834 = vshrl.u32 %v833, 7
        %vm835 = vcmp.eq.s32.totalorder %v834, 5
        %v836 = vsel %vm835, %v826, %v832
        %v837 = vld [vmem:[%s816] ss:$0 sm:$0xff]
        %838 = vst [vmem:[%s816] sm:$0x3f] %v836
        %s839 = smov [#allocation10]
        %s840 = smov [#allocation13]
        %v841 = vld [vmem:[%s839] ss:$0 sm:$0xff]
        %s843 = scalar_lea.vmem %s839, 4294967295
        %v844 = vld [vmem:[%s843] sm:$0x3e]
        %v845 = vlaneseq
        %v846 = vshrl.u32 %v845, 7
        %vm847 = vcmp.eq.s32.totalorder %v846, 0
        %v848 = vsel %vm847, %v841, %v844
        %s849 = scalar_lea.vmem %s839, 5
        %v850 = vld [vmem:[%s849] ss:$0 sm:$0xff]
        %851 = vst [vmem:[%s839] sm:$0x3f] %v848
        %v852 = vld [vmem:[%s840] ss:$0 sm:$0xff]
        %s853 = scalar_lea.vmem %s839, 1
        %854 = vst [vmem:[%s853] sm:$0x1] %v852
        %s855 = scalar_lea.vmem %s840, 1
        %v856 = vld [vmem:[%s855] sm:$0x1f]
        %v857 = vlaneseq
        %v858 = vshrl.u32 %v857, 7
        %vm859 = vcmp.eq.s32.totalorder %v858, 5
        %v860 = vsel %vm859, %v850, %v856
        %v861 = vld [vmem:[%s840] ss:$0 sm:$0xff]
        %862 = vst [vmem:[%s840] sm:$0x3f] %v860
      $region101: #{custom-call.9} parent=93 // loop_footer
        %s383 = sadd.s32 1, %s379
      $region102: #{custom-call.9} parent=93 // loop_footer_branch
        %378 = sbr.rel target = $region98
      $region103: #{custom-call.9} parent=93 // loop_exit
        _
      %s863 = sadd.s32 %s281, 1
    $region94: #{custom-call.9} parent=1 // loop_footer
      _
    $region95: #{custom-call.9} parent=1 // loop_footer_branch
      %280 = sbr.rel target = $region91
    $region96: #{custom-call.9} parent=1 // loop_exit
      _
    %s866 = smov [#allocation15]
    %s867 = smov [#allocation4]
    %v868 = vlaneseq
    %v869 = vand.u32 %v868, 127
    %v870 = vmov %v869
    %v871 = vlaneseq
    %v872 = vshrl.u32 %v871, 7
    %v873 = vmov %v872
    %v874 = vld [vmem:[%s866] sm:$0x3f]
    %vm877 = vcmp.eq.s32.totalorder %v873, %v870
    %v878 = vsel %vm877, %v874, 0.0
    %v879 = vrot.slane %v878, 4
    %v880 = vadd.f32 %v878, %v879
    %v881 = vrot.slane %v880, 2
    %v882 = vadd.f32 %v880, %v881
    %v883 = vrot.slane %v882, 1
    %v884 = vadd.f32 %v882, %v883
    %885 = vst [vmem:[%s867] sm:$0x1] %v884
    %s886 = smov [#allocation18]
    %s887 = smov [#allocation6]
    %v888 = vlaneseq
    %v889 = vand.u32 %v888, 127
    %v890 = vmov %v889
    %v891 = vlaneseq
    %v892 = vshrl.u32 %v891, 7
    %v893 = vmov %v892
    %v894 = vld [vmem:[%s886] sm:$0x3f]
    %vm897 = vcmp.eq.s32.totalorder %v893, %v890
    %v898 = vsel %vm897, %v894, 0.0
    %v899 = vrot.slane %v898, 4
    %v900 = vadd.f32 %v898, %v899
    %v901 = vrot.slane %v900, 2
    %v902 = vadd.f32 %v900, %v901
    %v903 = vrot.slane %v902, 1
    %v904 = vadd.f32 %v902, %v903
    %905 = vst [vmem:[%s887] sm:$0x1] %v904
    %s907 = ssub.s32 2, 1
    %v908 = vld [vmem:[#allocation4] sm:%s907]
    %s910 = ssub.s32 2, 1
    %911 = vst [vmem:[#allocation5] sm:%s910] %v908
    %s913 = ssub.s32 2, 1
    %v914 = vld [vmem:[#allocation6] sm:%s913]
    %s916 = ssub.s32 2, 1
    %917 = vst [vmem:[#allocation7] sm:%s916] %v914
    // Predicated region
    $region104: #{custom-call.9} parent=1 // pred_check
      _
    $region105: #{custom-call.9} parent=1 // pred_check_branch
      %919 = sbr.rel (0) target = $region107
    $region106: #{custom-call.9} parent=1 // pred_region
      // Predicated region
      $region108: #{custom-call.9} parent=106 // pred_check
        _
      $region109: #{custom-call.9} parent=106 // pred_check_branch
        %921 = sbr.rel (0) target = $region111
      $region110: #{custom-call.9} parent=106 // pred_region
        %p923 = scmp.gt.s32.totalorder 0, 0
        // Predicated region
        $region112: #{custom-call.9} parent=110 // pred_check
          %p924 = pneg %p923
        $region113: #{custom-call.9} parent=110 // pred_check_branch
          %926 = sbr.rel (%p924) target = $region115
        $region114: #{custom-call.9} parent=110 // pred_region
          %s927 = ssub.s32 0, 1
          %s928 = smul.u32 %s927, 8
          %s929 = scalar_lea.vmem [#allocation5], %s928
          %v930 = vld [vmem:[#allocation5] sm:$0xff]
          // While loop
          $region116: #{custom-call.9} parent=114 // loop_pre_header
            _
          $region117: #{custom-call.9} parent=114 // loop_header
            %s931 = sphi [#allocation5], %s953
            %s932 = sphi %s4, %s954
            %v933 = vphi %v930, %v955
            %s934 = ssub.s32 %s929, 64
            %p935 = scmp.gt.s32.totalorder %s931, %s934
          $region118: #{custom-call.9} parent=114 // loop_header_branch
            %937 = sbr.rel (%p935) target = $region122
          $region119: #{custom-call.9} parent=114 // loop_body
            %938 = vst [vmem:[%s932] sm:$0xff] %v933
            %v939 = vld [vmem:[%s931 + $0x8] sm:$0xff]
            %940 = vst [vmem:[%s932 + $0x8] sm:$0xff] %v939
            %v941 = vld [vmem:[%s931 + $0x10] sm:$0xff]
            %942 = vst [vmem:[%s932 + $0x10] sm:$0xff] %v941
            %v943 = vld [vmem:[%s931 + $0x18] sm:$0xff]
            %944 = vst [vmem:[%s932 + $0x18] sm:$0xff] %v943
            %v945 = vld [vmem:[%s931 + $0x20] sm:$0xff]
            %946 = vst [vmem:[%s932 + $0x20] sm:$0xff] %v945
            %v947 = vld [vmem:[%s931 + $0x28] sm:$0xff]
            %948 = vst [vmem:[%s932 + $0x28] sm:$0xff] %v947
            %v949 = vld [vmem:[%s931 + $0x30] sm:$0xff]
            %950 = vst [vmem:[%s932 + $0x30] sm:$0xff] %v949
            %v951 = vld [vmem:[%s931 + $0x38] sm:$0xff]
            %952 = vst [vmem:[%s932 + $0x38] sm:$0xff] %v951
          $region120: #{custom-call.9} parent=114 // loop_footer
            %s953 = scalar_lea.vmem %s931, 64
            %s954 = scalar_lea.vmem %s932, 64
            %v955 = vld [vmem:[%s931 + $0x40] sm:$0xff]
          $region121: #{custom-call.9} parent=114 // loop_footer_branch
            %956 = sbr.rel target = $region117
          $region122: #{custom-call.9} parent=114 // loop_exit
            _
          // While loop
          $region123: #{custom-call.9} parent=114 // loop_pre_header
            _
          $region124: #{custom-call.9} parent=114 // loop_header
            %s957 = sphi %s931, %s965
            %s958 = sphi %s932, %s966
            %v959 = vphi %v933, %v959
            %p960 = scmp.gt.s32.totalorder %s957, %s929
          $region125: #{custom-call.9} parent=114 // loop_header_branch
            %962 = sbr.rel (%p960) target = $region129
          $region126: #{custom-call.9} parent=114 // loop_body
            %v963 = vld [vmem:[%s957] sm:$0xff]
            %964 = vst [vmem:[%s958] sm:$0xff] %v963
          $region127: #{custom-call.9} parent=114 // loop_footer
            %s965 = scalar_lea.vmem %s957, 8
            %s966 = scalar_lea.vmem %s958, 8
          $region128: #{custom-call.9} parent=114 // loop_footer_branch
            %967 = sbr.rel target = $region124
          $region129: #{custom-call.9} parent=114 // loop_exit
            _
        $region115: #{custom-call.9} parent=110 // pred_fallthru
          _
        %s969 = ssub.s32 2, 1
        %s970 = smul.u32 0, 8
        %s971 = scalar_lea.vmem %s4, %s970
        %s972 = smul.u32 0, 8
        %s973 = scalar_lea.vmem [#allocation5], %s972
        %v974 = vld [vmem:[%s973] sm:%s969]
        %975 = vst [vmem:[%s971] sm:%s969] %v974
      $region111: #{custom-call.9} parent=106 // pred_fallthru
        _
    $region107: #{custom-call.9} parent=1 // pred_fallthru
      _
    // Predicated region
    $region130: #{custom-call.9} parent=1 // pred_check
      _
    $region131: #{custom-call.9} parent=1 // pred_check_branch
      %977 = sbr.rel (0) target = $region133
    $region132: #{custom-call.9} parent=1 // pred_region
      // Predicated region
      $region134: #{custom-call.9} parent=132 // pred_check
        _
      $region135: #{custom-call.9} parent=132 // pred_check_branch
        %979 = sbr.rel (0) target = $region137
      $region136: #{custom-call.9} parent=132 // pred_region
        %p981 = scmp.gt.s32.totalorder 0, 0
        // Predicated region
        $region138: #{custom-call.9} parent=136 // pred_check
          %p982 = pneg %p981
        $region139: #{custom-call.9} parent=136 // pred_check_branch
          %984 = sbr.rel (%p982) target = $region141
        $region140: #{custom-call.9} parent=136 // pred_region
          %s985 = ssub.s32 0, 1
          %s986 = smul.u32 %s985, 8
          %s987 = scalar_lea.vmem [#allocation7], %s986
          %v988 = vld [vmem:[#allocation7] sm:$0xff]
          // While loop
          $region142: #{custom-call.9} parent=140 // loop_pre_header
            _
          $region143: #{custom-call.9} parent=140 // loop_header
            %s989 = sphi [#allocation7], %s1011
            %s990 = sphi %s5, %s1012
            %v991 = vphi %v988, %v1013
            %s992 = ssub.s32 %s987, 64
            %p993 = scmp.gt.s32.totalorder %s989, %s992
          $region144: #{custom-call.9} parent=140 // loop_header_branch
            %995 = sbr.rel (%p993) target = $region148
          $region145: #{custom-call.9} parent=140 // loop_body
            %996 = vst [vmem:[%s990] sm:$0xff] %v991
            %v997 = vld [vmem:[%s989 + $0x8] sm:$0xff]
            %998 = vst [vmem:[%s990 + $0x8] sm:$0xff] %v997
            %v999 = vld [vmem:[%s989 + $0x10] sm:$0xff]
            %1000 = vst [vmem:[%s990 + $0x10] sm:$0xff] %v999
            %v1001 = vld [vmem:[%s989 + $0x18] sm:$0xff]
            %1002 = vst [vmem:[%s990 + $0x18] sm:$0xff] %v1001
            %v1003 = vld [vmem:[%s989 + $0x20] sm:$0xff]
            %1004 = vst [vmem:[%s990 + $0x20] sm:$0xff] %v1003
            %v1005 = vld [vmem:[%s989 + $0x28] sm:$0xff]
            %1006 = vst [vmem:[%s990 + $0x28] sm:$0xff] %v1005
            %v1007 = vld [vmem:[%s989 + $0x30] sm:$0xff]
            %1008 = vst [vmem:[%s990 + $0x30] sm:$0xff] %v1007
            %v1009 = vld [vmem:[%s989 + $0x38] sm:$0xff]
            %1010 = vst [vmem:[%s990 + $0x38] sm:$0xff] %v1009
          $region146: #{custom-call.9} parent=140 // loop_footer
            %s1011 = scalar_lea.vmem %s989, 64
            %s1012 = scalar_lea.vmem %s990, 64
            %v1013 = vld [vmem:[%s989 + $0x40] sm:$0xff]
          $region147: #{custom-call.9} parent=140 // loop_footer_branch
            %1014 = sbr.rel target = $region143
          $region148: #{custom-call.9} parent=140 // loop_exit
            _
          // While loop
          $region149: #{custom-call.9} parent=140 // loop_pre_header
            _
          $region150: #{custom-call.9} parent=140 // loop_header
            %s1015 = sphi %s989, %s1023
            %s1016 = sphi %s990, %s1024
            %v1017 = vphi %v991, %v1017
            %p1018 = scmp.gt.s32.totalorder %s1015, %s987
          $region151: #{custom-call.9} parent=140 // loop_header_branch
            %1020 = sbr.rel (%p1018) target = $region155
          $region152: #{custom-call.9} parent=140 // loop_body
            %v1021 = vld [vmem:[%s1015] sm:$0xff]
            %1022 = vst [vmem:[%s1016] sm:$0xff] %v1021
          $region153: #{custom-call.9} parent=140 // loop_footer
            %s1023 = scalar_lea.vmem %s1015, 8
            %s1024 = scalar_lea.vmem %s1016, 8
          $region154: #{custom-call.9} parent=140 // loop_footer_branch
            %1025 = sbr.rel target = $region150
          $region155: #{custom-call.9} parent=140 // loop_exit
            _
        $region141: #{custom-call.9} parent=136 // pred_fallthru
          _
        %s1027 = ssub.s32 2, 1
        %s1028 = smul.u32 0, 8
        %s1029 = scalar_lea.vmem %s5, %s1028
        %s1030 = smul.u32 0, 8
        %s1031 = scalar_lea.vmem [#allocation7], %s1030
        %v1032 = vld [vmem:[%s1031] sm:%s1027]
        %1033 = vst [vmem:[%s1029] sm:%s1027] %v1032
      $region137: #{custom-call.9} parent=132 // pred_fallthru
        _
    $region133: #{custom-call.9} parent=1 // pred_fallthru
      _
    %1035 = vsyncadd [#allocation9], 0
    %s1037 = sshll.u32 [#allocation8], 4
    %s1038 = int_to_ptr.vmem [resolvable:$true] %s1037
    %s1039 = sshll.u32 %s6, 4
    %s1040 = int_to_ptr.hbm [resolvable:$true] %s1039
    %1042 = dma.vmem_to_hbm [thread:$0]  %s1038, 128, %s1040, [#allocation9]
    %1044 = vsyncadd [#allocation11], 0
    %s1046 = sshll.u32 [#allocation10], 4
    %s1047 = int_to_ptr.vmem [resolvable:$true] %s1046
    %s1048 = sshll.u32 %s7, 4
    %s1049 = int_to_ptr.hbm [resolvable:$true] %s1048
    %1051 = dma.vmem_to_hbm [thread:$0]  %s1047, 128, %s1049, [#allocation11]
    %1053 = vsyncadd [#allocation11], 0
    %s1055 = sshll.u32 [#allocation12], 4
    %s1056 = int_to_ptr.vmem [resolvable:$true] %s1055
    %s1057 = sshll.u32 %s8, 4
    %s1058 = int_to_ptr.hbm [resolvable:$true] %s1057
    %1060 = dma.vmem_to_hbm [thread:$0]  %s1056, 128, %s1058, [#allocation11]
    %1062 = vsyncadd [#allocation14], 0
    %s1064 = sshll.u32 [#allocation13], 4
    %s1065 = int_to_ptr.vmem [resolvable:$true] %s1064
    %s1066 = sshll.u32 %s9, 4
    %s1067 = int_to_ptr.hbm [resolvable:$true] %s1066
    %1069 = dma.vmem_to_hbm [thread:$0]  %s1065, 128, %s1067, [#allocation14]
    // Predicated region
    $region156: #{custom-call.9} parent=1 // pred_check
      _
    $region157: #{custom-call.9} parent=1 // pred_check_branch
      %1071 = sbr.rel (0) target = $region159
    $region158: #{custom-call.9} parent=1 // pred_region
      _
    $region159: #{custom-call.9} parent=1 // pred_fallthru
      _
    // Predicated region
    $region160: #{custom-call.9} parent=1 // pred_check
      _
    $region161: #{custom-call.9} parent=1 // pred_check_branch
      %1073 = sbr.rel (0) target = $region163
    $region162: #{custom-call.9} parent=1 // pred_region
      _
    $region163: #{custom-call.9} parent=1 // pred_fallthru
      _
    %1075 = dma.done [#allocation9], 128
    %1077 = dma.done [#allocation11], 128
    %1079 = dma.done [#allocation11], 128
    %1081 = dma.done [#allocation14], 128
    %1082 = vsyncpa [#allocation9], 1
    %1083 = vsyncpa [#allocation11], 1
    %1084 = vsyncpa [#allocation14], 1

// kernel: custom-call.11
$region0: #{custom-call.11}
  %s0 = inlined_call_operand.vmem [shape: f32[4,4], index: 0, kind: input, shape index: {}]
  %s1 = inlined_call_operand.vmem [shape: f32[4,4], index: 1, kind: input, shape index: {}]
  %s2 = inlined_call_operand.vmem [shape: f32[4,4], index: 2, kind: input, shape index: {}]
  %s3 = inlined_call_operand.vmem [shape: f32[4,4], index: 3, kind: input, shape index: {}]
  %s4 = inlined_call_operand.vmem [shape: f32[4], index: 4, kind: output, shape index: {0}]
  %s5 = inlined_call_operand.vmem [shape: f32[4], index: 5, kind: output, shape index: {1}]
  %s6 = inlined_call_operand.hbm [shape: f32[4,4], index: 6, kind: output, shape index: {2}]
  %s7 = inlined_call_operand.hbm [shape: f32[4,4], index: 7, kind: output, shape index: {3}]
  %s8 = inlined_call_operand.hbm [shape: f32[4,4], index: 8, kind: output, shape index: {4}]
  %s9 = inlined_call_operand.hbm [shape: f32[4,4], index: 9, kind: output, shape index: {5}]
  %10 = xla_tuple %s4, %s5, %s6, %s7, %s8, %s9
  $region1: #{custom-call.11} parent=0
    #allocation0 [shape = 'u8[4096]{0}', space=vmem, size = 0x1000, scoped, tag = 'operand span for operand 0']
    #allocation1 [shape = 'u8[2048]{0}', space=vmem, size = 0x800, scoped, tag = 'packed  for operand 0']
    #allocation2 [shape = 'u8[4096]{0}', space=vmem, size = 0x1000, scoped, tag = 'operand span for operand 1']
    #allocation3 [shape = 'u8[2048]{0}', space=vmem, size = 0x800, scoped, tag = 'packed  for operand 1']
    #allocation4 [shape = 'u8[4096]{0}', space=vmem, size = 0x1000, scoped, tag = 'operand span for operand 2']
    #allocation5 [shape = 'u8[2048]{0}', space=vmem, size = 0x800, scoped, tag = 'packed  for operand 2']
    #allocation6 [shape = 'u8[4096]{0}', space=vmem, size = 0x1000, scoped, tag = 'operand span for operand 3']
    #allocation7 [shape = 'u8[2048]{0}', space=vmem, size = 0x800, scoped, tag = 'packed  for operand 3']
    #allocation8 [shape = 'u8[4096]{0}', space=vmem, size = 0x1000, scoped, tag = 'operand span for operand 4']
    #allocation9 [shape = 'u8[512]{0}', space=vmem, size = 0x400, scoped, tag = 'packed  for operand 4']
    #allocation10 [shape = 'u8[4096]{0}', space=vmem, size = 0x1000, scoped, tag = 'operand span for operand 5']
    #allocation11 [shape = 'u8[512]{0}', space=vmem, size = 0x400, scoped, tag = 'packed  for operand 5']
    #allocation12 [shape = 'u8[4096]{0}', space=vmem, size = 0x1000, scoped, tag = 'operand span for operand 6']
    #allocation13 [shape = 'u8[2048]{0}', space=vmem, size = 0x800, scoped, tag = 'packed  for operand 6']
    #allocation14 [shape = 's32[1]{0}', space=sflag, size = 0x4, scoped, tag = 'scoped memory for custom-call.11']
    #allocation15 [shape = 'u8[4096]{0}', space=vmem, size = 0x1000, scoped, tag = 'operand span for operand 7']
    #allocation16 [shape = 'u8[2048]{0}', space=vmem, size = 0x800, scoped, tag = 'packed  for operand 7']
    #allocation17 [shape = 's32[1]{0}', space=sflag, size = 0x4, scoped, tag = 'scoped memory for custom-call.11']
    #allocation18 [shape = 'u8[4096]{0}', space=vmem, size = 0x1000, scoped, tag = 'operand span for operand 8']
    #allocation19 [shape = 'u8[2048]{0}', space=vmem, size = 0x800, scoped, tag = 'packed  for operand 8']
    #allocation20 [shape = 'u8[4096]{0}', space=vmem, size = 0x1000, scoped, tag = 'operand span for operand 9']
    #allocation21 [shape = 'u8[2048]{0}', space=vmem, size = 0x800, scoped, tag = 'packed  for operand 9']
    #allocation22 [shape = 's32[1]{0}', space=sflag, size = 0x4, scoped, tag = 'scoped memory for custom-call.11']
    #allocation23 [shape = 'f32[4,4]{1,0}', space=vmem, size = 0x1000, scoped, tag = 'a top-left matrix']
    #allocation24 [shape = 'f32[4,4]{1,0}', space=vmem, size = 0x1000, scoped, tag = 'a top-right matrix']
    #allocation25 [shape = 'f32[4,4]{1,0}', space=vmem, size = 0x1000, scoped, tag = 'a bottom-left matrix']
    #allocation26 [shape = 'f32[4,4]{1,0}', space=vmem, size = 0x1000, scoped, tag = 'a bottom-right matrix']
    %11 = vsyncpa [#allocation14], 0
    %12 = vsyncpa [#allocation17], 0
    %13 = vsyncpa [#allocation22], 0
    // Predicated region
    $region2: #{custom-call.11} parent=1 // pred_check
      _
    $region3: #{custom-call.11} parent=1 // pred_check_branch
      %15 = sbr.rel (0) target = $region5
    $region4: #{custom-call.11} parent=1 // pred_region
      %p17 = scmp.gt.s32.totalorder 0, 0
      // Predicated region
      $region6: #{custom-call.11} parent=4 // pred_check
        %p18 = pneg %p17
      $region7: #{custom-call.11} parent=4 // pred_check_branch
        %20 = sbr.rel (%p18) target = $region9
      $region8: #{custom-call.11} parent=4 // pred_region
        %s21 = ssub.s32 0, 1
        %s22 = smul.u32 %s21, 8
        %s23 = scalar_lea.vmem %s0, %s22
        %v24 = vld [vmem:[%s0] sm:$0xff]
        // While loop
        $region10: #{custom-call.11} parent=8 // loop_pre_header
          _
        $region11: #{custom-call.11} parent=8 // loop_header
          %s25 = sphi %s0, %s47
          %s26 = sphi [#allocation1], %s48
          %v27 = vphi %v24, %v49
          %s28 = ssub.s32 %s23, 64
          %p29 = scmp.gt.s32.totalorder %s25, %s28
        $region12: #{custom-call.11} parent=8 // loop_header_branch
          %31 = sbr.rel (%p29) target = $region16
        $region13: #{custom-call.11} parent=8 // loop_body
          %32 = vst [vmem:[%s26] sm:$0xff] %v27
          %v33 = vld [vmem:[%s25 + $0x8] sm:$0xff]
          %34 = vst [vmem:[%s26 + $0x8] sm:$0xff] %v33
          %v35 = vld [vmem:[%s25 + $0x10] sm:$0xff]
          %36 = vst [vmem:[%s26 + $0x10] sm:$0xff] %v35
          %v37 = vld [vmem:[%s25 + $0x18] sm:$0xff]
          %38 = vst [vmem:[%s26 + $0x18] sm:$0xff] %v37
          %v39 = vld [vmem:[%s25 + $0x20] sm:$0xff]
          %40 = vst [vmem:[%s26 + $0x20] sm:$0xff] %v39
          %v41 = vld [vmem:[%s25 + $0x28] sm:$0xff]
          %42 = vst [vmem:[%s26 + $0x28] sm:$0xff] %v41
          %v43 = vld [vmem:[%s25 + $0x30] sm:$0xff]
          %44 = vst [vmem:[%s26 + $0x30] sm:$0xff] %v43
          %v45 = vld [vmem:[%s25 + $0x38] sm:$0xff]
          %46 = vst [vmem:[%s26 + $0x38] sm:$0xff] %v45
        $region14: #{custom-call.11} parent=8 // loop_footer
          %s47 = scalar_lea.vmem %s25, 64
          %s48 = scalar_lea.vmem %s26, 64
          %v49 = vld [vmem:[%s25 + $0x40] sm:$0xff]
        $region15: #{custom-call.11} parent=8 // loop_footer_branch
          %50 = sbr.rel target = $region11
        $region16: #{custom-call.11} parent=8 // loop_exit
          _
        // While loop
        $region17: #{custom-call.11} parent=8 // loop_pre_header
          _
        $region18: #{custom-call.11} parent=8 // loop_header
          %s51 = sphi %s25, %s59
          %s52 = sphi %s26, %s60
          %v53 = vphi %v27, %v53
          %p54 = scmp.gt.s32.totalorder %s51, %s23
        $region19: #{custom-call.11} parent=8 // loop_header_branch
          %56 = sbr.rel (%p54) target = $region23
        $region20: #{custom-call.11} parent=8 // loop_body
          %v57 = vld [vmem:[%s51] sm:$0xff]
          %58 = vst [vmem:[%s52] sm:$0xff] %v57
        $region21: #{custom-call.11} parent=8 // loop_footer
          %s59 = scalar_lea.vmem %s51, 8
          %s60 = scalar_lea.vmem %s52, 8
        $region22: #{custom-call.11} parent=8 // loop_footer_branch
          %61 = sbr.rel target = $region18
        $region23: #{custom-call.11} parent=8 // loop_exit
          _
      $region9: #{custom-call.11} parent=4 // pred_fallthru
        _
      %s63 = ssub.s32 16, 1
      %s64 = smul.u32 0, 8
      %s65 = scalar_lea.vmem [#allocation1], %s64
      %s66 = smul.u32 0, 8
      %s67 = scalar_lea.vmem %s0, %s66
      %v68 = vld [vmem:[%s67] sm:%s63]
      %69 = vst [vmem:[%s65] sm:%s63] %v68
    $region5: #{custom-call.11} parent=1 // pred_fallthru
      _
    // Predicated region
    $region24: #{custom-call.11} parent=1 // pred_check
      _
    $region25: #{custom-call.11} parent=1 // pred_check_branch
      %71 = sbr.rel (0) target = $region27
    $region26: #{custom-call.11} parent=1 // pred_region
      %p73 = scmp.gt.s32.totalorder 0, 0
      // Predicated region
      $region28: #{custom-call.11} parent=26 // pred_check
        %p74 = pneg %p73
      $region29: #{custom-call.11} parent=26 // pred_check_branch
        %76 = sbr.rel (%p74) target = $region31
      $region30: #{custom-call.11} parent=26 // pred_region
        %s77 = ssub.s32 0, 1
        %s78 = smul.u32 %s77, 8
        %s79 = scalar_lea.vmem %s1, %s78
        %v80 = vld [vmem:[%s1] sm:$0xff]
        // While loop
        $region32: #{custom-call.11} parent=30 // loop_pre_header
          _
        $region33: #{custom-call.11} parent=30 // loop_header
          %s81 = sphi %s1, %s103
          %s82 = sphi [#allocation3], %s104
          %v83 = vphi %v80, %v105
          %s84 = ssub.s32 %s79, 64
          %p85 = scmp.gt.s32.totalorder %s81, %s84
        $region34: #{custom-call.11} parent=30 // loop_header_branch
          %87 = sbr.rel (%p85) target = $region38
        $region35: #{custom-call.11} parent=30 // loop_body
          %88 = vst [vmem:[%s82] sm:$0xff] %v83
          %v89 = vld [vmem:[%s81 + $0x8] sm:$0xff]
          %90 = vst [vmem:[%s82 + $0x8] sm:$0xff] %v89
          %v91 = vld [vmem:[%s81 + $0x10] sm:$0xff]
          %92 = vst [vmem:[%s82 + $0x10] sm:$0xff] %v91
          %v93 = vld [vmem:[%s81 + $0x18] sm:$0xff]
          %94 = vst [vmem:[%s82 + $0x18] sm:$0xff] %v93
          %v95 = vld [vmem:[%s81 + $0x20] sm:$0xff]
          %96 = vst [vmem:[%s82 + $0x20] sm:$0xff] %v95
          %v97 = vld [vmem:[%s81 + $0x28] sm:$0xff]
          %98 = vst [vmem:[%s82 + $0x28] sm:$0xff] %v97
          %v99 = vld [vmem:[%s81 + $0x30] sm:$0xff]
          %100 = vst [vmem:[%s82 + $0x30] sm:$0xff] %v99
          %v101 = vld [vmem:[%s81 + $0x38] sm:$0xff]
          %102 = vst [vmem:[%s82 + $0x38] sm:$0xff] %v101
        $region36: #{custom-call.11} parent=30 // loop_footer
          %s103 = scalar_lea.vmem %s81, 64
          %s104 = scalar_lea.vmem %s82, 64
          %v105 = vld [vmem:[%s81 + $0x40] sm:$0xff]
        $region37: #{custom-call.11} parent=30 // loop_footer_branch
          %106 = sbr.rel target = $region33
        $region38: #{custom-call.11} parent=30 // loop_exit
          _
        // While loop
        $region39: #{custom-call.11} parent=30 // loop_pre_header
          _
        $region40: #{custom-call.11} parent=30 // loop_header
          %s107 = sphi %s81, %s115
          %s108 = sphi %s82, %s116
          %v109 = vphi %v83, %v109
          %p110 = scmp.gt.s32.totalorder %s107, %s79
        $region41: #{custom-call.11} parent=30 // loop_header_branch
          %112 = sbr.rel (%p110) target = $region45
        $region42: #{custom-call.11} parent=30 // loop_body
          %v113 = vld [vmem:[%s107] sm:$0xff]
          %114 = vst [vmem:[%s108] sm:$0xff] %v113
        $region43: #{custom-call.11} parent=30 // loop_footer
          %s115 = scalar_lea.vmem %s107, 8
          %s116 = scalar_lea.vmem %s108, 8
        $region44: #{custom-call.11} parent=30 // loop_footer_branch
          %117 = sbr.rel target = $region40
        $region45: #{custom-call.11} parent=30 // loop_exit
          _
      $region31: #{custom-call.11} parent=26 // pred_fallthru
        _
      %s119 = ssub.s32 16, 1
      %s120 = smul.u32 0, 8
      %s121 = scalar_lea.vmem [#allocation3], %s120
      %s122 = smul.u32 0, 8
      %s123 = scalar_lea.vmem %s1, %s122
      %v124 = vld [vmem:[%s123] sm:%s119]
      %125 = vst [vmem:[%s121] sm:%s119] %v124
    $region27: #{custom-call.11} parent=1 // pred_fallthru
      _
    // Predicated region
    $region46: #{custom-call.11} parent=1 // pred_check
      _
    $region47: #{custom-call.11} parent=1 // pred_check_branch
      %127 = sbr.rel (0) target = $region49
    $region48: #{custom-call.11} parent=1 // pred_region
      %p129 = scmp.gt.s32.totalorder 0, 0
      // Predicated region
      $region50: #{custom-call.11} parent=48 // pred_check
        %p130 = pneg %p129
      $region51: #{custom-call.11} parent=48 // pred_check_branch
        %132 = sbr.rel (%p130) target = $region53
      $region52: #{custom-call.11} parent=48 // pred_region
        %s133 = ssub.s32 0, 1
        %s134 = smul.u32 %s133, 8
        %s135 = scalar_lea.vmem %s2, %s134
        %v136 = vld [vmem:[%s2] sm:$0xff]
        // While loop
        $region54: #{custom-call.11} parent=52 // loop_pre_header
          _
        $region55: #{custom-call.11} parent=52 // loop_header
          %s137 = sphi %s2, %s159
          %s138 = sphi [#allocation5], %s160
          %v139 = vphi %v136, %v161
          %s140 = ssub.s32 %s135, 64
          %p141 = scmp.gt.s32.totalorder %s137, %s140
        $region56: #{custom-call.11} parent=52 // loop_header_branch
          %143 = sbr.rel (%p141) target = $region60
        $region57: #{custom-call.11} parent=52 // loop_body
          %144 = vst [vmem:[%s138] sm:$0xff] %v139
          %v145 = vld [vmem:[%s137 + $0x8] sm:$0xff]
          %146 = vst [vmem:[%s138 + $0x8] sm:$0xff] %v145
          %v147 = vld [vmem:[%s137 + $0x10] sm:$0xff]
          %148 = vst [vmem:[%s138 + $0x10] sm:$0xff] %v147
          %v149 = vld [vmem:[%s137 + $0x18] sm:$0xff]
          %150 = vst [vmem:[%s138 + $0x18] sm:$0xff] %v149
          %v151 = vld [vmem:[%s137 + $0x20] sm:$0xff]
          %152 = vst [vmem:[%s138 + $0x20] sm:$0xff] %v151
          %v153 = vld [vmem:[%s137 + $0x28] sm:$0xff]
          %154 = vst [vmem:[%s138 + $0x28] sm:$0xff] %v153
          %v155 = vld [vmem:[%s137 + $0x30] sm:$0xff]
          %156 = vst [vmem:[%s138 + $0x30] sm:$0xff] %v155
          %v157 = vld [vmem:[%s137 + $0x38] sm:$0xff]
          %158 = vst [vmem:[%s138 + $0x38] sm:$0xff] %v157
        $region58: #{custom-call.11} parent=52 // loop_footer
          %s159 = scalar_lea.vmem %s137, 64
          %s160 = scalar_lea.vmem %s138, 64
          %v161 = vld [vmem:[%s137 + $0x40] sm:$0xff]
        $region59: #{custom-call.11} parent=52 // loop_footer_branch
          %162 = sbr.rel target = $region55
        $region60: #{custom-call.11} parent=52 // loop_exit
          _
        // While loop
        $region61: #{custom-call.11} parent=52 // loop_pre_header
          _
        $region62: #{custom-call.11} parent=52 // loop_header
          %s163 = sphi %s137, %s171
          %s164 = sphi %s138, %s172
          %v165 = vphi %v139, %v165
          %p166 = scmp.gt.s32.totalorder %s163, %s135
        $region63: #{custom-call.11} parent=52 // loop_header_branch
          %168 = sbr.rel (%p166) target = $region67
        $region64: #{custom-call.11} parent=52 // loop_body
          %v169 = vld [vmem:[%s163] sm:$0xff]
          %170 = vst [vmem:[%s164] sm:$0xff] %v169
        $region65: #{custom-call.11} parent=52 // loop_footer
          %s171 = scalar_lea.vmem %s163, 8
          %s172 = scalar_lea.vmem %s164, 8
        $region66: #{custom-call.11} parent=52 // loop_footer_branch
          %173 = sbr.rel target = $region62
        $region67: #{custom-call.11} parent=52 // loop_exit
          _
      $region53: #{custom-call.11} parent=48 // pred_fallthru
        _
      %s175 = ssub.s32 16, 1
      %s176 = smul.u32 0, 8
      %s177 = scalar_lea.vmem [#allocation5], %s176
      %s178 = smul.u32 0, 8
      %s179 = scalar_lea.vmem %s2, %s178
      %v180 = vld [vmem:[%s179] sm:%s175]
      %181 = vst [vmem:[%s177] sm:%s175] %v180
    $region49: #{custom-call.11} parent=1 // pred_fallthru
      _
    // Predicated region
    $region68: #{custom-call.11} parent=1 // pred_check
      _
    $region69: #{custom-call.11} parent=1 // pred_check_branch
      %183 = sbr.rel (0) target = $region71
    $region70: #{custom-call.11} parent=1 // pred_region
      %p185 = scmp.gt.s32.totalorder 0, 0
      // Predicated region
      $region72: #{custom-call.11} parent=70 // pred_check
        %p186 = pneg %p185
      $region73: #{custom-call.11} parent=70 // pred_check_branch
        %188 = sbr.rel (%p186) target = $region75
      $region74: #{custom-call.11} parent=70 // pred_region
        %s189 = ssub.s32 0, 1
        %s190 = smul.u32 %s189, 8
        %s191 = scalar_lea.vmem %s3, %s190
        %v192 = vld [vmem:[%s3] sm:$0xff]
        // While loop
        $region76: #{custom-call.11} parent=74 // loop_pre_header
          _
        $region77: #{custom-call.11} parent=74 // loop_header
          %s193 = sphi %s3, %s215
          %s194 = sphi [#allocation7], %s216
          %v195 = vphi %v192, %v217
          %s196 = ssub.s32 %s191, 64
          %p197 = scmp.gt.s32.totalorder %s193, %s196
        $region78: #{custom-call.11} parent=74 // loop_header_branch
          %199 = sbr.rel (%p197) target = $region82
        $region79: #{custom-call.11} parent=74 // loop_body
          %200 = vst [vmem:[%s194] sm:$0xff] %v195
          %v201 = vld [vmem:[%s193 + $0x8] sm:$0xff]
          %202 = vst [vmem:[%s194 + $0x8] sm:$0xff] %v201
          %v203 = vld [vmem:[%s193 + $0x10] sm:$0xff]
          %204 = vst [vmem:[%s194 + $0x10] sm:$0xff] %v203
          %v205 = vld [vmem:[%s193 + $0x18] sm:$0xff]
          %206 = vst [vmem:[%s194 + $0x18] sm:$0xff] %v205
          %v207 = vld [vmem:[%s193 + $0x20] sm:$0xff]
          %208 = vst [vmem:[%s194 + $0x20] sm:$0xff] %v207
          %v209 = vld [vmem:[%s193 + $0x28] sm:$0xff]
          %210 = vst [vmem:[%s194 + $0x28] sm:$0xff] %v209
          %v211 = vld [vmem:[%s193 + $0x30] sm:$0xff]
          %212 = vst [vmem:[%s194 + $0x30] sm:$0xff] %v211
          %v213 = vld [vmem:[%s193 + $0x38] sm:$0xff]
          %214 = vst [vmem:[%s194 + $0x38] sm:$0xff] %v213
        $region80: #{custom-call.11} parent=74 // loop_footer
          %s215 = scalar_lea.vmem %s193, 64
          %s216 = scalar_lea.vmem %s194, 64
          %v217 = vld [vmem:[%s193 + $0x40] sm:$0xff]
        $region81: #{custom-call.11} parent=74 // loop_footer_branch
          %218 = sbr.rel target = $region77
        $region82: #{custom-call.11} parent=74 // loop_exit
          _
        // While loop
        $region83: #{custom-call.11} parent=74 // loop_pre_header
          _
        $region84: #{custom-call.11} parent=74 // loop_header
          %s219 = sphi %s193, %s227
          %s220 = sphi %s194, %s228
          %v221 = vphi %v195, %v221
          %p222 = scmp.gt.s32.totalorder %s219, %s191
        $region85: #{custom-call.11} parent=74 // loop_header_branch
          %224 = sbr.rel (%p222) target = $region89
        $region86: #{custom-call.11} parent=74 // loop_body
          %v225 = vld [vmem:[%s219] sm:$0xff]
          %226 = vst [vmem:[%s220] sm:$0xff] %v225
        $region87: #{custom-call.11} parent=74 // loop_footer
          %s227 = scalar_lea.vmem %s219, 8
          %s228 = scalar_lea.vmem %s220, 8
        $region88: #{custom-call.11} parent=74 // loop_footer_branch
          %229 = sbr.rel target = $region84
        $region89: #{custom-call.11} parent=74 // loop_exit
          _
      $region75: #{custom-call.11} parent=70 // pred_fallthru
        _
      %s231 = ssub.s32 16, 1
      %s232 = smul.u32 0, 8
      %s233 = scalar_lea.vmem [#allocation7], %s232
      %s234 = smul.u32 0, 8
      %s235 = scalar_lea.vmem %s3, %s234
      %v236 = vld [vmem:[%s235] sm:%s231]
      %237 = vst [vmem:[%s233] sm:%s231] %v236
    $region71: #{custom-call.11} parent=1 // pred_fallthru
      _
    %s239 = ssub.s32 16, 1
    %v240 = vld [vmem:[#allocation1] sm:%s239]
    %241 = vst [vmem:[#allocation0] sm:%s239] %v240
    %s243 = ssub.s32 16, 1
    %v244 = vld [vmem:[#allocation3] sm:%s243]
    %245 = vst [vmem:[#allocation2] sm:%s243] %v244
    %s247 = ssub.s32 16, 1
    %v248 = vld [vmem:[#allocation5] sm:%s247]
    %249 = vst [vmem:[#allocation4] sm:%s247] %v248
    %s251 = ssub.s32 16, 1
    %v252 = vld [vmem:[#allocation7] sm:%s251]
    %253 = vst [vmem:[#allocation6] sm:%s251] %v252
    %s254 = smov [#allocation23]
    %v255 = vld [vmem:[#allocation0] sm:$0xff]
    %256 = vst [vmem:[%s254] sm:$0xff] %v255
    %s257 = smov [#allocation24]
    %v258 = vld [vmem:[#allocation2] sm:$0xff]
    %259 = vst [vmem:[%s257] sm:$0xff] %v258
    %s260 = smov [#allocation25]
    %v261 = vld [vmem:[#allocation4] sm:$0xff]
    %262 = vst [vmem:[%s260] sm:$0xff] %v261
    %s263 = smov [#allocation26]
    %v264 = vld [vmem:[#allocation6] sm:$0xff]
    %265 = vst [vmem:[%s263] sm:$0xff] %v264
    %266 = vst [vmem:[#allocation12] sm:$0xff] 0.0
    %267 = vst [vmem:[#allocation15] sm:$0xff] 0.0
    %268 = vst [vmem:[#allocation18] sm:$0xff] 0.0
    %269 = vst [vmem:[#allocation20] sm:$0xff] 0.0
    %s270 = smov [#allocation12]
    %v271 = vlaneseq
    %v272 = vand.u32 %v271, 127
    %v273 = vmov %v272
    %v274 = vlaneseq
    %v275 = vshrl.u32 %v274, 7
    %v276 = vmov %v275
    %v277 = vld [vmem:[%s270] sm:$0xf]
    %vm280 = vcmp.eq.s32.totalorder %v276, %v273
    %v281 = vsel %vm280, 1.0, %v277
    %282 = vst [vmem:[%s270] sm:$0xf] %v281
    %s283 = smov [#allocation20]
    %v284 = vlaneseq
    %v285 = vand.u32 %v284, 127
    %v286 = vmov %v285
    %v287 = vlaneseq
    %v288 = vshrl.u32 %v287, 7
    %v289 = vmov %v288
    %v290 = vld [vmem:[%s283] sm:$0xf]
    %vm293 = vcmp.eq.s32.totalorder %v289, %v286
    %v294 = vsel %vm293, 1.0, %v290
    %295 = vst [vmem:[%s283] sm:$0xf] %v294
    // While loop
    $region90: #{custom-call.11} parent=1 // loop_pre_header
      _
    $region91: #{custom-call.11} parent=1 // loop_header
      %s297 = sphi 0, %s879
      %v298 = vlaneseq
      %v299 = vand.u32 %v298, 127
      %v300 = vmov %v299
      %v301 = vlaneseq
      %v302 = vshrl.u32 %v301, 7
      %v303 = vmov %v302
      %s304 = smov [#allocation23]
      %v305 = vlaneseq
      %v306 = vand.u32 %v305, 127
      %vm307 = vcmp.ge.s32.totalorder %v306, 0
      %vm308 = vcmp.lt.s32.totalorder %v306, 4
      %vm309 = vmand %vm307, %vm308
      %v310 = vld [vmem:[%s304] sm:$0xf]
      %v311 = vsel %vm309, %v310, 0.0
      %v312 = vmul.f32 %v311, %v311
      %vm315 = vcmp.eq.s32.totalorder %v303, %v300
      %v316 = vsel %vm315, 0.0, %v312
      %v317 = vlaneseq
      %v318 = vand.u32 %v317, 127
      %v319 = vmov %v318
      %v320 = vlaneseq
      %v321 = vshrl.u32 %v320, 7
      %v322 = vmov %v321
      %s323 = smov [#allocation24]
      %v324 = vlaneseq
      %v325 = vand.u32 %v324, 127
      %vm326 = vcmp.ge.s32.totalorder %v325, 0
      %vm327 = vcmp.lt.s32.totalorder %v325, 4
      %vm328 = vmand %vm326, %vm327
      %v329 = vld [vmem:[%s323] sm:$0xf]
      %v330 = vsel %vm328, %v329, 0.0
      %v331 = vmul.f32 %v330, %v330
      %v332 = vadd.f32 %v316, %v331
      %v333 = vadd.f32 %v312, %v331
      %v334 = vlaneseq
      %v335 = vand.u32 %v334, 127
      %v336 = vmov %v335
      %v337 = vlaneseq
      %v338 = vshrl.u32 %v337, 7
      %v339 = vmov %v338
      %s340 = smov [#allocation25]
      %v341 = vlaneseq
      %v342 = vand.u32 %v341, 127
      %vm343 = vcmp.ge.s32.totalorder %v342, 0
      %vm344 = vcmp.lt.s32.totalorder %v342, 4
      %vm345 = vmand %vm343, %vm344
      %v346 = vld [vmem:[%s340] sm:$0xf]
      %v347 = vsel %vm345, %v346, 0.0
      %v348 = vmul.f32 %v347, %v347
      %v349 = vadd.f32 %v332, %v348
      %v350 = vadd.f32 %v333, %v348
      %v351 = vlaneseq
      %v352 = vand.u32 %v351, 127
      %v353 = vmov %v352
      %v354 = vlaneseq
      %v355 = vshrl.u32 %v354, 7
      %v356 = vmov %v355
      %s357 = smov [#allocation26]
      %v358 = vlaneseq
      %v359 = vand.u32 %v358, 127
      %vm360 = vcmp.ge.s32.totalorder %v359, 0
      %vm361 = vcmp.lt.s32.totalorder %v359, 4
      %vm362 = vmand %vm360, %vm361
      %v363 = vld [vmem:[%s357] sm:$0xf]
      %v364 = vsel %vm362, %v363, 0.0
      %v365 = vmul.f32 %v364, %v364
      %vm368 = vcmp.eq.s32.totalorder %v356, %v353
      %v369 = vsel %vm368, 0.0, %v365
      %v370 = vadd.f32 %v349, %v369
      %v371 = vadd.f32 %v350, %v365
      %372 = vadd.xlane.f32.xlu0 %v371
      %v373 = vpop.xlane.xlu0 %372
      %v374 = vrot.slane %v373, 4
      %v375 = vadd.f32 %v373, %v374
      %v376 = vrot.slane %v375, 2
      %v377 = vadd.f32 %v375, %v376
      %v378 = vrot.slane %v377, 1
      %v379 = vadd.f32 %v377, %v378
      %380 = vadd.xlane.f32.xlu0 %v370
      %v381 = vpop.xlane.xlu0 %380
      %v382 = vrot.slane %v381, 4
      %v383 = vadd.f32 %v381, %v382
      %v384 = vrot.slane %v383, 2
      %v385 = vadd.f32 %v383, %v384
      %v386 = vrot.slane %v385, 1
      %v387 = vadd.f32 %v385, %v386
      %s388 = vtos %v387
      %s389 = vtos %v379
      %s390 = smul.f32 1e-10, %s389
      %p391 = scmp.le.f32.partialorder %s388, %s390
      %p392 = scmp.ge.s32.totalorder %s297, 15
      %p393 = por %p391, %p392
    $region92: #{custom-call.11} parent=1 // loop_header_branch
      %881 = sbr.rel (%p393) target = $region96
    $region93: #{custom-call.11} parent=1 // loop_body
      loop: start=0, step=1, limit=7
      $region97: #{custom-call.11} parent=93 // loop_pre_header
        _
      $region98: #{custom-call.11} parent=93 // loop_header
        %s395 = sphi 0, %s399
        %p396 = scmp.ge.s32.totalorder %s395, 7
      $region99: #{custom-call.11} parent=93 // loop_header_branch
        %398 = sbr.rel (%p396) target = $region103
      $region100: #{custom-call.11} parent=93 // loop_body
        #allocation27 [shape = 'f32[1024]{0}', space=vmem, size = 0x1000, scoped, tag = 'a_tl_diag vmem']
        #allocation28 [shape = 'f32[1024]{0}', space=vmem, size = 0x1000, scoped, tag = 'a_tr_diag vmem']
        #allocation29 [shape = 'f32[1024]{0}', space=vmem, size = 0x1000, scoped, tag = 'a_br_diag vmem']
        #allocation30 [shape = 'f32[1024]{0}', space=vmem, size = 0x1000, scoped, tag = 'rt1 vmem']
        #allocation31 [shape = 'f32[1024]{0}', space=vmem, size = 0x1000, scoped, tag = 'rt2 vmem']
        #allocation32 [shape = 'f32[1024]{0}', space=vmem, size = 0x1000, scoped, tag = 'c vmem']
        #allocation33 [shape = 'f32[1024]{0}', space=vmem, size = 0x1000, scoped, tag = 's vmem']
        #allocation34 [shape = 'f32[4096]{0}', space=vmem, size = 0x4000, scoped, tag = 'c broadcast']
        #allocation35 [shape = 'f32[4096]{0}', space=vmem, size = 0x4000, scoped, tag = 's broadcast']
        %s400 = smov [#allocation23]
        %s401 = smov [#allocation27]
        %v402 = vlaneseq
        %v403 = vand.u32 %v402, 127
        %v404 = vmov %v403
        %v405 = vlaneseq
        %v406 = vshrl.u32 %v405, 7
        %v407 = vmov %v406
        %v408 = vld [vmem:[%s400] sm:$0xf]
        %vm411 = vcmp.eq.s32.totalorder %v407, %v404
        %v412 = vsel %vm411, %v408, 0.0
        %v413 = vrot.slane %v412, 4
        %v414 = vadd.f32 %v412, %v413
        %v415 = vrot.slane %v414, 2
        %v416 = vadd.f32 %v414, %v415
        %v417 = vrot.slane %v416, 1
        %v418 = vadd.f32 %v416, %v417
        %419 = vst [vmem:[%s401] sm:$0x1] %v418
        %s420 = smov [#allocation24]
        %s421 = smov [#allocation28]
        %v422 = vlaneseq
        %v423 = vand.u32 %v422, 127
        %v424 = vmov %v423
        %v425 = vlaneseq
        %v426 = vshrl.u32 %v425, 7
        %v427 = vmov %v426
        %v428 = vld [vmem:[%s420] sm:$0xf]
        %vm431 = vcmp.eq.s32.totalorder %v427, %v424
        %v432 = vsel %vm431, %v428, 0.0
        %v433 = vrot.slane %v432, 4
        %v434 = vadd.f32 %v432, %v433
        %v435 = vrot.slane %v434, 2
        %v436 = vadd.f32 %v434, %v435
        %v437 = vrot.slane %v436, 1
        %v438 = vadd.f32 %v436, %v437
        %439 = vst [vmem:[%s421] sm:$0x1] %v438
        %s440 = smov [#allocation26]
        %s441 = smov [#allocation29]
        %v442 = vlaneseq
        %v443 = vand.u32 %v442, 127
        %v444 = vmov %v443
        %v445 = vlaneseq
        %v446 = vshrl.u32 %v445, 7
        %v447 = vmov %v446
        %v448 = vld [vmem:[%s440] sm:$0xf]
        %vm451 = vcmp.eq.s32.totalorder %v447, %v444
        %v452 = vsel %vm451, %v448, 0.0
        %v453 = vrot.slane %v452, 4
        %v454 = vadd.f32 %v452, %v453
        %v455 = vrot.slane %v454, 2
        %v456 = vadd.f32 %v454, %v455
        %v457 = vrot.slane %v456, 1
        %v458 = vadd.f32 %v456, %v457
        %459 = vst [vmem:[%s441] sm:$0x1] %v458
        %s460 = smov [#allocation32]
        %s461 = smov [#allocation33]
        %s462 = smov [#allocation27]
        %v463 = vld [vmem:[%s462] sm:$0xff]
        %s464 = smov [#allocation28]
        %v465 = vld [vmem:[%s464] sm:$0xff]
        %s466 = smov [#allocation29]
        %v467 = vld [vmem:[%s466] sm:$0xff]
        %v468 = vsub.f32 %v467, %v463
        %v469 = vmul.f32 2.0, %v465
        %v470 = vrcp.pop %v469
        %v471 = vmul.f32 %v469, %v470
        %v472 = vsub.f32 1.0, %v471
        %v473 = vmul.f32 %v470, %v472
        %v474 = vadd.f32 %v470, %v473
        %vm475 = vweird.f32 %v469
        %vm476 = vweird.f32 %v470
        %vm477 = vmor %vm475, %vm476
        %v478 = vsel %vm477, %v470, %v474
        %v479 = vand.u32 2147483647, %v469
        %vm480 = vcmp.eq.f32.partialorder %v479, 8.507059e+37
        %v481 = vand.u32 %v469, 2147483648
        %v482 = vor.u32 1.1754944e-38, %v481
        %v483 = vsel %vm480, %v482, %v478
        %v484 = vmul.f32 %v468, %v483
        %vm485 = vcmp.ge.f32.partialorder %v484, 0.0
        %v486 = vmul.f32 %v484, %v484
        %v487 = vadd.f32 1.0, %v486
        %v488 = vrsqrt.pop %v487
        %v489 = vmul.f32 %v488, %v487
        %v490 = vmul.f32 %v489, %v488
        %v491 = vmul.f32 0.5, %v490
        %v492 = vsub.f32 1.5, %v491
        %v493 = vmul.f32 %v488, %v492
        %v494 = vmul.f32 %v487, %v493
        %vm495 = vcmp.eq.f32.partialorder %v487, inf
        %v496 = vsel %vm495, %v487, %v494
        %vm497 = vcmp.eq.f32.partialorder %v487, 0.0
        %v498 = vand.u32 %v487, 2147483648
        %v499 = vsel %vm497, %v498, %v496
        %v500 = vxor.u32 %v499, 2147483648
        %v501 = vsel %vm485, %v499, %v500
        %v502 = vadd.f32 %v484, %v501
        %v503 = vrcp.pop %v502
        %v504 = vmul.f32 %v502, %v503
        %v505 = vsub.f32 1.0, %v504
        %v506 = vmul.f32 %v503, %v505
        %v507 = vadd.f32 %v503, %v506
        %vm508 = vweird.f32 %v502
        %vm509 = vweird.f32 %v503
        %vm510 = vmor %vm508, %vm509
        %v511 = vsel %vm510, %v503, %v507
        %v512 = vand.u32 2147483647, %v502
        %vm513 = vcmp.eq.f32.partialorder %v512, 8.507059e+37
        %v514 = vand.u32 %v502, 2147483648
        %v515 = vor.u32 1.1754944e-38, %v514
        %v516 = vsel %vm513, %v515, %v511
        %v517 = vand.u32 2147483647, %v463
        %v518 = vand.u32 2147483647, %v465
        %v519 = vand.u32 2147483647, %v467
        %v520 = vmin.f32 %v517, %v519
        %v521 = vmul.f32 1.1920929e-08, %v520
        %vm522 = vcmp.le.f32.partialorder %v518, %v521
        %v523 = vsel %vm522, 0.0, %v516
        %v524 = vmul.f32 %v523, %v523
        %v525 = vadd.f32 1.0, %v524
        %v526 = vrsqrt.pop %v525
        %v527 = vmul.f32 %v526, %v525
        %v528 = vmul.f32 %v527, %v526
        %v529 = vmul.f32 0.5, %v528
        %v530 = vsub.f32 1.5, %v529
        %v531 = vmul.f32 %v526, %v530
        %vm532 = vweird.f32 %v525
        %vm533 = vweird.f32 %v526
        %vm534 = vmor %vm532, %vm533
        %v535 = vsel %vm534, %v526, %v531
        %v536 = vmul.f32 %v523, %v535
        %v537 = vmul.f32 %v523, %v465
        %v538 = vsub.f32 %v463, %v537
        %v539 = vmul.f32 %v523, %v465
        %v540 = vadd.f32 %v467, %v539
        %s541 = smov [#allocation30]
        %542 = vst [vmem:[%s541] sm:$0xff] %v538
        %s543 = smov [#allocation31]
        %544 = vst [vmem:[%s543] sm:$0xff] %v540
        %s545 = smov %s460
        %546 = vst [vmem:[%s545] sm:$0xff] %v535
        %s547 = smov %s461
        %548 = vst [vmem:[%s547] sm:$0xff] %v536
        %s549 = smov [#allocation32]
        %v550 = vld [vmem:[%s549] ss:$0 sm:$0xff]
        %v551 = vlaneseq
        %v552 = vand.u32 %v551, 127
        %v553 = vmov %v552
        %v554 = vlaneseq
        %v555 = vshrl.u32 %v554, 7
        %v556 = vmov %v555
        %vm558 = vcmp.eq.s32.totalorder %v556, %v553
        %v559 = vsel %vm558, %v550, 0.0
        %560 = vadd.xlane.f32.xlu0 %v559
        %v561 = vpop.xlane.xlu0 %560
        %s562 = smov [#allocation34]
        %563 = vst [vmem:[%s562] sm:$0xff] %v561
        %s564 = smov [#allocation33]
        %v565 = vld [vmem:[%s564] ss:$0 sm:$0xff]
        %v566 = vlaneseq
        %v567 = vand.u32 %v566, 127
        %v568 = vmov %v567
        %v569 = vlaneseq
        %v570 = vshrl.u32 %v569, 7
        %v571 = vmov %v570
        %vm573 = vcmp.eq.s32.totalorder %v571, %v568
        %v574 = vsel %vm573, %v565, 0.0
        %575 = vadd.xlane.f32.xlu0 %v574
        %v576 = vpop.xlane.xlu0 %575
        %s577 = smov [#allocation35]
        %578 = vst [vmem:[%s577] sm:$0xff] %v576
        %s579 = smov [#allocation34]
        %v580 = vld [vmem:[%s579] sm:$0xff]
        %s581 = smov [#allocation35]
        %v582 = vld [vmem:[%s581] sm:$0xff]
        %s583 = smov [#allocation23]
        %s584 = smov [#allocation24]
        %s585 = smov [#allocation25]
        %s586 = smov [#allocation26]
        %v587 = vld [vmem:[%s583] sm:$0xf]
        %v588 = vld [vmem:[%s584] sm:$0xf]
        %v589 = vld [vmem:[%s585] sm:$0xf]
        %v590 = vld [vmem:[%s586] sm:$0xf]
        %v591 = vmul.f32 %v580, %v587
        %v592 = vmul.f32 %v582, %v589
        %v593 = vsub.f32 %v591, %v592
        %v594 = vmul.f32 %v580, %v588
        %v595 = vmul.f32 %v582, %v590
        %v596 = vsub.f32 %v594, %v595
        %v597 = vmul.f32 %v582, %v587
        %v598 = vmul.f32 %v580, %v589
        %v599 = vadd.f32 %v597, %v598
        %v600 = vmul.f32 %v582, %v588
        %v601 = vmul.f32 %v580, %v590
        %v602 = vadd.f32 %v600, %v601
        %603 = vst [vmem:[%s583] sm:$0xf] %v593
        %604 = vst [vmem:[%s584] sm:$0xf] %v596
        %605 = vst [vmem:[%s585] sm:$0xf] %v599
        %606 = vst [vmem:[%s586] sm:$0xf] %v602
        %s607 = smov [#allocation32]
        %v608 = vld [vmem:[%s607] ss:$0 sm:$0xff]
        %s609 = smov [#allocation33]
        %v610 = vld [vmem:[%s609] ss:$0 sm:$0xff]
        %s611 = smov [#allocation23]
        %s612 = smov [#allocation24]
        %s613 = smov [#allocation25]
        %s614 = smov [#allocation26]
        %v615 = vld [vmem:[%s611] sm:$0xf]
        %v616 = vld [vmem:[%s612] sm:$0xf]
        %v617 = vld [vmem:[%s613] sm:$0xf]
        %v618 = vld [vmem:[%s614] sm:$0xf]
        %v619 = vmul.f32 %v608, %v615
        %v620 = vmul.f32 %v610, %v616
        %v621 = vsub.f32 %v619, %v620
        %v622 = vmul.f32 %v610, %v615
        %v623 = vmul.f32 %v608, %v616
        %v624 = vadd.f32 %v622, %v623
        %v625 = vmul.f32 %v608, %v617
        %v626 = vmul.f32 %v610, %v618
        %v627 = vsub.f32 %v625, %v626
        %v628 = vmul.f32 %v610, %v617
        %v629 = vmul.f32 %v608, %v618
        %v630 = vadd.f32 %v628, %v629
        %631 = vst [vmem:[%s611] sm:$0xf] %v621
        %632 = vst [vmem:[%s612] sm:$0xf] %v624
        %633 = vst [vmem:[%s613] sm:$0xf] %v627
        %634 = vst [vmem:[%s614] sm:$0xf] %v630
        %s635 = smov [#allocation23]
        %s636 = smov [#allocation30]
        %v637 = vlaneseq
        %v638 = vand.u32 %v637, 127
        %v639 = vmov %v638
        %v640 = vlaneseq
        %v641 = vshrl.u32 %v640, 7
        %v642 = vmov %v641
        %v643 = vld [vmem:[%s636] ss:$0 sm:$0xff]
        %v644 = vld [vmem:[%s635] sm:$0xf]
        %vm647 = vcmp.eq.s32.totalorder %v642, %v639
        %v648 = vsel %vm647, %v643, %v644
        %649 = vst [vmem:[%s635] sm:$0xf] %v648
        %s650 = smov [#allocation24]
        %v651 = vlaneseq
        %v652 = vand.u32 %v651, 127
        %v653 = vmov %v652
        %v654 = vlaneseq
        %v655 = vshrl.u32 %v654, 7
        %v656 = vmov %v655
        %v657 = vld [vmem:[%s650] sm:$0xf]
        %vm660 = vcmp.eq.s32.totalorder %v656, %v653
        %v661 = vsel %vm660, 0.0, %v657
        %662 = vst [vmem:[%s650] sm:$0xf] %v661
        %s663 = smov [#allocation25]
        %v664 = vlaneseq
        %v665 = vand.u32 %v664, 127
        %v666 = vmov %v665
        %v667 = vlaneseq
        %v668 = vshrl.u32 %v667, 7
        %v669 = vmov %v668
        %v670 = vld [vmem:[%s663] sm:$0xf]
        %vm673 = vcmp.eq.s32.totalorder %v669, %v666
        %v674 = vsel %vm673, 0.0, %v670
        %675 = vst [vmem:[%s663] sm:$0xf] %v674
        %s676 = smov [#allocation26]
        %s677 = smov [#allocation31]
        %v678 = vlaneseq
        %v679 = vand.u32 %v678, 127
        %v680 = vmov %v679
        %v681 = vlaneseq
        %v682 = vshrl.u32 %v681, 7
        %v683 = vmov %v682
        %v684 = vld [vmem:[%s677] ss:$0 sm:$0xff]
        %v685 = vld [vmem:[%s676] sm:$0xf]
        %vm688 = vcmp.eq.s32.totalorder %v683, %v680
        %v689 = vsel %vm688, %v684, %v685
        %690 = vst [vmem:[%s676] sm:$0xf] %v689
        %s691 = smov [#allocation23]
        %s692 = smov [#allocation24]
        %v693 = vld [vmem:[%s692] sm:$0xf]
        %694 = vrot.lane.b32.xlu0 %v693, 1
        %v695 = vpop.permute.xlu0 %694
        %v696 = vld [vmem:[%s691] sm:$0xf]
        %v697 = vld [vmem:[%s691] sm:$0xf]
        %698 = vrot.lane.b32.xlu0 %v697, 1
        %v699 = vpop.permute.xlu0 %698
        %v700 = vlaneseq
        %v701 = vand.u32 %v700, 127
        %vm702 = vcmp.eq.s32.totalorder %v701, 0
        %v703 = vsel %vm702, %v697, %v699
        %v704 = vlaneseq
        %v705 = vand.u32 %v704, 127
        %vm706 = vcmp.eq.s32.totalorder %v705, 1
        %v707 = vsel %vm706, %v695, %v703
        %v708 = vlaneseq
        %v709 = vand.u32 %v708, 127
        %vm710 = vcmp.ge.s32.totalorder %v709, 0
        %vm711 = vcmp.lt.s32.totalorder %v709, 4
        %vm712 = vmand %vm710, %vm711
        %v713 = vsel %vm712, %v707, 0.0
        %v714 = vld [vmem:[%s692] sm:$0xf]
        %715 = vrot.lane.b32.xlu0 %v714, 127
        %v716 = vpop.permute.xlu0 %715
        %v717 = vlaneseq
        %v718 = vand.u32 %v717, 127
        %vm719 = vcmp.eq.s32.totalorder %v718, 3
        %v720 = vsel %vm719, %v696, %v716
        %721 = vst [vmem:[%s691] sm:$0xf] %v713
        %722 = vst [vmem:[%s692] sm:$0xf] %v720
        %s723 = smov [#allocation25]
        %s724 = smov [#allocation26]
        %v725 = vld [vmem:[%s724] sm:$0xf]
        %726 = vrot.lane.b32.xlu0 %v725, 1
        %v727 = vpop.permute.xlu0 %726
        %v728 = vld [vmem:[%s723] sm:$0xf]
        %v729 = vld [vmem:[%s723] sm:$0xf]
        %730 = vrot.lane.b32.xlu0 %v729, 1
        %v731 = vpop.permute.xlu0 %730
        %v732 = vlaneseq
        %v733 = vand.u32 %v732, 127
        %vm734 = vcmp.eq.s32.totalorder %v733, 0
        %v735 = vsel %vm734, %v729, %v731
        %v736 = vlaneseq
        %v737 = vand.u32 %v736, 127
        %vm738 = vcmp.eq.s32.totalorder %v737, 1
        %v739 = vsel %vm738, %v727, %v735
        %v740 = vlaneseq
        %v741 = vand.u32 %v740, 127
        %vm742 = vcmp.ge.s32.totalorder %v741, 0
        %vm743 = vcmp.lt.s32.totalorder %v741, 4
        %vm744 = vmand %vm742, %vm743
        %v745 = vsel %vm744, %v739, 0.0
        %v746 = vld [vmem:[%s724] sm:$0xf]
        %747 = vrot.lane.b32.xlu0 %v746, 127
        %v748 = vpop.permute.xlu0 %747
        %v749 = vlaneseq
        %v750 = vand.u32 %v749, 127
        %vm751 = vcmp.eq.s32.totalorder %v750, 3
        %v752 = vsel %vm751, %v728, %v748
        %753 = vst [vmem:[%s723] sm:$0xf] %v745
        %754 = vst [vmem:[%s724] sm:$0xf] %v752
        %s755 = smov [#allocation23]
        %s756 = smov [#allocation25]
        %v757 = vld [vmem:[%s755] ss:$0 sm:$0xff]
        %s759 = scalar_lea.vmem %s755, 4294967295
        %v760 = vld [vmem:[%s759] sm:$0xe]
        %v761 = vlaneseq
        %v762 = vshrl.u32 %v761, 7
        %vm763 = vcmp.eq.s32.totalorder %v762, 0
        %v764 = vsel %vm763, %v757, %v760
        %s765 = scalar_lea.vmem %s755, 3
        %v766 = vld [vmem:[%s765] ss:$0 sm:$0xff]
        %767 = vst [vmem:[%s755] sm:$0xf] %v764
        %v768 = vld [vmem:[%s756] ss:$0 sm:$0xff]
        %s769 = scalar_lea.vmem %s755, 1
        %770 = vst [vmem:[%s769] sm:$0x1] %v768
        %s771 = scalar_lea.vmem %s756, 1
        %v772 = vld [vmem:[%s771] sm:$0x7]
        %v773 = vlaneseq
        %v774 = vshrl.u32 %v773, 7
        %vm775 = vcmp.eq.s32.totalorder %v774, 3
        %v776 = vsel %vm775, %v766, %v772
        %v777 = vld [vmem:[%s756] ss:$0 sm:$0xff]
        %778 = vst [vmem:[%s756] sm:$0xf] %v776
        %s779 = smov [#allocation24]
        %s780 = smov [#allocation26]
        %v781 = vld [vmem:[%s779] ss:$0 sm:$0xff]
        %s783 = scalar_lea.vmem %s779, 4294967295
        %v784 = vld [vmem:[%s783] sm:$0xe]
        %v785 = vlaneseq
        %v786 = vshrl.u32 %v785, 7
        %vm787 = vcmp.eq.s32.totalorder %v786, 0
        %v788 = vsel %vm787, %v781, %v784
        %s789 = scalar_lea.vmem %s779, 3
        %v790 = vld [vmem:[%s789] ss:$0 sm:$0xff]
        %791 = vst [vmem:[%s779] sm:$0xf] %v788
        %v792 = vld [vmem:[%s780] ss:$0 sm:$0xff]
        %s793 = scalar_lea.vmem %s779, 1
        %794 = vst [vmem:[%s793] sm:$0x1] %v792
        %s795 = scalar_lea.vmem %s780, 1
        %v796 = vld [vmem:[%s795] sm:$0x7]
        %v797 = vlaneseq
        %v798 = vshrl.u32 %v797, 7
        %vm799 = vcmp.eq.s32.totalorder %v798, 3
        %v800 = vsel %vm799, %v790, %v796
        %v801 = vld [vmem:[%s780] ss:$0 sm:$0xff]
        %802 = vst [vmem:[%s780] sm:$0xf] %v800
        %s803 = smov [#allocation34]
        %v804 = vld [vmem:[%s803] sm:$0xff]
        %s805 = smov [#allocation35]
        %v806 = vld [vmem:[%s805] sm:$0xff]
        %s807 = smov [#allocation12]
        %s808 = smov [#allocation15]
        %s809 = smov [#allocation18]
        %s810 = smov [#allocation20]
        %v811 = vld [vmem:[%s807] sm:$0xf]
        %v812 = vld [vmem:[%s808] sm:$0xf]
        %v813 = vld [vmem:[%s809] sm:$0xf]
        %v814 = vld [vmem:[%s810] sm:$0xf]
        %v815 = vmul.f32 %v804, %v811
        %v816 = vmul.f32 %v806, %v813
        %v817 = vsub.f32 %v815, %v816
        %v818 = vmul.f32 %v804, %v812
        %v819 = vmul.f32 %v806, %v814
        %v820 = vsub.f32 %v818, %v819
        %v821 = vmul.f32 %v806, %v811
        %v822 = vmul.f32 %v804, %v813
        %v823 = vadd.f32 %v821, %v822
        %v824 = vmul.f32 %v806, %v812
        %v825 = vmul.f32 %v804, %v814
        %v826 = vadd.f32 %v824, %v825
        %827 = vst [vmem:[%s807] sm:$0xf] %v817
        %828 = vst [vmem:[%s808] sm:$0xf] %v820
        %829 = vst [vmem:[%s809] sm:$0xf] %v823
        %830 = vst [vmem:[%s810] sm:$0xf] %v826
        %s831 = smov [#allocation12]
        %s832 = smov [#allocation18]
        %v833 = vld [vmem:[%s831] ss:$0 sm:$0xff]
        %s835 = scalar_lea.vmem %s831, 4294967295
        %v836 = vld [vmem:[%s835] sm:$0xe]
        %v837 = vlaneseq
        %v838 = vshrl.u32 %v837, 7
        %vm839 = vcmp.eq.s32.totalorder %v838, 0
        %v840 = vsel %vm839, %v833, %v836
        %s841 = scalar_lea.vmem %s831, 3
        %v842 = vld [vmem:[%s841] ss:$0 sm:$0xff]
        %843 = vst [vmem:[%s831] sm:$0xf] %v840
        %v844 = vld [vmem:[%s832] ss:$0 sm:$0xff]
        %s845 = scalar_lea.vmem %s831, 1
        %846 = vst [vmem:[%s845] sm:$0x1] %v844
        %s847 = scalar_lea.vmem %s832, 1
        %v848 = vld [vmem:[%s847] sm:$0x7]
        %v849 = vlaneseq
        %v850 = vshrl.u32 %v849, 7
        %vm851 = vcmp.eq.s32.totalorder %v850, 3
        %v852 = vsel %vm851, %v842, %v848
        %v853 = vld [vmem:[%s832] ss:$0 sm:$0xff]
        %854 = vst [vmem:[%s832] sm:$0xf] %v852
        %s855 = smov [#allocation15]
        %s856 = smov [#allocation20]
        %v857 = vld [vmem:[%s855] ss:$0 sm:$0xff]
        %s859 = scalar_lea.vmem %s855, 4294967295
        %v860 = vld [vmem:[%s859] sm:$0xe]
        %v861 = vlaneseq
        %v862 = vshrl.u32 %v861, 7
        %vm863 = vcmp.eq.s32.totalorder %v862, 0
        %v864 = vsel %vm863, %v857, %v860
        %s865 = scalar_lea.vmem %s855, 3
        %v866 = vld [vmem:[%s865] ss:$0 sm:$0xff]
        %867 = vst [vmem:[%s855] sm:$0xf] %v864
        %v868 = vld [vmem:[%s856] ss:$0 sm:$0xff]
        %s869 = scalar_lea.vmem %s855, 1
        %870 = vst [vmem:[%s869] sm:$0x1] %v868
        %s871 = scalar_lea.vmem %s856, 1
        %v872 = vld [vmem:[%s871] sm:$0x7]
        %v873 = vlaneseq
        %v874 = vshrl.u32 %v873, 7
        %vm875 = vcmp.eq.s32.totalorder %v874, 3
        %v876 = vsel %vm875, %v866, %v872
        %v877 = vld [vmem:[%s856] ss:$0 sm:$0xff]
        %878 = vst [vmem:[%s856] sm:$0xf] %v876
      $region101: #{custom-call.11} parent=93 // loop_footer
        %s399 = sadd.s32 1, %s395
      $region102: #{custom-call.11} parent=93 // loop_footer_branch
        %394 = sbr.rel target = $region98
      $region103: #{custom-call.11} parent=93 // loop_exit
        _
      %s879 = sadd.s32 %s297, 1
    $region94: #{custom-call.11} parent=1 // loop_footer
      _
    $region95: #{custom-call.11} parent=1 // loop_footer_branch
      %296 = sbr.rel target = $region91
    $region96: #{custom-call.11} parent=1 // loop_exit
      _
    %s882 = smov [#allocation23]
    %s883 = smov [#allocation8]
    %v884 = vlaneseq
    %v885 = vand.u32 %v884, 127
    %v886 = vmov %v885
    %v887 = vlaneseq
    %v888 = vshrl.u32 %v887, 7
    %v889 = vmov %v888
    %v890 = vld [vmem:[%s882] sm:$0xf]
    %vm893 = vcmp.eq.s32.totalorder %v889, %v886
    %v894 = vsel %vm893, %v890, 0.0
    %v895 = vrot.slane %v894, 4
    %v896 = vadd.f32 %v894, %v895
    %v897 = vrot.slane %v896, 2
    %v898 = vadd.f32 %v896, %v897
    %v899 = vrot.slane %v898, 1
    %v900 = vadd.f32 %v898, %v899
    %901 = vst [vmem:[%s883] sm:$0x1] %v900
    %s902 = smov [#allocation26]
    %s903 = smov [#allocation10]
    %v904 = vlaneseq
    %v905 = vand.u32 %v904, 127
    %v906 = vmov %v905
    %v907 = vlaneseq
    %v908 = vshrl.u32 %v907, 7
    %v909 = vmov %v908
    %v910 = vld [vmem:[%s902] sm:$0xf]
    %vm913 = vcmp.eq.s32.totalorder %v909, %v906
    %v914 = vsel %vm913, %v910, 0.0
    %v915 = vrot.slane %v914, 4
    %v916 = vadd.f32 %v914, %v915
    %v917 = vrot.slane %v916, 2
    %v918 = vadd.f32 %v916, %v917
    %v919 = vrot.slane %v918, 1
    %v920 = vadd.f32 %v918, %v919
    %921 = vst [vmem:[%s903] sm:$0x1] %v920
    %s923 = ssub.s32 2, 1
    %v924 = vld [vmem:[#allocation8] sm:%s923]
    %s926 = ssub.s32 2, 1
    %927 = vst [vmem:[#allocation9] sm:%s926] %v924
    %s929 = ssub.s32 2, 1
    %v930 = vld [vmem:[#allocation10] sm:%s929]
    %s932 = ssub.s32 2, 1
    %933 = vst [vmem:[#allocation11] sm:%s932] %v930
    %s935 = ssub.s32 16, 1
    %v936 = vld [vmem:[#allocation12] sm:%s935]
    %s938 = ssub.s32 16, 1
    %939 = vst [vmem:[#allocation13] sm:%s938] %v936
    %s941 = ssub.s32 16, 1
    %v942 = vld [vmem:[#allocation15] sm:%s941]
    %s944 = ssub.s32 16, 1
    %945 = vst [vmem:[#allocation16] sm:%s944] %v942
    %s947 = ssub.s32 16, 1
    %v948 = vld [vmem:[#allocation18] sm:%s947]
    %s950 = ssub.s32 16, 1
    %951 = vst [vmem:[#allocation19] sm:%s950] %v948
    %s953 = ssub.s32 16, 1
    %v954 = vld [vmem:[#allocation20] sm:%s953]
    %s956 = ssub.s32 16, 1
    %957 = vst [vmem:[#allocation21] sm:%s956] %v954
    // Predicated region
    $region104: #{custom-call.11} parent=1 // pred_check
      _
    $region105: #{custom-call.11} parent=1 // pred_check_branch
      %959 = sbr.rel (0) target = $region107
    $region106: #{custom-call.11} parent=1 // pred_region
      // Predicated region
      $region108: #{custom-call.11} parent=106 // pred_check
        _
      $region109: #{custom-call.11} parent=106 // pred_check_branch
        %961 = sbr.rel (0) target = $region111
      $region110: #{custom-call.11} parent=106 // pred_region
        %p963 = scmp.gt.s32.totalorder 0, 0
        // Predicated region
        $region112: #{custom-call.11} parent=110 // pred_check
          %p964 = pneg %p963
        $region113: #{custom-call.11} parent=110 // pred_check_branch
          %966 = sbr.rel (%p964) target = $region115
        $region114: #{custom-call.11} parent=110 // pred_region
          %s967 = ssub.s32 0, 1
          %s968 = smul.u32 %s967, 8
          %s969 = scalar_lea.vmem [#allocation9], %s968
          %v970 = vld [vmem:[#allocation9] sm:$0xff]
          // While loop
          $region116: #{custom-call.11} parent=114 // loop_pre_header
            _
          $region117: #{custom-call.11} parent=114 // loop_header
            %s971 = sphi [#allocation9], %s993
            %s972 = sphi %s4, %s994
            %v973 = vphi %v970, %v995
            %s974 = ssub.s32 %s969, 64
            %p975 = scmp.gt.s32.totalorder %s971, %s974
          $region118: #{custom-call.11} parent=114 // loop_header_branch
            %977 = sbr.rel (%p975) target = $region122
          $region119: #{custom-call.11} parent=114 // loop_body
            %978 = vst [vmem:[%s972] sm:$0xff] %v973
            %v979 = vld [vmem:[%s971 + $0x8] sm:$0xff]
            %980 = vst [vmem:[%s972 + $0x8] sm:$0xff] %v979
            %v981 = vld [vmem:[%s971 + $0x10] sm:$0xff]
            %982 = vst [vmem:[%s972 + $0x10] sm:$0xff] %v981
            %v983 = vld [vmem:[%s971 + $0x18] sm:$0xff]
            %984 = vst [vmem:[%s972 + $0x18] sm:$0xff] %v983
            %v985 = vld [vmem:[%s971 + $0x20] sm:$0xff]
            %986 = vst [vmem:[%s972 + $0x20] sm:$0xff] %v985
            %v987 = vld [vmem:[%s971 + $0x28] sm:$0xff]
            %988 = vst [vmem:[%s972 + $0x28] sm:$0xff] %v987
            %v989 = vld [vmem:[%s971 + $0x30] sm:$0xff]
            %990 = vst [vmem:[%s972 + $0x30] sm:$0xff] %v989
            %v991 = vld [vmem:[%s971 + $0x38] sm:$0xff]
            %992 = vst [vmem:[%s972 + $0x38] sm:$0xff] %v991
          $region120: #{custom-call.11} parent=114 // loop_footer
            %s993 = scalar_lea.vmem %s971, 64
            %s994 = scalar_lea.vmem %s972, 64
            %v995 = vld [vmem:[%s971 + $0x40] sm:$0xff]
          $region121: #{custom-call.11} parent=114 // loop_footer_branch
            %996 = sbr.rel target = $region117
          $region122: #{custom-call.11} parent=114 // loop_exit
            _
          // While loop
          $region123: #{custom-call.11} parent=114 // loop_pre_header
            _
          $region124: #{custom-call.11} parent=114 // loop_header
            %s997 = sphi %s971, %s1005
            %s998 = sphi %s972, %s1006
            %v999 = vphi %v973, %v999
            %p1000 = scmp.gt.s32.totalorder %s997, %s969
          $region125: #{custom-call.11} parent=114 // loop_header_branch
            %1002 = sbr.rel (%p1000) target = $region129
          $region126: #{custom-call.11} parent=114 // loop_body
            %v1003 = vld [vmem:[%s997] sm:$0xff]
            %1004 = vst [vmem:[%s998] sm:$0xff] %v1003
          $region127: #{custom-call.11} parent=114 // loop_footer
            %s1005 = scalar_lea.vmem %s997, 8
            %s1006 = scalar_lea.vmem %s998, 8
          $region128: #{custom-call.11} parent=114 // loop_footer_branch
            %1007 = sbr.rel target = $region124
          $region129: #{custom-call.11} parent=114 // loop_exit
            _
        $region115: #{custom-call.11} parent=110 // pred_fallthru
          _
        %s1009 = ssub.s32 2, 1
        %s1010 = smul.u32 0, 8
        %s1011 = scalar_lea.vmem %s4, %s1010
        %s1012 = smul.u32 0, 8
        %s1013 = scalar_lea.vmem [#allocation9], %s1012
        %v1014 = vld [vmem:[%s1013] sm:%s1009]
        %1015 = vst [vmem:[%s1011] sm:%s1009] %v1014
      $region111: #{custom-call.11} parent=106 // pred_fallthru
        _
    $region107: #{custom-call.11} parent=1 // pred_fallthru
      _
    // Predicated region
    $region130: #{custom-call.11} parent=1 // pred_check
      _
    $region131: #{custom-call.11} parent=1 // pred_check_branch
      %1017 = sbr.rel (0) target = $region133
    $region132: #{custom-call.11} parent=1 // pred_region
      // Predicated region
      $region134: #{custom-call.11} parent=132 // pred_check
        _
      $region135: #{custom-call.11} parent=132 // pred_check_branch
        %1019 = sbr.rel (0) target = $region137
      $region136: #{custom-call.11} parent=132 // pred_region
        %p1021 = scmp.gt.s32.totalorder 0, 0
        // Predicated region
        $region138: #{custom-call.11} parent=136 // pred_check
          %p1022 = pneg %p1021
        $region139: #{custom-call.11} parent=136 // pred_check_branch
          %1024 = sbr.rel (%p1022) target = $region141
        $region140: #{custom-call.11} parent=136 // pred_region
          %s1025 = ssub.s32 0, 1
          %s1026 = smul.u32 %s1025, 8
          %s1027 = scalar_lea.vmem [#allocation11], %s1026
          %v1028 = vld [vmem:[#allocation11] sm:$0xff]
          // While loop
          $region142: #{custom-call.11} parent=140 // loop_pre_header
            _
          $region143: #{custom-call.11} parent=140 // loop_header
            %s1029 = sphi [#allocation11], %s1051
            %s1030 = sphi %s5, %s1052
            %v1031 = vphi %v1028, %v1053
            %s1032 = ssub.s32 %s1027, 64
            %p1033 = scmp.gt.s32.totalorder %s1029, %s1032
          $region144: #{custom-call.11} parent=140 // loop_header_branch
            %1035 = sbr.rel (%p1033) target = $region148
          $region145: #{custom-call.11} parent=140 // loop_body
            %1036 = vst [vmem:[%s1030] sm:$0xff] %v1031
            %v1037 = vld [vmem:[%s1029 + $0x8] sm:$0xff]
            %1038 = vst [vmem:[%s1030 + $0x8] sm:$0xff] %v1037
            %v1039 = vld [vmem:[%s1029 + $0x10] sm:$0xff]
            %1040 = vst [vmem:[%s1030 + $0x10] sm:$0xff] %v1039
            %v1041 = vld [vmem:[%s1029 + $0x18] sm:$0xff]
            %1042 = vst [vmem:[%s1030 + $0x18] sm:$0xff] %v1041
            %v1043 = vld [vmem:[%s1029 + $0x20] sm:$0xff]
            %1044 = vst [vmem:[%s1030 + $0x20] sm:$0xff] %v1043
            %v1045 = vld [vmem:[%s1029 + $0x28] sm:$0xff]
            %1046 = vst [vmem:[%s1030 + $0x28] sm:$0xff] %v1045
            %v1047 = vld [vmem:[%s1029 + $0x30] sm:$0xff]
            %1048 = vst [vmem:[%s1030 + $0x30] sm:$0xff] %v1047
            %v1049 = vld [vmem:[%s1029 + $0x38] sm:$0xff]
            %1050 = vst [vmem:[%s1030 + $0x38] sm:$0xff] %v1049
          $region146: #{custom-call.11} parent=140 // loop_footer
            %s1051 = scalar_lea.vmem %s1029, 64
            %s1052 = scalar_lea.vmem %s1030, 64
            %v1053 = vld [vmem:[%s1029 + $0x40] sm:$0xff]
          $region147: #{custom-call.11} parent=140 // loop_footer_branch
            %1054 = sbr.rel target = $region143
          $region148: #{custom-call.11} parent=140 // loop_exit
            _
          // While loop
          $region149: #{custom-call.11} parent=140 // loop_pre_header
            _
          $region150: #{custom-call.11} parent=140 // loop_header
            %s1055 = sphi %s1029, %s1063
            %s1056 = sphi %s1030, %s1064
            %v1057 = vphi %v1031, %v1057
            %p1058 = scmp.gt.s32.totalorder %s1055, %s1027
          $region151: #{custom-call.11} parent=140 // loop_header_branch
            %1060 = sbr.rel (%p1058) target = $region155
          $region152: #{custom-call.11} parent=140 // loop_body
            %v1061 = vld [vmem:[%s1055] sm:$0xff]
            %1062 = vst [vmem:[%s1056] sm:$0xff] %v1061
          $region153: #{custom-call.11} parent=140 // loop_footer
            %s1063 = scalar_lea.vmem %s1055, 8
            %s1064 = scalar_lea.vmem %s1056, 8
          $region154: #{custom-call.11} parent=140 // loop_footer_branch
            %1065 = sbr.rel target = $region150
          $region155: #{custom-call.11} parent=140 // loop_exit
            _
        $region141: #{custom-call.11} parent=136 // pred_fallthru
          _
        %s1067 = ssub.s32 2, 1
        %s1068 = smul.u32 0, 8
        %s1069 = scalar_lea.vmem %s5, %s1068
        %s1070 = smul.u32 0, 8
        %s1071 = scalar_lea.vmem [#allocation11], %s1070
        %v1072 = vld [vmem:[%s1071] sm:%s1067]
        %1073 = vst [vmem:[%s1069] sm:%s1067] %v1072
      $region137: #{custom-call.11} parent=132 // pred_fallthru
        _
    $region133: #{custom-call.11} parent=1 // pred_fallthru
      _
    %1075 = vsyncadd [#allocation14], 0
    %s1077 = sshll.u32 [#allocation13], 4
    %s1078 = int_to_ptr.vmem [resolvable:$true] %s1077
    %s1079 = sshll.u32 %s6, 4
    %s1080 = int_to_ptr.hbm [resolvable:$true] %s1079
    %1082 = dma.vmem_to_hbm [thread:$0]  %s1078, 64, %s1080, [#allocation14]
    %1084 = vsyncadd [#allocation17], 0
    %s1086 = sshll.u32 [#allocation16], 4
    %s1087 = int_to_ptr.vmem [resolvable:$true] %s1086
    %s1088 = sshll.u32 %s7, 4
    %s1089 = int_to_ptr.hbm [resolvable:$true] %s1088
    %1091 = dma.vmem_to_hbm [thread:$0]  %s1087, 64, %s1089, [#allocation17]
    %1093 = vsyncadd [#allocation17], 0
    %s1095 = sshll.u32 [#allocation19], 4
    %s1096 = int_to_ptr.vmem [resolvable:$true] %s1095
    %s1097 = sshll.u32 %s8, 4
    %s1098 = int_to_ptr.hbm [resolvable:$true] %s1097
    %1100 = dma.vmem_to_hbm [thread:$0]  %s1096, 64, %s1098, [#allocation17]
    %1102 = vsyncadd [#allocation22], 0
    %s1104 = sshll.u32 [#allocation21], 4
    %s1105 = int_to_ptr.vmem [resolvable:$true] %s1104
    %s1106 = sshll.u32 %s9, 4
    %s1107 = int_to_ptr.hbm [resolvable:$true] %s1106
    %1109 = dma.vmem_to_hbm [thread:$0]  %s1105, 64, %s1107, [#allocation22]
    // Predicated region
    $region156: #{custom-call.11} parent=1 // pred_check
      _
    $region157: #{custom-call.11} parent=1 // pred_check_branch
      %1111 = sbr.rel (0) target = $region159
    $region158: #{custom-call.11} parent=1 // pred_region
      _
    $region159: #{custom-call.11} parent=1 // pred_fallthru
      _
    // Predicated region
    $region160: #{custom-call.11} parent=1 // pred_check
      _
    $region161: #{custom-call.11} parent=1 // pred_check_branch
      %1113 = sbr.rel (0) target = $region163
    $region162: #{custom-call.11} parent=1 // pred_region
      _
    $region163: #{custom-call.11} parent=1 // pred_fallthru
      _
    %1115 = dma.done [#allocation14], 64
    %1117 = dma.done [#allocation17], 64
    %1119 = dma.done [#allocation17], 64
    %1121 = dma.done [#allocation22], 64
    %1122 = vsyncpa [#allocation14], 1
    %1123 = vsyncpa [#allocation17], 1
    %1124 = vsyncpa [#allocation22], 1

// kernel: gsan_forward.1
$region0: #{gsan_forward.1}
  #allocation0 [shape = 'u32[]', space=smem, size = 0x4, offset = 0x4, fixed_abs, tag = 'smem constant byte address 0x4 - core index']
  #allocation1 [shape = 'u32[72,128]{1,0:T(1,128)}', space=vmem, size = 0x9000, scoped, tag = 'internal scratch']
  %s0 = inlined_call_operand.vmem [shape: f32[384,8], index: 0, kind: input, shape index: {}]
  %s1 = inlined_call_operand.vmem [shape: f32[8,80], index: 1, kind: input, shape index: {}]
  %s2 = inlined_call_operand.vmem [shape: f32[8,4], index: 2, kind: input, shape index: {}]
  %s3 = inlined_call_operand.vmem [shape: f32[4,128], index: 3, kind: input, shape index: {}]
  %s4 = inlined_call_operand.vmem [shape: bf16[384,384], index: 4, kind: input, shape index: {}]
  %s5 = inlined_call_operand.vmem [shape: bf16[384,384], index: 5, kind: input, shape index: {}]
  %s6 = inlined_call_operand.vmem [shape: bf16[384,384], index: 6, kind: input, shape index: {}]
  %s7 = inlined_call_operand.vmem [shape: f32[384,384], index: 7, kind: input, shape index: {}]
  %s8 = inlined_call_operand.vmem [shape: f32[128,128], index: 8, kind: input, shape index: {}]
  %s9 = inlined_call_operand.vmem [shape: f32[128,128], index: 9, kind: input, shape index: {}]
  %s10 = inlined_call_operand.vmem [shape: f32[384,16], index: 10, kind: output, shape index: {}]
  %s11 = sld [smem:[#allocation0]]
  $region77: #{gsan_forward.1} parent=0
    _
  %s13 = ssub.s32 1, %s11
  %s14 = scalar_select 0, %s13, %s11
  loop: start=0, step=1, limit=5
  $region2: #{gsan_forward.1} parent=0 // loop_pre_header
    _
  $region3: #{gsan_forward.1} parent=0 // loop_header
    %s16 = sphi 0, %s20
    %p17 = scmp.ge.s32.totalorder %s16, 5
    %s24 = sphi 0, %s24
    %s26 = sphi 0, %s24
    %s27 = sphi 0, %s26
    %s41 = sphi 0, %s27
    %s45 = sphi 0, %s45
    %s47 = sphi 0, %s45
    %s48 = sphi 0, %s47
    %s62 = sphi 0, %s48
    %s66 = sphi 0, %s66
    %s68 = sphi 0, %s66
    %s69 = sphi 0, %s68
    %s83 = sphi 0, %s69
    %s87 = sphi 0, %s87
    %s89 = sphi 0, %s87
    %s90 = sphi 0, %s89
    %s104 = sphi 0, %s90
    %s110 = sphi 0, %s112
    %s113 = sphi 0, %s110
    %s114 = sphi 0, %s113
    %s130 = sphi 0, %s114
    %s136 = sphi 0, %s138
    %s139 = sphi 0, %s136
    %s140 = sphi 0, %s139
    %s156 = sphi 0, %s140
    %s162 = sphi 0, %s164
    %s165 = sphi 0, %s162
    %s166 = sphi 0, %s165
    %s182 = sphi 0, %s166
    %s188 = sphi 0, %s190
    %s191 = sphi 0, %s188
    %s192 = sphi 0, %s191
    %s208 = sphi 0, %s192
    %s224 = sphi 0, %s226
    %s227 = sphi 0, %s224
    %s228 = sphi 0, %s227
    %s244 = sphi 0, %s228
    %s260 = sphi 0, %s262
    %s263 = sphi 0, %s260
    %s264 = sphi 0, %s263
    %s280 = sphi 0, %s264
    %s286 = sphi 0, %s288
    %s289 = sphi 0, %s286
    %s290 = sphi 0, %s289
    %s306 = sphi 0, %s290
  $region4: #{gsan_forward.1} parent=0 // loop_header_branch
    %19 = sbr.rel (%p17) target = $region8
  $region5: #{gsan_forward.1} parent=0 // loop_body
    %s21 = ssub.s32 %s16, 1
    %s22 = ssub.s32 %s16, 2
    %s23 = sadd.s32 %s16, 1
    %s25 = sadd.s32 %s24, 1
    %p28 = scmp.eq.s32.totalorder %s16, 2
    %p29 = scmp.ne.s32.totalorder %s24, %s26
    %p30 = scmp.eq.s32.totalorder %s16, 0
    %p31 = por %p29, %p30
    %p32 = scmp.ne.s32.totalorder %s24, %s26
    %p33 = scmp.eq.s32.totalorder %s21, 2
    %p34 = por %p32, %p33
    %p35 = scmp.ne.s32.totalorder %s26, %s27
    %p36 = scmp.eq.s32.totalorder %s21, 0
    %p37 = por %p35, %p36
    %p38 = scmp.ne.s32.totalorder %s26, %s27
    %p39 = scmp.eq.s32.totalorder %s22, 2
    %p40 = por %p38, %p39
    %p42 = scmp.ne.s32.totalorder %s27, %s41
    %p43 = scmp.eq.s32.totalorder %s22, 0
    %p44 = por %p42, %p43
    %s46 = sadd.s32 %s45, 1
    %p49 = scmp.eq.s32.totalorder %s16, 2
    %p50 = scmp.ne.s32.totalorder %s45, %s47
    %p51 = scmp.eq.s32.totalorder %s16, 0
    %p52 = por %p50, %p51
    %p53 = scmp.ne.s32.totalorder %s45, %s47
    %p54 = scmp.eq.s32.totalorder %s21, 2
    %p55 = por %p53, %p54
    %p56 = scmp.ne.s32.totalorder %s47, %s48
    %p57 = scmp.eq.s32.totalorder %s21, 0
    %p58 = por %p56, %p57
    %p59 = scmp.ne.s32.totalorder %s47, %s48
    %p60 = scmp.eq.s32.totalorder %s22, 2
    %p61 = por %p59, %p60
    %p63 = scmp.ne.s32.totalorder %s48, %s62
    %p64 = scmp.eq.s32.totalorder %s22, 0
    %p65 = por %p63, %p64
    %s67 = sadd.s32 %s66, 1
    %p70 = scmp.eq.s32.totalorder %s16, 2
    %p71 = scmp.ne.s32.totalorder %s66, %s68
    %p72 = scmp.eq.s32.totalorder %s16, 0
    %p73 = por %p71, %p72
    %p74 = scmp.ne.s32.totalorder %s66, %s68
    %p75 = scmp.eq.s32.totalorder %s21, 2
    %p76 = por %p74, %p75
    %p77 = scmp.ne.s32.totalorder %s68, %s69
    %p78 = scmp.eq.s32.totalorder %s21, 0
    %p79 = por %p77, %p78
    %p80 = scmp.ne.s32.totalorder %s68, %s69
    %p81 = scmp.eq.s32.totalorder %s22, 2
    %p82 = por %p80, %p81
    %p84 = scmp.ne.s32.totalorder %s69, %s83
    %p85 = scmp.eq.s32.totalorder %s22, 0
    %p86 = por %p84, %p85
    %s88 = sadd.s32 %s87, 1
    %p91 = scmp.eq.s32.totalorder %s16, 2
    %p92 = scmp.ne.s32.totalorder %s87, %s89
    %p93 = scmp.eq.s32.totalorder %s16, 0
    %p94 = por %p92, %p93
    %p95 = scmp.ne.s32.totalorder %s87, %s89
    %p96 = scmp.eq.s32.totalorder %s21, 2
    %p97 = por %p95, %p96
    %p98 = scmp.ne.s32.totalorder %s89, %s90
    %p99 = scmp.eq.s32.totalorder %s21, 0
    %p100 = por %p98, %p99
    %p101 = scmp.ne.s32.totalorder %s89, %s90
    %p102 = scmp.eq.s32.totalorder %s22, 2
    %p103 = por %p101, %p102
    %p105 = scmp.ne.s32.totalorder %s90, %s104
    %p106 = scmp.eq.s32.totalorder %s22, 0
    %p107 = por %p105, %p106
    %s108 = ssub.s32 %s16, %s23
    %p109 = scmp.eq.s32.totalorder %s108, 0
    %s111 = sadd.s32 %s110, 1
    %s112 = scalar_select %p109, %s110, %s111
    %p115 = pneg %p109
    %p116 = scmp.eq.s32.totalorder %s16, 2
    %p117 = por %p115, %p116
    %p118 = scmp.ne.s32.totalorder %s110, %s113
    %p119 = scmp.eq.s32.totalorder %s16, 0
    %p120 = por %p118, %p119
    %p121 = scmp.ne.s32.totalorder %s110, %s113
    %p122 = scmp.eq.s32.totalorder %s21, 2
    %p123 = por %p121, %p122
    %p124 = scmp.ne.s32.totalorder %s113, %s114
    %p125 = scmp.eq.s32.totalorder %s21, 0
    %p126 = por %p124, %p125
    %p127 = scmp.ne.s32.totalorder %s113, %s114
    %p128 = scmp.eq.s32.totalorder %s22, 2
    %p129 = por %p127, %p128
    %p131 = scmp.ne.s32.totalorder %s114, %s130
    %p132 = scmp.eq.s32.totalorder %s22, 0
    %p133 = por %p131, %p132
    %s134 = ssub.s32 %s16, %s23
    %p135 = scmp.eq.s32.totalorder %s134, 0
    %s137 = sadd.s32 %s136, 1
    %s138 = scalar_select %p135, %s136, %s137
    %p141 = pneg %p135
    %p142 = scmp.eq.s32.totalorder %s16, 2
    %p143 = por %p141, %p142
    %p144 = scmp.ne.s32.totalorder %s136, %s139
    %p145 = scmp.eq.s32.totalorder %s16, 0
    %p146 = por %p144, %p145
    %p147 = scmp.ne.s32.totalorder %s136, %s139
    %p148 = scmp.eq.s32.totalorder %s21, 2
    %p149 = por %p147, %p148
    %p150 = scmp.ne.s32.totalorder %s139, %s140
    %p151 = scmp.eq.s32.totalorder %s21, 0
    %p152 = por %p150, %p151
    %p153 = scmp.ne.s32.totalorder %s139, %s140
    %p154 = scmp.eq.s32.totalorder %s22, 2
    %p155 = por %p153, %p154
    %p157 = scmp.ne.s32.totalorder %s140, %s156
    %p158 = scmp.eq.s32.totalorder %s22, 0
    %p159 = por %p157, %p158
    %s160 = ssub.s32 %s16, %s23
    %p161 = scmp.eq.s32.totalorder %s160, 0
    %s163 = sadd.s32 %s162, 1
    %s164 = scalar_select %p161, %s162, %s163
    %p167 = pneg %p161
    %p168 = scmp.eq.s32.totalorder %s16, 2
    %p169 = por %p167, %p168
    %p170 = scmp.ne.s32.totalorder %s162, %s165
    %p171 = scmp.eq.s32.totalorder %s16, 0
    %p172 = por %p170, %p171
    %p173 = scmp.ne.s32.totalorder %s162, %s165
    %p174 = scmp.eq.s32.totalorder %s21, 2
    %p175 = por %p173, %p174
    %p176 = scmp.ne.s32.totalorder %s165, %s166
    %p177 = scmp.eq.s32.totalorder %s21, 0
    %p178 = por %p176, %p177
    %p179 = scmp.ne.s32.totalorder %s165, %s166
    %p180 = scmp.eq.s32.totalorder %s22, 2
    %p181 = por %p179, %p180
    %p183 = scmp.ne.s32.totalorder %s166, %s182
    %p184 = scmp.eq.s32.totalorder %s22, 0
    %p185 = por %p183, %p184
    %s186 = ssub.s32 %s16, %s23
    %p187 = scmp.eq.s32.totalorder %s186, 0
    %s189 = sadd.s32 %s188, 1
    %s190 = scalar_select %p187, %s188, %s189
    %p193 = pneg %p187
    %p194 = scmp.eq.s32.totalorder %s16, 2
    %p195 = por %p193, %p194
    %p196 = scmp.ne.s32.totalorder %s188, %s191
    %p197 = scmp.eq.s32.totalorder %s16, 0
    %p198 = por %p196, %p197
    %p199 = scmp.ne.s32.totalorder %s188, %s191
    %p200 = scmp.eq.s32.totalorder %s21, 2
    %p201 = por %p199, %p200
    %p202 = scmp.ne.s32.totalorder %s191, %s192
    %p203 = scmp.eq.s32.totalorder %s21, 0
    %p204 = por %p202, %p203
    %p205 = scmp.ne.s32.totalorder %s191, %s192
    %p206 = scmp.eq.s32.totalorder %s22, 2
    %p207 = por %p205, %p206
    %p209 = scmp.ne.s32.totalorder %s192, %s208
    %p210 = scmp.eq.s32.totalorder %s22, 0
    %p211 = por %p209, %p210
    %s212 = ssub.s32 %s16, 1
    %p213 = scmp.lt.s32.totalorder %s212, 0
    %s214 = scalar_select %p213, %s212, 0
    %p215 = scmp.gt.s32.totalorder %s214, 0
    %s216 = scalar_select %p215, %s214, 0
    %s217 = ssub.s32 %s23, 1
    %p218 = scmp.lt.s32.totalorder %s217, 0
    %s219 = scalar_select %p218, %s217, 0
    %p220 = scmp.gt.s32.totalorder %s219, 0
    %s221 = scalar_select %p220, %s219, 0
    %s222 = ssub.s32 %s216, %s221
    %p223 = scmp.eq.s32.totalorder %s222, 0
    %s225 = sadd.s32 %s224, 1
    %s226 = scalar_select %p223, %s224, %s225
    %p229 = pneg %p223
    %p230 = scmp.eq.s32.totalorder %s16, 2
    %p231 = por %p229, %p230
    %p232 = scmp.ne.s32.totalorder %s224, %s227
    %p233 = scmp.eq.s32.totalorder %s16, 0
    %p234 = por %p232, %p233
    %p235 = scmp.ne.s32.totalorder %s224, %s227
    %p236 = scmp.eq.s32.totalorder %s21, 2
    %p237 = por %p235, %p236
    %p238 = scmp.ne.s32.totalorder %s227, %s228
    %p239 = scmp.eq.s32.totalorder %s21, 0
    %p240 = por %p238, %p239
    %p241 = scmp.ne.s32.totalorder %s227, %s228
    %p242 = scmp.eq.s32.totalorder %s22, 2
    %p243 = por %p241, %p242
    %p245 = scmp.ne.s32.totalorder %s228, %s244
    %p246 = scmp.eq.s32.totalorder %s22, 0
    %p247 = por %p245, %p246
    %s248 = ssub.s32 %s16, 1
    %p249 = scmp.lt.s32.totalorder %s248, 0
    %s250 = scalar_select %p249, %s248, 0
    %p251 = scmp.gt.s32.totalorder %s250, 0
    %s252 = scalar_select %p251, %s250, 0
    %s253 = ssub.s32 %s23, 1
    %p254 = scmp.lt.s32.totalorder %s253, 0
    %s255 = scalar_select %p254, %s253, 0
    %p256 = scmp.gt.s32.totalorder %s255, 0
    %s257 = scalar_select %p256, %s255, 0
    %s258 = ssub.s32 %s252, %s257
    %p259 = scmp.eq.s32.totalorder %s258, 0
    %s261 = sadd.s32 %s260, 1
    %s262 = scalar_select %p259, %s260, %s261
    %p265 = pneg %p259
    %p266 = scmp.eq.s32.totalorder %s16, 2
    %p267 = por %p265, %p266
    %p268 = scmp.ne.s32.totalorder %s260, %s263
    %p269 = scmp.eq.s32.totalorder %s16, 0
    %p270 = por %p268, %p269
    %p271 = scmp.ne.s32.totalorder %s260, %s263
    %p272 = scmp.eq.s32.totalorder %s21, 2
    %p273 = por %p271, %p272
    %p274 = scmp.ne.s32.totalorder %s263, %s264
    %p275 = scmp.eq.s32.totalorder %s21, 0
    %p276 = por %p274, %p275
    %p277 = scmp.ne.s32.totalorder %s263, %s264
    %p278 = scmp.eq.s32.totalorder %s22, 2
    %p279 = por %p277, %p278
    %p281 = scmp.ne.s32.totalorder %s264, %s280
    %p282 = scmp.eq.s32.totalorder %s22, 0
    %p283 = por %p281, %p282
    %s284 = ssub.s32 %s16, %s23
    %p285 = scmp.eq.s32.totalorder %s284, 0
    %s287 = sadd.s32 %s286, 1
    %s288 = scalar_select %p285, %s286, %s287
    %p291 = pneg %p285
    %p292 = scmp.eq.s32.totalorder %s16, 2
    %p293 = por %p291, %p292
    %p294 = scmp.ne.s32.totalorder %s286, %s289
    %p295 = scmp.eq.s32.totalorder %s16, 0
    %p296 = por %p294, %p295
    %p297 = scmp.ne.s32.totalorder %s286, %s289
    %p298 = scmp.eq.s32.totalorder %s21, 2
    %p299 = por %p297, %p298
    %p300 = scmp.ne.s32.totalorder %s289, %s290
    %p301 = scmp.eq.s32.totalorder %s21, 0
    %p302 = por %p300, %p301
    %p303 = scmp.ne.s32.totalorder %s289, %s290
    %p304 = scmp.eq.s32.totalorder %s22, 2
    %p305 = por %p303, %p304
    %p307 = scmp.ne.s32.totalorder %s290, %s306
    %p308 = scmp.eq.s32.totalorder %s22, 0
    %p309 = por %p307, %p308
    %p310 = scmp.le.s32.totalorder 1, %s16
    %p311 = scmp.lt.s32.totalorder %s16, 4
    %p312 = pnand %p310, %p311
    %p313 = pneg %p312
    // Predicated region
    $region9: #{gsan_forward.1} parent=5 // pred_check
      _
    $region10: #{gsan_forward.1} parent=5 // pred_check_branch
      %315 = sbr.rel (%p312) target = $region12
    $region11: #{gsan_forward.1} parent=5 // pred_region
      %s316 = ssub.s32 %s16, 1
      // Predicated region
      $region13: #{gsan_forward.1} parent=11 // pred_check
        %p317 = pneg %p37
      $region14: #{gsan_forward.1} parent=11 // pred_check_branch
        %319 = sbr.rel (%p317) target = $region16
      $region15: #{gsan_forward.1} parent=11 // pred_region
        _
      $region16: #{gsan_forward.1} parent=11 // pred_fallthru
        _
      // Predicated region
      $region17: #{gsan_forward.1} parent=11 // pred_check
        %p320 = pneg %p58
      $region18: #{gsan_forward.1} parent=11 // pred_check_branch
        %322 = sbr.rel (%p320) target = $region20
      $region19: #{gsan_forward.1} parent=11 // pred_region
        _
      $region20: #{gsan_forward.1} parent=11 // pred_fallthru
        _
      // Predicated region
      $region21: #{gsan_forward.1} parent=11 // pred_check
        %p323 = pneg %p79
      $region22: #{gsan_forward.1} parent=11 // pred_check_branch
        %325 = sbr.rel (%p323) target = $region24
      $region23: #{gsan_forward.1} parent=11 // pred_region
        _
      $region24: #{gsan_forward.1} parent=11 // pred_fallthru
        _
      // Predicated region
      $region25: #{gsan_forward.1} parent=11 // pred_check
        %p326 = pneg %p100
      $region26: #{gsan_forward.1} parent=11 // pred_check_branch
        %328 = sbr.rel (%p326) target = $region28
      $region27: #{gsan_forward.1} parent=11 // pred_region
        _
      $region28: #{gsan_forward.1} parent=11 // pred_fallthru
        _
    $region12: #{gsan_forward.1} parent=5 // pred_fallthru
      _
    %p329 = scmp.lt.s32.totalorder %s16, 3
    // Predicated region
    $region29: #{gsan_forward.1} parent=5 // pred_check
      %p330 = pneg %p329
    $region30: #{gsan_forward.1} parent=5 // pred_check_branch
      %332 = sbr.rel (%p330) target = $region32
    $region31: #{gsan_forward.1} parent=5 // pred_region
      // Predicated region
      $region33: #{gsan_forward.1} parent=31 // pred_check
        %p333 = pneg %p120
      $region34: #{gsan_forward.1} parent=31 // pred_check_branch
        %335 = sbr.rel (%p333) target = $region36
      $region35: #{gsan_forward.1} parent=31 // pred_region
        %s336 = smul.u32 16, %s16
        %p337 = scmp.lt.s32.totalorder %s336, 47
        %s338 = scalar_select %p337, %s336, 47
        %s339 = smul.addr %s338, 3
        %s340 = smul.addr %s339, 4
        %s341 = scalar_lea.vmem %s4, %s340
        %s342 = smul.u32 16, %s16
      $region36: #{gsan_forward.1} parent=31 // pred_fallthru
        _
      // Predicated region
      $region37: #{gsan_forward.1} parent=31 // pred_check
        %p343 = pneg %p146
      $region38: #{gsan_forward.1} parent=31 // pred_check_branch
        %345 = sbr.rel (%p343) target = $region40
      $region39: #{gsan_forward.1} parent=31 // pred_region
        %s346 = smul.u32 16, %s16
        %p347 = scmp.lt.s32.totalorder %s346, 47
        %s348 = scalar_select %p347, %s346, 47
        %s349 = smul.addr %s348, 3
        %s350 = smul.addr %s349, 4
        %s351 = scalar_lea.vmem %s5, %s350
        %s352 = smul.u32 16, %s16
      $region40: #{gsan_forward.1} parent=31 // pred_fallthru
        _
      // Predicated region
      $region41: #{gsan_forward.1} parent=31 // pred_check
        %p353 = pneg %p172
      $region42: #{gsan_forward.1} parent=31 // pred_check_branch
        %355 = sbr.rel (%p353) target = $region44
      $region43: #{gsan_forward.1} parent=31 // pred_region
        %s356 = smul.u32 16, %s16
        %p357 = scmp.lt.s32.totalorder %s356, 47
        %s358 = scalar_select %p357, %s356, 47
        %s359 = smul.addr %s358, 3
        %s360 = smul.addr %s359, 4
        %s361 = scalar_lea.vmem %s6, %s360
        %s362 = smul.u32 16, %s16
      $region44: #{gsan_forward.1} parent=31 // pred_fallthru
        _
      // Predicated region
      $region45: #{gsan_forward.1} parent=31 // pred_check
        %p363 = pneg %p198
      $region46: #{gsan_forward.1} parent=31 // pred_check_branch
        %365 = sbr.rel (%p363) target = $region48
      $region47: #{gsan_forward.1} parent=31 // pred_region
        %s366 = smul.u32 16, %s16
        %p367 = scmp.lt.s32.totalorder %s366, 47
        %s368 = scalar_select %p367, %s366, 47
        %s369 = smul.addr %s368, 3
        %s370 = smul.addr %s369, 8
        %s371 = scalar_lea.vmem %s7, %s370
        %s372 = smul.u32 16, %s16
      $region48: #{gsan_forward.1} parent=31 // pred_fallthru
        _
      // Predicated region
      $region49: #{gsan_forward.1} parent=31 // pred_check
        %p373 = pneg %p234
      $region50: #{gsan_forward.1} parent=31 // pred_check_branch
        %375 = sbr.rel (%p373) target = $region52
      $region51: #{gsan_forward.1} parent=31 // pred_region
        %s376 = ssub.s32 %s16, 1
        %p377 = scmp.lt.s32.totalorder %s376, 0
        %s378 = scalar_select %p377, %s376, 0
        %p379 = scmp.gt.s32.totalorder %s378, 0
        %s380 = scalar_select %p379, %s378, 0
        %s381 = smul.u32 16, %s380
        %p382 = scmp.lt.s32.totalorder %s381, 15
        %s383 = scalar_select %p382, %s381, 15
        %s384 = smul.addr %s383, 8
        %s385 = scalar_lea.vmem %s8, %s384
        %s386 = ssub.s32 %s16, 1
        %p387 = scmp.lt.s32.totalorder %s386, 0
        %s388 = scalar_select %p387, %s386, 0
        %p389 = scmp.gt.s32.totalorder %s388, 0
        %s390 = scalar_select %p389, %s388, 0
        %s391 = smul.u32 16, %s390
      $region52: #{gsan_forward.1} parent=31 // pred_fallthru
        _
      // Predicated region
      $region53: #{gsan_forward.1} parent=31 // pred_check
        %p392 = pneg %p270
      $region54: #{gsan_forward.1} parent=31 // pred_check_branch
        %394 = sbr.rel (%p392) target = $region56
      $region55: #{gsan_forward.1} parent=31 // pred_region
        %s395 = ssub.s32 %s16, 1
        %p396 = scmp.lt.s32.totalorder %s395, 0
        %s397 = scalar_select %p396, %s395, 0
        %p398 = scmp.gt.s32.totalorder %s397, 0
        %s399 = scalar_select %p398, %s397, 0
        %s400 = smul.u32 16, %s399
        %p401 = scmp.lt.s32.totalorder %s400, 15
        %s402 = scalar_select %p401, %s400, 15
        %s403 = smul.addr %s402, 8
        %s404 = scalar_lea.vmem %s9, %s403
        %s405 = ssub.s32 %s16, 1
        %p406 = scmp.lt.s32.totalorder %s405, 0
        %s407 = scalar_select %p406, %s405, 0
        %p408 = scmp.gt.s32.totalorder %s407, 0
        %s409 = scalar_select %p408, %s407, 0
        %s410 = smul.u32 16, %s409
      $region56: #{gsan_forward.1} parent=31 // pred_fallthru
        _
    $region32: #{gsan_forward.1} parent=5 // pred_fallthru
      _
    %p411 = scmp.le.s32.totalorder 1, %s16
    %p412 = scmp.lt.s32.totalorder %s16, 4
    %p413 = pnand %p411, %p412
    %p414 = pneg %p413
    // Predicated region
    $region57: #{gsan_forward.1} parent=5 // pred_check
      _
    $region58: #{gsan_forward.1} parent=5 // pred_check_branch
      %416 = sbr.rel (%p413) target = $region60
    $region59: #{gsan_forward.1} parent=5 // pred_region
      %s417 = ssub.s32 %s16, 1
      %p418 = pneg %p37
      %p419 = pneg %p34
      %p420 = pneg %p58
      %p421 = pneg %p55
      %p422 = pneg %p79
      %p423 = pneg %p76
      %p424 = pneg %p100
      %p425 = pneg %p97
      %s426 = smul.u32 16, %s21
      %p427 = scmp.lt.s32.totalorder %s426, 47
      %s428 = scalar_select %p427, %s426, 47
      %s429 = smul.addr %s428, 3
      %s430 = smul.addr %s429, 4
      %s431 = scalar_lea.vmem %s4, %s430
      %p432 = pneg %p126
      %p433 = pneg %p123
      %s434 = smul.u32 16, %s21
      %p435 = scmp.lt.s32.totalorder %s434, 47
      %s436 = scalar_select %p435, %s434, 47
      %s437 = smul.addr %s436, 3
      %s438 = smul.addr %s437, 4
      %s439 = scalar_lea.vmem %s5, %s438
      %p440 = pneg %p152
      %p441 = pneg %p149
      %s442 = smul.u32 16, %s21
      %p443 = scmp.lt.s32.totalorder %s442, 47
      %s444 = scalar_select %p443, %s442, 47
      %s445 = smul.addr %s444, 3
      %s446 = smul.addr %s445, 4
      %s447 = scalar_lea.vmem %s6, %s446
      %p448 = pneg %p178
      %p449 = pneg %p175
      %s450 = smul.u32 16, %s21
      %p451 = scmp.lt.s32.totalorder %s450, 47
      %s452 = scalar_select %p451, %s450, 47
      %s453 = smul.addr %s452, 3
      %s454 = smul.addr %s453, 8
      %s455 = scalar_lea.vmem %s7, %s454
      %p456 = pneg %p204
      %p457 = pneg %p201
      %s458 = ssub.s32 %s21, 1
      %p459 = scmp.lt.s32.totalorder %s458, 0
      %s460 = scalar_select %p459, %s458, 0
      %p461 = scmp.gt.s32.totalorder %s460, 0
      %s462 = scalar_select %p461, %s460, 0
      %s463 = smul.u32 16, %s462
      %p464 = scmp.lt.s32.totalorder %s463, 15
      %s465 = scalar_select %p464, %s463, 15
      %s466 = smul.addr %s465, 8
      %s467 = scalar_lea.vmem %s8, %s466
      %p468 = pneg %p240
      %p469 = pneg %p237
      %s470 = ssub.s32 %s21, 1
      %p471 = scmp.lt.s32.totalorder %s470, 0
      %s472 = scalar_select %p471, %s470, 0
      %p473 = scmp.gt.s32.totalorder %s472, 0
      %s474 = scalar_select %p473, %s472, 0
      %s475 = smul.u32 16, %s474
      %p476 = scmp.lt.s32.totalorder %s475, 15
      %s477 = scalar_select %p476, %s475, 15
      %s478 = smul.addr %s477, 8
      %s479 = scalar_lea.vmem %s9, %s478
      %p480 = pneg %p276
      %p481 = pneg %p273
      %p482 = pneg %p302
      %p483 = pneg %p299
      %s484 = smul.u32 16, %s21
      %p485 = scmp.lt.s32.totalorder %s484, 47
      %s486 = scalar_select %p485, %s484, 47
      %s487 = smul.addr %s486, 8
      %s488 = scalar_lea.vmem %s10, %s487
      %s489 = smul.u32 16, %s21
      %p490 = scmp.lt.s32.totalorder %s489, 47
      %s491 = scalar_select %p490, %s489, 47
      %s492 = smul.addr %s491, 3
      %s493 = smul.addr %s492, 4
      %s494 = scalar_lea.vmem %s4, %s493
      %s495 = smul.u32 16, %s21
      %s496 = smul.u32 16, %s21
      %p497 = scmp.lt.s32.totalorder %s496, 47
      %s498 = scalar_select %p497, %s496, 47
      %s499 = smul.addr %s498, 3
      %s500 = smul.addr %s499, 4
      %s501 = scalar_lea.vmem %s5, %s500
      %s502 = smul.u32 16, %s21
      %s503 = smul.u32 16, %s21
      %p504 = scmp.lt.s32.totalorder %s503, 47
      %s505 = scalar_select %p504, %s503, 47
      %s506 = smul.addr %s505, 3
      %s507 = smul.addr %s506, 4
      %s508 = scalar_lea.vmem %s6, %s507
      %s509 = smul.u32 16, %s21
      %s510 = smul.u32 16, %s21
      %p511 = scmp.lt.s32.totalorder %s510, 47
      %s512 = scalar_select %p511, %s510, 47
      %s513 = smul.addr %s512, 3
      %s514 = smul.addr %s513, 8
      %s515 = scalar_lea.vmem %s7, %s514
      %s516 = smul.u32 16, %s21
      %s517 = ssub.s32 %s21, 1
      %p518 = scmp.lt.s32.totalorder %s517, 0
      %s519 = scalar_select %p518, %s517, 0
      %p520 = scmp.gt.s32.totalorder %s519, 0
      %s521 = scalar_select %p520, %s519, 0
      %s522 = smul.u32 16, %s521
      %p523 = scmp.lt.s32.totalorder %s522, 15
      %s524 = scalar_select %p523, %s522, 15
      %s525 = smul.addr %s524, 8
      %s526 = scalar_lea.vmem %s8, %s525
      %s527 = ssub.s32 %s21, 1
      %p528 = scmp.lt.s32.totalorder %s527, 0
      %s529 = scalar_select %p528, %s527, 0
      %p530 = scmp.gt.s32.totalorder %s529, 0
      %s531 = scalar_select %p530, %s529, 0
      %s532 = smul.u32 16, %s531
      %s533 = ssub.s32 %s21, 1
      %p534 = scmp.lt.s32.totalorder %s533, 0
      %s535 = scalar_select %p534, %s533, 0
      %p536 = scmp.gt.s32.totalorder %s535, 0
      %s537 = scalar_select %p536, %s535, 0
      %s538 = smul.u32 16, %s537
      %p539 = scmp.lt.s32.totalorder %s538, 15
      %s540 = scalar_select %p539, %s538, 15
      %s541 = smul.addr %s540, 8
      %s542 = scalar_lea.vmem %s9, %s541
      %s543 = ssub.s32 %s21, 1
      %p544 = scmp.lt.s32.totalorder %s543, 0
      %s545 = scalar_select %p544, %s543, 0
      %p546 = scmp.gt.s32.totalorder %s545, 0
      %s547 = scalar_select %p546, %s545, 0
      %s548 = smul.u32 16, %s547
      %s549 = smul.u32 16, %s21
      %p550 = scmp.lt.s32.totalorder %s549, 47
      %s551 = scalar_select %p550, %s549, 47
      %s552 = smul.addr %s551, 8
      %s553 = scalar_lea.vmem %s10, %s552
      %s554 = smul.u32 16, %s21
      %v555 = vld [vmem:[%s0] sm:$0xff]
      %v556 = vld [vmem:[%s0 + $0x8] sm:$0xff]
      %v557 = vld [vmem:[%s0 + $0x10] sm:$0xff]
      %v558 = vld [vmem:[%s0 + $0x18] sm:$0xff]
      %v559 = vld [vmem:[%s0 + $0x20] sm:$0xff]
      %v560 = vld [vmem:[%s0 + $0x28] sm:$0xff]
      %v561 = vld [vmem:[%s0 + $0x30] sm:$0xff]
      %v562 = vld [vmem:[%s0 + $0x38] sm:$0xff]
      %v563 = vld [vmem:[%s0 + $0x40] sm:$0xff]
      %v564 = vld [vmem:[%s0 + $0x48] sm:$0xff]
      %v565 = vld [vmem:[%s0 + $0x50] sm:$0xff]
      %v566 = vld [vmem:[%s0 + $0x58] sm:$0xff]
      %v567 = vld [vmem:[%s0 + $0x60] sm:$0xff]
      %v568 = vld [vmem:[%s0 + $0x68] sm:$0xff]
      %v569 = vld [vmem:[%s0 + $0x70] sm:$0xff]
      %v570 = vld [vmem:[%s0 + $0x78] sm:$0xff]
      %v571 = vld [vmem:[%s0 + $0x80] sm:$0xff]
      %v572 = vld [vmem:[%s0 + $0x88] sm:$0xff]
      %v573 = vld [vmem:[%s0 + $0x90] sm:$0xff]
      %v574 = vld [vmem:[%s0 + $0x98] sm:$0xff]
      %v575 = vld [vmem:[%s0 + $0xa0] sm:$0xff]
      %v576 = vld [vmem:[%s0 + $0xa8] sm:$0xff]
      %v577 = vld [vmem:[%s0 + $0xb0] sm:$0xff]
      %v578 = vld [vmem:[%s0 + $0xb8] sm:$0xff]
      %v579 = vld [vmem:[%s0 + $0xc0] sm:$0xff]
      %v580 = vld [vmem:[%s0 + $0xc8] sm:$0xff]
      %v581 = vld [vmem:[%s0 + $0xd0] sm:$0xff]
      %v582 = vld [vmem:[%s0 + $0xd8] sm:$0xff]
      %v583 = vld [vmem:[%s0 + $0xe0] sm:$0xff]
      %v584 = vld [vmem:[%s0 + $0xe8] sm:$0xff]
      %v585 = vld [vmem:[%s0 + $0xf0] sm:$0xff]
      %v586 = vld [vmem:[%s0 + $0xf8] sm:$0xff]
      %v587 = vld [vmem:[%s0 + $0x100] sm:$0xff]
      %v588 = vld [vmem:[%s0 + $0x108] sm:$0xff]
      %v589 = vld [vmem:[%s0 + $0x110] sm:$0xff]
      %v590 = vld [vmem:[%s0 + $0x118] sm:$0xff]
      %v591 = vld [vmem:[%s0 + $0x120] sm:$0xff]
      %v592 = vld [vmem:[%s0 + $0x128] sm:$0xff]
      %v593 = vld [vmem:[%s0 + $0x130] sm:$0xff]
      %v594 = vld [vmem:[%s0 + $0x138] sm:$0xff]
      %v595 = vld [vmem:[%s0 + $0x140] sm:$0xff]
      %v596 = vld [vmem:[%s0 + $0x148] sm:$0xff]
      %v597 = vld [vmem:[%s0 + $0x150] sm:$0xff]
      %v598 = vld [vmem:[%s0 + $0x158] sm:$0xff]
      %v599 = vld [vmem:[%s0 + $0x160] sm:$0xff]
      %v600 = vld [vmem:[%s0 + $0x168] sm:$0xff]
      %v601 = vld [vmem:[%s0 + $0x170] sm:$0xff]
      %v602 = vld [vmem:[%s0 + $0x178] sm:$0xff]
      %v603 = vld [vmem:[%s1] sm:$0xff]
      %vm604 = vcmask 64512
      %v606 = vsel %vm604, %v555, 0
      %v609 = vsel %vm604, %v556, 0
      %v612 = vsel %vm604, %v557, 0
      %v615 = vsel %vm604, %v558, 0
      %v618 = vsel %vm604, %v559, 0
      %v621 = vsel %vm604, %v560, 0
      %v624 = vsel %vm604, %v561, 0
      %v627 = vsel %vm604, %v562, 0
      %v630 = vsel %vm604, %v563, 0
      %v633 = vsel %vm604, %v564, 0
      %v636 = vsel %vm604, %v565, 0
      %v639 = vsel %vm604, %v566, 0
      %v642 = vsel %vm604, %v567, 0
      %v645 = vsel %vm604, %v568, 0
      %v648 = vsel %vm604, %v569, 0
      %v651 = vsel %vm604, %v570, 0
      %v654 = vsel %vm604, %v571, 0
      %v657 = vsel %vm604, %v572, 0
      %v660 = vsel %vm604, %v573, 0
      %v663 = vsel %vm604, %v574, 0
      %v666 = vsel %vm604, %v575, 0
      %v669 = vsel %vm604, %v576, 0
      %v672 = vsel %vm604, %v577, 0
      %v675 = vsel %vm604, %v578, 0
      %v678 = vsel %vm604, %v579, 0
      %v681 = vsel %vm604, %v580, 0
      %v684 = vsel %vm604, %v581, 0
      %v687 = vsel %vm604, %v582, 0
      %v690 = vsel %vm604, %v583, 0
      %v693 = vsel %vm604, %v584, 0
      %v696 = vsel %vm604, %v585, 0
      %v699 = vsel %vm604, %v586, 0
      %v702 = vsel %vm604, %v587, 0
      %v705 = vsel %vm604, %v588, 0
      %v708 = vsel %vm604, %v589, 0
      %v711 = vsel %vm604, %v590, 0
      %v714 = vsel %vm604, %v591, 0
      %v717 = vsel %vm604, %v592, 0
      %v720 = vsel %vm604, %v593, 0
      %v723 = vsel %vm604, %v594, 0
      %v726 = vsel %vm604, %v595, 0
      %v729 = vsel %vm604, %v596, 0
      %v732 = vsel %vm604, %v597, 0
      %v735 = vsel %vm604, %v598, 0
      %v738 = vsel %vm604, %v599, 0
      %v741 = vsel %vm604, %v600, 0
      %v744 = vsel %vm604, %v601, 0
      %v747 = vsel %vm604, %v602, 0
      %749 = vmatpush.msra.mxu0 0.0
      %750 = vmatpush.msra.mxu0 0.0
      %751 = vmatpush.msra.mxu0 0.0
      %752 = vmatpush.msra.mxu0 0.0
      %753 = vmatpush.msra.mxu0 0.0
      %754 = vmatpush.msra.mxu0 0.0
      %755 = vmatpush.msra.mxu0 0.0
      %756 = vmatpush.msra.mxu0 0.0
      %757 = vmatpush.msra.mxu0 0.0
      %758 = vmatpush.msra.mxu0 0.0
      %759 = vmatpush.msra.mxu0 0.0
      %760 = vmatpush.msra.mxu0 0.0
      %761 = vmatpush.msra.mxu0 0.0
      %762 = vmatpush.msra.mxu0 0.0
      %763 = vmatpush.msra.mxu0 0.0
      %764 = vmatpush.msra.mxu0 %v603
      %765 = vmatmul.f32.gmra.mxu0 %v606
      %v766 = vpop.f32.mrf.mxu0
      %v767 = vadd.f32 0.0, %v766
      %768 = vmatmul.f32.gmra.mxu0 %v609
      %v769 = vpop.f32.mrf.mxu0
      %v770 = vadd.f32 0.0, %v769
      %771 = vmatmul.f32.gmra.mxu0 %v612
      %v772 = vpop.f32.mrf.mxu0
      %v773 = vadd.f32 0.0, %v772
      %774 = vmatmul.f32.gmra.mxu0 %v615
      %v775 = vpop.f32.mrf.mxu0
      %v776 = vadd.f32 0.0, %v775
      %777 = vmatmul.f32.gmra.mxu0 %v618
      %v778 = vpop.f32.mrf.mxu0
      %v779 = vadd.f32 0.0, %v778
      %780 = vmatmul.f32.gmra.mxu0 %v621
      %v781 = vpop.f32.mrf.mxu0
      %v782 = vadd.f32 0.0, %v781
      %783 = vmatmul.f32.gmra.mxu0 %v624
      %v784 = vpop.f32.mrf.mxu0
      %v785 = vadd.f32 0.0, %v784
      %786 = vmatmul.f32.gmra.mxu0 %v627
      %v787 = vpop.f32.mrf.mxu0
      %v788 = vadd.f32 0.0, %v787
      %789 = vmatmul.f32.gmra.mxu0 %v630
      %v790 = vpop.f32.mrf.mxu0
      %v791 = vadd.f32 0.0, %v790
      %792 = vmatmul.f32.gmra.mxu0 %v633
      %v793 = vpop.f32.mrf.mxu0
      %v794 = vadd.f32 0.0, %v793
      %795 = vmatmul.f32.gmra.mxu0 %v636
      %v796 = vpop.f32.mrf.mxu0
      %v797 = vadd.f32 0.0, %v796
      %798 = vmatmul.f32.gmra.mxu0 %v639
      %v799 = vpop.f32.mrf.mxu0
      %v800 = vadd.f32 0.0, %v799
      %801 = vmatmul.f32.gmra.mxu0 %v642
      %v802 = vpop.f32.mrf.mxu0
      %v803 = vadd.f32 0.0, %v802
      %804 = vmatmul.f32.gmra.mxu0 %v645
      %v805 = vpop.f32.mrf.mxu0
      %v806 = vadd.f32 0.0, %v805
      %807 = vmatmul.f32.gmra.mxu0 %v648
      %v808 = vpop.f32.mrf.mxu0
      %v809 = vadd.f32 0.0, %v808
      %810 = vmatmul.f32.gmra.mxu0 %v651
      %v811 = vpop.f32.mrf.mxu0
      %v812 = vadd.f32 0.0, %v811
      %813 = vmatmul.f32.gmra.mxu0 %v654
      %v814 = vpop.f32.mrf.mxu0
      %v815 = vadd.f32 0.0, %v814
      %816 = vmatmul.f32.gmra.mxu0 %v657
      %v817 = vpop.f32.mrf.mxu0
      %v818 = vadd.f32 0.0, %v817
      %819 = vmatmul.f32.gmra.mxu0 %v660
      %v820 = vpop.f32.mrf.mxu0
      %v821 = vadd.f32 0.0, %v820
      %822 = vmatmul.f32.gmra.mxu0 %v663
      %v823 = vpop.f32.mrf.mxu0
      %v824 = vadd.f32 0.0, %v823
      %825 = vmatmul.f32.gmra.mxu0 %v666
      %v826 = vpop.f32.mrf.mxu0
      %v827 = vadd.f32 0.0, %v826
      %828 = vmatmul.f32.gmra.mxu0 %v669
      %v829 = vpop.f32.mrf.mxu0
      %v830 = vadd.f32 0.0, %v829
      %831 = vmatmul.f32.gmra.mxu0 %v672
      %v832 = vpop.f32.mrf.mxu0
      %v833 = vadd.f32 0.0, %v832
      %834 = vmatmul.f32.gmra.mxu0 %v675
      %v835 = vpop.f32.mrf.mxu0
      %v836 = vadd.f32 0.0, %v835
      %837 = vmatmul.f32.gmra.mxu0 %v678
      %v838 = vpop.f32.mrf.mxu0
      %v839 = vadd.f32 0.0, %v838
      %840 = vmatmul.f32.gmra.mxu0 %v681
      %v841 = vpop.f32.mrf.mxu0
      %v842 = vadd.f32 0.0, %v841
      %843 = vmatmul.f32.gmra.mxu0 %v684
      %v844 = vpop.f32.mrf.mxu0
      %v845 = vadd.f32 0.0, %v844
      %846 = vmatmul.f32.gmra.mxu0 %v687
      %v847 = vpop.f32.mrf.mxu0
      %v848 = vadd.f32 0.0, %v847
      %849 = vmatmul.f32.gmra.mxu0 %v690
      %v850 = vpop.f32.mrf.mxu0
      %v851 = vadd.f32 0.0, %v850
      %852 = vmatmul.f32.gmra.mxu0 %v693
      %v853 = vpop.f32.mrf.mxu0
      %v854 = vadd.f32 0.0, %v853
      %855 = vmatmul.f32.gmra.mxu0 %v696
      %v856 = vpop.f32.mrf.mxu0
      %v857 = vadd.f32 0.0, %v856
      %858 = vmatmul.f32.gmra.mxu0 %v699
      %v859 = vpop.f32.mrf.mxu0
      %v860 = vadd.f32 0.0, %v859
      %861 = vmatmul.f32.gmra.mxu0 %v702
      %v862 = vpop.f32.mrf.mxu0
      %v863 = vadd.f32 0.0, %v862
      %864 = vmatmul.f32.gmra.mxu0 %v705
      %v865 = vpop.f32.mrf.mxu0
      %v866 = vadd.f32 0.0, %v865
      %867 = vmatmul.f32.gmra.mxu0 %v708
      %v868 = vpop.f32.mrf.mxu0
      %v869 = vadd.f32 0.0, %v868
      %870 = vmatmul.f32.gmra.mxu0 %v711
      %v871 = vpop.f32.mrf.mxu0
      %v872 = vadd.f32 0.0, %v871
      %873 = vmatmul.f32.gmra.mxu0 %v714
      %v874 = vpop.f32.mrf.mxu0
      %v875 = vadd.f32 0.0, %v874
      %876 = vmatmul.f32.gmra.mxu0 %v717
      %v877 = vpop.f32.mrf.mxu0
      %v878 = vadd.f32 0.0, %v877
      %879 = vmatmul.f32.gmra.mxu0 %v720
      %v880 = vpop.f32.mrf.mxu0
      %v881 = vadd.f32 0.0, %v880
      %882 = vmatmul.f32.gmra.mxu0 %v723
      %v883 = vpop.f32.mrf.mxu0
      %v884 = vadd.f32 0.0, %v883
      %885 = vmatmul.f32.gmra.mxu0 %v726
      %v886 = vpop.f32.mrf.mxu0
      %v887 = vadd.f32 0.0, %v886
      %888 = vmatmul.f32.gmra.mxu0 %v729
      %v889 = vpop.f32.mrf.mxu0
      %v890 = vadd.f32 0.0, %v889
      %891 = vmatmul.f32.gmra.mxu0 %v732
      %v892 = vpop.f32.mrf.mxu0
      %v893 = vadd.f32 0.0, %v892
      %894 = vmatmul.f32.gmra.mxu0 %v735
      %v895 = vpop.f32.mrf.mxu0
      %v896 = vadd.f32 0.0, %v895
      %897 = vmatmul.f32.gmra.mxu0 %v738
      %v898 = vpop.f32.mrf.mxu0
      %v899 = vadd.f32 0.0, %v898
      %900 = vmatmul.f32.gmra.mxu0 %v741
      %v901 = vpop.f32.mrf.mxu0
      %v902 = vadd.f32 0.0, %v901
      %903 = vmatmul.f32.gmra.mxu0 %v744
      %v904 = vpop.f32.mrf.mxu0
      %v905 = vadd.f32 0.0, %v904
      %906 = vmatmul.f32.gmra.mxu0 %v747
      %v907 = vpop.f32.mrf.mxu0
      %v908 = vadd.f32 0.0, %v907
      %909 = vdwg.mxu0
      %v910 = vlaneseq
      %v911 = vshrl.u32 %v910, 7
      %v912 = vadd.s32 %v911, 8
      %v913 = vadd.s32 %v911, 16
      %v914 = vadd.s32 %v911, 24
      %v915 = vadd.s32 %v911, 32
      %v916 = vadd.s32 %v911, 40
      %v917 = vadd.s32 %v911, 48
      %v918 = vadd.s32 %v911, 56
      %v919 = vadd.s32 %v911, 64
      %v920 = vadd.s32 %v911, 72
      %v921 = vadd.s32 %v911, 80
      %v922 = vadd.s32 %v911, 88
      %v923 = vadd.s32 %v911, 96
      %v924 = vadd.s32 %v911, 104
      %v925 = vadd.s32 %v911, 112
      %v926 = vadd.s32 %v911, 120
      %v927 = vadd.s32 %v911, 128
      %v928 = vadd.s32 %v911, 136
      %v929 = vadd.s32 %v911, 144
      %v930 = vadd.s32 %v911, 152
      %v931 = vadd.s32 %v911, 160
      %v932 = vadd.s32 %v911, 168
      %v933 = vadd.s32 %v911, 176
      %v934 = vadd.s32 %v911, 184
      %v935 = vadd.s32 %v911, 192
      %v936 = vadd.s32 %v911, 200
      %v937 = vadd.s32 %v911, 208
      %v938 = vadd.s32 %v911, 216
      %v939 = vadd.s32 %v911, 224
      %v940 = vadd.s32 %v911, 232
      %v941 = vadd.s32 %v911, 240
      %v942 = vadd.s32 %v911, 248
      %v943 = vadd.s32 %v911, 256
      %v944 = vadd.s32 %v911, 264
      %v945 = vadd.s32 %v911, 272
      %v946 = vadd.s32 %v911, 280
      %v947 = vadd.s32 %v911, 288
      %v948 = vadd.s32 %v911, 296
      %v949 = vadd.s32 %v911, 304
      %v950 = vadd.s32 %v911, 312
      %v951 = vadd.s32 %v911, 320
      %v952 = vadd.s32 %v911, 328
      %v953 = vadd.s32 %v911, 336
      %v954 = vadd.s32 %v911, 344
      %v955 = vadd.s32 %v911, 352
      %v956 = vadd.s32 %v911, 360
      %v957 = vadd.s32 %v911, 368
      %v958 = vadd.s32 %v911, 376
      %vm959 = vcmp.lt.s32.totalorder %v911, 256
      %vm960 = vcmp.lt.s32.totalorder %v912, 256
      %vm961 = vcmp.lt.s32.totalorder %v913, 256
      %vm962 = vcmp.lt.s32.totalorder %v914, 256
      %vm963 = vcmp.lt.s32.totalorder %v915, 256
      %vm964 = vcmp.lt.s32.totalorder %v916, 256
      %vm965 = vcmp.lt.s32.totalorder %v917, 256
      %vm966 = vcmp.lt.s32.totalorder %v918, 256
      %vm967 = vcmp.lt.s32.totalorder %v919, 256
      %vm968 = vcmp.lt.s32.totalorder %v920, 256
      %vm969 = vcmp.lt.s32.totalorder %v921, 256
      %vm970 = vcmp.lt.s32.totalorder %v922, 256
      %vm971 = vcmp.lt.s32.totalorder %v923, 256
      %vm972 = vcmp.lt.s32.totalorder %v924, 256
      %vm973 = vcmp.lt.s32.totalorder %v925, 256
      %vm974 = vcmp.lt.s32.totalorder %v926, 256
      %vm975 = vcmp.lt.s32.totalorder %v927, 256
      %vm976 = vcmp.lt.s32.totalorder %v928, 256
      %vm977 = vcmp.lt.s32.totalorder %v929, 256
      %vm978 = vcmp.lt.s32.totalorder %v930, 256
      %vm979 = vcmp.lt.s32.totalorder %v931, 256
      %vm980 = vcmp.lt.s32.totalorder %v932, 256
      %vm981 = vcmp.lt.s32.totalorder %v933, 256
      %vm982 = vcmp.lt.s32.totalorder %v934, 256
      %vm983 = vcmp.lt.s32.totalorder %v935, 256
      %vm984 = vcmp.lt.s32.totalorder %v936, 256
      %vm985 = vcmp.lt.s32.totalorder %v937, 256
      %vm986 = vcmp.lt.s32.totalorder %v938, 256
      %vm987 = vcmp.lt.s32.totalorder %v939, 256
      %vm988 = vcmp.lt.s32.totalorder %v940, 256
      %vm989 = vcmp.lt.s32.totalorder %v941, 256
      %vm990 = vcmp.lt.s32.totalorder %v942, 256
      %vm991 = vcmp.lt.s32.totalorder %v943, 256
      %vm992 = vcmp.lt.s32.totalorder %v944, 256
      %vm993 = vcmp.lt.s32.totalorder %v945, 256
      %vm994 = vcmp.lt.s32.totalorder %v946, 256
      %vm995 = vcmp.lt.s32.totalorder %v947, 256
      %vm996 = vcmp.lt.s32.totalorder %v948, 256
      %vm997 = vcmp.lt.s32.totalorder %v949, 256
      %vm998 = vcmp.lt.s32.totalorder %v950, 256
      %vm999 = vcmp.lt.s32.totalorder %v951, 256
      %vm1000 = vcmp.lt.s32.totalorder %v952, 256
      %vm1001 = vcmp.lt.s32.totalorder %v953, 256
      %vm1002 = vcmp.lt.s32.totalorder %v954, 256
      %vm1003 = vcmp.lt.s32.totalorder %v955, 256
      %vm1004 = vcmp.lt.s32.totalorder %v956, 256
      %vm1005 = vcmp.lt.s32.totalorder %v957, 256
      %vm1006 = vcmp.lt.s32.totalorder %v958, 256
      %v1007 = vsel %vm959, 1, 0
      %v1008 = vsel %vm960, 1, 0
      %v1009 = vsel %vm961, 1, 0
      %v1010 = vsel %vm962, 1, 0
      %v1011 = vsel %vm963, 1, 0
      %v1012 = vsel %vm964, 1, 0
      %v1013 = vsel %vm965, 1, 0
      %v1014 = vsel %vm966, 1, 0
      %v1015 = vsel %vm967, 1, 0
      %v1016 = vsel %vm968, 1, 0
      %v1017 = vsel %vm969, 1, 0
      %v1018 = vsel %vm970, 1, 0
      %v1019 = vsel %vm971, 1, 0
      %v1020 = vsel %vm972, 1, 0
      %v1021 = vsel %vm973, 1, 0
      %v1022 = vsel %vm974, 1, 0
      %v1023 = vsel %vm975, 1, 0
      %v1024 = vsel %vm976, 1, 0
      %v1025 = vsel %vm977, 1, 0
      %v1026 = vsel %vm978, 1, 0
      %v1027 = vsel %vm979, 1, 0
      %v1028 = vsel %vm980, 1, 0
      %v1029 = vsel %vm981, 1, 0
      %v1030 = vsel %vm982, 1, 0
      %v1031 = vsel %vm983, 1, 0
      %v1032 = vsel %vm984, 1, 0
      %v1033 = vsel %vm985, 1, 0
      %v1034 = vsel %vm986, 1, 0
      %v1035 = vsel %vm987, 1, 0
      %v1036 = vsel %vm988, 1, 0
      %v1037 = vsel %vm989, 1, 0
      %v1038 = vsel %vm990, 1, 0
      %v1039 = vsel %vm991, 1, 0
      %v1040 = vsel %vm992, 1, 0
      %v1041 = vsel %vm993, 1, 0
      %v1042 = vsel %vm994, 1, 0
      %v1043 = vsel %vm995, 1, 0
      %v1044 = vsel %vm996, 1, 0
      %v1045 = vsel %vm997, 1, 0
      %v1046 = vsel %vm998, 1, 0
      %v1047 = vsel %vm999, 1, 0
      %v1048 = vsel %vm1000, 1, 0
      %v1049 = vsel %vm1001, 1, 0
      %v1050 = vsel %vm1002, 1, 0
      %v1051 = vsel %vm1003, 1, 0
      %v1052 = vsel %vm1004, 1, 0
      %v1053 = vsel %vm1005, 1, 0
      %v1054 = vsel %vm1006, 1, 0
      %vm1055 = vcmp.eq.s32.totalorder %v1007, 1
      %vm1056 = vcmp.eq.s32.totalorder %v1008, 1
      %vm1057 = vcmp.eq.s32.totalorder %v1009, 1
      %vm1058 = vcmp.eq.s32.totalorder %v1010, 1
      %vm1059 = vcmp.eq.s32.totalorder %v1011, 1
      %vm1060 = vcmp.eq.s32.totalorder %v1012, 1
      %vm1061 = vcmp.eq.s32.totalorder %v1013, 1
      %vm1062 = vcmp.eq.s32.totalorder %v1014, 1
      %vm1063 = vcmp.eq.s32.totalorder %v1015, 1
      %vm1064 = vcmp.eq.s32.totalorder %v1016, 1
      %vm1065 = vcmp.eq.s32.totalorder %v1017, 1
      %vm1066 = vcmp.eq.s32.totalorder %v1018, 1
      %vm1067 = vcmp.eq.s32.totalorder %v1019, 1
      %vm1068 = vcmp.eq.s32.totalorder %v1020, 1
      %vm1069 = vcmp.eq.s32.totalorder %v1021, 1
      %vm1070 = vcmp.eq.s32.totalorder %v1022, 1
      %vm1071 = vcmp.eq.s32.totalorder %v1023, 1
      %vm1072 = vcmp.eq.s32.totalorder %v1024, 1
      %vm1073 = vcmp.eq.s32.totalorder %v1025, 1
      %vm1074 = vcmp.eq.s32.totalorder %v1026, 1
      %vm1075 = vcmp.eq.s32.totalorder %v1027, 1
      %vm1076 = vcmp.eq.s32.totalorder %v1028, 1
      %vm1077 = vcmp.eq.s32.totalorder %v1029, 1
      %vm1078 = vcmp.eq.s32.totalorder %v1030, 1
      %vm1079 = vcmp.eq.s32.totalorder %v1031, 1
      %vm1080 = vcmp.eq.s32.totalorder %v1032, 1
      %vm1081 = vcmp.eq.s32.totalorder %v1033, 1
      %vm1082 = vcmp.eq.s32.totalorder %v1034, 1
      %vm1083 = vcmp.eq.s32.totalorder %v1035, 1
      %vm1084 = vcmp.eq.s32.totalorder %v1036, 1
      %vm1085 = vcmp.eq.s32.totalorder %v1037, 1
      %vm1086 = vcmp.eq.s32.totalorder %v1038, 1
      %vm1087 = vcmp.eq.s32.totalorder %v1039, 1
      %vm1088 = vcmp.eq.s32.totalorder %v1040, 1
      %vm1089 = vcmp.eq.s32.totalorder %v1041, 1
      %vm1090 = vcmp.eq.s32.totalorder %v1042, 1
      %vm1091 = vcmp.eq.s32.totalorder %v1043, 1
      %vm1092 = vcmp.eq.s32.totalorder %v1044, 1
      %vm1093 = vcmp.eq.s32.totalorder %v1045, 1
      %vm1094 = vcmp.eq.s32.totalorder %v1046, 1
      %vm1095 = vcmp.eq.s32.totalorder %v1047, 1
      %vm1096 = vcmp.eq.s32.totalorder %v1048, 1
      %vm1097 = vcmp.eq.s32.totalorder %v1049, 1
      %vm1098 = vcmp.eq.s32.totalorder %v1050, 1
      %vm1099 = vcmp.eq.s32.totalorder %v1051, 1
      %vm1100 = vcmp.eq.s32.totalorder %v1052, 1
      %vm1101 = vcmp.eq.s32.totalorder %v1053, 1
      %vm1102 = vcmp.eq.s32.totalorder %v1054, 1
      %1151 = vrot.lane.b32.xlu0 %v767, 112
      %v1152 = vpop.permute.xlu0 %1151
      %1153 = vrot.lane.b32.xlu0 %v770, 112
      %v1154 = vpop.permute.xlu0 %1153
      %1155 = vrot.lane.b32.xlu0 %v773, 112
      %v1156 = vpop.permute.xlu0 %1155
      %1157 = vrot.lane.b32.xlu0 %v776, 112
      %v1158 = vpop.permute.xlu0 %1157
      %1159 = vrot.lane.b32.xlu0 %v779, 112
      %v1160 = vpop.permute.xlu0 %1159
      %1161 = vrot.lane.b32.xlu0 %v782, 112
      %v1162 = vpop.permute.xlu0 %1161
      %1163 = vrot.lane.b32.xlu0 %v785, 112
      %v1164 = vpop.permute.xlu0 %1163
      %1165 = vrot.lane.b32.xlu0 %v788, 112
      %v1166 = vpop.permute.xlu0 %1165
      %1167 = vrot.lane.b32.xlu0 %v791, 112
      %v1168 = vpop.permute.xlu0 %1167
      %1169 = vrot.lane.b32.xlu0 %v794, 112
      %v1170 = vpop.permute.xlu0 %1169
      %1171 = vrot.lane.b32.xlu0 %v797, 112
      %v1172 = vpop.permute.xlu0 %1171
      %1173 = vrot.lane.b32.xlu0 %v800, 112
      %v1174 = vpop.permute.xlu0 %1173
      %1175 = vrot.lane.b32.xlu0 %v803, 112
      %v1176 = vpop.permute.xlu0 %1175
      %1177 = vrot.lane.b32.xlu0 %v806, 112
      %v1178 = vpop.permute.xlu0 %1177
      %1179 = vrot.lane.b32.xlu0 %v809, 112
      %v1180 = vpop.permute.xlu0 %1179
      %1181 = vrot.lane.b32.xlu0 %v812, 112
      %v1182 = vpop.permute.xlu0 %1181
      %1183 = vrot.lane.b32.xlu0 %v815, 112
      %v1184 = vpop.permute.xlu0 %1183
      %1185 = vrot.lane.b32.xlu0 %v818, 112
      %v1186 = vpop.permute.xlu0 %1185
      %1187 = vrot.lane.b32.xlu0 %v821, 112
      %v1188 = vpop.permute.xlu0 %1187
      %1189 = vrot.lane.b32.xlu0 %v824, 112
      %v1190 = vpop.permute.xlu0 %1189
      %1191 = vrot.lane.b32.xlu0 %v827, 112
      %v1192 = vpop.permute.xlu0 %1191
      %1193 = vrot.lane.b32.xlu0 %v830, 112
      %v1194 = vpop.permute.xlu0 %1193
      %1195 = vrot.lane.b32.xlu0 %v833, 112
      %v1196 = vpop.permute.xlu0 %1195
      %1197 = vrot.lane.b32.xlu0 %v836, 112
      %v1198 = vpop.permute.xlu0 %1197
      %1199 = vrot.lane.b32.xlu0 %v839, 112
      %v1200 = vpop.permute.xlu0 %1199
      %1201 = vrot.lane.b32.xlu0 %v842, 112
      %v1202 = vpop.permute.xlu0 %1201
      %1203 = vrot.lane.b32.xlu0 %v845, 112
      %v1204 = vpop.permute.xlu0 %1203
      %1205 = vrot.lane.b32.xlu0 %v848, 112
      %v1206 = vpop.permute.xlu0 %1205
      %1207 = vrot.lane.b32.xlu0 %v851, 112
      %v1208 = vpop.permute.xlu0 %1207
      %1209 = vrot.lane.b32.xlu0 %v854, 112
      %v1210 = vpop.permute.xlu0 %1209
      %1211 = vrot.lane.b32.xlu0 %v857, 112
      %v1212 = vpop.permute.xlu0 %1211
      %1213 = vrot.lane.b32.xlu0 %v860, 112
      %v1214 = vpop.permute.xlu0 %1213
      %1215 = vrot.lane.b32.xlu0 %v863, 112
      %v1216 = vpop.permute.xlu0 %1215
      %1217 = vrot.lane.b32.xlu0 %v866, 112
      %v1218 = vpop.permute.xlu0 %1217
      %1219 = vrot.lane.b32.xlu0 %v869, 112
      %v1220 = vpop.permute.xlu0 %1219
      %1221 = vrot.lane.b32.xlu0 %v872, 112
      %v1222 = vpop.permute.xlu0 %1221
      %1223 = vrot.lane.b32.xlu0 %v875, 112
      %v1224 = vpop.permute.xlu0 %1223
      %1225 = vrot.lane.b32.xlu0 %v878, 112
      %v1226 = vpop.permute.xlu0 %1225
      %1227 = vrot.lane.b32.xlu0 %v881, 112
      %v1228 = vpop.permute.xlu0 %1227
      %1229 = vrot.lane.b32.xlu0 %v884, 112
      %v1230 = vpop.permute.xlu0 %1229
      %1231 = vrot.lane.b32.xlu0 %v887, 112
      %v1232 = vpop.permute.xlu0 %1231
      %1233 = vrot.lane.b32.xlu0 %v890, 112
      %v1234 = vpop.permute.xlu0 %1233
      %1235 = vrot.lane.b32.xlu0 %v893, 112
      %v1236 = vpop.permute.xlu0 %1235
      %1237 = vrot.lane.b32.xlu0 %v896, 112
      %v1238 = vpop.permute.xlu0 %1237
      %1239 = vrot.lane.b32.xlu0 %v899, 112
      %v1240 = vpop.permute.xlu0 %1239
      %1241 = vrot.lane.b32.xlu0 %v902, 112
      %v1242 = vpop.permute.xlu0 %1241
      %1243 = vrot.lane.b32.xlu0 %v905, 112
      %v1244 = vpop.permute.xlu0 %1243
      %1245 = vrot.lane.b32.xlu0 %v908, 112
      %v1246 = vpop.permute.xlu0 %1245
      %v1295 = vsel %vm1055, %v767, %v1152
      %v1296 = vsel %vm1056, %v770, %v1154
      %v1297 = vsel %vm1057, %v773, %v1156
      %v1298 = vsel %vm1058, %v776, %v1158
      %v1299 = vsel %vm1059, %v779, %v1160
      %v1300 = vsel %vm1060, %v782, %v1162
      %v1301 = vsel %vm1061, %v785, %v1164
      %v1302 = vsel %vm1062, %v788, %v1166
      %v1303 = vsel %vm1063, %v791, %v1168
      %v1304 = vsel %vm1064, %v794, %v1170
      %v1305 = vsel %vm1065, %v797, %v1172
      %v1306 = vsel %vm1066, %v800, %v1174
      %v1307 = vsel %vm1067, %v803, %v1176
      %v1308 = vsel %vm1068, %v806, %v1178
      %v1309 = vsel %vm1069, %v809, %v1180
      %v1310 = vsel %vm1070, %v812, %v1182
      %v1311 = vsel %vm1071, %v815, %v1184
      %v1312 = vsel %vm1072, %v818, %v1186
      %v1313 = vsel %vm1073, %v821, %v1188
      %v1314 = vsel %vm1074, %v824, %v1190
      %v1315 = vsel %vm1075, %v827, %v1192
      %v1316 = vsel %vm1076, %v830, %v1194
      %v1317 = vsel %vm1077, %v833, %v1196
      %v1318 = vsel %vm1078, %v836, %v1198
      %v1319 = vsel %vm1079, %v839, %v1200
      %v1320 = vsel %vm1080, %v842, %v1202
      %v1321 = vsel %vm1081, %v845, %v1204
      %v1322 = vsel %vm1082, %v848, %v1206
      %v1323 = vsel %vm1083, %v851, %v1208
      %v1324 = vsel %vm1084, %v854, %v1210
      %v1325 = vsel %vm1085, %v857, %v1212
      %v1326 = vsel %vm1086, %v860, %v1214
      %v1327 = vsel %vm1087, %v863, %v1216
      %v1328 = vsel %vm1088, %v866, %v1218
      %v1329 = vsel %vm1089, %v869, %v1220
      %v1330 = vsel %vm1090, %v872, %v1222
      %v1331 = vsel %vm1091, %v875, %v1224
      %v1332 = vsel %vm1092, %v878, %v1226
      %v1333 = vsel %vm1093, %v881, %v1228
      %v1334 = vsel %vm1094, %v884, %v1230
      %v1335 = vsel %vm1095, %v887, %v1232
      %v1336 = vsel %vm1096, %v890, %v1234
      %v1337 = vsel %vm1097, %v893, %v1236
      %v1338 = vsel %vm1098, %v896, %v1238
      %v1339 = vsel %vm1099, %v899, %v1240
      %v1340 = vsel %vm1100, %v902, %v1242
      %v1341 = vsel %vm1101, %v905, %v1244
      %v1342 = vsel %vm1102, %v908, %v1246
      %v1343 = vld [vmem:[%s494] sm:$0xff]
      %v1344 = vld [vmem:[%s494 + $0x8] sm:$0xf]
      %v1345 = vld [vmem:[%s494 + $0xc] sm:$0xff]
      %v1346 = vld [vmem:[%s494 + $0x14] sm:$0xf]
      %v1347 = vld [vmem:[%s494 + $0x18] sm:$0xff]
      %v1348 = vld [vmem:[%s494 + $0x20] sm:$0xf]
      %v1349 = vld [vmem:[%s494 + $0x24] sm:$0xff]
      %v1350 = vld [vmem:[%s494 + $0x2c] sm:$0xf]
      %v1351 = vld [vmem:[%s494 + $0x30] sm:$0xff]
      %v1352 = vld [vmem:[%s494 + $0x38] sm:$0xf]
      %v1353 = vld [vmem:[%s494 + $0x3c] sm:$0xff]
      %v1354 = vld [vmem:[%s494 + $0x44] sm:$0xf]
      %v1355 = vld [vmem:[%s494 + $0x48] sm:$0xff]
      %v1356 = vld [vmem:[%s494 + $0x50] sm:$0xf]
      %v1357 = vld [vmem:[%s494 + $0x54] sm:$0xff]
      %v1358 = vld [vmem:[%s494 + $0x5c] sm:$0xf]
      %v1359 = vld [vmem:[%s494 + $0x60] sm:$0xff]
      %v1360 = vld [vmem:[%s494 + $0x68] sm:$0xf]
      %v1361 = vld [vmem:[%s494 + $0x6c] sm:$0xff]
      %v1362 = vld [vmem:[%s494 + $0x74] sm:$0xf]
      %v1363 = vld [vmem:[%s494 + $0x78] sm:$0xff]
      %v1364 = vld [vmem:[%s494 + $0x80] sm:$0xf]
      %v1365 = vld [vmem:[%s494 + $0x84] sm:$0xff]
      %v1366 = vld [vmem:[%s494 + $0x8c] sm:$0xf]
      %v1367 = vld [vmem:[%s494 + $0x90] sm:$0xff]
      %v1368 = vld [vmem:[%s494 + $0x98] sm:$0xf]
      %v1369 = vld [vmem:[%s494 + $0x9c] sm:$0xff]
      %v1370 = vld [vmem:[%s494 + $0xa4] sm:$0xf]
      %v1371 = vld [vmem:[%s494 + $0xa8] sm:$0xff]
      %v1372 = vld [vmem:[%s494 + $0xb0] sm:$0xf]
      %v1373 = vld [vmem:[%s494 + $0xb4] sm:$0xff]
      %v1374 = vld [vmem:[%s494 + $0xbc] sm:$0xf]
      %v1375 = vunpack.c.l.bf16 %v1343
      %v1376 = vunpack.c.h.bf16 %v1343
      %v1377 = vunpack.c.l.bf16 %v1344
      %v1378 = vunpack.c.l.bf16 %v1345
      %v1379 = vunpack.c.h.bf16 %v1345
      %v1380 = vunpack.c.l.bf16 %v1346
      %v1381 = vunpack.c.l.bf16 %v1347
      %v1382 = vunpack.c.h.bf16 %v1347
      %v1383 = vunpack.c.l.bf16 %v1348
      %v1384 = vunpack.c.l.bf16 %v1349
      %v1385 = vunpack.c.h.bf16 %v1349
      %v1386 = vunpack.c.l.bf16 %v1350
      %v1387 = vunpack.c.l.bf16 %v1351
      %v1388 = vunpack.c.h.bf16 %v1351
      %v1389 = vunpack.c.l.bf16 %v1352
      %v1390 = vunpack.c.l.bf16 %v1353
      %v1391 = vunpack.c.h.bf16 %v1353
      %v1392 = vunpack.c.l.bf16 %v1354
      %v1393 = vunpack.c.l.bf16 %v1355
      %v1394 = vunpack.c.h.bf16 %v1355
      %v1395 = vunpack.c.l.bf16 %v1356
      %v1396 = vunpack.c.l.bf16 %v1357
      %v1397 = vunpack.c.h.bf16 %v1357
      %v1398 = vunpack.c.l.bf16 %v1358
      %v1399 = vunpack.c.l.bf16 %v1359
      %v1400 = vunpack.c.h.bf16 %v1359
      %v1401 = vunpack.c.l.bf16 %v1360
      %v1402 = vunpack.c.l.bf16 %v1361
      %v1403 = vunpack.c.h.bf16 %v1361
      %v1404 = vunpack.c.l.bf16 %v1362
      %v1405 = vunpack.c.l.bf16 %v1363
      %v1406 = vunpack.c.h.bf16 %v1363
      %v1407 = vunpack.c.l.bf16 %v1364
      %v1408 = vunpack.c.l.bf16 %v1365
      %v1409 = vunpack.c.h.bf16 %v1365
      %v1410 = vunpack.c.l.bf16 %v1366
      %v1411 = vunpack.c.l.bf16 %v1367
      %v1412 = vunpack.c.h.bf16 %v1367
      %v1413 = vunpack.c.l.bf16 %v1368
      %v1414 = vunpack.c.l.bf16 %v1369
      %v1415 = vunpack.c.h.bf16 %v1369
      %v1416 = vunpack.c.l.bf16 %v1370
      %v1417 = vunpack.c.l.bf16 %v1371
      %v1418 = vunpack.c.h.bf16 %v1371
      %v1419 = vunpack.c.l.bf16 %v1372
      %v1420 = vunpack.c.l.bf16 %v1373
      %v1421 = vunpack.c.h.bf16 %v1373
      %v1422 = vunpack.c.l.bf16 %v1374
      %v1423 = vld [vmem:[%s501] sm:$0xff]
      %v1424 = vld [vmem:[%s501 + $0x8] sm:$0xf]
      %v1425 = vld [vmem:[%s501 + $0xc] sm:$0xff]
      %v1426 = vld [vmem:[%s501 + $0x14] sm:$0xf]
      %v1427 = vld [vmem:[%s501 + $0x18] sm:$0xff]
      %v1428 = vld [vmem:[%s501 + $0x20] sm:$0xf]
      %v1429 = vld [vmem:[%s501 + $0x24] sm:$0xff]
      %v1430 = vld [vmem:[%s501 + $0x2c] sm:$0xf]
      %v1431 = vld [vmem:[%s501 + $0x30] sm:$0xff]
      %v1432 = vld [vmem:[%s501 + $0x38] sm:$0xf]
      %v1433 = vld [vmem:[%s501 + $0x3c] sm:$0xff]
      %v1434 = vld [vmem:[%s501 + $0x44] sm:$0xf]
      %v1435 = vld [vmem:[%s501 + $0x48] sm:$0xff]
      %v1436 = vld [vmem:[%s501 + $0x50] sm:$0xf]
      %v1437 = vld [vmem:[%s501 + $0x54] sm:$0xff]
      %v1438 = vld [vmem:[%s501 + $0x5c] sm:$0xf]
      %v1439 = vld [vmem:[%s501 + $0x60] sm:$0xff]
      %v1440 = vld [vmem:[%s501 + $0x68] sm:$0xf]
      %v1441 = vld [vmem:[%s501 + $0x6c] sm:$0xff]
      %v1442 = vld [vmem:[%s501 + $0x74] sm:$0xf]
      %v1443 = vld [vmem:[%s501 + $0x78] sm:$0xff]
      %v1444 = vld [vmem:[%s501 + $0x80] sm:$0xf]
      %v1445 = vld [vmem:[%s501 + $0x84] sm:$0xff]
      %v1446 = vld [vmem:[%s501 + $0x8c] sm:$0xf]
      %v1447 = vld [vmem:[%s501 + $0x90] sm:$0xff]
      %v1448 = vld [vmem:[%s501 + $0x98] sm:$0xf]
      %v1449 = vld [vmem:[%s501 + $0x9c] sm:$0xff]
      %v1450 = vld [vmem:[%s501 + $0xa4] sm:$0xf]
      %v1451 = vld [vmem:[%s501 + $0xa8] sm:$0xff]
      %v1452 = vld [vmem:[%s501 + $0xb0] sm:$0xf]
      %v1453 = vld [vmem:[%s501 + $0xb4] sm:$0xff]
      %v1454 = vld [vmem:[%s501 + $0xbc] sm:$0xf]
      %v1455 = vunpack.c.l.bf16 %v1423
      %v1456 = vunpack.c.h.bf16 %v1423
      %v1457 = vunpack.c.l.bf16 %v1424
      %v1458 = vunpack.c.l.bf16 %v1425
      %v1459 = vunpack.c.h.bf16 %v1425
      %v1460 = vunpack.c.l.bf16 %v1426
      %v1461 = vunpack.c.l.bf16 %v1427
      %v1462 = vunpack.c.h.bf16 %v1427
      %v1463 = vunpack.c.l.bf16 %v1428
      %v1464 = vunpack.c.l.bf16 %v1429
      %v1465 = vunpack.c.h.bf16 %v1429
      %v1466 = vunpack.c.l.bf16 %v1430
      %v1467 = vunpack.c.l.bf16 %v1431
      %v1468 = vunpack.c.h.bf16 %v1431
      %v1469 = vunpack.c.l.bf16 %v1432
      %v1470 = vunpack.c.l.bf16 %v1433
      %v1471 = vunpack.c.h.bf16 %v1433
      %v1472 = vunpack.c.l.bf16 %v1434
      %v1473 = vunpack.c.l.bf16 %v1435
      %v1474 = vunpack.c.h.bf16 %v1435
      %v1475 = vunpack.c.l.bf16 %v1436
      %v1476 = vunpack.c.l.bf16 %v1437
      %v1477 = vunpack.c.h.bf16 %v1437
      %v1478 = vunpack.c.l.bf16 %v1438
      %v1479 = vunpack.c.l.bf16 %v1439
      %v1480 = vunpack.c.h.bf16 %v1439
      %v1481 = vunpack.c.l.bf16 %v1440
      %v1482 = vunpack.c.l.bf16 %v1441
      %v1483 = vunpack.c.h.bf16 %v1441
      %v1484 = vunpack.c.l.bf16 %v1442
      %v1485 = vunpack.c.l.bf16 %v1443
      %v1486 = vunpack.c.h.bf16 %v1443
      %v1487 = vunpack.c.l.bf16 %v1444
      %v1488 = vunpack.c.l.bf16 %v1445
      %v1489 = vunpack.c.h.bf16 %v1445
      %v1490 = vunpack.c.l.bf16 %v1446
      %v1491 = vunpack.c.l.bf16 %v1447
      %v1492 = vunpack.c.h.bf16 %v1447
      %v1493 = vunpack.c.l.bf16 %v1448
      %v1494 = vunpack.c.l.bf16 %v1449
      %v1495 = vunpack.c.h.bf16 %v1449
      %v1496 = vunpack.c.l.bf16 %v1450
      %v1497 = vunpack.c.l.bf16 %v1451
      %v1498 = vunpack.c.h.bf16 %v1451
      %v1499 = vunpack.c.l.bf16 %v1452
      %v1500 = vunpack.c.l.bf16 %v1453
      %v1501 = vunpack.c.h.bf16 %v1453
      %v1502 = vunpack.c.l.bf16 %v1454
      %1503 = vrot.lane.b32.xlu0 %v767, 96
      %v1504 = vpop.permute.xlu0 %1503
      %1505 = vrot.lane.b32.xlu0 %v770, 96
      %v1506 = vpop.permute.xlu0 %1505
      %1507 = vrot.lane.b32.xlu0 %v773, 96
      %v1508 = vpop.permute.xlu0 %1507
      %1509 = vrot.lane.b32.xlu0 %v776, 96
      %v1510 = vpop.permute.xlu0 %1509
      %1511 = vrot.lane.b32.xlu0 %v779, 96
      %v1512 = vpop.permute.xlu0 %1511
      %1513 = vrot.lane.b32.xlu0 %v782, 96
      %v1514 = vpop.permute.xlu0 %1513
      %1515 = vrot.lane.b32.xlu0 %v785, 96
      %v1516 = vpop.permute.xlu0 %1515
      %1517 = vrot.lane.b32.xlu0 %v788, 96
      %v1518 = vpop.permute.xlu0 %1517
      %1519 = vrot.lane.b32.xlu0 %v791, 96
      %v1520 = vpop.permute.xlu0 %1519
      %1521 = vrot.lane.b32.xlu0 %v794, 96
      %v1522 = vpop.permute.xlu0 %1521
      %1523 = vrot.lane.b32.xlu0 %v797, 96
      %v1524 = vpop.permute.xlu0 %1523
      %1525 = vrot.lane.b32.xlu0 %v800, 96
      %v1526 = vpop.permute.xlu0 %1525
      %1527 = vrot.lane.b32.xlu0 %v803, 96
      %v1528 = vpop.permute.xlu0 %1527
      %1529 = vrot.lane.b32.xlu0 %v806, 96
      %v1530 = vpop.permute.xlu0 %1529
      %1531 = vrot.lane.b32.xlu0 %v809, 96
      %v1532 = vpop.permute.xlu0 %1531
      %1533 = vrot.lane.b32.xlu0 %v812, 96
      %v1534 = vpop.permute.xlu0 %1533
      %1535 = vrot.lane.b32.xlu0 %v815, 96
      %v1536 = vpop.permute.xlu0 %1535
      %1537 = vrot.lane.b32.xlu0 %v818, 96
      %v1538 = vpop.permute.xlu0 %1537
      %1539 = vrot.lane.b32.xlu0 %v821, 96
      %v1540 = vpop.permute.xlu0 %1539
      %1541 = vrot.lane.b32.xlu0 %v824, 96
      %v1542 = vpop.permute.xlu0 %1541
      %1543 = vrot.lane.b32.xlu0 %v827, 96
      %v1544 = vpop.permute.xlu0 %1543
      %1545 = vrot.lane.b32.xlu0 %v830, 96
      %v1546 = vpop.permute.xlu0 %1545
      %1547 = vrot.lane.b32.xlu0 %v833, 96
      %v1548 = vpop.permute.xlu0 %1547
      %1549 = vrot.lane.b32.xlu0 %v836, 96
      %v1550 = vpop.permute.xlu0 %1549
      %1551 = vrot.lane.b32.xlu0 %v839, 96
      %v1552 = vpop.permute.xlu0 %1551
      %1553 = vrot.lane.b32.xlu0 %v842, 96
      %v1554 = vpop.permute.xlu0 %1553
      %1555 = vrot.lane.b32.xlu0 %v845, 96
      %v1556 = vpop.permute.xlu0 %1555
      %1557 = vrot.lane.b32.xlu0 %v848, 96
      %v1558 = vpop.permute.xlu0 %1557
      %1559 = vrot.lane.b32.xlu0 %v851, 96
      %v1560 = vpop.permute.xlu0 %1559
      %1561 = vrot.lane.b32.xlu0 %v854, 96
      %v1562 = vpop.permute.xlu0 %1561
      %1563 = vrot.lane.b32.xlu0 %v857, 96
      %v1564 = vpop.permute.xlu0 %1563
      %1565 = vrot.lane.b32.xlu0 %v860, 96
      %v1566 = vpop.permute.xlu0 %1565
      %1567 = vrot.lane.b32.xlu0 %v863, 96
      %v1568 = vpop.permute.xlu0 %1567
      %1569 = vrot.lane.b32.xlu0 %v866, 96
      %v1570 = vpop.permute.xlu0 %1569
      %1571 = vrot.lane.b32.xlu0 %v869, 96
      %v1572 = vpop.permute.xlu0 %1571
      %1573 = vrot.lane.b32.xlu0 %v872, 96
      %v1574 = vpop.permute.xlu0 %1573
      %1575 = vrot.lane.b32.xlu0 %v875, 96
      %v1576 = vpop.permute.xlu0 %1575
      %1577 = vrot.lane.b32.xlu0 %v878, 96
      %v1578 = vpop.permute.xlu0 %1577
      %1579 = vrot.lane.b32.xlu0 %v881, 96
      %v1580 = vpop.permute.xlu0 %1579
      %1581 = vrot.lane.b32.xlu0 %v884, 96
      %v1582 = vpop.permute.xlu0 %1581
      %1583 = vrot.lane.b32.xlu0 %v887, 96
      %v1584 = vpop.permute.xlu0 %1583
      %1585 = vrot.lane.b32.xlu0 %v890, 96
      %v1586 = vpop.permute.xlu0 %1585
      %1587 = vrot.lane.b32.xlu0 %v893, 96
      %v1588 = vpop.permute.xlu0 %1587
      %1589 = vrot.lane.b32.xlu0 %v896, 96
      %v1590 = vpop.permute.xlu0 %1589
      %1591 = vrot.lane.b32.xlu0 %v899, 96
      %v1592 = vpop.permute.xlu0 %1591
      %1593 = vrot.lane.b32.xlu0 %v902, 96
      %v1594 = vpop.permute.xlu0 %1593
      %1595 = vrot.lane.b32.xlu0 %v905, 96
      %v1596 = vpop.permute.xlu0 %1595
      %1597 = vrot.lane.b32.xlu0 %v908, 96
      %v1598 = vpop.permute.xlu0 %1597
      %1647 = vmatpush.msra.mxu0 %v1534
      %1648 = vmatpush.msra.mxu0 %v1532
      %1649 = vmatpush.msra.mxu0 %v1530
      %1650 = vmatpush.msra.mxu0 %v1528
      %1651 = vmatpush.msra.mxu0 %v1526
      %1652 = vmatpush.msra.mxu0 %v1524
      %1653 = vmatpush.msra.mxu0 %v1522
      %1654 = vmatpush.msra.mxu0 %v1520
      %1655 = vmatpush.msra.mxu0 %v1518
      %1656 = vmatpush.msra.mxu0 %v1516
      %1657 = vmatpush.msra.mxu0 %v1514
      %1658 = vmatpush.msra.mxu0 %v1512
      %1659 = vmatpush.msra.mxu0 %v1510
      %1660 = vmatpush.msra.mxu0 %v1508
      %1661 = vmatpush.msra.mxu0 %v1506
      %1662 = vmatpush.msra.mxu0 %v1504
      %1663 = vmatmul.f32.gmra.mxu0 %v1455
      %v1664 = vpop.f32.mrf.mxu0
      %v1665 = vadd.f32 0.0, %v1664
      %1666 = vmatmul.f32.gmra.mxu0 %v1458
      %v1667 = vpop.f32.mrf.mxu0
      %v1668 = vadd.f32 0.0, %v1667
      %1669 = vmatmul.f32.gmra.mxu0 %v1461
      %v1670 = vpop.f32.mrf.mxu0
      %v1671 = vadd.f32 0.0, %v1670
      %1672 = vmatmul.f32.gmra.mxu0 %v1464
      %v1673 = vpop.f32.mrf.mxu0
      %v1674 = vadd.f32 0.0, %v1673
      %1675 = vmatmul.f32.gmra.mxu0 %v1467
      %v1676 = vpop.f32.mrf.mxu0
      %v1677 = vadd.f32 0.0, %v1676
      %1678 = vmatmul.f32.gmra.mxu0 %v1470
      %v1679 = vpop.f32.mrf.mxu0
      %v1680 = vadd.f32 0.0, %v1679
      %1681 = vmatmul.f32.gmra.mxu0 %v1473
      %v1682 = vpop.f32.mrf.mxu0
      %v1683 = vadd.f32 0.0, %v1682
      %1684 = vmatmul.f32.gmra.mxu0 %v1476
      %v1685 = vpop.f32.mrf.mxu0
      %v1686 = vadd.f32 0.0, %v1685
      %1687 = vmatmul.f32.gmra.mxu0 %v1479
      %v1688 = vpop.f32.mrf.mxu0
      %v1689 = vadd.f32 0.0, %v1688
      %1690 = vmatmul.f32.gmra.mxu0 %v1482
      %v1691 = vpop.f32.mrf.mxu0
      %v1692 = vadd.f32 0.0, %v1691
      %1693 = vmatmul.f32.gmra.mxu0 %v1485
      %v1694 = vpop.f32.mrf.mxu0
      %v1695 = vadd.f32 0.0, %v1694
      %1696 = vmatmul.f32.gmra.mxu0 %v1488
      %v1697 = vpop.f32.mrf.mxu0
      %v1698 = vadd.f32 0.0, %v1697
      %1699 = vmatmul.f32.gmra.mxu0 %v1491
      %v1700 = vpop.f32.mrf.mxu0
      %v1701 = vadd.f32 0.0, %v1700
      %1702 = vmatmul.f32.gmra.mxu0 %v1494
      %v1703 = vpop.f32.mrf.mxu0
      %v1704 = vadd.f32 0.0, %v1703
      %1705 = vmatmul.f32.gmra.mxu0 %v1497
      %v1706 = vpop.f32.mrf.mxu0
      %v1707 = vadd.f32 0.0, %v1706
      %1708 = vmatmul.f32.gmra.mxu0 %v1500
      %v1709 = vpop.f32.mrf.mxu0
      %v1710 = vadd.f32 0.0, %v1709
      %1711 = vdwg.mxu0
      %1712 = vmatpush.msra.mxu0 %v1566
      %1713 = vmatpush.msra.mxu0 %v1564
      %1714 = vmatpush.msra.mxu0 %v1562
      %1715 = vmatpush.msra.mxu0 %v1560
      %1716 = vmatpush.msra.mxu0 %v1558
      %1717 = vmatpush.msra.mxu0 %v1556
      %1718 = vmatpush.msra.mxu0 %v1554
      %1719 = vmatpush.msra.mxu0 %v1552
      %1720 = vmatpush.msra.mxu0 %v1550
      %1721 = vmatpush.msra.mxu0 %v1548
      %1722 = vmatpush.msra.mxu0 %v1546
      %1723 = vmatpush.msra.mxu0 %v1544
      %1724 = vmatpush.msra.mxu0 %v1542
      %1725 = vmatpush.msra.mxu0 %v1540
      %1726 = vmatpush.msra.mxu0 %v1538
      %1727 = vmatpush.msra.mxu0 %v1536
      %1728 = vmatmul.f32.gmra.mxu0 %v1456
      %v1729 = vpop.f32.mrf.mxu0
      %v1730 = vadd.f32 %v1665, %v1729
      %1731 = vmatmul.f32.gmra.mxu0 %v1459
      %v1732 = vpop.f32.mrf.mxu0
      %v1733 = vadd.f32 %v1668, %v1732
      %1734 = vmatmul.f32.gmra.mxu0 %v1462
      %v1735 = vpop.f32.mrf.mxu0
      %v1736 = vadd.f32 %v1671, %v1735
      %1737 = vmatmul.f32.gmra.mxu0 %v1465
      %v1738 = vpop.f32.mrf.mxu0
      %v1739 = vadd.f32 %v1674, %v1738
      %1740 = vmatmul.f32.gmra.mxu0 %v1468
      %v1741 = vpop.f32.mrf.mxu0
      %v1742 = vadd.f32 %v1677, %v1741
      %1743 = vmatmul.f32.gmra.mxu0 %v1471
      %v1744 = vpop.f32.mrf.mxu0
      %v1745 = vadd.f32 %v1680, %v1744
      %1746 = vmatmul.f32.gmra.mxu0 %v1474
      %v1747 = vpop.f32.mrf.mxu0
      %v1748 = vadd.f32 %v1683, %v1747
      %1749 = vmatmul.f32.gmra.mxu0 %v1477
      %v1750 = vpop.f32.mrf.mxu0
      %v1751 = vadd.f32 %v1686, %v1750
      %1752 = vmatmul.f32.gmra.mxu0 %v1480
      %v1753 = vpop.f32.mrf.mxu0
      %v1754 = vadd.f32 %v1689, %v1753
      %1755 = vmatmul.f32.gmra.mxu0 %v1483
      %v1756 = vpop.f32.mrf.mxu0
      %v1757 = vadd.f32 %v1692, %v1756
      %1758 = vmatmul.f32.gmra.mxu0 %v1486
      %v1759 = vpop.f32.mrf.mxu0
      %v1760 = vadd.f32 %v1695, %v1759
      %1761 = vmatmul.f32.gmra.mxu0 %v1489
      %v1762 = vpop.f32.mrf.mxu0
      %v1763 = vadd.f32 %v1698, %v1762
      %1764 = vmatmul.f32.gmra.mxu0 %v1492
      %v1765 = vpop.f32.mrf.mxu0
      %v1766 = vadd.f32 %v1701, %v1765
      %1767 = vmatmul.f32.gmra.mxu0 %v1495
      %v1768 = vpop.f32.mrf.mxu0
      %v1769 = vadd.f32 %v1704, %v1768
      %1770 = vmatmul.f32.gmra.mxu0 %v1498
      %v1771 = vpop.f32.mrf.mxu0
      %v1772 = vadd.f32 %v1707, %v1771
      %1773 = vmatmul.f32.gmra.mxu0 %v1501
      %v1774 = vpop.f32.mrf.mxu0
      %v1775 = vadd.f32 %v1710, %v1774
      %1776 = vdwg.mxu0
      %1777 = vmatpush.msra.mxu0 %v1598
      %1778 = vmatpush.msra.mxu0 %v1596
      %1779 = vmatpush.msra.mxu0 %v1594
      %1780 = vmatpush.msra.mxu0 %v1592
      %1781 = vmatpush.msra.mxu0 %v1590
      %1782 = vmatpush.msra.mxu0 %v1588
      %1783 = vmatpush.msra.mxu0 %v1586
      %1784 = vmatpush.msra.mxu0 %v1584
      %1785 = vmatpush.msra.mxu0 %v1582
      %1786 = vmatpush.msra.mxu0 %v1580
      %1787 = vmatpush.msra.mxu0 %v1578
      %1788 = vmatpush.msra.mxu0 %v1576
      %1789 = vmatpush.msra.mxu0 %v1574
      %1790 = vmatpush.msra.mxu0 %v1572
      %1791 = vmatpush.msra.mxu0 %v1570
      %1792 = vmatpush.msra.mxu0 %v1568
      %1793 = vmatmul.f32.gmra.mxu0 %v1457
      %v1794 = vpop.f32.mrf.mxu0
      %v1795 = vadd.f32 %v1730, %v1794
      %1796 = vmatmul.f32.gmra.mxu0 %v1460
      %v1797 = vpop.f32.mrf.mxu0
      %v1798 = vadd.f32 %v1733, %v1797
      %1799 = vmatmul.f32.gmra.mxu0 %v1463
      %v1800 = vpop.f32.mrf.mxu0
      %v1801 = vadd.f32 %v1736, %v1800
      %1802 = vmatmul.f32.gmra.mxu0 %v1466
      %v1803 = vpop.f32.mrf.mxu0
      %v1804 = vadd.f32 %v1739, %v1803
      %1805 = vmatmul.f32.gmra.mxu0 %v1469
      %v1806 = vpop.f32.mrf.mxu0
      %v1807 = vadd.f32 %v1742, %v1806
      %1808 = vmatmul.f32.gmra.mxu0 %v1472
      %v1809 = vpop.f32.mrf.mxu0
      %v1810 = vadd.f32 %v1745, %v1809
      %1811 = vmatmul.f32.gmra.mxu0 %v1475
      %v1812 = vpop.f32.mrf.mxu0
      %v1813 = vadd.f32 %v1748, %v1812
      %1814 = vmatmul.f32.gmra.mxu0 %v1478
      %v1815 = vpop.f32.mrf.mxu0
      %v1816 = vadd.f32 %v1751, %v1815
      %1817 = vmatmul.f32.gmra.mxu0 %v1481
      %v1818 = vpop.f32.mrf.mxu0
      %v1819 = vadd.f32 %v1754, %v1818
      %1820 = vmatmul.f32.gmra.mxu0 %v1484
      %v1821 = vpop.f32.mrf.mxu0
      %v1822 = vadd.f32 %v1757, %v1821
      %1823 = vmatmul.f32.gmra.mxu0 %v1487
      %v1824 = vpop.f32.mrf.mxu0
      %v1825 = vadd.f32 %v1760, %v1824
      %1826 = vmatmul.f32.gmra.mxu0 %v1490
      %v1827 = vpop.f32.mrf.mxu0
      %v1828 = vadd.f32 %v1763, %v1827
      %1829 = vmatmul.f32.gmra.mxu0 %v1493
      %v1830 = vpop.f32.mrf.mxu0
      %v1831 = vadd.f32 %v1766, %v1830
      %1832 = vmatmul.f32.gmra.mxu0 %v1496
      %v1833 = vpop.f32.mrf.mxu0
      %v1834 = vadd.f32 %v1769, %v1833
      %1835 = vmatmul.f32.gmra.mxu0 %v1499
      %v1836 = vpop.f32.mrf.mxu0
      %v1837 = vadd.f32 %v1772, %v1836
      %1838 = vmatmul.f32.gmra.mxu0 %v1502
      %v1839 = vpop.f32.mrf.mxu0
      %v1840 = vadd.f32 %v1775, %v1839
      %1841 = vdwg.mxu0
      %1842 = vmatpush.msra.mxu0 %v1310
      %1843 = vmatpush.msra.mxu0 %v1309
      %1844 = vmatpush.msra.mxu0 %v1308
      %1845 = vmatpush.msra.mxu0 %v1307
      %1846 = vmatpush.msra.mxu0 %v1306
      %1847 = vmatpush.msra.mxu0 %v1305
      %1848 = vmatpush.msra.mxu0 %v1304
      %1849 = vmatpush.msra.mxu0 %v1303
      %1850 = vmatpush.msra.mxu0 %v1302
      %1851 = vmatpush.msra.mxu0 %v1301
      %1852 = vmatpush.msra.mxu0 %v1300
      %1853 = vmatpush.msra.mxu0 %v1299
      %1854 = vmatpush.msra.mxu0 %v1298
      %1855 = vmatpush.msra.mxu0 %v1297
      %1856 = vmatpush.msra.mxu0 %v1296
      %1857 = vmatpush.msra.mxu0 %v1295
      %1858 = vmatmul.f32.gmra.mxu0 %v1375
      %v1859 = vpop.f32.mrf.mxu0
      %v1860 = vadd.f32 %v1795, %v1859
      %1861 = vmatmul.f32.gmra.mxu0 %v1378
      %v1862 = vpop.f32.mrf.mxu0
      %v1863 = vadd.f32 %v1798, %v1862
      %1864 = vmatmul.f32.gmra.mxu0 %v1381
      %v1865 = vpop.f32.mrf.mxu0
      %v1866 = vadd.f32 %v1801, %v1865
      %1867 = vmatmul.f32.gmra.mxu0 %v1384
      %v1868 = vpop.f32.mrf.mxu0
      %v1869 = vadd.f32 %v1804, %v1868
      %1870 = vmatmul.f32.gmra.mxu0 %v1387
      %v1871 = vpop.f32.mrf.mxu0
      %v1872 = vadd.f32 %v1807, %v1871
      %1873 = vmatmul.f32.gmra.mxu0 %v1390
      %v1874 = vpop.f32.mrf.mxu0
      %v1875 = vadd.f32 %v1810, %v1874
      %1876 = vmatmul.f32.gmra.mxu0 %v1393
      %v1877 = vpop.f32.mrf.mxu0
      %v1878 = vadd.f32 %v1813, %v1877
      %1879 = vmatmul.f32.gmra.mxu0 %v1396
      %v1880 = vpop.f32.mrf.mxu0
      %v1881 = vadd.f32 %v1816, %v1880
      %1882 = vmatmul.f32.gmra.mxu0 %v1399
      %v1883 = vpop.f32.mrf.mxu0
      %v1884 = vadd.f32 %v1819, %v1883
      %1885 = vmatmul.f32.gmra.mxu0 %v1402
      %v1886 = vpop.f32.mrf.mxu0
      %v1887 = vadd.f32 %v1822, %v1886
      %1888 = vmatmul.f32.gmra.mxu0 %v1405
      %v1889 = vpop.f32.mrf.mxu0
      %v1890 = vadd.f32 %v1825, %v1889
      %1891 = vmatmul.f32.gmra.mxu0 %v1408
      %v1892 = vpop.f32.mrf.mxu0
      %v1893 = vadd.f32 %v1828, %v1892
      %1894 = vmatmul.f32.gmra.mxu0 %v1411
      %v1895 = vpop.f32.mrf.mxu0
      %v1896 = vadd.f32 %v1831, %v1895
      %1897 = vmatmul.f32.gmra.mxu0 %v1414
      %v1898 = vpop.f32.mrf.mxu0
      %v1899 = vadd.f32 %v1834, %v1898
      %1900 = vmatmul.f32.gmra.mxu0 %v1417
      %v1901 = vpop.f32.mrf.mxu0
      %v1902 = vadd.f32 %v1837, %v1901
      %1903 = vmatmul.f32.gmra.mxu0 %v1420
      %v1904 = vpop.f32.mrf.mxu0
      %v1905 = vadd.f32 %v1840, %v1904
      %1906 = vdwg.mxu0
      %1907 = vmatpush.msra.mxu0 %v1326
      %1908 = vmatpush.msra.mxu0 %v1325
      %1909 = vmatpush.msra.mxu0 %v1324
      %1910 = vmatpush.msra.mxu0 %v1323
      %1911 = vmatpush.msra.mxu0 %v1322
      %1912 = vmatpush.msra.mxu0 %v1321
      %1913 = vmatpush.msra.mxu0 %v1320
      %1914 = vmatpush.msra.mxu0 %v1319
      %1915 = vmatpush.msra.mxu0 %v1318
      %1916 = vmatpush.msra.mxu0 %v1317
      %1917 = vmatpush.msra.mxu0 %v1316
      %1918 = vmatpush.msra.mxu0 %v1315
      %1919 = vmatpush.msra.mxu0 %v1314
      %1920 = vmatpush.msra.mxu0 %v1313
      %1921 = vmatpush.msra.mxu0 %v1312
      %1922 = vmatpush.msra.mxu0 %v1311
      %1923 = vmatmul.f32.gmra.mxu0 %v1376
      %v1924 = vpop.f32.mrf.mxu0
      %v1925 = vadd.f32 %v1860, %v1924
      %1926 = vmatmul.f32.gmra.mxu0 %v1379
      %v1927 = vpop.f32.mrf.mxu0
      %v1928 = vadd.f32 %v1863, %v1927
      %1929 = vmatmul.f32.gmra.mxu0 %v1382
      %v1930 = vpop.f32.mrf.mxu0
      %v1931 = vadd.f32 %v1866, %v1930
      %1932 = vmatmul.f32.gmra.mxu0 %v1385
      %v1933 = vpop.f32.mrf.mxu0
      %v1934 = vadd.f32 %v1869, %v1933
      %1935 = vmatmul.f32.gmra.mxu0 %v1388
      %v1936 = vpop.f32.mrf.mxu0
      %v1937 = vadd.f32 %v1872, %v1936
      %1938 = vmatmul.f32.gmra.mxu0 %v1391
      %v1939 = vpop.f32.mrf.mxu0
      %v1940 = vadd.f32 %v1875, %v1939
      %1941 = vmatmul.f32.gmra.mxu0 %v1394
      %v1942 = vpop.f32.mrf.mxu0
      %v1943 = vadd.f32 %v1878, %v1942
      %1944 = vmatmul.f32.gmra.mxu0 %v1397
      %v1945 = vpop.f32.mrf.mxu0
      %v1946 = vadd.f32 %v1881, %v1945
      %1947 = vmatmul.f32.gmra.mxu0 %v1400
      %v1948 = vpop.f32.mrf.mxu0
      %v1949 = vadd.f32 %v1884, %v1948
      %1950 = vmatmul.f32.gmra.mxu0 %v1403
      %v1951 = vpop.f32.mrf.mxu0
      %v1952 = vadd.f32 %v1887, %v1951
      %1953 = vmatmul.f32.gmra.mxu0 %v1406
      %v1954 = vpop.f32.mrf.mxu0
      %v1955 = vadd.f32 %v1890, %v1954
      %1956 = vmatmul.f32.gmra.mxu0 %v1409
      %v1957 = vpop.f32.mrf.mxu0
      %v1958 = vadd.f32 %v1893, %v1957
      %1959 = vmatmul.f32.gmra.mxu0 %v1412
      %v1960 = vpop.f32.mrf.mxu0
      %v1961 = vadd.f32 %v1896, %v1960
      %1962 = vmatmul.f32.gmra.mxu0 %v1415
      %v1963 = vpop.f32.mrf.mxu0
      %v1964 = vadd.f32 %v1899, %v1963
      %1965 = vmatmul.f32.gmra.mxu0 %v1418
      %v1966 = vpop.f32.mrf.mxu0
      %v1967 = vadd.f32 %v1902, %v1966
      %1968 = vmatmul.f32.gmra.mxu0 %v1421
      %v1969 = vpop.f32.mrf.mxu0
      %v1970 = vadd.f32 %v1905, %v1969
      %1971 = vdwg.mxu0
      %1972 = vmatpush.msra.mxu0 %v1342
      %1973 = vmatpush.msra.mxu0 %v1341
      %1974 = vmatpush.msra.mxu0 %v1340
      %1975 = vmatpush.msra.mxu0 %v1339
      %1976 = vmatpush.msra.mxu0 %v1338
      %1977 = vmatpush.msra.mxu0 %v1337
      %1978 = vmatpush.msra.mxu0 %v1336
      %1979 = vmatpush.msra.mxu0 %v1335
      %1980 = vmatpush.msra.mxu0 %v1334
      %1981 = vmatpush.msra.mxu0 %v1333
      %1982 = vmatpush.msra.mxu0 %v1332
      %1983 = vmatpush.msra.mxu0 %v1331
      %1984 = vmatpush.msra.mxu0 %v1330
      %1985 = vmatpush.msra.mxu0 %v1329
      %1986 = vmatpush.msra.mxu0 %v1328
      %1987 = vmatpush.msra.mxu0 %v1327
      %1988 = vmatmul.f32.gmra.mxu0 %v1377
      %v1989 = vpop.f32.mrf.mxu0
      %v1990 = vadd.f32 %v1925, %v1989
      %1991 = vmatmul.f32.gmra.mxu0 %v1380
      %v1992 = vpop.f32.mrf.mxu0
      %v1993 = vadd.f32 %v1928, %v1992
      %1994 = vmatmul.f32.gmra.mxu0 %v1383
      %v1995 = vpop.f32.mrf.mxu0
      %v1996 = vadd.f32 %v1931, %v1995
      %1997 = vmatmul.f32.gmra.mxu0 %v1386
      %v1998 = vpop.f32.mrf.mxu0
      %v1999 = vadd.f32 %v1934, %v1998
      %2000 = vmatmul.f32.gmra.mxu0 %v1389
      %v2001 = vpop.f32.mrf.mxu0
      %v2002 = vadd.f32 %v1937, %v2001
      %2003 = vmatmul.f32.gmra.mxu0 %v1392
      %v2004 = vpop.f32.mrf.mxu0
      %v2005 = vadd.f32 %v1940, %v2004
      %2006 = vmatmul.f32.gmra.mxu0 %v1395
      %v2007 = vpop.f32.mrf.mxu0
      %v2008 = vadd.f32 %v1943, %v2007
      %2009 = vmatmul.f32.gmra.mxu0 %v1398
      %v2010 = vpop.f32.mrf.mxu0
      %v2011 = vadd.f32 %v1946, %v2010
      %2012 = vmatmul.f32.gmra.mxu0 %v1401
      %v2013 = vpop.f32.mrf.mxu0
      %v2014 = vadd.f32 %v1949, %v2013
      %2015 = vmatmul.f32.gmra.mxu0 %v1404
      %v2016 = vpop.f32.mrf.mxu0
      %v2017 = vadd.f32 %v1952, %v2016
      %2018 = vmatmul.f32.gmra.mxu0 %v1407
      %v2019 = vpop.f32.mrf.mxu0
      %v2020 = vadd.f32 %v1955, %v2019
      %2021 = vmatmul.f32.gmra.mxu0 %v1410
      %v2022 = vpop.f32.mrf.mxu0
      %v2023 = vadd.f32 %v1958, %v2022
      %2024 = vmatmul.f32.gmra.mxu0 %v1413
      %v2025 = vpop.f32.mrf.mxu0
      %v2026 = vadd.f32 %v1961, %v2025
      %2027 = vmatmul.f32.gmra.mxu0 %v1416
      %v2028 = vpop.f32.mrf.mxu0
      %v2029 = vadd.f32 %v1964, %v2028
      %2030 = vmatmul.f32.gmra.mxu0 %v1419
      %v2031 = vpop.f32.mrf.mxu0
      %v2032 = vadd.f32 %v1967, %v2031
      %2033 = vmatmul.f32.gmra.mxu0 %v1422
      %v2034 = vpop.f32.mrf.mxu0
      %v2035 = vadd.f32 %v1970, %v2034
      %2036 = vdwg.mxu0
      %v2037 = vld [vmem:[%s508] sm:$0xff]
      %v2038 = vld [vmem:[%s508 + $0x8] sm:$0xf]
      %v2039 = vld [vmem:[%s508 + $0xc] sm:$0xff]
      %v2040 = vld [vmem:[%s508 + $0x14] sm:$0xf]
      %v2041 = vld [vmem:[%s508 + $0x18] sm:$0xff]
      %v2042 = vld [vmem:[%s508 + $0x20] sm:$0xf]
      %v2043 = vld [vmem:[%s508 + $0x24] sm:$0xff]
      %v2044 = vld [vmem:[%s508 + $0x2c] sm:$0xf]
      %v2045 = vld [vmem:[%s508 + $0x30] sm:$0xff]
      %v2046 = vld [vmem:[%s508 + $0x38] sm:$0xf]
      %v2047 = vld [vmem:[%s508 + $0x3c] sm:$0xff]
      %v2048 = vld [vmem:[%s508 + $0x44] sm:$0xf]
      %v2049 = vld [vmem:[%s508 + $0x48] sm:$0xff]
      %v2050 = vld [vmem:[%s508 + $0x50] sm:$0xf]
      %v2051 = vld [vmem:[%s508 + $0x54] sm:$0xff]
      %v2052 = vld [vmem:[%s508 + $0x5c] sm:$0xf]
      %v2053 = vld [vmem:[%s508 + $0x60] sm:$0xff]
      %v2054 = vld [vmem:[%s508 + $0x68] sm:$0xf]
      %v2055 = vld [vmem:[%s508 + $0x6c] sm:$0xff]
      %v2056 = vld [vmem:[%s508 + $0x74] sm:$0xf]
      %v2057 = vld [vmem:[%s508 + $0x78] sm:$0xff]
      %v2058 = vld [vmem:[%s508 + $0x80] sm:$0xf]
      %v2059 = vld [vmem:[%s508 + $0x84] sm:$0xff]
      %v2060 = vld [vmem:[%s508 + $0x8c] sm:$0xf]
      %v2061 = vld [vmem:[%s508 + $0x90] sm:$0xff]
      %v2062 = vld [vmem:[%s508 + $0x98] sm:$0xf]
      %v2063 = vld [vmem:[%s508 + $0x9c] sm:$0xff]
      %v2064 = vld [vmem:[%s508 + $0xa4] sm:$0xf]
      %v2065 = vld [vmem:[%s508 + $0xa8] sm:$0xff]
      %v2066 = vld [vmem:[%s508 + $0xb0] sm:$0xf]
      %v2067 = vld [vmem:[%s508 + $0xb4] sm:$0xff]
      %v2068 = vld [vmem:[%s508 + $0xbc] sm:$0xf]
      %v2069 = vunpack.c.l.bf16 %v2037
      %v2070 = vunpack.c.h.bf16 %v2037
      %v2071 = vunpack.c.l.bf16 %v2038
      %v2072 = vunpack.c.l.bf16 %v2039
      %v2073 = vunpack.c.h.bf16 %v2039
      %v2074 = vunpack.c.l.bf16 %v2040
      %v2075 = vunpack.c.l.bf16 %v2041
      %v2076 = vunpack.c.h.bf16 %v2041
      %v2077 = vunpack.c.l.bf16 %v2042
      %v2078 = vunpack.c.l.bf16 %v2043
      %v2079 = vunpack.c.h.bf16 %v2043
      %v2080 = vunpack.c.l.bf16 %v2044
      %v2081 = vunpack.c.l.bf16 %v2045
      %v2082 = vunpack.c.h.bf16 %v2045
      %v2083 = vunpack.c.l.bf16 %v2046
      %v2084 = vunpack.c.l.bf16 %v2047
      %v2085 = vunpack.c.h.bf16 %v2047
      %v2086 = vunpack.c.l.bf16 %v2048
      %v2087 = vunpack.c.l.bf16 %v2049
      %v2088 = vunpack.c.h.bf16 %v2049
      %v2089 = vunpack.c.l.bf16 %v2050
      %v2090 = vunpack.c.l.bf16 %v2051
      %v2091 = vunpack.c.h.bf16 %v2051
      %v2092 = vunpack.c.l.bf16 %v2052
      %v2093 = vunpack.c.l.bf16 %v2053
      %v2094 = vunpack.c.h.bf16 %v2053
      %v2095 = vunpack.c.l.bf16 %v2054
      %v2096 = vunpack.c.l.bf16 %v2055
      %v2097 = vunpack.c.h.bf16 %v2055
      %v2098 = vunpack.c.l.bf16 %v2056
      %v2099 = vunpack.c.l.bf16 %v2057
      %v2100 = vunpack.c.h.bf16 %v2057
      %v2101 = vunpack.c.l.bf16 %v2058
      %v2102 = vunpack.c.l.bf16 %v2059
      %v2103 = vunpack.c.h.bf16 %v2059
      %v2104 = vunpack.c.l.bf16 %v2060
      %v2105 = vunpack.c.l.bf16 %v2061
      %v2106 = vunpack.c.h.bf16 %v2061
      %v2107 = vunpack.c.l.bf16 %v2062
      %v2108 = vunpack.c.l.bf16 %v2063
      %v2109 = vunpack.c.h.bf16 %v2063
      %v2110 = vunpack.c.l.bf16 %v2064
      %v2111 = vunpack.c.l.bf16 %v2065
      %v2112 = vunpack.c.h.bf16 %v2065
      %v2113 = vunpack.c.l.bf16 %v2066
      %v2114 = vunpack.c.l.bf16 %v2067
      %v2115 = vunpack.c.h.bf16 %v2067
      %v2116 = vunpack.c.l.bf16 %v2068
      %2117 = vrot.lane.b32.xlu0 %v767, 80
      %v2118 = vpop.permute.xlu0 %2117
      %2119 = vrot.lane.b32.xlu0 %v770, 80
      %v2120 = vpop.permute.xlu0 %2119
      %2121 = vrot.lane.b32.xlu0 %v773, 80
      %v2122 = vpop.permute.xlu0 %2121
      %2123 = vrot.lane.b32.xlu0 %v776, 80
      %v2124 = vpop.permute.xlu0 %2123
      %2125 = vrot.lane.b32.xlu0 %v779, 80
      %v2126 = vpop.permute.xlu0 %2125
      %2127 = vrot.lane.b32.xlu0 %v782, 80
      %v2128 = vpop.permute.xlu0 %2127
      %2129 = vrot.lane.b32.xlu0 %v785, 80
      %v2130 = vpop.permute.xlu0 %2129
      %2131 = vrot.lane.b32.xlu0 %v788, 80
      %v2132 = vpop.permute.xlu0 %2131
      %2133 = vrot.lane.b32.xlu0 %v791, 80
      %v2134 = vpop.permute.xlu0 %2133
      %2135 = vrot.lane.b32.xlu0 %v794, 80
      %v2136 = vpop.permute.xlu0 %2135
      %2137 = vrot.lane.b32.xlu0 %v797, 80
      %v2138 = vpop.permute.xlu0 %2137
      %2139 = vrot.lane.b32.xlu0 %v800, 80
      %v2140 = vpop.permute.xlu0 %2139
      %2141 = vrot.lane.b32.xlu0 %v803, 80
      %v2142 = vpop.permute.xlu0 %2141
      %2143 = vrot.lane.b32.xlu0 %v806, 80
      %v2144 = vpop.permute.xlu0 %2143
      %2145 = vrot.lane.b32.xlu0 %v809, 80
      %v2146 = vpop.permute.xlu0 %2145
      %2147 = vrot.lane.b32.xlu0 %v812, 80
      %v2148 = vpop.permute.xlu0 %2147
      %2149 = vrot.lane.b32.xlu0 %v815, 80
      %v2150 = vpop.permute.xlu0 %2149
      %2151 = vrot.lane.b32.xlu0 %v818, 80
      %v2152 = vpop.permute.xlu0 %2151
      %2153 = vrot.lane.b32.xlu0 %v821, 80
      %v2154 = vpop.permute.xlu0 %2153
      %2155 = vrot.lane.b32.xlu0 %v824, 80
      %v2156 = vpop.permute.xlu0 %2155
      %2157 = vrot.lane.b32.xlu0 %v827, 80
      %v2158 = vpop.permute.xlu0 %2157
      %2159 = vrot.lane.b32.xlu0 %v830, 80
      %v2160 = vpop.permute.xlu0 %2159
      %2161 = vrot.lane.b32.xlu0 %v833, 80
      %v2162 = vpop.permute.xlu0 %2161
      %2163 = vrot.lane.b32.xlu0 %v836, 80
      %v2164 = vpop.permute.xlu0 %2163
      %2165 = vrot.lane.b32.xlu0 %v839, 80
      %v2166 = vpop.permute.xlu0 %2165
      %2167 = vrot.lane.b32.xlu0 %v842, 80
      %v2168 = vpop.permute.xlu0 %2167
      %2169 = vrot.lane.b32.xlu0 %v845, 80
      %v2170 = vpop.permute.xlu0 %2169
      %2171 = vrot.lane.b32.xlu0 %v848, 80
      %v2172 = vpop.permute.xlu0 %2171
      %2173 = vrot.lane.b32.xlu0 %v851, 80
      %v2174 = vpop.permute.xlu0 %2173
      %2175 = vrot.lane.b32.xlu0 %v854, 80
      %v2176 = vpop.permute.xlu0 %2175
      %2177 = vrot.lane.b32.xlu0 %v857, 80
      %v2178 = vpop.permute.xlu0 %2177
      %2179 = vrot.lane.b32.xlu0 %v860, 80
      %v2180 = vpop.permute.xlu0 %2179
      %2181 = vrot.lane.b32.xlu0 %v863, 80
      %v2182 = vpop.permute.xlu0 %2181
      %2183 = vrot.lane.b32.xlu0 %v866, 80
      %v2184 = vpop.permute.xlu0 %2183
      %2185 = vrot.lane.b32.xlu0 %v869, 80
      %v2186 = vpop.permute.xlu0 %2185
      %2187 = vrot.lane.b32.xlu0 %v872, 80
      %v2188 = vpop.permute.xlu0 %2187
      %2189 = vrot.lane.b32.xlu0 %v875, 80
      %v2190 = vpop.permute.xlu0 %2189
      %2191 = vrot.lane.b32.xlu0 %v878, 80
      %v2192 = vpop.permute.xlu0 %2191
      %2193 = vrot.lane.b32.xlu0 %v881, 80
      %v2194 = vpop.permute.xlu0 %2193
      %2195 = vrot.lane.b32.xlu0 %v884, 80
      %v2196 = vpop.permute.xlu0 %2195
      %2197 = vrot.lane.b32.xlu0 %v887, 80
      %v2198 = vpop.permute.xlu0 %2197
      %2199 = vrot.lane.b32.xlu0 %v890, 80
      %v2200 = vpop.permute.xlu0 %2199
      %2201 = vrot.lane.b32.xlu0 %v893, 80
      %v2202 = vpop.permute.xlu0 %2201
      %2203 = vrot.lane.b32.xlu0 %v896, 80
      %v2204 = vpop.permute.xlu0 %2203
      %2205 = vrot.lane.b32.xlu0 %v899, 80
      %v2206 = vpop.permute.xlu0 %2205
      %2207 = vrot.lane.b32.xlu0 %v902, 80
      %v2208 = vpop.permute.xlu0 %2207
      %2209 = vrot.lane.b32.xlu0 %v905, 80
      %v2210 = vpop.permute.xlu0 %2209
      %2211 = vrot.lane.b32.xlu0 %v908, 80
      %v2212 = vpop.permute.xlu0 %2211
      %2261 = vmatpush.msra.mxu0 %v2148
      %2262 = vmatpush.msra.mxu0 %v2146
      %2263 = vmatpush.msra.mxu0 %v2144
      %2264 = vmatpush.msra.mxu0 %v2142
      %2265 = vmatpush.msra.mxu0 %v2140
      %2266 = vmatpush.msra.mxu0 %v2138
      %2267 = vmatpush.msra.mxu0 %v2136
      %2268 = vmatpush.msra.mxu0 %v2134
      %2269 = vmatpush.msra.mxu0 %v2132
      %2270 = vmatpush.msra.mxu0 %v2130
      %2271 = vmatpush.msra.mxu0 %v2128
      %2272 = vmatpush.msra.mxu0 %v2126
      %2273 = vmatpush.msra.mxu0 %v2124
      %2274 = vmatpush.msra.mxu0 %v2122
      %2275 = vmatpush.msra.mxu0 %v2120
      %2276 = vmatpush.msra.mxu0 %v2118
      %2277 = vmatmul.f32.gmra.mxu0 %v2069
      %v2278 = vpop.f32.mrf.mxu0
      %v2279 = vadd.f32 0.0, %v2278
      %2280 = vmatmul.f32.gmra.mxu0 %v2072
      %v2281 = vpop.f32.mrf.mxu0
      %v2282 = vadd.f32 0.0, %v2281
      %2283 = vmatmul.f32.gmra.mxu0 %v2075
      %v2284 = vpop.f32.mrf.mxu0
      %v2285 = vadd.f32 0.0, %v2284
      %2286 = vmatmul.f32.gmra.mxu0 %v2078
      %v2287 = vpop.f32.mrf.mxu0
      %v2288 = vadd.f32 0.0, %v2287
      %2289 = vmatmul.f32.gmra.mxu0 %v2081
      %v2290 = vpop.f32.mrf.mxu0
      %v2291 = vadd.f32 0.0, %v2290
      %2292 = vmatmul.f32.gmra.mxu0 %v2084
      %v2293 = vpop.f32.mrf.mxu0
      %v2294 = vadd.f32 0.0, %v2293
      %2295 = vmatmul.f32.gmra.mxu0 %v2087
      %v2296 = vpop.f32.mrf.mxu0
      %v2297 = vadd.f32 0.0, %v2296
      %2298 = vmatmul.f32.gmra.mxu0 %v2090
      %v2299 = vpop.f32.mrf.mxu0
      %v2300 = vadd.f32 0.0, %v2299
      %2301 = vmatmul.f32.gmra.mxu0 %v2093
      %v2302 = vpop.f32.mrf.mxu0
      %v2303 = vadd.f32 0.0, %v2302
      %2304 = vmatmul.f32.gmra.mxu0 %v2096
      %v2305 = vpop.f32.mrf.mxu0
      %v2306 = vadd.f32 0.0, %v2305
      %2307 = vmatmul.f32.gmra.mxu0 %v2099
      %v2308 = vpop.f32.mrf.mxu0
      %v2309 = vadd.f32 0.0, %v2308
      %2310 = vmatmul.f32.gmra.mxu0 %v2102
      %v2311 = vpop.f32.mrf.mxu0
      %v2312 = vadd.f32 0.0, %v2311
      %2313 = vmatmul.f32.gmra.mxu0 %v2105
      %v2314 = vpop.f32.mrf.mxu0
      %v2315 = vadd.f32 0.0, %v2314
      %2316 = vmatmul.f32.gmra.mxu0 %v2108
      %v2317 = vpop.f32.mrf.mxu0
      %v2318 = vadd.f32 0.0, %v2317
      %2319 = vmatmul.f32.gmra.mxu0 %v2111
      %v2320 = vpop.f32.mrf.mxu0
      %v2321 = vadd.f32 0.0, %v2320
      %2322 = vmatmul.f32.gmra.mxu0 %v2114
      %v2323 = vpop.f32.mrf.mxu0
      %v2324 = vadd.f32 0.0, %v2323
      %2325 = vdwg.mxu0
      %2326 = vmatpush.msra.mxu0 %v2180
      %2327 = vmatpush.msra.mxu0 %v2178
      %2328 = vmatpush.msra.mxu0 %v2176
      %2329 = vmatpush.msra.mxu0 %v2174
      %2330 = vmatpush.msra.mxu0 %v2172
      %2331 = vmatpush.msra.mxu0 %v2170
      %2332 = vmatpush.msra.mxu0 %v2168
      %2333 = vmatpush.msra.mxu0 %v2166
      %2334 = vmatpush.msra.mxu0 %v2164
      %2335 = vmatpush.msra.mxu0 %v2162
      %2336 = vmatpush.msra.mxu0 %v2160
      %2337 = vmatpush.msra.mxu0 %v2158
      %2338 = vmatpush.msra.mxu0 %v2156
      %2339 = vmatpush.msra.mxu0 %v2154
      %2340 = vmatpush.msra.mxu0 %v2152
      %2341 = vmatpush.msra.mxu0 %v2150
      %2342 = vmatmul.f32.gmra.mxu0 %v2070
      %v2343 = vpop.f32.mrf.mxu0
      %v2344 = vadd.f32 %v2279, %v2343
      %2345 = vmatmul.f32.gmra.mxu0 %v2073
      %v2346 = vpop.f32.mrf.mxu0
      %v2347 = vadd.f32 %v2282, %v2346
      %2348 = vmatmul.f32.gmra.mxu0 %v2076
      %v2349 = vpop.f32.mrf.mxu0
      %v2350 = vadd.f32 %v2285, %v2349
      %2351 = vmatmul.f32.gmra.mxu0 %v2079
      %v2352 = vpop.f32.mrf.mxu0
      %v2353 = vadd.f32 %v2288, %v2352
      %2354 = vmatmul.f32.gmra.mxu0 %v2082
      %v2355 = vpop.f32.mrf.mxu0
      %v2356 = vadd.f32 %v2291, %v2355
      %2357 = vmatmul.f32.gmra.mxu0 %v2085
      %v2358 = vpop.f32.mrf.mxu0
      %v2359 = vadd.f32 %v2294, %v2358
      %2360 = vmatmul.f32.gmra.mxu0 %v2088
      %v2361 = vpop.f32.mrf.mxu0
      %v2362 = vadd.f32 %v2297, %v2361
      %2363 = vmatmul.f32.gmra.mxu0 %v2091
      %v2364 = vpop.f32.mrf.mxu0
      %v2365 = vadd.f32 %v2300, %v2364
      %2366 = vmatmul.f32.gmra.mxu0 %v2094
      %v2367 = vpop.f32.mrf.mxu0
      %v2368 = vadd.f32 %v2303, %v2367
      %2369 = vmatmul.f32.gmra.mxu0 %v2097
      %v2370 = vpop.f32.mrf.mxu0
      %v2371 = vadd.f32 %v2306, %v2370
      %2372 = vmatmul.f32.gmra.mxu0 %v2100
      %v2373 = vpop.f32.mrf.mxu0
      %v2374 = vadd.f32 %v2309, %v2373
      %2375 = vmatmul.f32.gmra.mxu0 %v2103
      %v2376 = vpop.f32.mrf.mxu0
      %v2377 = vadd.f32 %v2312, %v2376
      %2378 = vmatmul.f32.gmra.mxu0 %v2106
      %v2379 = vpop.f32.mrf.mxu0
      %v2380 = vadd.f32 %v2315, %v2379
      %2381 = vmatmul.f32.gmra.mxu0 %v2109
      %v2382 = vpop.f32.mrf.mxu0
      %v2383 = vadd.f32 %v2318, %v2382
      %2384 = vmatmul.f32.gmra.mxu0 %v2112
      %v2385 = vpop.f32.mrf.mxu0
      %v2386 = vadd.f32 %v2321, %v2385
      %2387 = vmatmul.f32.gmra.mxu0 %v2115
      %v2388 = vpop.f32.mrf.mxu0
      %v2389 = vadd.f32 %v2324, %v2388
      %2390 = vdwg.mxu0
      %2391 = vmatpush.msra.mxu0 %v2212
      %2392 = vmatpush.msra.mxu0 %v2210
      %2393 = vmatpush.msra.mxu0 %v2208
      %2394 = vmatpush.msra.mxu0 %v2206
      %2395 = vmatpush.msra.mxu0 %v2204
      %2396 = vmatpush.msra.mxu0 %v2202
      %2397 = vmatpush.msra.mxu0 %v2200
      %2398 = vmatpush.msra.mxu0 %v2198
      %2399 = vmatpush.msra.mxu0 %v2196
      %2400 = vmatpush.msra.mxu0 %v2194
      %2401 = vmatpush.msra.mxu0 %v2192
      %2402 = vmatpush.msra.mxu0 %v2190
      %2403 = vmatpush.msra.mxu0 %v2188
      %2404 = vmatpush.msra.mxu0 %v2186
      %2405 = vmatpush.msra.mxu0 %v2184
      %2406 = vmatpush.msra.mxu0 %v2182
      %2407 = vmatmul.f32.gmra.mxu0 %v2071
      %v2408 = vpop.f32.mrf.mxu0
      %v2409 = vadd.f32 %v2344, %v2408
      %2410 = vmatmul.f32.gmra.mxu0 %v2074
      %v2411 = vpop.f32.mrf.mxu0
      %v2412 = vadd.f32 %v2347, %v2411
      %2413 = vmatmul.f32.gmra.mxu0 %v2077
      %v2414 = vpop.f32.mrf.mxu0
      %v2415 = vadd.f32 %v2350, %v2414
      %2416 = vmatmul.f32.gmra.mxu0 %v2080
      %v2417 = vpop.f32.mrf.mxu0
      %v2418 = vadd.f32 %v2353, %v2417
      %2419 = vmatmul.f32.gmra.mxu0 %v2083
      %v2420 = vpop.f32.mrf.mxu0
      %v2421 = vadd.f32 %v2356, %v2420
      %2422 = vmatmul.f32.gmra.mxu0 %v2086
      %v2423 = vpop.f32.mrf.mxu0
      %v2424 = vadd.f32 %v2359, %v2423
      %2425 = vmatmul.f32.gmra.mxu0 %v2089
      %v2426 = vpop.f32.mrf.mxu0
      %v2427 = vadd.f32 %v2362, %v2426
      %2428 = vmatmul.f32.gmra.mxu0 %v2092
      %v2429 = vpop.f32.mrf.mxu0
      %v2430 = vadd.f32 %v2365, %v2429
      %2431 = vmatmul.f32.gmra.mxu0 %v2095
      %v2432 = vpop.f32.mrf.mxu0
      %v2433 = vadd.f32 %v2368, %v2432
      %2434 = vmatmul.f32.gmra.mxu0 %v2098
      %v2435 = vpop.f32.mrf.mxu0
      %v2436 = vadd.f32 %v2371, %v2435
      %2437 = vmatmul.f32.gmra.mxu0 %v2101
      %v2438 = vpop.f32.mrf.mxu0
      %v2439 = vadd.f32 %v2374, %v2438
      %2440 = vmatmul.f32.gmra.mxu0 %v2104
      %v2441 = vpop.f32.mrf.mxu0
      %v2442 = vadd.f32 %v2377, %v2441
      %2443 = vmatmul.f32.gmra.mxu0 %v2107
      %v2444 = vpop.f32.mrf.mxu0
      %v2445 = vadd.f32 %v2380, %v2444
      %2446 = vmatmul.f32.gmra.mxu0 %v2110
      %v2447 = vpop.f32.mrf.mxu0
      %v2448 = vadd.f32 %v2383, %v2447
      %2449 = vmatmul.f32.gmra.mxu0 %v2113
      %v2450 = vpop.f32.mrf.mxu0
      %v2451 = vadd.f32 %v2386, %v2450
      %2452 = vmatmul.f32.gmra.mxu0 %v2116
      %v2453 = vpop.f32.mrf.mxu0
      %v2454 = vadd.f32 %v2389, %v2453
      %2455 = vdwg.mxu0
      %v2456 = vadd.f32 %v1990, %v2409
      %v2457 = vadd.f32 %v1993, %v2412
      %v2458 = vadd.f32 %v1996, %v2415
      %v2459 = vadd.f32 %v1999, %v2418
      %v2460 = vadd.f32 %v2002, %v2421
      %v2461 = vadd.f32 %v2005, %v2424
      %v2462 = vadd.f32 %v2008, %v2427
      %v2463 = vadd.f32 %v2011, %v2430
      %v2464 = vadd.f32 %v2014, %v2433
      %v2465 = vadd.f32 %v2017, %v2436
      %v2466 = vadd.f32 %v2020, %v2439
      %v2467 = vadd.f32 %v2023, %v2442
      %v2468 = vadd.f32 %v2026, %v2445
      %v2469 = vadd.f32 %v2029, %v2448
      %v2470 = vadd.f32 %v2032, %v2451
      %v2471 = vadd.f32 %v2035, %v2454
      %v2472 = vld [vmem:[%s515] sm:$0xff]
      %v2473 = vld [vmem:[%s515 + $0x8] sm:$0xff]
      %v2474 = vld [vmem:[%s515 + $0x10] sm:$0xff]
      %v2475 = vld [vmem:[%s515 + $0x18] sm:$0xff]
      %v2476 = vld [vmem:[%s515 + $0x20] sm:$0xff]
      %v2477 = vld [vmem:[%s515 + $0x28] sm:$0xff]
      %v2478 = vld [vmem:[%s515 + $0x30] sm:$0xff]
      %v2479 = vld [vmem:[%s515 + $0x38] sm:$0xff]
      %v2480 = vld [vmem:[%s515 + $0x40] sm:$0xff]
      %v2481 = vld [vmem:[%s515 + $0x48] sm:$0xff]
      %v2482 = vld [vmem:[%s515 + $0x50] sm:$0xff]
      %v2483 = vld [vmem:[%s515 + $0x58] sm:$0xff]
      %v2484 = vld [vmem:[%s515 + $0x60] sm:$0xff]
      %v2485 = vld [vmem:[%s515 + $0x68] sm:$0xff]
      %v2486 = vld [vmem:[%s515 + $0x70] sm:$0xff]
      %v2487 = vld [vmem:[%s515 + $0x78] sm:$0xff]
      %v2488 = vld [vmem:[%s515 + $0x80] sm:$0xff]
      %v2489 = vld [vmem:[%s515 + $0x88] sm:$0xff]
      %v2490 = vld [vmem:[%s515 + $0x90] sm:$0xff]
      %v2491 = vld [vmem:[%s515 + $0x98] sm:$0xff]
      %v2492 = vld [vmem:[%s515 + $0xa0] sm:$0xff]
      %v2493 = vld [vmem:[%s515 + $0xa8] sm:$0xff]
      %v2494 = vld [vmem:[%s515 + $0xb0] sm:$0xff]
      %v2495 = vld [vmem:[%s515 + $0xb8] sm:$0xff]
      %v2496 = vld [vmem:[%s515 + $0xc0] sm:$0xff]
      %v2497 = vld [vmem:[%s515 + $0xc8] sm:$0xff]
      %v2498 = vld [vmem:[%s515 + $0xd0] sm:$0xff]
      %v2499 = vld [vmem:[%s515 + $0xd8] sm:$0xff]
      %v2500 = vld [vmem:[%s515 + $0xe0] sm:$0xff]
      %v2501 = vld [vmem:[%s515 + $0xe8] sm:$0xff]
      %v2502 = vld [vmem:[%s515 + $0xf0] sm:$0xff]
      %v2503 = vld [vmem:[%s515 + $0xf8] sm:$0xff]
      %v2504 = vld [vmem:[%s515 + $0x100] sm:$0xff]
      %v2505 = vld [vmem:[%s515 + $0x108] sm:$0xff]
      %v2506 = vld [vmem:[%s515 + $0x110] sm:$0xff]
      %v2507 = vld [vmem:[%s515 + $0x118] sm:$0xff]
      %v2508 = vld [vmem:[%s515 + $0x120] sm:$0xff]
      %v2509 = vld [vmem:[%s515 + $0x128] sm:$0xff]
      %v2510 = vld [vmem:[%s515 + $0x130] sm:$0xff]
      %v2511 = vld [vmem:[%s515 + $0x138] sm:$0xff]
      %v2512 = vld [vmem:[%s515 + $0x140] sm:$0xff]
      %v2513 = vld [vmem:[%s515 + $0x148] sm:$0xff]
      %v2514 = vld [vmem:[%s515 + $0x150] sm:$0xff]
      %v2515 = vld [vmem:[%s515 + $0x158] sm:$0xff]
      %v2516 = vld [vmem:[%s515 + $0x160] sm:$0xff]
      %v2517 = vld [vmem:[%s515 + $0x168] sm:$0xff]
      %v2518 = vld [vmem:[%s515 + $0x170] sm:$0xff]
      %v2519 = vld [vmem:[%s515 + $0x178] sm:$0xff]
      %2520 = vrot.lane.b32.xlu0 %v767, 64
      %v2521 = vpop.permute.xlu0 %2520
      %2522 = vrot.lane.b32.xlu0 %v770, 64
      %v2523 = vpop.permute.xlu0 %2522
      %2524 = vrot.lane.b32.xlu0 %v773, 64
      %v2525 = vpop.permute.xlu0 %2524
      %2526 = vrot.lane.b32.xlu0 %v776, 64
      %v2527 = vpop.permute.xlu0 %2526
      %2528 = vrot.lane.b32.xlu0 %v779, 64
      %v2529 = vpop.permute.xlu0 %2528
      %2530 = vrot.lane.b32.xlu0 %v782, 64
      %v2531 = vpop.permute.xlu0 %2530
      %2532 = vrot.lane.b32.xlu0 %v785, 64
      %v2533 = vpop.permute.xlu0 %2532
      %2534 = vrot.lane.b32.xlu0 %v788, 64
      %v2535 = vpop.permute.xlu0 %2534
      %2536 = vrot.lane.b32.xlu0 %v791, 64
      %v2537 = vpop.permute.xlu0 %2536
      %2538 = vrot.lane.b32.xlu0 %v794, 64
      %v2539 = vpop.permute.xlu0 %2538
      %2540 = vrot.lane.b32.xlu0 %v797, 64
      %v2541 = vpop.permute.xlu0 %2540
      %2542 = vrot.lane.b32.xlu0 %v800, 64
      %v2543 = vpop.permute.xlu0 %2542
      %2544 = vrot.lane.b32.xlu0 %v803, 64
      %v2545 = vpop.permute.xlu0 %2544
      %2546 = vrot.lane.b32.xlu0 %v806, 64
      %v2547 = vpop.permute.xlu0 %2546
      %2548 = vrot.lane.b32.xlu0 %v809, 64
      %v2549 = vpop.permute.xlu0 %2548
      %2550 = vrot.lane.b32.xlu0 %v812, 64
      %v2551 = vpop.permute.xlu0 %2550
      %2552 = vrot.lane.b32.xlu0 %v815, 64
      %v2553 = vpop.permute.xlu0 %2552
      %2554 = vrot.lane.b32.xlu0 %v818, 64
      %v2555 = vpop.permute.xlu0 %2554
      %2556 = vrot.lane.b32.xlu0 %v821, 64
      %v2557 = vpop.permute.xlu0 %2556
      %2558 = vrot.lane.b32.xlu0 %v824, 64
      %v2559 = vpop.permute.xlu0 %2558
      %2560 = vrot.lane.b32.xlu0 %v827, 64
      %v2561 = vpop.permute.xlu0 %2560
      %2562 = vrot.lane.b32.xlu0 %v830, 64
      %v2563 = vpop.permute.xlu0 %2562
      %2564 = vrot.lane.b32.xlu0 %v833, 64
      %v2565 = vpop.permute.xlu0 %2564
      %2566 = vrot.lane.b32.xlu0 %v836, 64
      %v2567 = vpop.permute.xlu0 %2566
      %2568 = vrot.lane.b32.xlu0 %v839, 64
      %v2569 = vpop.permute.xlu0 %2568
      %2570 = vrot.lane.b32.xlu0 %v842, 64
      %v2571 = vpop.permute.xlu0 %2570
      %2572 = vrot.lane.b32.xlu0 %v845, 64
      %v2573 = vpop.permute.xlu0 %2572
      %2574 = vrot.lane.b32.xlu0 %v848, 64
      %v2575 = vpop.permute.xlu0 %2574
      %2576 = vrot.lane.b32.xlu0 %v851, 64
      %v2577 = vpop.permute.xlu0 %2576
      %2578 = vrot.lane.b32.xlu0 %v854, 64
      %v2579 = vpop.permute.xlu0 %2578
      %2580 = vrot.lane.b32.xlu0 %v857, 64
      %v2581 = vpop.permute.xlu0 %2580
      %2582 = vrot.lane.b32.xlu0 %v860, 64
      %v2583 = vpop.permute.xlu0 %2582
      %2584 = vrot.lane.b32.xlu0 %v863, 64
      %v2585 = vpop.permute.xlu0 %2584
      %2586 = vrot.lane.b32.xlu0 %v866, 64
      %v2587 = vpop.permute.xlu0 %2586
      %2588 = vrot.lane.b32.xlu0 %v869, 64
      %v2589 = vpop.permute.xlu0 %2588
      %2590 = vrot.lane.b32.xlu0 %v872, 64
      %v2591 = vpop.permute.xlu0 %2590
      %2592 = vrot.lane.b32.xlu0 %v875, 64
      %v2593 = vpop.permute.xlu0 %2592
      %2594 = vrot.lane.b32.xlu0 %v878, 64
      %v2595 = vpop.permute.xlu0 %2594
      %2596 = vrot.lane.b32.xlu0 %v881, 64
      %v2597 = vpop.permute.xlu0 %2596
      %2598 = vrot.lane.b32.xlu0 %v884, 64
      %v2599 = vpop.permute.xlu0 %2598
      %2600 = vrot.lane.b32.xlu0 %v887, 64
      %v2601 = vpop.permute.xlu0 %2600
      %2602 = vrot.lane.b32.xlu0 %v890, 64
      %v2603 = vpop.permute.xlu0 %2602
      %2604 = vrot.lane.b32.xlu0 %v893, 64
      %v2605 = vpop.permute.xlu0 %2604
      %2606 = vrot.lane.b32.xlu0 %v896, 64
      %v2607 = vpop.permute.xlu0 %2606
      %2608 = vrot.lane.b32.xlu0 %v899, 64
      %v2609 = vpop.permute.xlu0 %2608
      %2610 = vrot.lane.b32.xlu0 %v902, 64
      %v2611 = vpop.permute.xlu0 %2610
      %2612 = vrot.lane.b32.xlu0 %v905, 64
      %v2613 = vpop.permute.xlu0 %2612
      %2614 = vrot.lane.b32.xlu0 %v908, 64
      %v2615 = vpop.permute.xlu0 %2614
      %2664 = vmatpush.msra.mxu0 %v2551
      %2665 = vmatpush.msra.mxu0 %v2549
      %2666 = vmatpush.msra.mxu0 %v2547
      %2667 = vmatpush.msra.mxu0 %v2545
      %2668 = vmatpush.msra.mxu0 %v2543
      %2669 = vmatpush.msra.mxu0 %v2541
      %2670 = vmatpush.msra.mxu0 %v2539
      %2671 = vmatpush.msra.mxu0 %v2537
      %2672 = vmatpush.msra.mxu0 %v2535
      %2673 = vmatpush.msra.mxu0 %v2533
      %2674 = vmatpush.msra.mxu0 %v2531
      %2675 = vmatpush.msra.mxu0 %v2529
      %2676 = vmatpush.msra.mxu0 %v2527
      %2677 = vmatpush.msra.mxu0 %v2525
      %2678 = vmatpush.msra.mxu0 %v2523
      %2679 = vmatpush.msra.mxu0 %v2521
      %2680 = vmatmul.f32.gmra.mxu0 %v2472
      %v2681 = vpop.f32.mrf.mxu0
      %v2682 = vadd.f32 0.0, %v2681
      %2683 = vmatmul.f32.gmra.mxu0 %v2475
      %v2684 = vpop.f32.mrf.mxu0
      %v2685 = vadd.f32 0.0, %v2684
      %2686 = vmatmul.f32.gmra.mxu0 %v2478
      %v2687 = vpop.f32.mrf.mxu0
      %v2688 = vadd.f32 0.0, %v2687
      %2689 = vmatmul.f32.gmra.mxu0 %v2481
      %v2690 = vpop.f32.mrf.mxu0
      %v2691 = vadd.f32 0.0, %v2690
      %2692 = vmatmul.f32.gmra.mxu0 %v2484
      %v2693 = vpop.f32.mrf.mxu0
      %v2694 = vadd.f32 0.0, %v2693
      %2695 = vmatmul.f32.gmra.mxu0 %v2487
      %v2696 = vpop.f32.mrf.mxu0
      %v2697 = vadd.f32 0.0, %v2696
      %2698 = vmatmul.f32.gmra.mxu0 %v2490
      %v2699 = vpop.f32.mrf.mxu0
      %v2700 = vadd.f32 0.0, %v2699
      %2701 = vmatmul.f32.gmra.mxu0 %v2493
      %v2702 = vpop.f32.mrf.mxu0
      %v2703 = vadd.f32 0.0, %v2702
      %2704 = vmatmul.f32.gmra.mxu0 %v2496
      %v2705 = vpop.f32.mrf.mxu0
      %v2706 = vadd.f32 0.0, %v2705
      %2707 = vmatmul.f32.gmra.mxu0 %v2499
      %v2708 = vpop.f32.mrf.mxu0
      %v2709 = vadd.f32 0.0, %v2708
      %2710 = vmatmul.f32.gmra.mxu0 %v2502
      %v2711 = vpop.f32.mrf.mxu0
      %v2712 = vadd.f32 0.0, %v2711
      %2713 = vmatmul.f32.gmra.mxu0 %v2505
      %v2714 = vpop.f32.mrf.mxu0
      %v2715 = vadd.f32 0.0, %v2714
      %2716 = vmatmul.f32.gmra.mxu0 %v2508
      %v2717 = vpop.f32.mrf.mxu0
      %v2718 = vadd.f32 0.0, %v2717
      %2719 = vmatmul.f32.gmra.mxu0 %v2511
      %v2720 = vpop.f32.mrf.mxu0
      %v2721 = vadd.f32 0.0, %v2720
      %2722 = vmatmul.f32.gmra.mxu0 %v2514
      %v2723 = vpop.f32.mrf.mxu0
      %v2724 = vadd.f32 0.0, %v2723
      %2725 = vmatmul.f32.gmra.mxu0 %v2517
      %v2726 = vpop.f32.mrf.mxu0
      %v2727 = vadd.f32 0.0, %v2726
      %2728 = vdwg.mxu0
      %2729 = vmatpush.msra.mxu0 %v2583
      %2730 = vmatpush.msra.mxu0 %v2581
      %2731 = vmatpush.msra.mxu0 %v2579
      %2732 = vmatpush.msra.mxu0 %v2577
      %2733 = vmatpush.msra.mxu0 %v2575
      %2734 = vmatpush.msra.mxu0 %v2573
      %2735 = vmatpush.msra.mxu0 %v2571
      %2736 = vmatpush.msra.mxu0 %v2569
      %2737 = vmatpush.msra.mxu0 %v2567
      %2738 = vmatpush.msra.mxu0 %v2565
      %2739 = vmatpush.msra.mxu0 %v2563
      %2740 = vmatpush.msra.mxu0 %v2561
      %2741 = vmatpush.msra.mxu0 %v2559
      %2742 = vmatpush.msra.mxu0 %v2557
      %2743 = vmatpush.msra.mxu0 %v2555
      %2744 = vmatpush.msra.mxu0 %v2553
      %2745 = vmatmul.f32.gmra.mxu0 %v2473
      %v2746 = vpop.f32.mrf.mxu0
      %v2747 = vadd.f32 %v2682, %v2746
      %2748 = vmatmul.f32.gmra.mxu0 %v2476
      %v2749 = vpop.f32.mrf.mxu0
      %v2750 = vadd.f32 %v2685, %v2749
      %2751 = vmatmul.f32.gmra.mxu0 %v2479
      %v2752 = vpop.f32.mrf.mxu0
      %v2753 = vadd.f32 %v2688, %v2752
      %2754 = vmatmul.f32.gmra.mxu0 %v2482
      %v2755 = vpop.f32.mrf.mxu0
      %v2756 = vadd.f32 %v2691, %v2755
      %2757 = vmatmul.f32.gmra.mxu0 %v2485
      %v2758 = vpop.f32.mrf.mxu0
      %v2759 = vadd.f32 %v2694, %v2758
      %2760 = vmatmul.f32.gmra.mxu0 %v2488
      %v2761 = vpop.f32.mrf.mxu0
      %v2762 = vadd.f32 %v2697, %v2761
      %2763 = vmatmul.f32.gmra.mxu0 %v2491
      %v2764 = vpop.f32.mrf.mxu0
      %v2765 = vadd.f32 %v2700, %v2764
      %2766 = vmatmul.f32.gmra.mxu0 %v2494
      %v2767 = vpop.f32.mrf.mxu0
      %v2768 = vadd.f32 %v2703, %v2767
      %2769 = vmatmul.f32.gmra.mxu0 %v2497
      %v2770 = vpop.f32.mrf.mxu0
      %v2771 = vadd.f32 %v2706, %v2770
      %2772 = vmatmul.f32.gmra.mxu0 %v2500
      %v2773 = vpop.f32.mrf.mxu0
      %v2774 = vadd.f32 %v2709, %v2773
      %2775 = vmatmul.f32.gmra.mxu0 %v2503
      %v2776 = vpop.f32.mrf.mxu0
      %v2777 = vadd.f32 %v2712, %v2776
      %2778 = vmatmul.f32.gmra.mxu0 %v2506
      %v2779 = vpop.f32.mrf.mxu0
      %v2780 = vadd.f32 %v2715, %v2779
      %2781 = vmatmul.f32.gmra.mxu0 %v2509
      %v2782 = vpop.f32.mrf.mxu0
      %v2783 = vadd.f32 %v2718, %v2782
      %2784 = vmatmul.f32.gmra.mxu0 %v2512
      %v2785 = vpop.f32.mrf.mxu0
      %v2786 = vadd.f32 %v2721, %v2785
      %2787 = vmatmul.f32.gmra.mxu0 %v2515
      %v2788 = vpop.f32.mrf.mxu0
      %v2789 = vadd.f32 %v2724, %v2788
      %2790 = vmatmul.f32.gmra.mxu0 %v2518
      %v2791 = vpop.f32.mrf.mxu0
      %v2792 = vadd.f32 %v2727, %v2791
      %2793 = vdwg.mxu0
      %2794 = vmatpush.msra.mxu0 %v2615
      %2795 = vmatpush.msra.mxu0 %v2613
      %2796 = vmatpush.msra.mxu0 %v2611
      %2797 = vmatpush.msra.mxu0 %v2609
      %2798 = vmatpush.msra.mxu0 %v2607
      %2799 = vmatpush.msra.mxu0 %v2605
      %2800 = vmatpush.msra.mxu0 %v2603
      %2801 = vmatpush.msra.mxu0 %v2601
      %2802 = vmatpush.msra.mxu0 %v2599
      %2803 = vmatpush.msra.mxu0 %v2597
      %2804 = vmatpush.msra.mxu0 %v2595
      %2805 = vmatpush.msra.mxu0 %v2593
      %2806 = vmatpush.msra.mxu0 %v2591
      %2807 = vmatpush.msra.mxu0 %v2589
      %2808 = vmatpush.msra.mxu0 %v2587
      %2809 = vmatpush.msra.mxu0 %v2585
      %2810 = vmatmul.f32.gmra.mxu0 %v2474
      %v2811 = vpop.f32.mrf.mxu0
      %v2812 = vadd.f32 %v2747, %v2811
      %2813 = vmatmul.f32.gmra.mxu0 %v2477
      %v2814 = vpop.f32.mrf.mxu0
      %v2815 = vadd.f32 %v2750, %v2814
      %2816 = vmatmul.f32.gmra.mxu0 %v2480
      %v2817 = vpop.f32.mrf.mxu0
      %v2818 = vadd.f32 %v2753, %v2817
      %2819 = vmatmul.f32.gmra.mxu0 %v2483
      %v2820 = vpop.f32.mrf.mxu0
      %v2821 = vadd.f32 %v2756, %v2820
      %2822 = vmatmul.f32.gmra.mxu0 %v2486
      %v2823 = vpop.f32.mrf.mxu0
      %v2824 = vadd.f32 %v2759, %v2823
      %2825 = vmatmul.f32.gmra.mxu0 %v2489
      %v2826 = vpop.f32.mrf.mxu0
      %v2827 = vadd.f32 %v2762, %v2826
      %2828 = vmatmul.f32.gmra.mxu0 %v2492
      %v2829 = vpop.f32.mrf.mxu0
      %v2830 = vadd.f32 %v2765, %v2829
      %2831 = vmatmul.f32.gmra.mxu0 %v2495
      %v2832 = vpop.f32.mrf.mxu0
      %v2833 = vadd.f32 %v2768, %v2832
      %2834 = vmatmul.f32.gmra.mxu0 %v2498
      %v2835 = vpop.f32.mrf.mxu0
      %v2836 = vadd.f32 %v2771, %v2835
      %2837 = vmatmul.f32.gmra.mxu0 %v2501
      %v2838 = vpop.f32.mrf.mxu0
      %v2839 = vadd.f32 %v2774, %v2838
      %2840 = vmatmul.f32.gmra.mxu0 %v2504
      %v2841 = vpop.f32.mrf.mxu0
      %v2842 = vadd.f32 %v2777, %v2841
      %2843 = vmatmul.f32.gmra.mxu0 %v2507
      %v2844 = vpop.f32.mrf.mxu0
      %v2845 = vadd.f32 %v2780, %v2844
      %2846 = vmatmul.f32.gmra.mxu0 %v2510
      %v2847 = vpop.f32.mrf.mxu0
      %v2848 = vadd.f32 %v2783, %v2847
      %2849 = vmatmul.f32.gmra.mxu0 %v2513
      %v2850 = vpop.f32.mrf.mxu0
      %v2851 = vadd.f32 %v2786, %v2850
      %2852 = vmatmul.f32.gmra.mxu0 %v2516
      %v2853 = vpop.f32.mrf.mxu0
      %v2854 = vadd.f32 %v2789, %v2853
      %2855 = vmatmul.f32.gmra.mxu0 %v2519
      %v2856 = vpop.f32.mrf.mxu0
      %v2857 = vadd.f32 %v2792, %v2856
      %2858 = vdwg.mxu0
      %v2859 = vadd.f32 %v2456, %v2812
      %v2860 = vadd.f32 %v2457, %v2815
      %v2861 = vadd.f32 %v2458, %v2818
      %v2862 = vadd.f32 %v2459, %v2821
      %v2863 = vadd.f32 %v2460, %v2824
      %v2864 = vadd.f32 %v2461, %v2827
      %v2865 = vadd.f32 %v2462, %v2830
      %v2866 = vadd.f32 %v2463, %v2833
      %v2867 = vadd.f32 %v2464, %v2836
      %v2868 = vadd.f32 %v2465, %v2839
      %v2869 = vadd.f32 %v2466, %v2842
      %v2870 = vadd.f32 %v2467, %v2845
      %v2871 = vadd.f32 %v2468, %v2848
      %v2872 = vadd.f32 %v2469, %v2851
      %v2873 = vadd.f32 %v2470, %v2854
      %v2874 = vadd.f32 %v2471, %v2857
      %vm2875 = vcmask 130048
      %2876 = vst.msk [vmem:[%s553] sm:$0xff] %vm2875, %v2859
      %2877 = vst.msk [vmem:[%s553 + $0x8] sm:$0xff] %vm2875, %v2860
      %2878 = vst.msk [vmem:[%s553 + $0x10] sm:$0xff] %vm2875, %v2861
      %2879 = vst.msk [vmem:[%s553 + $0x18] sm:$0xff] %vm2875, %v2862
      %2880 = vst.msk [vmem:[%s553 + $0x20] sm:$0xff] %vm2875, %v2863
      %2881 = vst.msk [vmem:[%s553 + $0x28] sm:$0xff] %vm2875, %v2864
      %2882 = vst.msk [vmem:[%s553 + $0x30] sm:$0xff] %vm2875, %v2865
      %2883 = vst.msk [vmem:[%s553 + $0x38] sm:$0xff] %vm2875, %v2866
      %2884 = vst.msk [vmem:[%s553 + $0x40] sm:$0xff] %vm2875, %v2867
      %2885 = vst.msk [vmem:[%s553 + $0x48] sm:$0xff] %vm2875, %v2868
      %2886 = vst.msk [vmem:[%s553 + $0x50] sm:$0xff] %vm2875, %v2869
      %2887 = vst.msk [vmem:[%s553 + $0x58] sm:$0xff] %vm2875, %v2870
      %2888 = vst.msk [vmem:[%s553 + $0x60] sm:$0xff] %vm2875, %v2871
      %2889 = vst.msk [vmem:[%s553 + $0x68] sm:$0xff] %vm2875, %v2872
      %2890 = vst.msk [vmem:[%s553 + $0x70] sm:$0xff] %vm2875, %v2873
      %2891 = vst.msk [vmem:[%s553 + $0x78] sm:$0xff] %vm2875, %v2874
      %p2892 = scmp.ge.s32.totalorder %s21, 1
      %p2893 = scmp.lt.s32.totalorder %s21, 2
      %p2894 = pnand %p2892, %p2893
      %p2895 = pneg %p2894
      // Predicated region
      $region61: #{gsan_forward.1} parent=59 // pred_check
        _
      $region62: #{gsan_forward.1} parent=59 // pred_check_branch
        %2897 = sbr.rel (%p2894) target = $region64
      $region63: #{gsan_forward.1} parent=59 // pred_region
        %s2898 = smul.u32 %s21, 128
        %s2899 = scalar_lea.vmem %s0, %s2898
        %v2900 = vld [vmem:[%s2899] sm:$0xff]
        %v2901 = vld [vmem:[%s2899 + $0x8] sm:$0xff]
        %v2902 = vld [vmem:[%s2899 + $0x10] sm:$0xff]
        %v2903 = vld [vmem:[%s2899 + $0x18] sm:$0xff]
        %v2904 = vld [vmem:[%s2899 + $0x20] sm:$0xff]
        %v2905 = vld [vmem:[%s2899 + $0x28] sm:$0xff]
        %v2906 = vld [vmem:[%s2899 + $0x30] sm:$0xff]
        %v2907 = vld [vmem:[%s2899 + $0x38] sm:$0xff]
        %v2908 = vld [vmem:[%s2899 + $0x40] sm:$0xff]
        %v2909 = vld [vmem:[%s2899 + $0x48] sm:$0xff]
        %v2910 = vld [vmem:[%s2899 + $0x50] sm:$0xff]
        %v2911 = vld [vmem:[%s2899 + $0x58] sm:$0xff]
        %v2912 = vld [vmem:[%s2899 + $0x60] sm:$0xff]
        %v2913 = vld [vmem:[%s2899 + $0x68] sm:$0xff]
        %v2914 = vld [vmem:[%s2899 + $0x70] sm:$0xff]
        %v2915 = vld [vmem:[%s2899 + $0x78] sm:$0xff]
        %v2916 = vld [vmem:[%s2] sm:$0xff]
        %v2918 = vsel %vm604, %v2900, 0
        %v2921 = vsel %vm604, %v2901, 0
        %v2924 = vsel %vm604, %v2902, 0
        %v2927 = vsel %vm604, %v2903, 0
        %v2930 = vsel %vm604, %v2904, 0
        %v2933 = vsel %vm604, %v2905, 0
        %v2936 = vsel %vm604, %v2906, 0
        %v2939 = vsel %vm604, %v2907, 0
        %v2942 = vsel %vm604, %v2908, 0
        %v2945 = vsel %vm604, %v2909, 0
        %v2948 = vsel %vm604, %v2910, 0
        %v2951 = vsel %vm604, %v2911, 0
        %v2954 = vsel %vm604, %v2912, 0
        %v2957 = vsel %vm604, %v2913, 0
        %v2960 = vsel %vm604, %v2914, 0
        %v2963 = vsel %vm604, %v2915, 0
        %2965 = vmatpush.msra.mxu0 0.0
        %2966 = vmatpush.msra.mxu0 0.0
        %2967 = vmatpush.msra.mxu0 0.0
        %2968 = vmatpush.msra.mxu0 0.0
        %2969 = vmatpush.msra.mxu0 0.0
        %2970 = vmatpush.msra.mxu0 0.0
        %2971 = vmatpush.msra.mxu0 0.0
        %2972 = vmatpush.msra.mxu0 0.0
        %2973 = vmatpush.msra.mxu0 0.0
        %2974 = vmatpush.msra.mxu0 0.0
        %2975 = vmatpush.msra.mxu0 0.0
        %2976 = vmatpush.msra.mxu0 0.0
        %2977 = vmatpush.msra.mxu0 0.0
        %2978 = vmatpush.msra.mxu0 0.0
        %2979 = vmatpush.msra.mxu0 0.0
        %2980 = vmatpush.msra.mxu0 %v2916
        %2981 = vmatmul.f32.gmra.mxu0 %v2918
        %v2982 = vpop.f32.mrf.mxu0
        %v2983 = vadd.f32 0.0, %v2982
        %2984 = vmatmul.f32.gmra.mxu0 %v2921
        %v2985 = vpop.f32.mrf.mxu0
        %v2986 = vadd.f32 0.0, %v2985
        %2987 = vmatmul.f32.gmra.mxu0 %v2924
        %v2988 = vpop.f32.mrf.mxu0
        %v2989 = vadd.f32 0.0, %v2988
        %2990 = vmatmul.f32.gmra.mxu0 %v2927
        %v2991 = vpop.f32.mrf.mxu0
        %v2992 = vadd.f32 0.0, %v2991
        %2993 = vmatmul.f32.gmra.mxu0 %v2930
        %v2994 = vpop.f32.mrf.mxu0
        %v2995 = vadd.f32 0.0, %v2994
        %2996 = vmatmul.f32.gmra.mxu0 %v2933
        %v2997 = vpop.f32.mrf.mxu0
        %v2998 = vadd.f32 0.0, %v2997
        %2999 = vmatmul.f32.gmra.mxu0 %v2936
        %v3000 = vpop.f32.mrf.mxu0
        %v3001 = vadd.f32 0.0, %v3000
        %3002 = vmatmul.f32.gmra.mxu0 %v2939
        %v3003 = vpop.f32.mrf.mxu0
        %v3004 = vadd.f32 0.0, %v3003
        %3005 = vmatmul.f32.gmra.mxu0 %v2942
        %v3006 = vpop.f32.mrf.mxu0
        %v3007 = vadd.f32 0.0, %v3006
        %3008 = vmatmul.f32.gmra.mxu0 %v2945
        %v3009 = vpop.f32.mrf.mxu0
        %v3010 = vadd.f32 0.0, %v3009
        %3011 = vmatmul.f32.gmra.mxu0 %v2948
        %v3012 = vpop.f32.mrf.mxu0
        %v3013 = vadd.f32 0.0, %v3012
        %3014 = vmatmul.f32.gmra.mxu0 %v2951
        %v3015 = vpop.f32.mrf.mxu0
        %v3016 = vadd.f32 0.0, %v3015
        %3017 = vmatmul.f32.gmra.mxu0 %v2954
        %v3018 = vpop.f32.mrf.mxu0
        %v3019 = vadd.f32 0.0, %v3018
        %3020 = vmatmul.f32.gmra.mxu0 %v2957
        %v3021 = vpop.f32.mrf.mxu0
        %v3022 = vadd.f32 0.0, %v3021
        %3023 = vmatmul.f32.gmra.mxu0 %v2960
        %v3024 = vpop.f32.mrf.mxu0
        %v3025 = vadd.f32 0.0, %v3024
        %3026 = vmatmul.f32.gmra.mxu0 %v2963
        %v3027 = vpop.f32.mrf.mxu0
        %v3028 = vadd.f32 0.0, %v3027
        %3029 = vdwg.mxu0
        %v3030 = vld [vmem:[%s3] sm:$0xf]
        %v3031 = vld [vmem:[%s526] sm:$0xff]
        %v3032 = vld [vmem:[%s526 + $0x8] sm:$0xff]
        %v3033 = vld [vmem:[%s526 + $0x10] sm:$0xff]
        %v3034 = vld [vmem:[%s526 + $0x18] sm:$0xff]
        %v3035 = vld [vmem:[%s526 + $0x20] sm:$0xff]
        %v3036 = vld [vmem:[%s526 + $0x28] sm:$0xff]
        %v3037 = vld [vmem:[%s526 + $0x30] sm:$0xff]
        %v3038 = vld [vmem:[%s526 + $0x38] sm:$0xff]
        %v3039 = vld [vmem:[%s526 + $0x40] sm:$0xff]
        %v3040 = vld [vmem:[%s526 + $0x48] sm:$0xff]
        %v3041 = vld [vmem:[%s526 + $0x50] sm:$0xff]
        %v3042 = vld [vmem:[%s526 + $0x58] sm:$0xff]
        %v3043 = vld [vmem:[%s526 + $0x60] sm:$0xff]
        %v3044 = vld [vmem:[%s526 + $0x68] sm:$0xff]
        %v3045 = vld [vmem:[%s526 + $0x70] sm:$0xff]
        %v3046 = vld [vmem:[%s526 + $0x78] sm:$0xff]
        %vm3047 = vcmp.ge.f32.partialorder %v3031, 1.5
        %vm3048 = vcmp.ge.f32.partialorder %v3032, 1.5
        %vm3049 = vcmp.ge.f32.partialorder %v3033, 1.5
        %vm3050 = vcmp.ge.f32.partialorder %v3034, 1.5
        %vm3051 = vcmp.ge.f32.partialorder %v3035, 1.5
        %vm3052 = vcmp.ge.f32.partialorder %v3036, 1.5
        %vm3053 = vcmp.ge.f32.partialorder %v3037, 1.5
        %vm3054 = vcmp.ge.f32.partialorder %v3038, 1.5
        %vm3055 = vcmp.ge.f32.partialorder %v3039, 1.5
        %vm3056 = vcmp.ge.f32.partialorder %v3040, 1.5
        %vm3057 = vcmp.ge.f32.partialorder %v3041, 1.5
        %vm3058 = vcmp.ge.f32.partialorder %v3042, 1.5
        %vm3059 = vcmp.ge.f32.partialorder %v3043, 1.5
        %vm3060 = vcmp.ge.f32.partialorder %v3044, 1.5
        %vm3061 = vcmp.ge.f32.partialorder %v3045, 1.5
        %vm3062 = vcmp.ge.f32.partialorder %v3046, 1.5
        %3064 = vset.pattern.permute.xlu0 1
        %3065 = vperm.xlu0 %3064, %v2983
        %v3066 = vpop.permute.xlu0 %3065
        %3069 = vset.pattern.permute.xlu0 1
        %3070 = vperm.xlu0 %3069, %v2986
        %v3071 = vpop.permute.xlu0 %3070
        %3074 = vset.pattern.permute.xlu0 1
        %3075 = vperm.xlu0 %3074, %v2989
        %v3076 = vpop.permute.xlu0 %3075
        %3079 = vset.pattern.permute.xlu0 1
        %3080 = vperm.xlu0 %3079, %v2992
        %v3081 = vpop.permute.xlu0 %3080
        %3084 = vset.pattern.permute.xlu0 1
        %3085 = vperm.xlu0 %3084, %v2995
        %v3086 = vpop.permute.xlu0 %3085
        %3089 = vset.pattern.permute.xlu0 1
        %3090 = vperm.xlu0 %3089, %v2998
        %v3091 = vpop.permute.xlu0 %3090
        %3094 = vset.pattern.permute.xlu0 1
        %3095 = vperm.xlu0 %3094, %v3001
        %v3096 = vpop.permute.xlu0 %3095
        %3099 = vset.pattern.permute.xlu0 1
        %3100 = vperm.xlu0 %3099, %v3004
        %v3101 = vpop.permute.xlu0 %3100
        %3104 = vset.pattern.permute.xlu0 1
        %3105 = vperm.xlu0 %3104, %v3007
        %v3106 = vpop.permute.xlu0 %3105
        %3109 = vset.pattern.permute.xlu0 1
        %3110 = vperm.xlu0 %3109, %v3010
        %v3111 = vpop.permute.xlu0 %3110
        %3114 = vset.pattern.permute.xlu0 1
        %3115 = vperm.xlu0 %3114, %v3013
        %v3116 = vpop.permute.xlu0 %3115
        %3119 = vset.pattern.permute.xlu0 1
        %3120 = vperm.xlu0 %3119, %v3016
        %v3121 = vpop.permute.xlu0 %3120
        %3124 = vset.pattern.permute.xlu0 1
        %3125 = vperm.xlu0 %3124, %v3019
        %v3126 = vpop.permute.xlu0 %3125
        %3129 = vset.pattern.permute.xlu0 1
        %3130 = vperm.xlu0 %3129, %v3022
        %v3131 = vpop.permute.xlu0 %3130
        %3134 = vset.pattern.permute.xlu0 1
        %3135 = vperm.xlu0 %3134, %v3025
        %v3136 = vpop.permute.xlu0 %3135
        %3139 = vset.pattern.permute.xlu0 1
        %3140 = vperm.xlu0 %3139, %v3028
        %v3141 = vpop.permute.xlu0 %3140
        %v3143 = vperm.slane %v3030, 0
        %v3144 = vadd.f32 %v3066, %v3143
        %v3145 = vadd.f32 %v3071, %v3143
        %v3146 = vadd.f32 %v3076, %v3143
        %v3147 = vadd.f32 %v3081, %v3143
        %v3148 = vadd.f32 %v3086, %v3143
        %v3149 = vadd.f32 %v3091, %v3143
        %v3150 = vadd.f32 %v3096, %v3143
        %v3151 = vadd.f32 %v3101, %v3143
        %v3152 = vadd.f32 %v3106, %v3143
        %v3153 = vadd.f32 %v3111, %v3143
        %v3154 = vadd.f32 %v3116, %v3143
        %v3155 = vadd.f32 %v3121, %v3143
        %v3156 = vadd.f32 %v3126, %v3143
        %v3157 = vadd.f32 %v3131, %v3143
        %v3158 = vadd.f32 %v3136, %v3143
        %v3159 = vadd.f32 %v3141, %v3143
        %3160 = vset.pattern.permute.xlu0 0
        %3161 = vperm.xlu0 %3160, %v2983
        %v3162 = vpop.permute.xlu0 %3161
        %3164 = vset.pattern.permute.xlu0 0
        %3165 = vperm.xlu0 %3164, %v2986
        %v3166 = vpop.permute.xlu0 %3165
        %3168 = vset.pattern.permute.xlu0 0
        %3169 = vperm.xlu0 %3168, %v2989
        %v3170 = vpop.permute.xlu0 %3169
        %3172 = vset.pattern.permute.xlu0 0
        %3173 = vperm.xlu0 %3172, %v2992
        %v3174 = vpop.permute.xlu0 %3173
        %3176 = vset.pattern.permute.xlu0 0
        %3177 = vperm.xlu0 %3176, %v2995
        %v3178 = vpop.permute.xlu0 %3177
        %3180 = vset.pattern.permute.xlu0 0
        %3181 = vperm.xlu0 %3180, %v2998
        %v3182 = vpop.permute.xlu0 %3181
        %3184 = vset.pattern.permute.xlu0 0
        %3185 = vperm.xlu0 %3184, %v3001
        %v3186 = vpop.permute.xlu0 %3185
        %3188 = vset.pattern.permute.xlu0 0
        %3189 = vperm.xlu0 %3188, %v3004
        %v3190 = vpop.permute.xlu0 %3189
        %3192 = vset.pattern.permute.xlu0 0
        %3193 = vperm.xlu0 %3192, %v3007
        %v3194 = vpop.permute.xlu0 %3193
        %3196 = vset.pattern.permute.xlu0 0
        %3197 = vperm.xlu0 %3196, %v3010
        %v3198 = vpop.permute.xlu0 %3197
        %3200 = vset.pattern.permute.xlu0 0
        %3201 = vperm.xlu0 %3200, %v3013
        %v3202 = vpop.permute.xlu0 %3201
        %3204 = vset.pattern.permute.xlu0 0
        %3205 = vperm.xlu0 %3204, %v3016
        %v3206 = vpop.permute.xlu0 %3205
        %3208 = vset.pattern.permute.xlu0 0
        %3209 = vperm.xlu0 %3208, %v3019
        %v3210 = vpop.permute.xlu0 %3209
        %3212 = vset.pattern.permute.xlu0 0
        %3213 = vperm.xlu0 %3212, %v3022
        %v3214 = vpop.permute.xlu0 %3213
        %3216 = vset.pattern.permute.xlu0 0
        %3217 = vperm.xlu0 %3216, %v3025
        %v3218 = vpop.permute.xlu0 %3217
        %3220 = vset.pattern.permute.xlu0 0
        %3221 = vperm.xlu0 %3220, %v3028
        %v3222 = vpop.permute.xlu0 %3221
        %v3224 = vperm.slane %v3030, 1
        %v3225 = vadd.f32 %v3162, %v3224
        %v3226 = vadd.f32 %v3166, %v3224
        %v3227 = vadd.f32 %v3170, %v3224
        %v3228 = vadd.f32 %v3174, %v3224
        %v3229 = vadd.f32 %v3178, %v3224
        %v3230 = vadd.f32 %v3182, %v3224
        %v3231 = vadd.f32 %v3186, %v3224
        %v3232 = vadd.f32 %v3190, %v3224
        %v3233 = vadd.f32 %v3194, %v3224
        %v3234 = vadd.f32 %v3198, %v3224
        %v3235 = vadd.f32 %v3202, %v3224
        %v3236 = vadd.f32 %v3206, %v3224
        %v3237 = vadd.f32 %v3210, %v3224
        %v3238 = vadd.f32 %v3214, %v3224
        %v3239 = vadd.f32 %v3218, %v3224
        %v3240 = vadd.f32 %v3222, %v3224
        %v3241 = vsel %vm3047, %v3144, %v3225
        %v3242 = vsel %vm3048, %v3145, %v3226
        %v3243 = vsel %vm3049, %v3146, %v3227
        %v3244 = vsel %vm3050, %v3147, %v3228
        %v3245 = vsel %vm3051, %v3148, %v3229
        %v3246 = vsel %vm3052, %v3149, %v3230
        %v3247 = vsel %vm3053, %v3150, %v3231
        %v3248 = vsel %vm3054, %v3151, %v3232
        %v3249 = vsel %vm3055, %v3152, %v3233
        %v3250 = vsel %vm3056, %v3153, %v3234
        %v3251 = vsel %vm3057, %v3154, %v3235
        %v3252 = vsel %vm3058, %v3155, %v3236
        %v3253 = vsel %vm3059, %v3156, %v3237
        %v3254 = vsel %vm3060, %v3157, %v3238
        %v3255 = vsel %vm3061, %v3158, %v3239
        %v3256 = vsel %vm3062, %v3159, %v3240
        %vm3257 = vcmp.ge.f32.partialorder %v3031, 0.5
        %vm3258 = vcmp.ge.f32.partialorder %v3032, 0.5
        %vm3259 = vcmp.ge.f32.partialorder %v3033, 0.5
        %vm3260 = vcmp.ge.f32.partialorder %v3034, 0.5
        %vm3261 = vcmp.ge.f32.partialorder %v3035, 0.5
        %vm3262 = vcmp.ge.f32.partialorder %v3036, 0.5
        %vm3263 = vcmp.ge.f32.partialorder %v3037, 0.5
        %vm3264 = vcmp.ge.f32.partialorder %v3038, 0.5
        %vm3265 = vcmp.ge.f32.partialorder %v3039, 0.5
        %vm3266 = vcmp.ge.f32.partialorder %v3040, 0.5
        %vm3267 = vcmp.ge.f32.partialorder %v3041, 0.5
        %vm3268 = vcmp.ge.f32.partialorder %v3042, 0.5
        %vm3269 = vcmp.ge.f32.partialorder %v3043, 0.5
        %vm3270 = vcmp.ge.f32.partialorder %v3044, 0.5
        %vm3271 = vcmp.ge.f32.partialorder %v3045, 0.5
        %vm3272 = vcmp.ge.f32.partialorder %v3046, 0.5
        %v3273 = vxor.u32 %v3241, 2147483648
        %v3274 = vxor.u32 %v3242, 2147483648
        %v3275 = vxor.u32 %v3243, 2147483648
        %v3276 = vxor.u32 %v3244, 2147483648
        %v3277 = vxor.u32 %v3245, 2147483648
        %v3278 = vxor.u32 %v3246, 2147483648
        %v3279 = vxor.u32 %v3247, 2147483648
        %v3280 = vxor.u32 %v3248, 2147483648
        %v3281 = vxor.u32 %v3249, 2147483648
        %v3282 = vxor.u32 %v3250, 2147483648
        %v3283 = vxor.u32 %v3251, 2147483648
        %v3284 = vxor.u32 %v3252, 2147483648
        %v3285 = vxor.u32 %v3253, 2147483648
        %v3286 = vxor.u32 %v3254, 2147483648
        %v3287 = vxor.u32 %v3255, 2147483648
        %v3288 = vxor.u32 %v3256, 2147483648
        %v3289 = vmul.f32 %v3273, 1.442695
        %v3290 = vpow.pop %v3289
        %v3291 = vmul.f32 %v3274, 1.442695
        %v3292 = vpow.pop %v3291
        %v3293 = vmul.f32 %v3275, 1.442695
        %v3294 = vpow.pop %v3293
        %v3295 = vmul.f32 %v3276, 1.442695
        %v3296 = vpow.pop %v3295
        %v3297 = vmul.f32 %v3277, 1.442695
        %v3298 = vpow.pop %v3297
        %v3299 = vmul.f32 %v3278, 1.442695
        %v3300 = vpow.pop %v3299
        %v3301 = vmul.f32 %v3279, 1.442695
        %v3302 = vpow.pop %v3301
        %v3303 = vmul.f32 %v3280, 1.442695
        %v3304 = vpow.pop %v3303
        %v3305 = vmul.f32 %v3281, 1.442695
        %v3306 = vpow.pop %v3305
        %v3307 = vmul.f32 %v3282, 1.442695
        %v3308 = vpow.pop %v3307
        %v3309 = vmul.f32 %v3283, 1.442695
        %v3310 = vpow.pop %v3309
        %v3311 = vmul.f32 %v3284, 1.442695
        %v3312 = vpow.pop %v3311
        %v3313 = vmul.f32 %v3285, 1.442695
        %v3314 = vpow.pop %v3313
        %v3315 = vmul.f32 %v3286, 1.442695
        %v3316 = vpow.pop %v3315
        %v3317 = vmul.f32 %v3287, 1.442695
        %v3318 = vpow.pop %v3317
        %v3319 = vmul.f32 %v3288, 1.442695
        %v3320 = vpow.pop %v3319
        %v3321 = vadd.f32 %v3290, 1.0
        %v3322 = vadd.f32 %v3292, 1.0
        %v3323 = vadd.f32 %v3294, 1.0
        %v3324 = vadd.f32 %v3296, 1.0
        %v3325 = vadd.f32 %v3298, 1.0
        %v3326 = vadd.f32 %v3300, 1.0
        %v3327 = vadd.f32 %v3302, 1.0
        %v3328 = vadd.f32 %v3304, 1.0
        %v3329 = vadd.f32 %v3306, 1.0
        %v3330 = vadd.f32 %v3308, 1.0
        %v3331 = vadd.f32 %v3310, 1.0
        %v3332 = vadd.f32 %v3312, 1.0
        %v3333 = vadd.f32 %v3314, 1.0
        %v3334 = vadd.f32 %v3316, 1.0
        %v3335 = vadd.f32 %v3318, 1.0
        %v3336 = vadd.f32 %v3320, 1.0
        %v3337 = vrcp.pop %v3321
        %v3338 = vmul.f32 %v3321, %v3337
        %v3339 = vsub.f32 1.0, %v3338
        %v3340 = vmul.f32 %v3337, %v3339
        %v3341 = vadd.f32 %v3337, %v3340
        %vm3342 = vweird.f32 %v3321
        %vm3343 = vweird.f32 %v3337
        %vm3344 = vmor %vm3342, %vm3343
        %v3345 = vsel %vm3344, %v3337, %v3341
        %v3346 = vand.u32 2147483647, %v3321
        %vm3347 = vcmp.eq.f32.partialorder %v3346, 8.507059e+37
        %v3348 = vand.u32 %v3321, 2147483648
        %v3349 = vor.u32 1.1754944e-38, %v3348
        %v3350 = vsel %vm3347, %v3349, %v3345
        %v3351 = vmul.f32 1.0, %v3350
        %v3352 = vrcp.pop %v3322
        %v3353 = vmul.f32 %v3322, %v3352
        %v3354 = vsub.f32 1.0, %v3353
        %v3355 = vmul.f32 %v3352, %v3354
        %v3356 = vadd.f32 %v3352, %v3355
        %vm3357 = vweird.f32 %v3322
        %vm3358 = vweird.f32 %v3352
        %vm3359 = vmor %vm3357, %vm3358
        %v3360 = vsel %vm3359, %v3352, %v3356
        %v3361 = vand.u32 2147483647, %v3322
        %vm3362 = vcmp.eq.f32.partialorder %v3361, 8.507059e+37
        %v3363 = vand.u32 %v3322, 2147483648
        %v3364 = vor.u32 1.1754944e-38, %v3363
        %v3365 = vsel %vm3362, %v3364, %v3360
        %v3366 = vmul.f32 1.0, %v3365
        %v3367 = vrcp.pop %v3323
        %v3368 = vmul.f32 %v3323, %v3367
        %v3369 = vsub.f32 1.0, %v3368
        %v3370 = vmul.f32 %v3367, %v3369
        %v3371 = vadd.f32 %v3367, %v3370
        %vm3372 = vweird.f32 %v3323
        %vm3373 = vweird.f32 %v3367
        %vm3374 = vmor %vm3372, %vm3373
        %v3375 = vsel %vm3374, %v3367, %v3371
        %v3376 = vand.u32 2147483647, %v3323
        %vm3377 = vcmp.eq.f32.partialorder %v3376, 8.507059e+37
        %v3378 = vand.u32 %v3323, 2147483648
        %v3379 = vor.u32 1.1754944e-38, %v3378
        %v3380 = vsel %vm3377, %v3379, %v3375
        %v3381 = vmul.f32 1.0, %v3380
        %v3382 = vrcp.pop %v3324
        %v3383 = vmul.f32 %v3324, %v3382
        %v3384 = vsub.f32 1.0, %v3383
        %v3385 = vmul.f32 %v3382, %v3384
        %v3386 = vadd.f32 %v3382, %v3385
        %vm3387 = vweird.f32 %v3324
        %vm3388 = vweird.f32 %v3382
        %vm3389 = vmor %vm3387, %vm3388
        %v3390 = vsel %vm3389, %v3382, %v3386
        %v3391 = vand.u32 2147483647, %v3324
        %vm3392 = vcmp.eq.f32.partialorder %v3391, 8.507059e+37
        %v3393 = vand.u32 %v3324, 2147483648
        %v3394 = vor.u32 1.1754944e-38, %v3393
        %v3395 = vsel %vm3392, %v3394, %v3390
        %v3396 = vmul.f32 1.0, %v3395
        %v3397 = vrcp.pop %v3325
        %v3398 = vmul.f32 %v3325, %v3397
        %v3399 = vsub.f32 1.0, %v3398
        %v3400 = vmul.f32 %v3397, %v3399
        %v3401 = vadd.f32 %v3397, %v3400
        %vm3402 = vweird.f32 %v3325
        %vm3403 = vweird.f32 %v3397
        %vm3404 = vmor %vm3402, %vm3403
        %v3405 = vsel %vm3404, %v3397, %v3401
        %v3406 = vand.u32 2147483647, %v3325
        %vm3407 = vcmp.eq.f32.partialorder %v3406, 8.507059e+37
        %v3408 = vand.u32 %v3325, 2147483648
        %v3409 = vor.u32 1.1754944e-38, %v3408
        %v3410 = vsel %vm3407, %v3409, %v3405
        %v3411 = vmul.f32 1.0, %v3410
        %v3412 = vrcp.pop %v3326
        %v3413 = vmul.f32 %v3326, %v3412
        %v3414 = vsub.f32 1.0, %v3413
        %v3415 = vmul.f32 %v3412, %v3414
        %v3416 = vadd.f32 %v3412, %v3415
        %vm3417 = vweird.f32 %v3326
        %vm3418 = vweird.f32 %v3412
        %vm3419 = vmor %vm3417, %vm3418
        %v3420 = vsel %vm3419, %v3412, %v3416
        %v3421 = vand.u32 2147483647, %v3326
        %vm3422 = vcmp.eq.f32.partialorder %v3421, 8.507059e+37
        %v3423 = vand.u32 %v3326, 2147483648
        %v3424 = vor.u32 1.1754944e-38, %v3423
        %v3425 = vsel %vm3422, %v3424, %v3420
        %v3426 = vmul.f32 1.0, %v3425
        %v3427 = vrcp.pop %v3327
        %v3428 = vmul.f32 %v3327, %v3427
        %v3429 = vsub.f32 1.0, %v3428
        %v3430 = vmul.f32 %v3427, %v3429
        %v3431 = vadd.f32 %v3427, %v3430
        %vm3432 = vweird.f32 %v3327
        %vm3433 = vweird.f32 %v3427
        %vm3434 = vmor %vm3432, %vm3433
        %v3435 = vsel %vm3434, %v3427, %v3431
        %v3436 = vand.u32 2147483647, %v3327
        %vm3437 = vcmp.eq.f32.partialorder %v3436, 8.507059e+37
        %v3438 = vand.u32 %v3327, 2147483648
        %v3439 = vor.u32 1.1754944e-38, %v3438
        %v3440 = vsel %vm3437, %v3439, %v3435
        %v3441 = vmul.f32 1.0, %v3440
        %v3442 = vrcp.pop %v3328
        %v3443 = vmul.f32 %v3328, %v3442
        %v3444 = vsub.f32 1.0, %v3443
        %v3445 = vmul.f32 %v3442, %v3444
        %v3446 = vadd.f32 %v3442, %v3445
        %vm3447 = vweird.f32 %v3328
        %vm3448 = vweird.f32 %v3442
        %vm3449 = vmor %vm3447, %vm3448
        %v3450 = vsel %vm3449, %v3442, %v3446
        %v3451 = vand.u32 2147483647, %v3328
        %vm3452 = vcmp.eq.f32.partialorder %v3451, 8.507059e+37
        %v3453 = vand.u32 %v3328, 2147483648
        %v3454 = vor.u32 1.1754944e-38, %v3453
        %v3455 = vsel %vm3452, %v3454, %v3450
        %v3456 = vmul.f32 1.0, %v3455
        %v3457 = vrcp.pop %v3329
        %v3458 = vmul.f32 %v3329, %v3457
        %v3459 = vsub.f32 1.0, %v3458
        %v3460 = vmul.f32 %v3457, %v3459
        %v3461 = vadd.f32 %v3457, %v3460
        %vm3462 = vweird.f32 %v3329
        %vm3463 = vweird.f32 %v3457
        %vm3464 = vmor %vm3462, %vm3463
        %v3465 = vsel %vm3464, %v3457, %v3461
        %v3466 = vand.u32 2147483647, %v3329
        %vm3467 = vcmp.eq.f32.partialorder %v3466, 8.507059e+37
        %v3468 = vand.u32 %v3329, 2147483648
        %v3469 = vor.u32 1.1754944e-38, %v3468
        %v3470 = vsel %vm3467, %v3469, %v3465
        %v3471 = vmul.f32 1.0, %v3470
        %v3472 = vrcp.pop %v3330
        %v3473 = vmul.f32 %v3330, %v3472
        %v3474 = vsub.f32 1.0, %v3473
        %v3475 = vmul.f32 %v3472, %v3474
        %v3476 = vadd.f32 %v3472, %v3475
        %vm3477 = vweird.f32 %v3330
        %vm3478 = vweird.f32 %v3472
        %vm3479 = vmor %vm3477, %vm3478
        %v3480 = vsel %vm3479, %v3472, %v3476
        %v3481 = vand.u32 2147483647, %v3330
        %vm3482 = vcmp.eq.f32.partialorder %v3481, 8.507059e+37
        %v3483 = vand.u32 %v3330, 2147483648
        %v3484 = vor.u32 1.1754944e-38, %v3483
        %v3485 = vsel %vm3482, %v3484, %v3480
        %v3486 = vmul.f32 1.0, %v3485
        %v3487 = vrcp.pop %v3331
        %v3488 = vmul.f32 %v3331, %v3487
        %v3489 = vsub.f32 1.0, %v3488
        %v3490 = vmul.f32 %v3487, %v3489
        %v3491 = vadd.f32 %v3487, %v3490
        %vm3492 = vweird.f32 %v3331
        %vm3493 = vweird.f32 %v3487
        %vm3494 = vmor %vm3492, %vm3493
        %v3495 = vsel %vm3494, %v3487, %v3491
        %v3496 = vand.u32 2147483647, %v3331
        %vm3497 = vcmp.eq.f32.partialorder %v3496, 8.507059e+37
        %v3498 = vand.u32 %v3331, 2147483648
        %v3499 = vor.u32 1.1754944e-38, %v3498
        %v3500 = vsel %vm3497, %v3499, %v3495
        %v3501 = vmul.f32 1.0, %v3500
        %v3502 = vrcp.pop %v3332
        %v3503 = vmul.f32 %v3332, %v3502
        %v3504 = vsub.f32 1.0, %v3503
        %v3505 = vmul.f32 %v3502, %v3504
        %v3506 = vadd.f32 %v3502, %v3505
        %vm3507 = vweird.f32 %v3332
        %vm3508 = vweird.f32 %v3502
        %vm3509 = vmor %vm3507, %vm3508
        %v3510 = vsel %vm3509, %v3502, %v3506
        %v3511 = vand.u32 2147483647, %v3332
        %vm3512 = vcmp.eq.f32.partialorder %v3511, 8.507059e+37
        %v3513 = vand.u32 %v3332, 2147483648
        %v3514 = vor.u32 1.1754944e-38, %v3513
        %v3515 = vsel %vm3512, %v3514, %v3510
        %v3516 = vmul.f32 1.0, %v3515
        %v3517 = vrcp.pop %v3333
        %v3518 = vmul.f32 %v3333, %v3517
        %v3519 = vsub.f32 1.0, %v3518
        %v3520 = vmul.f32 %v3517, %v3519
        %v3521 = vadd.f32 %v3517, %v3520
        %vm3522 = vweird.f32 %v3333
        %vm3523 = vweird.f32 %v3517
        %vm3524 = vmor %vm3522, %vm3523
        %v3525 = vsel %vm3524, %v3517, %v3521
        %v3526 = vand.u32 2147483647, %v3333
        %vm3527 = vcmp.eq.f32.partialorder %v3526, 8.507059e+37
        %v3528 = vand.u32 %v3333, 2147483648
        %v3529 = vor.u32 1.1754944e-38, %v3528
        %v3530 = vsel %vm3527, %v3529, %v3525
        %v3531 = vmul.f32 1.0, %v3530
        %v3532 = vrcp.pop %v3334
        %v3533 = vmul.f32 %v3334, %v3532
        %v3534 = vsub.f32 1.0, %v3533
        %v3535 = vmul.f32 %v3532, %v3534
        %v3536 = vadd.f32 %v3532, %v3535
        %vm3537 = vweird.f32 %v3334
        %vm3538 = vweird.f32 %v3532
        %vm3539 = vmor %vm3537, %vm3538
        %v3540 = vsel %vm3539, %v3532, %v3536
        %v3541 = vand.u32 2147483647, %v3334
        %vm3542 = vcmp.eq.f32.partialorder %v3541, 8.507059e+37
        %v3543 = vand.u32 %v3334, 2147483648
        %v3544 = vor.u32 1.1754944e-38, %v3543
        %v3545 = vsel %vm3542, %v3544, %v3540
        %v3546 = vmul.f32 1.0, %v3545
        %v3547 = vrcp.pop %v3335
        %v3548 = vmul.f32 %v3335, %v3547
        %v3549 = vsub.f32 1.0, %v3548
        %v3550 = vmul.f32 %v3547, %v3549
        %v3551 = vadd.f32 %v3547, %v3550
        %vm3552 = vweird.f32 %v3335
        %vm3553 = vweird.f32 %v3547
        %vm3554 = vmor %vm3552, %vm3553
        %v3555 = vsel %vm3554, %v3547, %v3551
        %v3556 = vand.u32 2147483647, %v3335
        %vm3557 = vcmp.eq.f32.partialorder %v3556, 8.507059e+37
        %v3558 = vand.u32 %v3335, 2147483648
        %v3559 = vor.u32 1.1754944e-38, %v3558
        %v3560 = vsel %vm3557, %v3559, %v3555
        %v3561 = vmul.f32 1.0, %v3560
        %v3562 = vrcp.pop %v3336
        %v3563 = vmul.f32 %v3336, %v3562
        %v3564 = vsub.f32 1.0, %v3563
        %v3565 = vmul.f32 %v3562, %v3564
        %v3566 = vadd.f32 %v3562, %v3565
        %vm3567 = vweird.f32 %v3336
        %vm3568 = vweird.f32 %v3562
        %vm3569 = vmor %vm3567, %vm3568
        %v3570 = vsel %vm3569, %v3562, %v3566
        %v3571 = vand.u32 2147483647, %v3336
        %vm3572 = vcmp.eq.f32.partialorder %v3571, 8.507059e+37
        %v3573 = vand.u32 %v3336, 2147483648
        %v3574 = vor.u32 1.1754944e-38, %v3573
        %v3575 = vsel %vm3572, %v3574, %v3570
        %v3576 = vmul.f32 1.0, %v3575
        %v3577 = vsel %vm3257, %v3351, 0.0
        %v3578 = vsel %vm3258, %v3366, 0.0
        %v3579 = vsel %vm3259, %v3381, 0.0
        %v3580 = vsel %vm3260, %v3396, 0.0
        %v3581 = vsel %vm3261, %v3411, 0.0
        %v3582 = vsel %vm3262, %v3426, 0.0
        %v3583 = vsel %vm3263, %v3441, 0.0
        %v3584 = vsel %vm3264, %v3456, 0.0
        %v3585 = vsel %vm3265, %v3471, 0.0
        %v3586 = vsel %vm3266, %v3486, 0.0
        %v3587 = vsel %vm3267, %v3501, 0.0
        %v3588 = vsel %vm3268, %v3516, 0.0
        %v3589 = vsel %vm3269, %v3531, 0.0
        %v3590 = vsel %vm3270, %v3546, 0.0
        %v3591 = vsel %vm3271, %v3561, 0.0
        %v3592 = vsel %vm3272, %v3576, 0.0
        %v3593 = vld [vmem:[%s542] sm:$0xff]
        %v3594 = vld [vmem:[%s542 + $0x8] sm:$0xff]
        %v3595 = vld [vmem:[%s542 + $0x10] sm:$0xff]
        %v3596 = vld [vmem:[%s542 + $0x18] sm:$0xff]
        %v3597 = vld [vmem:[%s542 + $0x20] sm:$0xff]
        %v3598 = vld [vmem:[%s542 + $0x28] sm:$0xff]
        %v3599 = vld [vmem:[%s542 + $0x30] sm:$0xff]
        %v3600 = vld [vmem:[%s542 + $0x38] sm:$0xff]
        %v3601 = vld [vmem:[%s542 + $0x40] sm:$0xff]
        %v3602 = vld [vmem:[%s542 + $0x48] sm:$0xff]
        %v3603 = vld [vmem:[%s542 + $0x50] sm:$0xff]
        %v3604 = vld [vmem:[%s542 + $0x58] sm:$0xff]
        %v3605 = vld [vmem:[%s542 + $0x60] sm:$0xff]
        %v3606 = vld [vmem:[%s542 + $0x68] sm:$0xff]
        %v3607 = vld [vmem:[%s542 + $0x70] sm:$0xff]
        %v3608 = vld [vmem:[%s542 + $0x78] sm:$0xff]
        %vm3609 = vcmp.ge.f32.partialorder %v3593, 1.5
        %vm3610 = vcmp.ge.f32.partialorder %v3594, 1.5
        %vm3611 = vcmp.ge.f32.partialorder %v3595, 1.5
        %vm3612 = vcmp.ge.f32.partialorder %v3596, 1.5
        %vm3613 = vcmp.ge.f32.partialorder %v3597, 1.5
        %vm3614 = vcmp.ge.f32.partialorder %v3598, 1.5
        %vm3615 = vcmp.ge.f32.partialorder %v3599, 1.5
        %vm3616 = vcmp.ge.f32.partialorder %v3600, 1.5
        %vm3617 = vcmp.ge.f32.partialorder %v3601, 1.5
        %vm3618 = vcmp.ge.f32.partialorder %v3602, 1.5
        %vm3619 = vcmp.ge.f32.partialorder %v3603, 1.5
        %vm3620 = vcmp.ge.f32.partialorder %v3604, 1.5
        %vm3621 = vcmp.ge.f32.partialorder %v3605, 1.5
        %vm3622 = vcmp.ge.f32.partialorder %v3606, 1.5
        %vm3623 = vcmp.ge.f32.partialorder %v3607, 1.5
        %vm3624 = vcmp.ge.f32.partialorder %v3608, 1.5
        %3625 = vset.pattern.permute.xlu0 3
        %3626 = vperm.xlu0 %3625, %v2983
        %v3627 = vpop.permute.xlu0 %3626
        %3629 = vset.pattern.permute.xlu0 3
        %3630 = vperm.xlu0 %3629, %v2986
        %v3631 = vpop.permute.xlu0 %3630
        %3633 = vset.pattern.permute.xlu0 3
        %3634 = vperm.xlu0 %3633, %v2989
        %v3635 = vpop.permute.xlu0 %3634
        %3637 = vset.pattern.permute.xlu0 3
        %3638 = vperm.xlu0 %3637, %v2992
        %v3639 = vpop.permute.xlu0 %3638
        %3641 = vset.pattern.permute.xlu0 3
        %3642 = vperm.xlu0 %3641, %v2995
        %v3643 = vpop.permute.xlu0 %3642
        %3645 = vset.pattern.permute.xlu0 3
        %3646 = vperm.xlu0 %3645, %v2998
        %v3647 = vpop.permute.xlu0 %3646
        %3649 = vset.pattern.permute.xlu0 3
        %3650 = vperm.xlu0 %3649, %v3001
        %v3651 = vpop.permute.xlu0 %3650
        %3653 = vset.pattern.permute.xlu0 3
        %3654 = vperm.xlu0 %3653, %v3004
        %v3655 = vpop.permute.xlu0 %3654
        %3657 = vset.pattern.permute.xlu0 3
        %3658 = vperm.xlu0 %3657, %v3007
        %v3659 = vpop.permute.xlu0 %3658
        %3661 = vset.pattern.permute.xlu0 3
        %3662 = vperm.xlu0 %3661, %v3010
        %v3663 = vpop.permute.xlu0 %3662
        %3665 = vset.pattern.permute.xlu0 3
        %3666 = vperm.xlu0 %3665, %v3013
        %v3667 = vpop.permute.xlu0 %3666
        %3669 = vset.pattern.permute.xlu0 3
        %3670 = vperm.xlu0 %3669, %v3016
        %v3671 = vpop.permute.xlu0 %3670
        %3673 = vset.pattern.permute.xlu0 3
        %3674 = vperm.xlu0 %3673, %v3019
        %v3675 = vpop.permute.xlu0 %3674
        %3677 = vset.pattern.permute.xlu0 3
        %3678 = vperm.xlu0 %3677, %v3022
        %v3679 = vpop.permute.xlu0 %3678
        %3681 = vset.pattern.permute.xlu0 3
        %3682 = vperm.xlu0 %3681, %v3025
        %v3683 = vpop.permute.xlu0 %3682
        %3685 = vset.pattern.permute.xlu0 3
        %3686 = vperm.xlu0 %3685, %v3028
        %v3687 = vpop.permute.xlu0 %3686
        %v3689 = vperm.slane %v3030, 2
        %v3690 = vadd.f32 %v3627, %v3689
        %v3691 = vadd.f32 %v3631, %v3689
        %v3692 = vadd.f32 %v3635, %v3689
        %v3693 = vadd.f32 %v3639, %v3689
        %v3694 = vadd.f32 %v3643, %v3689
        %v3695 = vadd.f32 %v3647, %v3689
        %v3696 = vadd.f32 %v3651, %v3689
        %v3697 = vadd.f32 %v3655, %v3689
        %v3698 = vadd.f32 %v3659, %v3689
        %v3699 = vadd.f32 %v3663, %v3689
        %v3700 = vadd.f32 %v3667, %v3689
        %v3701 = vadd.f32 %v3671, %v3689
        %v3702 = vadd.f32 %v3675, %v3689
        %v3703 = vadd.f32 %v3679, %v3689
        %v3704 = vadd.f32 %v3683, %v3689
        %v3705 = vadd.f32 %v3687, %v3689
        %3706 = vset.pattern.permute.xlu0 2
        %3707 = vperm.xlu0 %3706, %v2983
        %v3708 = vpop.permute.xlu0 %3707
        %3710 = vset.pattern.permute.xlu0 2
        %3711 = vperm.xlu0 %3710, %v2986
        %v3712 = vpop.permute.xlu0 %3711
        %3714 = vset.pattern.permute.xlu0 2
        %3715 = vperm.xlu0 %3714, %v2989
        %v3716 = vpop.permute.xlu0 %3715
        %3718 = vset.pattern.permute.xlu0 2
        %3719 = vperm.xlu0 %3718, %v2992
        %v3720 = vpop.permute.xlu0 %3719
        %3722 = vset.pattern.permute.xlu0 2
        %3723 = vperm.xlu0 %3722, %v2995
        %v3724 = vpop.permute.xlu0 %3723
        %3726 = vset.pattern.permute.xlu0 2
        %3727 = vperm.xlu0 %3726, %v2998
        %v3728 = vpop.permute.xlu0 %3727
        %3730 = vset.pattern.permute.xlu0 2
        %3731 = vperm.xlu0 %3730, %v3001
        %v3732 = vpop.permute.xlu0 %3731
        %3734 = vset.pattern.permute.xlu0 2
        %3735 = vperm.xlu0 %3734, %v3004
        %v3736 = vpop.permute.xlu0 %3735
        %3738 = vset.pattern.permute.xlu0 2
        %3739 = vperm.xlu0 %3738, %v3007
        %v3740 = vpop.permute.xlu0 %3739
        %3742 = vset.pattern.permute.xlu0 2
        %3743 = vperm.xlu0 %3742, %v3010
        %v3744 = vpop.permute.xlu0 %3743
        %3746 = vset.pattern.permute.xlu0 2
        %3747 = vperm.xlu0 %3746, %v3013
        %v3748 = vpop.permute.xlu0 %3747
        %3750 = vset.pattern.permute.xlu0 2
        %3751 = vperm.xlu0 %3750, %v3016
        %v3752 = vpop.permute.xlu0 %3751
        %3754 = vset.pattern.permute.xlu0 2
        %3755 = vperm.xlu0 %3754, %v3019
        %v3756 = vpop.permute.xlu0 %3755
        %3758 = vset.pattern.permute.xlu0 2
        %3759 = vperm.xlu0 %3758, %v3022
        %v3760 = vpop.permute.xlu0 %3759
        %3762 = vset.pattern.permute.xlu0 2
        %3763 = vperm.xlu0 %3762, %v3025
        %v3764 = vpop.permute.xlu0 %3763
        %3766 = vset.pattern.permute.xlu0 2
        %3767 = vperm.xlu0 %3766, %v3028
        %v3768 = vpop.permute.xlu0 %3767
        %v3770 = vperm.slane %v3030, 3
        %v3771 = vadd.f32 %v3708, %v3770
        %v3772 = vadd.f32 %v3712, %v3770
        %v3773 = vadd.f32 %v3716, %v3770
        %v3774 = vadd.f32 %v3720, %v3770
        %v3775 = vadd.f32 %v3724, %v3770
        %v3776 = vadd.f32 %v3728, %v3770
        %v3777 = vadd.f32 %v3732, %v3770
        %v3778 = vadd.f32 %v3736, %v3770
        %v3779 = vadd.f32 %v3740, %v3770
        %v3780 = vadd.f32 %v3744, %v3770
        %v3781 = vadd.f32 %v3748, %v3770
        %v3782 = vadd.f32 %v3752, %v3770
        %v3783 = vadd.f32 %v3756, %v3770
        %v3784 = vadd.f32 %v3760, %v3770
        %v3785 = vadd.f32 %v3764, %v3770
        %v3786 = vadd.f32 %v3768, %v3770
        %v3787 = vsel %vm3609, %v3690, %v3771
        %v3788 = vsel %vm3610, %v3691, %v3772
        %v3789 = vsel %vm3611, %v3692, %v3773
        %v3790 = vsel %vm3612, %v3693, %v3774
        %v3791 = vsel %vm3613, %v3694, %v3775
        %v3792 = vsel %vm3614, %v3695, %v3776
        %v3793 = vsel %vm3615, %v3696, %v3777
        %v3794 = vsel %vm3616, %v3697, %v3778
        %v3795 = vsel %vm3617, %v3698, %v3779
        %v3796 = vsel %vm3618, %v3699, %v3780
        %v3797 = vsel %vm3619, %v3700, %v3781
        %v3798 = vsel %vm3620, %v3701, %v3782
        %v3799 = vsel %vm3621, %v3702, %v3783
        %v3800 = vsel %vm3622, %v3703, %v3784
        %v3801 = vsel %vm3623, %v3704, %v3785
        %v3802 = vsel %vm3624, %v3705, %v3786
        %vm3803 = vcmp.ge.f32.partialorder %v3593, 0.5
        %vm3804 = vcmp.ge.f32.partialorder %v3594, 0.5
        %vm3805 = vcmp.ge.f32.partialorder %v3595, 0.5
        %vm3806 = vcmp.ge.f32.partialorder %v3596, 0.5
        %vm3807 = vcmp.ge.f32.partialorder %v3597, 0.5
        %vm3808 = vcmp.ge.f32.partialorder %v3598, 0.5
        %vm3809 = vcmp.ge.f32.partialorder %v3599, 0.5
        %vm3810 = vcmp.ge.f32.partialorder %v3600, 0.5
        %vm3811 = vcmp.ge.f32.partialorder %v3601, 0.5
        %vm3812 = vcmp.ge.f32.partialorder %v3602, 0.5
        %vm3813 = vcmp.ge.f32.partialorder %v3603, 0.5
        %vm3814 = vcmp.ge.f32.partialorder %v3604, 0.5
        %vm3815 = vcmp.ge.f32.partialorder %v3605, 0.5
        %vm3816 = vcmp.ge.f32.partialorder %v3606, 0.5
        %vm3817 = vcmp.ge.f32.partialorder %v3607, 0.5
        %vm3818 = vcmp.ge.f32.partialorder %v3608, 0.5
        %v3819 = vxor.u32 %v3787, 2147483648
        %v3820 = vxor.u32 %v3788, 2147483648
        %v3821 = vxor.u32 %v3789, 2147483648
        %v3822 = vxor.u32 %v3790, 2147483648
        %v3823 = vxor.u32 %v3791, 2147483648
        %v3824 = vxor.u32 %v3792, 2147483648
        %v3825 = vxor.u32 %v3793, 2147483648
        %v3826 = vxor.u32 %v3794, 2147483648
        %v3827 = vxor.u32 %v3795, 2147483648
        %v3828 = vxor.u32 %v3796, 2147483648
        %v3829 = vxor.u32 %v3797, 2147483648
        %v3830 = vxor.u32 %v3798, 2147483648
        %v3831 = vxor.u32 %v3799, 2147483648
        %v3832 = vxor.u32 %v3800, 2147483648
        %v3833 = vxor.u32 %v3801, 2147483648
        %v3834 = vxor.u32 %v3802, 2147483648
        %v3835 = vmul.f32 %v3819, 1.442695
        %v3836 = vpow.pop %v3835
        %v3837 = vmul.f32 %v3820, 1.442695
        %v3838 = vpow.pop %v3837
        %v3839 = vmul.f32 %v3821, 1.442695
        %v3840 = vpow.pop %v3839
        %v3841 = vmul.f32 %v3822, 1.442695
        %v3842 = vpow.pop %v3841
        %v3843 = vmul.f32 %v3823, 1.442695
        %v3844 = vpow.pop %v3843
        %v3845 = vmul.f32 %v3824, 1.442695
        %v3846 = vpow.pop %v3845
        %v3847 = vmul.f32 %v3825, 1.442695
        %v3848 = vpow.pop %v3847
        %v3849 = vmul.f32 %v3826, 1.442695
        %v3850 = vpow.pop %v3849
        %v3851 = vmul.f32 %v3827, 1.442695
        %v3852 = vpow.pop %v3851
        %v3853 = vmul.f32 %v3828, 1.442695
        %v3854 = vpow.pop %v3853
        %v3855 = vmul.f32 %v3829, 1.442695
        %v3856 = vpow.pop %v3855
        %v3857 = vmul.f32 %v3830, 1.442695
        %v3858 = vpow.pop %v3857
        %v3859 = vmul.f32 %v3831, 1.442695
        %v3860 = vpow.pop %v3859
        %v3861 = vmul.f32 %v3832, 1.442695
        %v3862 = vpow.pop %v3861
        %v3863 = vmul.f32 %v3833, 1.442695
        %v3864 = vpow.pop %v3863
        %v3865 = vmul.f32 %v3834, 1.442695
        %v3866 = vpow.pop %v3865
        %v3867 = vadd.f32 %v3836, 1.0
        %v3868 = vadd.f32 %v3838, 1.0
        %v3869 = vadd.f32 %v3840, 1.0
        %v3870 = vadd.f32 %v3842, 1.0
        %v3871 = vadd.f32 %v3844, 1.0
        %v3872 = vadd.f32 %v3846, 1.0
        %v3873 = vadd.f32 %v3848, 1.0
        %v3874 = vadd.f32 %v3850, 1.0
        %v3875 = vadd.f32 %v3852, 1.0
        %v3876 = vadd.f32 %v3854, 1.0
        %v3877 = vadd.f32 %v3856, 1.0
        %v3878 = vadd.f32 %v3858, 1.0
        %v3879 = vadd.f32 %v3860, 1.0
        %v3880 = vadd.f32 %v3862, 1.0
        %v3881 = vadd.f32 %v3864, 1.0
        %v3882 = vadd.f32 %v3866, 1.0
        %v3883 = vrcp.pop %v3867
        %v3884 = vmul.f32 %v3867, %v3883
        %v3885 = vsub.f32 1.0, %v3884
        %v3886 = vmul.f32 %v3883, %v3885
        %v3887 = vadd.f32 %v3883, %v3886
        %vm3888 = vweird.f32 %v3867
        %vm3889 = vweird.f32 %v3883
        %vm3890 = vmor %vm3888, %vm3889
        %v3891 = vsel %vm3890, %v3883, %v3887
        %v3892 = vand.u32 2147483647, %v3867
        %vm3893 = vcmp.eq.f32.partialorder %v3892, 8.507059e+37
        %v3894 = vand.u32 %v3867, 2147483648
        %v3895 = vor.u32 1.1754944e-38, %v3894
        %v3896 = vsel %vm3893, %v3895, %v3891
        %v3897 = vmul.f32 1.0, %v3896
        %v3898 = vrcp.pop %v3868
        %v3899 = vmul.f32 %v3868, %v3898
        %v3900 = vsub.f32 1.0, %v3899
        %v3901 = vmul.f32 %v3898, %v3900
        %v3902 = vadd.f32 %v3898, %v3901
        %vm3903 = vweird.f32 %v3868
        %vm3904 = vweird.f32 %v3898
        %vm3905 = vmor %vm3903, %vm3904
        %v3906 = vsel %vm3905, %v3898, %v3902
        %v3907 = vand.u32 2147483647, %v3868
        %vm3908 = vcmp.eq.f32.partialorder %v3907, 8.507059e+37
        %v3909 = vand.u32 %v3868, 2147483648
        %v3910 = vor.u32 1.1754944e-38, %v3909
        %v3911 = vsel %vm3908, %v3910, %v3906
        %v3912 = vmul.f32 1.0, %v3911
        %v3913 = vrcp.pop %v3869
        %v3914 = vmul.f32 %v3869, %v3913
        %v3915 = vsub.f32 1.0, %v3914
        %v3916 = vmul.f32 %v3913, %v3915
        %v3917 = vadd.f32 %v3913, %v3916
        %vm3918 = vweird.f32 %v3869
        %vm3919 = vweird.f32 %v3913
        %vm3920 = vmor %vm3918, %vm3919
        %v3921 = vsel %vm3920, %v3913, %v3917
        %v3922 = vand.u32 2147483647, %v3869
        %vm3923 = vcmp.eq.f32.partialorder %v3922, 8.507059e+37
        %v3924 = vand.u32 %v3869, 2147483648
        %v3925 = vor.u32 1.1754944e-38, %v3924
        %v3926 = vsel %vm3923, %v3925, %v3921
        %v3927 = vmul.f32 1.0, %v3926
        %v3928 = vrcp.pop %v3870
        %v3929 = vmul.f32 %v3870, %v3928
        %v3930 = vsub.f32 1.0, %v3929
        %v3931 = vmul.f32 %v3928, %v3930
        %v3932 = vadd.f32 %v3928, %v3931
        %vm3933 = vweird.f32 %v3870
        %vm3934 = vweird.f32 %v3928
        %vm3935 = vmor %vm3933, %vm3934
        %v3936 = vsel %vm3935, %v3928, %v3932
        %v3937 = vand.u32 2147483647, %v3870
        %vm3938 = vcmp.eq.f32.partialorder %v3937, 8.507059e+37
        %v3939 = vand.u32 %v3870, 2147483648
        %v3940 = vor.u32 1.1754944e-38, %v3939
        %v3941 = vsel %vm3938, %v3940, %v3936
        %v3942 = vmul.f32 1.0, %v3941
        %v3943 = vrcp.pop %v3871
        %v3944 = vmul.f32 %v3871, %v3943
        %v3945 = vsub.f32 1.0, %v3944
        %v3946 = vmul.f32 %v3943, %v3945
        %v3947 = vadd.f32 %v3943, %v3946
        %vm3948 = vweird.f32 %v3871
        %vm3949 = vweird.f32 %v3943
        %vm3950 = vmor %vm3948, %vm3949
        %v3951 = vsel %vm3950, %v3943, %v3947
        %v3952 = vand.u32 2147483647, %v3871
        %vm3953 = vcmp.eq.f32.partialorder %v3952, 8.507059e+37
        %v3954 = vand.u32 %v3871, 2147483648
        %v3955 = vor.u32 1.1754944e-38, %v3954
        %v3956 = vsel %vm3953, %v3955, %v3951
        %v3957 = vmul.f32 1.0, %v3956
        %v3958 = vrcp.pop %v3872
        %v3959 = vmul.f32 %v3872, %v3958
        %v3960 = vsub.f32 1.0, %v3959
        %v3961 = vmul.f32 %v3958, %v3960
        %v3962 = vadd.f32 %v3958, %v3961
        %vm3963 = vweird.f32 %v3872
        %vm3964 = vweird.f32 %v3958
        %vm3965 = vmor %vm3963, %vm3964
        %v3966 = vsel %vm3965, %v3958, %v3962
        %v3967 = vand.u32 2147483647, %v3872
        %vm3968 = vcmp.eq.f32.partialorder %v3967, 8.507059e+37
        %v3969 = vand.u32 %v3872, 2147483648
        %v3970 = vor.u32 1.1754944e-38, %v3969
        %v3971 = vsel %vm3968, %v3970, %v3966
        %v3972 = vmul.f32 1.0, %v3971
        %v3973 = vrcp.pop %v3873
        %v3974 = vmul.f32 %v3873, %v3973
        %v3975 = vsub.f32 1.0, %v3974
        %v3976 = vmul.f32 %v3973, %v3975
        %v3977 = vadd.f32 %v3973, %v3976
        %vm3978 = vweird.f32 %v3873
        %vm3979 = vweird.f32 %v3973
        %vm3980 = vmor %vm3978, %vm3979
        %v3981 = vsel %vm3980, %v3973, %v3977
        %v3982 = vand.u32 2147483647, %v3873
        %vm3983 = vcmp.eq.f32.partialorder %v3982, 8.507059e+37
        %v3984 = vand.u32 %v3873, 2147483648
        %v3985 = vor.u32 1.1754944e-38, %v3984
        %v3986 = vsel %vm3983, %v3985, %v3981
        %v3987 = vmul.f32 1.0, %v3986
        %v3988 = vrcp.pop %v3874
        %v3989 = vmul.f32 %v3874, %v3988
        %v3990 = vsub.f32 1.0, %v3989
        %v3991 = vmul.f32 %v3988, %v3990
        %v3992 = vadd.f32 %v3988, %v3991
        %vm3993 = vweird.f32 %v3874
        %vm3994 = vweird.f32 %v3988
        %vm3995 = vmor %vm3993, %vm3994
        %v3996 = vsel %vm3995, %v3988, %v3992
        %v3997 = vand.u32 2147483647, %v3874
        %vm3998 = vcmp.eq.f32.partialorder %v3997, 8.507059e+37
        %v3999 = vand.u32 %v3874, 2147483648
        %v4000 = vor.u32 1.1754944e-38, %v3999
        %v4001 = vsel %vm3998, %v4000, %v3996
        %v4002 = vmul.f32 1.0, %v4001
        %v4003 = vrcp.pop %v3875
        %v4004 = vmul.f32 %v3875, %v4003
        %v4005 = vsub.f32 1.0, %v4004
        %v4006 = vmul.f32 %v4003, %v4005
        %v4007 = vadd.f32 %v4003, %v4006
        %vm4008 = vweird.f32 %v3875
        %vm4009 = vweird.f32 %v4003
        %vm4010 = vmor %vm4008, %vm4009
        %v4011 = vsel %vm4010, %v4003, %v4007
        %v4012 = vand.u32 2147483647, %v3875
        %vm4013 = vcmp.eq.f32.partialorder %v4012, 8.507059e+37
        %v4014 = vand.u32 %v3875, 2147483648
        %v4015 = vor.u32 1.1754944e-38, %v4014
        %v4016 = vsel %vm4013, %v4015, %v4011
        %v4017 = vmul.f32 1.0, %v4016
        %v4018 = vrcp.pop %v3876
        %v4019 = vmul.f32 %v3876, %v4018
        %v4020 = vsub.f32 1.0, %v4019
        %v4021 = vmul.f32 %v4018, %v4020
        %v4022 = vadd.f32 %v4018, %v4021
        %vm4023 = vweird.f32 %v3876
        %vm4024 = vweird.f32 %v4018
        %vm4025 = vmor %vm4023, %vm4024
        %v4026 = vsel %vm4025, %v4018, %v4022
        %v4027 = vand.u32 2147483647, %v3876
        %vm4028 = vcmp.eq.f32.partialorder %v4027, 8.507059e+37
        %v4029 = vand.u32 %v3876, 2147483648
        %v4030 = vor.u32 1.1754944e-38, %v4029
        %v4031 = vsel %vm4028, %v4030, %v4026
        %v4032 = vmul.f32 1.0, %v4031
        %v4033 = vrcp.pop %v3877
        %v4034 = vmul.f32 %v3877, %v4033
        %v4035 = vsub.f32 1.0, %v4034
        %v4036 = vmul.f32 %v4033, %v4035
        %v4037 = vadd.f32 %v4033, %v4036
        %vm4038 = vweird.f32 %v3877
        %vm4039 = vweird.f32 %v4033
        %vm4040 = vmor %vm4038, %vm4039
        %v4041 = vsel %vm4040, %v4033, %v4037
        %v4042 = vand.u32 2147483647, %v3877
        %vm4043 = vcmp.eq.f32.partialorder %v4042, 8.507059e+37
        %v4044 = vand.u32 %v3877, 2147483648
        %v4045 = vor.u32 1.1754944e-38, %v4044
        %v4046 = vsel %vm4043, %v4045, %v4041
        %v4047 = vmul.f32 1.0, %v4046
        %v4048 = vrcp.pop %v3878
        %v4049 = vmul.f32 %v3878, %v4048
        %v4050 = vsub.f32 1.0, %v4049
        %v4051 = vmul.f32 %v4048, %v4050
        %v4052 = vadd.f32 %v4048, %v4051
        %vm4053 = vweird.f32 %v3878
        %vm4054 = vweird.f32 %v4048
        %vm4055 = vmor %vm4053, %vm4054
        %v4056 = vsel %vm4055, %v4048, %v4052
        %v4057 = vand.u32 2147483647, %v3878
        %vm4058 = vcmp.eq.f32.partialorder %v4057, 8.507059e+37
        %v4059 = vand.u32 %v3878, 2147483648
        %v4060 = vor.u32 1.1754944e-38, %v4059
        %v4061 = vsel %vm4058, %v4060, %v4056
        %v4062 = vmul.f32 1.0, %v4061
        %v4063 = vrcp.pop %v3879
        %v4064 = vmul.f32 %v3879, %v4063
        %v4065 = vsub.f32 1.0, %v4064
        %v4066 = vmul.f32 %v4063, %v4065
        %v4067 = vadd.f32 %v4063, %v4066
        %vm4068 = vweird.f32 %v3879
        %vm4069 = vweird.f32 %v4063
        %vm4070 = vmor %vm4068, %vm4069
        %v4071 = vsel %vm4070, %v4063, %v4067
        %v4072 = vand.u32 2147483647, %v3879
        %vm4073 = vcmp.eq.f32.partialorder %v4072, 8.507059e+37
        %v4074 = vand.u32 %v3879, 2147483648
        %v4075 = vor.u32 1.1754944e-38, %v4074
        %v4076 = vsel %vm4073, %v4075, %v4071
        %v4077 = vmul.f32 1.0, %v4076
        %v4078 = vrcp.pop %v3880
        %v4079 = vmul.f32 %v3880, %v4078
        %v4080 = vsub.f32 1.0, %v4079
        %v4081 = vmul.f32 %v4078, %v4080
        %v4082 = vadd.f32 %v4078, %v4081
        %vm4083 = vweird.f32 %v3880
        %vm4084 = vweird.f32 %v4078
        %vm4085 = vmor %vm4083, %vm4084
        %v4086 = vsel %vm4085, %v4078, %v4082
        %v4087 = vand.u32 2147483647, %v3880
        %vm4088 = vcmp.eq.f32.partialorder %v4087, 8.507059e+37
        %v4089 = vand.u32 %v3880, 2147483648
        %v4090 = vor.u32 1.1754944e-38, %v4089
        %v4091 = vsel %vm4088, %v4090, %v4086
        %v4092 = vmul.f32 1.0, %v4091
        %v4093 = vrcp.pop %v3881
        %v4094 = vmul.f32 %v3881, %v4093
        %v4095 = vsub.f32 1.0, %v4094
        %v4096 = vmul.f32 %v4093, %v4095
        %v4097 = vadd.f32 %v4093, %v4096
        %vm4098 = vweird.f32 %v3881
        %vm4099 = vweird.f32 %v4093
        %vm4100 = vmor %vm4098, %vm4099
        %v4101 = vsel %vm4100, %v4093, %v4097
        %v4102 = vand.u32 2147483647, %v3881
        %vm4103 = vcmp.eq.f32.partialorder %v4102, 8.507059e+37
        %v4104 = vand.u32 %v3881, 2147483648
        %v4105 = vor.u32 1.1754944e-38, %v4104
        %v4106 = vsel %vm4103, %v4105, %v4101
        %v4107 = vmul.f32 1.0, %v4106
        %v4108 = vrcp.pop %v3882
        %v4109 = vmul.f32 %v3882, %v4108
        %v4110 = vsub.f32 1.0, %v4109
        %v4111 = vmul.f32 %v4108, %v4110
        %v4112 = vadd.f32 %v4108, %v4111
        %vm4113 = vweird.f32 %v3882
        %vm4114 = vweird.f32 %v4108
        %vm4115 = vmor %vm4113, %vm4114
        %v4116 = vsel %vm4115, %v4108, %v4112
        %v4117 = vand.u32 2147483647, %v3882
        %vm4118 = vcmp.eq.f32.partialorder %v4117, 8.507059e+37
        %v4119 = vand.u32 %v3882, 2147483648
        %v4120 = vor.u32 1.1754944e-38, %v4119
        %v4121 = vsel %vm4118, %v4120, %v4116
        %v4122 = vmul.f32 1.0, %v4121
        %v4123 = vsel %vm3803, %v3897, 0.0
        %v4124 = vsel %vm3804, %v3912, 0.0
        %v4125 = vsel %vm3805, %v3927, 0.0
        %v4126 = vsel %vm3806, %v3942, 0.0
        %v4127 = vsel %vm3807, %v3957, 0.0
        %v4128 = vsel %vm3808, %v3972, 0.0
        %v4129 = vsel %vm3809, %v3987, 0.0
        %v4130 = vsel %vm3810, %v4002, 0.0
        %v4131 = vsel %vm3811, %v4017, 0.0
        %v4132 = vsel %vm3812, %v4032, 0.0
        %v4133 = vsel %vm3813, %v4047, 0.0
        %v4134 = vsel %vm3814, %v4062, 0.0
        %v4135 = vsel %vm3815, %v4077, 0.0
        %v4136 = vsel %vm3816, %v4092, 0.0
        %v4137 = vsel %vm3817, %v4107, 0.0
        %v4138 = vsel %vm3818, %v4122, 0.0
        %v4139 = vld [vmem:[%s553] sm:$0xff]
        %v4140 = vld [vmem:[%s553 + $0x8] sm:$0xff]
        %v4141 = vld [vmem:[%s553 + $0x10] sm:$0xff]
        %v4142 = vld [vmem:[%s553 + $0x18] sm:$0xff]
        %v4143 = vld [vmem:[%s553 + $0x20] sm:$0xff]
        %v4144 = vld [vmem:[%s553 + $0x28] sm:$0xff]
        %v4145 = vld [vmem:[%s553 + $0x30] sm:$0xff]
        %v4146 = vld [vmem:[%s553 + $0x38] sm:$0xff]
        %v4147 = vld [vmem:[%s553 + $0x40] sm:$0xff]
        %v4148 = vld [vmem:[%s553 + $0x48] sm:$0xff]
        %v4149 = vld [vmem:[%s553 + $0x50] sm:$0xff]
        %v4150 = vld [vmem:[%s553 + $0x58] sm:$0xff]
        %v4151 = vld [vmem:[%s553 + $0x60] sm:$0xff]
        %v4152 = vld [vmem:[%s553 + $0x68] sm:$0xff]
        %v4153 = vld [vmem:[%s553 + $0x70] sm:$0xff]
        %v4154 = vld [vmem:[%s553 + $0x78] sm:$0xff]
        %4155 = vmatpush.msra.mxu0 %v860
        %4156 = vmatpush.msra.mxu0 %v857
        %4157 = vmatpush.msra.mxu0 %v854
        %4158 = vmatpush.msra.mxu0 %v851
        %4159 = vmatpush.msra.mxu0 %v848
        %4160 = vmatpush.msra.mxu0 %v845
        %4161 = vmatpush.msra.mxu0 %v842
        %4162 = vmatpush.msra.mxu0 %v839
        %4163 = vmatpush.msra.mxu0 %v836
        %4164 = vmatpush.msra.mxu0 %v833
        %4165 = vmatpush.msra.mxu0 %v830
        %4166 = vmatpush.msra.mxu0 %v827
        %4167 = vmatpush.msra.mxu0 %v824
        %4168 = vmatpush.msra.mxu0 %v821
        %4169 = vmatpush.msra.mxu0 %v818
        %4170 = vmatpush.msra.mxu0 %v815
        %4171 = vmatmul.f32.gmra.mxu0 %v3577
        %v4172 = vpop.f32.mrf.mxu0
        %v4173 = vadd.f32 0.0, %v4172
        %4174 = vmatmul.f32.gmra.mxu0 %v3578
        %v4175 = vpop.f32.mrf.mxu0
        %v4176 = vadd.f32 0.0, %v4175
        %4177 = vmatmul.f32.gmra.mxu0 %v3579
        %v4178 = vpop.f32.mrf.mxu0
        %v4179 = vadd.f32 0.0, %v4178
        %4180 = vmatmul.f32.gmra.mxu0 %v3580
        %v4181 = vpop.f32.mrf.mxu0
        %v4182 = vadd.f32 0.0, %v4181
        %4183 = vmatmul.f32.gmra.mxu0 %v3581
        %v4184 = vpop.f32.mrf.mxu0
        %v4185 = vadd.f32 0.0, %v4184
        %4186 = vmatmul.f32.gmra.mxu0 %v3582
        %v4187 = vpop.f32.mrf.mxu0
        %v4188 = vadd.f32 0.0, %v4187
        %4189 = vmatmul.f32.gmra.mxu0 %v3583
        %v4190 = vpop.f32.mrf.mxu0
        %v4191 = vadd.f32 0.0, %v4190
        %4192 = vmatmul.f32.gmra.mxu0 %v3584
        %v4193 = vpop.f32.mrf.mxu0
        %v4194 = vadd.f32 0.0, %v4193
        %4195 = vmatmul.f32.gmra.mxu0 %v3585
        %v4196 = vpop.f32.mrf.mxu0
        %v4197 = vadd.f32 0.0, %v4196
        %4198 = vmatmul.f32.gmra.mxu0 %v3586
        %v4199 = vpop.f32.mrf.mxu0
        %v4200 = vadd.f32 0.0, %v4199
        %4201 = vmatmul.f32.gmra.mxu0 %v3587
        %v4202 = vpop.f32.mrf.mxu0
        %v4203 = vadd.f32 0.0, %v4202
        %4204 = vmatmul.f32.gmra.mxu0 %v3588
        %v4205 = vpop.f32.mrf.mxu0
        %v4206 = vadd.f32 0.0, %v4205
        %4207 = vmatmul.f32.gmra.mxu0 %v3589
        %v4208 = vpop.f32.mrf.mxu0
        %v4209 = vadd.f32 0.0, %v4208
        %4210 = vmatmul.f32.gmra.mxu0 %v3590
        %v4211 = vpop.f32.mrf.mxu0
        %v4212 = vadd.f32 0.0, %v4211
        %4213 = vmatmul.f32.gmra.mxu0 %v3591
        %v4214 = vpop.f32.mrf.mxu0
        %v4215 = vadd.f32 0.0, %v4214
        %4216 = vmatmul.f32.gmra.mxu0 %v3592
        %v4217 = vpop.f32.mrf.mxu0
        %v4218 = vadd.f32 0.0, %v4217
        %4219 = vdwg.mxu0
        %v4220 = vadd.f32 %v4139, %v4173
        %v4221 = vadd.f32 %v4140, %v4176
        %v4222 = vadd.f32 %v4141, %v4179
        %v4223 = vadd.f32 %v4142, %v4182
        %v4224 = vadd.f32 %v4143, %v4185
        %v4225 = vadd.f32 %v4144, %v4188
        %v4226 = vadd.f32 %v4145, %v4191
        %v4227 = vadd.f32 %v4146, %v4194
        %v4228 = vadd.f32 %v4147, %v4197
        %v4229 = vadd.f32 %v4148, %v4200
        %v4230 = vadd.f32 %v4149, %v4203
        %v4231 = vadd.f32 %v4150, %v4206
        %v4232 = vadd.f32 %v4151, %v4209
        %v4233 = vadd.f32 %v4152, %v4212
        %v4234 = vadd.f32 %v4153, %v4215
        %v4235 = vadd.f32 %v4154, %v4218
        %4236 = vmatpush.msra.mxu0 %v1214
        %4237 = vmatpush.msra.mxu0 %v1212
        %4238 = vmatpush.msra.mxu0 %v1210
        %4239 = vmatpush.msra.mxu0 %v1208
        %4240 = vmatpush.msra.mxu0 %v1206
        %4241 = vmatpush.msra.mxu0 %v1204
        %4242 = vmatpush.msra.mxu0 %v1202
        %4243 = vmatpush.msra.mxu0 %v1200
        %4244 = vmatpush.msra.mxu0 %v1198
        %4245 = vmatpush.msra.mxu0 %v1196
        %4246 = vmatpush.msra.mxu0 %v1194
        %4247 = vmatpush.msra.mxu0 %v1192
        %4248 = vmatpush.msra.mxu0 %v1190
        %4249 = vmatpush.msra.mxu0 %v1188
        %4250 = vmatpush.msra.mxu0 %v1186
        %4251 = vmatpush.msra.mxu0 %v1184
        %4252 = vmatmul.f32.gmra.mxu0 %v4123
        %v4253 = vpop.f32.mrf.mxu0
        %v4254 = vadd.f32 0.0, %v4253
        %4255 = vmatmul.f32.gmra.mxu0 %v4124
        %v4256 = vpop.f32.mrf.mxu0
        %v4257 = vadd.f32 0.0, %v4256
        %4258 = vmatmul.f32.gmra.mxu0 %v4125
        %v4259 = vpop.f32.mrf.mxu0
        %v4260 = vadd.f32 0.0, %v4259
        %4261 = vmatmul.f32.gmra.mxu0 %v4126
        %v4262 = vpop.f32.mrf.mxu0
        %v4263 = vadd.f32 0.0, %v4262
        %4264 = vmatmul.f32.gmra.mxu0 %v4127
        %v4265 = vpop.f32.mrf.mxu0
        %v4266 = vadd.f32 0.0, %v4265
        %4267 = vmatmul.f32.gmra.mxu0 %v4128
        %v4268 = vpop.f32.mrf.mxu0
        %v4269 = vadd.f32 0.0, %v4268
        %4270 = vmatmul.f32.gmra.mxu0 %v4129
        %v4271 = vpop.f32.mrf.mxu0
        %v4272 = vadd.f32 0.0, %v4271
        %4273 = vmatmul.f32.gmra.mxu0 %v4130
        %v4274 = vpop.f32.mrf.mxu0
        %v4275 = vadd.f32 0.0, %v4274
        %4276 = vmatmul.f32.gmra.mxu0 %v4131
        %v4277 = vpop.f32.mrf.mxu0
        %v4278 = vadd.f32 0.0, %v4277
        %4279 = vmatmul.f32.gmra.mxu0 %v4132
        %v4280 = vpop.f32.mrf.mxu0
        %v4281 = vadd.f32 0.0, %v4280
        %4282 = vmatmul.f32.gmra.mxu0 %v4133
        %v4283 = vpop.f32.mrf.mxu0
        %v4284 = vadd.f32 0.0, %v4283
        %4285 = vmatmul.f32.gmra.mxu0 %v4134
        %v4286 = vpop.f32.mrf.mxu0
        %v4287 = vadd.f32 0.0, %v4286
        %4288 = vmatmul.f32.gmra.mxu0 %v4135
        %v4289 = vpop.f32.mrf.mxu0
        %v4290 = vadd.f32 0.0, %v4289
        %4291 = vmatmul.f32.gmra.mxu0 %v4136
        %v4292 = vpop.f32.mrf.mxu0
        %v4293 = vadd.f32 0.0, %v4292
        %4294 = vmatmul.f32.gmra.mxu0 %v4137
        %v4295 = vpop.f32.mrf.mxu0
        %v4296 = vadd.f32 0.0, %v4295
        %4297 = vmatmul.f32.gmra.mxu0 %v4138
        %v4298 = vpop.f32.mrf.mxu0
        %v4299 = vadd.f32 0.0, %v4298
        %4300 = vdwg.mxu0
        %v4301 = vadd.f32 %v4220, %v4254
        %v4302 = vadd.f32 %v4221, %v4257
        %v4303 = vadd.f32 %v4222, %v4260
        %v4304 = vadd.f32 %v4223, %v4263
        %v4305 = vadd.f32 %v4224, %v4266
        %v4306 = vadd.f32 %v4225, %v4269
        %v4307 = vadd.f32 %v4226, %v4272
        %v4308 = vadd.f32 %v4227, %v4275
        %v4309 = vadd.f32 %v4228, %v4278
        %v4310 = vadd.f32 %v4229, %v4281
        %v4311 = vadd.f32 %v4230, %v4284
        %v4312 = vadd.f32 %v4231, %v4287
        %v4313 = vadd.f32 %v4232, %v4290
        %v4314 = vadd.f32 %v4233, %v4293
        %v4315 = vadd.f32 %v4234, %v4296
        %v4316 = vadd.f32 %v4235, %v4299
        %4317 = vst.msk [vmem:[%s553] sm:$0xff] %vm2875, %v4301
        %4318 = vst.msk [vmem:[%s553 + $0x8] sm:$0xff] %vm2875, %v4302
        %4319 = vst.msk [vmem:[%s553 + $0x10] sm:$0xff] %vm2875, %v4303
        %4320 = vst.msk [vmem:[%s553 + $0x18] sm:$0xff] %vm2875, %v4304
        %4321 = vst.msk [vmem:[%s553 + $0x20] sm:$0xff] %vm2875, %v4305
        %4322 = vst.msk [vmem:[%s553 + $0x28] sm:$0xff] %vm2875, %v4306
        %4323 = vst.msk [vmem:[%s553 + $0x30] sm:$0xff] %vm2875, %v4307
        %4324 = vst.msk [vmem:[%s553 + $0x38] sm:$0xff] %vm2875, %v4308
        %4325 = vst.msk [vmem:[%s553 + $0x40] sm:$0xff] %vm2875, %v4309
        %4326 = vst.msk [vmem:[%s553 + $0x48] sm:$0xff] %vm2875, %v4310
        %4327 = vst.msk [vmem:[%s553 + $0x50] sm:$0xff] %vm2875, %v4311
        %4328 = vst.msk [vmem:[%s553 + $0x58] sm:$0xff] %vm2875, %v4312
        %4329 = vst.msk [vmem:[%s553 + $0x60] sm:$0xff] %vm2875, %v4313
        %4330 = vst.msk [vmem:[%s553 + $0x68] sm:$0xff] %vm2875, %v4314
        %4331 = vst.msk [vmem:[%s553 + $0x70] sm:$0xff] %vm2875, %v4315
        %4332 = vst.msk [vmem:[%s553 + $0x78] sm:$0xff] %vm2875, %v4316
      $region64: #{gsan_forward.1} parent=59 // pred_fallthru
        _
      %v4333 = vld [vmem:[%s553] sm:$0xff]
      %v4334 = vld [vmem:[%s553 + $0x8] sm:$0xff]
      %v4335 = vld [vmem:[%s553 + $0x10] sm:$0xff]
      %v4336 = vld [vmem:[%s553 + $0x18] sm:$0xff]
      %v4337 = vld [vmem:[%s553 + $0x20] sm:$0xff]
      %v4338 = vld [vmem:[%s553 + $0x28] sm:$0xff]
      %v4339 = vld [vmem:[%s553 + $0x30] sm:$0xff]
      %v4340 = vld [vmem:[%s553 + $0x38] sm:$0xff]
      %v4341 = vld [vmem:[%s553 + $0x40] sm:$0xff]
      %v4342 = vld [vmem:[%s553 + $0x48] sm:$0xff]
      %v4343 = vld [vmem:[%s553 + $0x50] sm:$0xff]
      %v4344 = vld [vmem:[%s553 + $0x58] sm:$0xff]
      %v4345 = vld [vmem:[%s553 + $0x60] sm:$0xff]
      %v4346 = vld [vmem:[%s553 + $0x68] sm:$0xff]
      %v4347 = vld [vmem:[%s553 + $0x70] sm:$0xff]
      %v4348 = vld [vmem:[%s553 + $0x78] sm:$0xff]
      %v4349 = vmax.f32 %v4333, 0.0
      %v4350 = vmax.f32 %v4334, 0.0
      %v4351 = vmax.f32 %v4335, 0.0
      %v4352 = vmax.f32 %v4336, 0.0
      %v4353 = vmax.f32 %v4337, 0.0
      %v4354 = vmax.f32 %v4338, 0.0
      %v4355 = vmax.f32 %v4339, 0.0
      %v4356 = vmax.f32 %v4340, 0.0
      %v4357 = vmax.f32 %v4341, 0.0
      %v4358 = vmax.f32 %v4342, 0.0
      %v4359 = vmax.f32 %v4343, 0.0
      %v4360 = vmax.f32 %v4344, 0.0
      %v4361 = vmax.f32 %v4345, 0.0
      %v4362 = vmax.f32 %v4346, 0.0
      %v4363 = vmax.f32 %v4347, 0.0
      %v4364 = vmax.f32 %v4348, 0.0
      %4365 = vst.msk [vmem:[%s553] sm:$0xff] %vm2875, %v4349
      %4366 = vst.msk [vmem:[%s553 + $0x8] sm:$0xff] %vm2875, %v4350
      %4367 = vst.msk [vmem:[%s553 + $0x10] sm:$0xff] %vm2875, %v4351
      %4368 = vst.msk [vmem:[%s553 + $0x18] sm:$0xff] %vm2875, %v4352
      %4369 = vst.msk [vmem:[%s553 + $0x20] sm:$0xff] %vm2875, %v4353
      %4370 = vst.msk [vmem:[%s553 + $0x28] sm:$0xff] %vm2875, %v4354
      %4371 = vst.msk [vmem:[%s553 + $0x30] sm:$0xff] %vm2875, %v4355
      %4372 = vst.msk [vmem:[%s553 + $0x38] sm:$0xff] %vm2875, %v4356
      %4373 = vst.msk [vmem:[%s553 + $0x40] sm:$0xff] %vm2875, %v4357
      %4374 = vst.msk [vmem:[%s553 + $0x48] sm:$0xff] %vm2875, %v4358
      %4375 = vst.msk [vmem:[%s553 + $0x50] sm:$0xff] %vm2875, %v4359
      %4376 = vst.msk [vmem:[%s553 + $0x58] sm:$0xff] %vm2875, %v4360
      %4377 = vst.msk [vmem:[%s553 + $0x60] sm:$0xff] %vm2875, %v4361
      %4378 = vst.msk [vmem:[%s553 + $0x68] sm:$0xff] %vm2875, %v4362
      %4379 = vst.msk [vmem:[%s553 + $0x70] sm:$0xff] %vm2875, %v4363
      %4380 = vst.msk [vmem:[%s553 + $0x78] sm:$0xff] %vm2875, %v4364
      %s4381 = smul.u32 16, %s21
      %p4382 = scmp.lt.s32.totalorder %s4381, 47
      %s4383 = scalar_select %p4382, %s4381, 47
      %s4384 = smul.addr %s4383, 8
      %s4385 = scalar_lea.vmem %s10, %s4384
      // Predicated region
      $region65: #{gsan_forward.1} parent=59 // pred_check
        %p4386 = pneg %p299
      $region66: #{gsan_forward.1} parent=59 // pred_check_branch
        %4388 = sbr.rel (%p4386) target = $region68
      $region67: #{gsan_forward.1} parent=59 // pred_region
        %s4389 = smul.u32 16, %s21
      $region68: #{gsan_forward.1} parent=59 // pred_fallthru
        _
    $region60: #{gsan_forward.1} parent=5 // pred_fallthru
      _
    %p4390 = scmp.le.s32.totalorder 2, %s16
    // Predicated region
    $region69: #{gsan_forward.1} parent=5 // pred_check
      %p4391 = pneg %p4390
    $region70: #{gsan_forward.1} parent=5 // pred_check_branch
      %4393 = sbr.rel (%p4391) target = $region72
    $region71: #{gsan_forward.1} parent=5 // pred_region
      %s4394 = ssub.s32 %s16, 2
      // Predicated region
      $region73: #{gsan_forward.1} parent=71 // pred_check
        %p4395 = pneg %p305
      $region74: #{gsan_forward.1} parent=71 // pred_check_branch
        %4397 = sbr.rel (%p4395) target = $region76
      $region75: #{gsan_forward.1} parent=71 // pred_region
        %s4398 = smul.u32 16, %s22
        %p4399 = scmp.lt.s32.totalorder %s4398, 47
        %s4400 = scalar_select %p4399, %s4398, 47
        %s4401 = smul.addr %s4400, 8
        %s4402 = scalar_lea.vmem %s10, %s4401
      $region76: #{gsan_forward.1} parent=71 // pred_fallthru
        _
    $region72: #{gsan_forward.1} parent=5 // pred_fallthru
      _
  $region6: #{gsan_forward.1} parent=0 // loop_footer
    %s20 = sadd.s32 1, %s16
  $region7: #{gsan_forward.1} parent=0 // loop_footer_branch
    %15 = sbr.rel target = $region3
  $region8: #{gsan_forward.1} parent=0 // loop_exit
    _

</llo_original>
